<compile_context>
chip_gen: v7x
topology: tpu7x:2x2x1
jax: 0.10.0
libtpu: 0.0.40
codegen_flags: <defaults>
</compile_context>

<pallas_src>
from functools import partial

import jax
import jax.numpy as jnp
from jax.experimental import pallas as pl
from jax.experimental.pallas import tpu as pltpu

# ----------------------------- configuration (small) ------------------------
B          = 2                 # batch
POINT_DIM  = 3
MAX_TOKEN  = 6
K          = MAX_TOKEN - 2     # number of label / part tokens = 4
N_POINTS   = 4
S          = K + N_POINTS      # encoder sequence length = 8
SK         = S - K             # point-token tail length = 4
H          = 128               # hidden_size (multiple of 128 lanes)
FF         = 4 * H             # ff_size
NUM_LAYERS = 2                 # "regular" transformer layers (module default is 6)
L          = NUM_LAYERS + 1    # + 1 label-wise layer
N_HEADS    = 4
DH         = H // N_HEADS
BHS        = B * N_HEADS * S   # flattened-head attention rows = 64
REG_F      = 64                # Ratio_Regressor hidden width
LANE       = 128

_VMEM = pl.BlockSpec(memory_space=pltpu.MemorySpace.VMEM)


def _ln(v, eps, g=None, b=None):
    """Layer norm over the last axis (traced inside the kernel), f32 math."""
    m = jnp.mean(v, axis=-1, keepdims=True)
    c = v - m
    var = jnp.mean(c * c, axis=-1, keepdims=True)
    y = c * jax.lax.rsqrt(var + eps)
    if g is not None:
        y = y * g + b
    return y


# ----------------------------- fused Pallas kernel ---------------------------
def _fused_encoder_kernel(
        # activations / small inputs
        src_ref, attn_bias_ref, labemb_ref, gate_ref, ratio_ref,
        # stacked transformer layer params (leading dim = layer index, bf16 weights)
        ln1g_ref, ln1b_ref, ln2g_ref, ln2b_ref,
        wqkv_ref, bqkv_ref, wo_ref, bo_ref,
        w1_ref, b1_ref, w2_ref, b2_ref,
        # fused output heads
        head_w_ref, head_b_ref,
        re_w_ref, re_b_ref, rg1_w_ref, rg1_b_ref, rg2_w_ref, rg2_b_ref,
        # outputs
        enc_ref, lablog_ref, ratio_out_ref, mu_ref, ls_ref):
    f32 = jnp.float32
    bf16 = jnp.bfloat16

    # (B*NH*S, B*NH*S) additive attention bias (block-diag + key padding),
    # hoisted once and shared by all layers.
    attn_bias = attn_bias_ref[...]

    def to_heads(t):                       # (B*S, H) -> (B*NH*S, DH), rows (b, h, s)
        parts = [t[:, h * DH:(h + 1) * DH].reshape(B, S, DH) for h in range(N_HEADS)]
        return jnp.stack(parts, axis=1).reshape(BHS, DH)

    def from_heads(t):                     # (B*NH*S, DH) -> (B*S, H)
        t4 = t.reshape(B, N_HEADS, S, DH)
        return jnp.concatenate([t4[:, h] for h in range(N_HEADS)],
                               axis=-1).reshape(B * S, H)

    def enc_layer(x, l):
        # --- pre-LN multi-head self-attention (single fused QKV matmul) ------
        xn = _ln(x, 1e-5, ln1g_ref[l], ln1b_ref[l])
        x2 = xn.reshape(B * S, H).astype(bf16)
        qkv = jnp.dot(x2, wqkv_ref[l], preferred_element_type=f32) + bqkv_ref[l]
        qf = to_heads(qkv[:, :H]).astype(bf16)          # scale already folded into W_q
        kf = to_heads(qkv[:, H:2 * H]).astype(bf16)
        vf = to_heads(qkv[:, 2 * H:]).astype(bf16)
        # flattened-head attention: two full matmuls + block-diagonal bias
        sc = jnp.einsum('qd,kd->qk', qf, kf,
                        preferred_element_type=f32) + attn_bias       # (BHS, BHS)
        sc = sc - jnp.max(sc, axis=-1, keepdims=True)
        p = jnp.exp(sc)
        p = p * pl.reciprocal(jnp.sum(p, axis=-1, keepdims=True), approx=True)
        ctx = jnp.dot(p.astype(bf16), vf, preferred_element_type=f32)  # (BHS, DH)
        attn = jnp.dot(from_heads(ctx).astype(bf16), wo_ref[l],
                       preferred_element_type=f32) + bo_ref[l]
        h1 = attn.reshape(B, S, H) + x                                 # residual 1
        # --- pre-LN position-wise feed-forward --------------------------------
        hn = _ln(h1, 1e-5, ln2g_ref[l], ln2b_ref[l])
        f = jnp.maximum(jnp.dot(hn.reshape(B * S, H).astype(bf16), w1_ref[l],
                                preferred_element_type=f32) + b1_ref[l], 0.0)
        f2 = jnp.dot(f.astype(bf16), w2_ref[l],
                     preferred_element_type=f32) + b2_ref[l]
        o = f2.reshape(B, S, H) + h1                                   # residual 2
        return jnp.maximum(o, 0.0)                                     # outer F.relu

    # ---- Fuse_Point_Embeddings LayerNorm (eps=1e-12, no affine) -------------
    x = _ln(src_ref[...], 1e-12)

    # ---- LabelWiseTransformerEncoder ----------------------------------------
    for l in range(NUM_LAYERS):
        x = enc_layer(x, l)
    # TODO(synk): LabelWiseTransformerEncoderLayer source is unavailable; approximated
    # as a standard layer whose input is conditioned on an additive label embedding.
    x = x + labemb_ref[...]
    x = enc_layer(x, NUM_LAYERS)
    enc = _ln(x, 1e-6)                                                 # final LN (no affine)
    enc_ref[...] = enc

    enc2 = enc.reshape(B * S, H).astype(bf16)

    # ---- fused output heads: label classifier + 2*K mu/std MLPs in ONE matmul
    head = jnp.dot(enc2, head_w_ref[...], preferred_element_type=f32) + head_b_ref[...]
    lablog_ref[...] = head[:, :LANE].reshape(B, S, LANE)               # lane-dense store

    musd = head[:, LANE:]                                              # (B*S, 2*K*H)
    gate = gate_ref[...]                                               # (B*S, K*H) pre-broadcast
    mu_flat = jnp.zeros((B * S, H), f32)
    ls_flat = jnp.zeros((B * S, H), f32)
    for i in range(K):                                                 # vreg-aligned lane slices
        g = gate[:, i * H:(i + 1) * H]
        mu_flat = mu_flat + musd[:, i * H:(i + 1) * H] * g
        ls_flat = ls_flat + musd[:, (K + i) * H:(K + i + 1) * H] * g
    mu_ref[...] = mu_flat.reshape(B, S, H)                             # single dense store
    ls_ref[...] = ls_flat.reshape(B, S, H)                             # single dense store

    # ---- Ratio_Regressor (Dropout layers are eval-mode no-ops) --------------
    re = jnp.dot(ratio_ref[...].astype(bf16), re_w_ref[...],
                 preferred_element_type=f32) + re_b_ref[...]           # (B, H)
    rx = enc[:, :K, :] + re.reshape(B, 1, H)                           # unsqueeze(1).repeat(1,K,1)
    rh = jnp.maximum(jnp.dot(rx.reshape(B * K, H).astype(bf16), rg1_w_ref[...],
                             preferred_element_type=f32) + rg1_b_ref[...], 0.0)
    rh = _ln(rh, 1e-5)                                                 # LayerNorm(64, no affine)
    logits = jnp.sum(rh.reshape(B, K, REG_F) * rg2_w_ref[...].reshape(1, 1, REG_F),
                     axis=-1) + rg2_b_ref[...]                         # (B, K)
    logits = logits - jnp.max(logits, axis=-1, keepdims=True)
    e = jnp.exp(logits)
    probs = e / jnp.sum(e, axis=-1, keepdims=True)                     # exact divide (tiny)
    ratio_out_ref[...] = jnp.concatenate(                              # single dense store
        [probs, jnp.zeros((B, LANE - K), f32)], axis=-1)


# ----------------------------- parameters -----------------------------------
def _linear(key, din, dout, scale=0.05):
    w = scale * jax.random.normal(key, (din, dout), jnp.float32)
    b = jnp.zeros((1, dout), jnp.float32)
    return w, b


def init_params(key):
    keys = iter(jax.random.split(key, 64))
    p = {}

    # Fuse_Point_Embeddings (synthetic; class definition not provided upstream)
    # TODO(synk): Fuse_Point_Embeddings source is unavailable; approximated as
    # [class tokens || Linear(points)] + token-type embedding + LN.
    p['point_w'], p['point_b'] = _linear(next(keys), POINT_DIM, H)
    p['cls_tokens'] = 0.05 * jax.random.normal(next(keys), (K, H), jnp.float32)
    p['type_table'] = 0.05 * jax.random.normal(next(keys), (MAX_TOKEN, H), jnp.float32)
    # label embedding used by the synthetic label-wise layer
    p['label_table'] = 0.05 * jax.random.normal(next(keys), (K, H), jnp.float32)

    def stack_linears(n, din, dout):
        ws, bs = [], []
        for _ in range(n):
            w, b = _linear(next(keys), din, dout)
            ws.append(w); bs.append(b)
        return jnp.stack(ws), jnp.stack(bs)

    # transformer layers (NUM_LAYERS regular + 1 label-wise), stacked on layer axis
    p['ln1g'] = jnp.ones((L, 1, H), jnp.float32)
    p['ln1b'] = jnp.zeros((L, 1, H), jnp.float32)
    p['ln2g'] = jnp.ones((L, 1, H), jnp.float32)
    p['ln2b'] = jnp.zeros((L, 1, H), jnp.float32)
    wq, bq = stack_linears(L, H, H)
    wk, bk = stack_linears(L, H, H)
    wv, bv = stack_linears(L, H, H)
    scale = 1.0 / (DH ** 0.5)
    # fused QKV weight, attention scale folded into the Q columns
    p['wqkv'] = jnp.concatenate([wq * scale, wk, wv], axis=-1)       # (L, H, 3H)
    p['bqkv'] = jnp.concatenate([bq * scale, bk, bv], axis=-1)       # (L, 1, 3H)
    p['wo'], p['bo'] = stack_linears(L, H, H)
    p['w1'], p['b1'] = stack_linears(L, H, FF)
    p['w2'], p['b2'] = stack_linears(L, FF, H)

    # label classifier: Linear(H, max_token - 2), zero-padded to 128 output lanes
    lc_w, lc_b = _linear(next(keys), H, K)
    lc_w = jnp.pad(lc_w, ((0, 0), (0, LANE - K)))
    lc_b = jnp.pad(lc_b, ((0, 0), (0, LANE - K)))

    # mu / std MLP stacks: 2*K Linear(H, H) fused along output lanes -> (H, 2*K*H)
    wmu, bmu = stack_linears(K, H, H)          # (K,H,H), (K,1,H)
    wst, bst = stack_linears(K, H, H)
    musd_w = jnp.concatenate(
        [jnp.transpose(wmu, (1, 0, 2)).reshape(H, K * H),
         jnp.transpose(wst, (1, 0, 2)).reshape(H, K * H)], axis=1)
    musd_b = jnp.concatenate(
        [bmu.reshape(1, K * H), bst.reshape(1, K * H)], axis=1)

    # fused output-head weight: [label classifier | mu heads | std heads]
    p['head_w'] = jnp.concatenate([lc_w, musd_w], axis=1)            # (H, 128 + 2*K*H)
    p['head_b'] = jnp.concatenate([lc_b, musd_b], axis=1)            # (1, 128 + 2*K*H)

    # ratio regressor
    p['re_w'], p['re_b'] = _linear(next(keys), K, H)
    p['rg1_w'], p['rg1_b'] = _linear(next(keys), H, REG_F)
    rg2_w, _ = _linear(next(keys), REG_F, 1)
    p['rg2_w'] = rg2_w.reshape(1, REG_F)       # row-vector form for lane reduction
    p['rg2_b'] = jnp.zeros((1, 1), jnp.float32)

    # MXU operands in bf16 (f32 accumulation in-kernel); biases / LN stay f32
    for name in ('wqkv', 'wo', 'w1', 'w2', 'head_w', 're_w', 'rg1_w'):
        p[name] = p[name].astype(jnp.bfloat16)
    return p


# ----------------------------- forward wrapper -------------------------------
@partial(jax.jit, static_argnames=("pretrain",))
def tvae_point_encoder_forward(p, input_points, token_type, label, src_mask,
                               pretrain=False, input_ratio=None):
    # ---- Fuse_Point_Embeddings (glue; gathers + point linear stay in XLA) ----
    pe = jnp.einsum('bnp,ph->bnh', input_points, p['point_w']) + p['point_b']
    class_embeds = jnp.broadcast_to(p['cls_tokens'][None], (B, K, H))
    tt = jnp.take(p['type_table'], token_type, axis=0)               # (B, S, H)
    src = jnp.concatenate([class_embeds, pe], axis=1) + tt

    labemb = jnp.take(p['label_table'], label, axis=0)               # (B, S, H)

    # block-diagonal attention bias over flattened heads, row/col order (b, h, s):
    # same-(b,h) block -> key-padding bias; off-block -> -1e9.  Built once here.
    key_bias = (1.0 - src_mask[:, 0, :]) * jnp.float32(-1e9)         # (B, S)
    r = jnp.arange(BHS)
    rb = r // (N_HEADS * S)
    rhd = (r // S) % N_HEADS
    rs = r % S
    same = (rb[:, None] == rb[None, :]) & (rhd[:, None] == rhd[None, :])
    col_bias = key_bias[rb, rs]                                      # (BHS,)
    attn_bias = jnp.where(same, col_bias[None, :],
                          jnp.float32(-1e9)).astype(jnp.float32)     # (BHS, BHS)

    # pre-broadcast mu/std label gate: (B*S, K*H), vreg-aligned lane blocks,
    # zero on the first K (non-point) positions.
    tail_mask = (jnp.arange(S) >= K).astype(jnp.float32)             # (S,)
    oh = jax.nn.one_hot(label, K, dtype=jnp.float32) * tail_mask[None, :, None]
    gate = jnp.repeat(oh.reshape(B * S, K), H, axis=1)               # (B*S, K*H)

    ratio_in = input_ratio if pretrain else jnp.zeros_like(input_ratio)

    args = (src, attn_bias, labemb, gate, ratio_in,
            p['ln1g'], p['ln1b'], p['ln2g'], p['ln2b'],
            p['wqkv'], p['bqkv'], p['wo'], p['bo'],
            p['w1'], p['b1'], p['w2'], p['b2'],
            p['head_w'], p['head_b'],
            p['re_w'], p['re_b'], p['rg1_w'], p['rg1_b'], p['rg2_w'], p['rg2_b'])

    out_shapes = (
        jax.ShapeDtypeStruct((B, S, H), jnp.float32),     # encoder_output
        jax.ShapeDtypeStruct((B, S, LANE), jnp.float32),  # label logits (lane-padded)
        jax.ShapeDtypeStruct((B, LANE), jnp.float32),     # ratio probs  (lane-padded)
        jax.ShapeDtypeStruct((B, S, H), jnp.float32),     # mu
        jax.ShapeDtypeStruct((B, S, H), jnp.float32),     # log_std
    )
    enc, lablog_p, ratio_p, mu, log_std = pl.pallas_call(
        _fused_encoder_kernel,
        out_shape=out_shapes,
        in_specs=[_VMEM] * len(args),
        out_specs=tuple([_VMEM] * len(out_shapes)),
    )(*args)

    label_logits = lablog_p[:, :, :K]
    ratio_logits = ratio_p[:, :K]
    if pretrain:
        return enc, label_logits, ratio_logits, None, None
    else:
        return enc, None, ratio_logits, mu, log_std


# ----------------------------- main ------------------------------------------
if __name__ == "__main__":
    key = jax.random.PRNGKey(0)
    k_pts, k_tt, k_lab, k_ratio = jax.random.split(key, 4)

    input_points = jax.random.normal(k_pts, (B, N_POINTS, POINT_DIM), jnp.float32)
    token_type = jax.random.randint(k_tt, (B, S), 0, MAX_TOKEN)
    label = jax.random.randint(k_lab, (B, S), 0, K)
    src_mask = jnp.ones((B, 1, S), jnp.float32).at[1, 0, S - 1].set(0.0)
    input_ratio = jax.random.uniform(k_ratio, (B, K), jnp.float32)

    params = init_params(jax.random.PRNGKey(1))

    enc, label_logits, ratio_logits, mu, log_std = tvae_point_encoder_forward(
        params, input_points, token_type, label, src_mask,
        pretrain=False, input_ratio=input_ratio)

    jax.block_until_ready((enc, ratio_logits, mu, log_std))
    assert enc.shape == (B, S, H)
    assert ratio_logits.shape == (B, K)
    assert mu.shape == (B, S, H) and log_std.shape == (B, S, H)
    assert bool(jnp.all(jnp.isfinite(enc)))
    assert bool(jnp.all(jnp.isfinite(ratio_logits)))
    assert bool(jnp.all(jnp.isfinite(mu))) and bool(jnp.all(jnp.isfinite(log_std)))
    # mu/log_std must be exactly zero on the class-token positions (as in PyTorch)
    assert bool(jnp.all(mu[:, :K, :] == 0.0)) and bool(jnp.all(log_std[:, :K, :] == 0.0))
    print("KERNEL_OK")
</pallas_src>

<mosaic_0001>
module attributes {stable_mosaic.version = 11 : i64} {
  func.func @_fused_encoder_kernel(%arg0: memref<2x8x128xf32, #tpu.memory_space<vmem>>, %arg1: memref<64x64xf32, #tpu.memory_space<vmem>>, %arg2: memref<2x8x128xf32, #tpu.memory_space<vmem>>, %arg3: memref<16x512xf32, #tpu.memory_space<vmem>>, %arg4: memref<2x4xf32, #tpu.memory_space<vmem>>, %arg5: memref<3x1x128xf32, #tpu.memory_space<vmem>>, %arg6: memref<3x1x128xf32, #tpu.memory_space<vmem>>, %arg7: memref<3x1x128xf32, #tpu.memory_space<vmem>>, %arg8: memref<3x1x128xf32, #tpu.memory_space<vmem>>, %arg9: memref<3x128x384xbf16, #tpu.memory_space<vmem>>, %arg10: memref<3x1x384xf32, #tpu.memory_space<vmem>>, %arg11: memref<3x128x128xbf16, #tpu.memory_space<vmem>>, %arg12: memref<3x1x128xf32, #tpu.memory_space<vmem>>, %arg13: memref<3x128x512xbf16, #tpu.memory_space<vmem>>, %arg14: memref<3x1x512xf32, #tpu.memory_space<vmem>>, %arg15: memref<3x512x128xbf16, #tpu.memory_space<vmem>>, %arg16: memref<3x1x128xf32, #tpu.memory_space<vmem>>, %arg17: memref<128x1152xbf16, #tpu.memory_space<vmem>>, %arg18: memref<1x1152xf32, #tpu.memory_space<vmem>>, %arg19: memref<4x128xbf16, #tpu.memory_space<vmem>>, %arg20: memref<1x128xf32, #tpu.memory_space<vmem>>, %arg21: memref<128x64xbf16, #tpu.memory_space<vmem>>, %arg22: memref<1x64xf32, #tpu.memory_space<vmem>>, %arg23: memref<1x64xf32, #tpu.memory_space<vmem>>, %arg24: memref<1x1xf32, #tpu.memory_space<vmem>>, %arg25: memref<2x8x128xf32, #tpu.memory_space<vmem>>, %arg26: memref<2x8x128xf32, #tpu.memory_space<vmem>>, %arg27: memref<2x128xf32, #tpu.memory_space<vmem>>, %arg28: memref<2x8x128xf32, #tpu.memory_space<vmem>>, %arg29: memref<2x8x128xf32, #tpu.memory_space<vmem>>) attributes {dimension_semantics = [], scalar_prefetch = 0 : i64, scratch_operands = 0 : i64, tpu.core_type = #tpu.core_type<tc>} {
    %c0 = arith.constant 0 : index
    %c0_0 = arith.constant 0 : index
    %0 = vector.load %arg1[%c0, %c0_0] : memref<64x64xf32, #tpu.memory_space<vmem>>, vector<64x64xf32>
    %c0_1 = arith.constant 0 : index
    %c0_2 = arith.constant 0 : index
    %c0_3 = arith.constant 0 : index
    %1 = vector.load %arg0[%c0_1, %c0_2, %c0_3] : memref<2x8x128xf32, #tpu.memory_space<vmem>>, vector<2x8x128xf32>
    %cst = arith.constant dense<0.000000e+00> : vector<2x8xf32>
    %2 = vector.multi_reduction <add>, %1, %cst [2] : vector<2x8x128xf32> to vector<2x8xf32>
    %3 = vector.shape_cast %2 : vector<2x8xf32> to vector<2x8x1xf32>
    %cst_4 = arith.constant 1.280000e+02 : f32
    %4 = vector.broadcast %cst_4 : f32 to vector<2x8x1xf32>
    %5 = arith.divf %3, %4 : vector<2x8x1xf32>
    %6 = vector.broadcast %5 : vector<2x8x1xf32> to vector<2x8x128xf32>
    %7 = arith.subf %1, %6 : vector<2x8x128xf32>
    %8 = arith.mulf %7, %7 : vector<2x8x128xf32>
    %cst_5 = arith.constant dense<0.000000e+00> : vector<2x8xf32>
    %9 = vector.multi_reduction <add>, %8, %cst_5 [2] : vector<2x8x128xf32> to vector<2x8xf32>
    %10 = vector.shape_cast %9 : vector<2x8xf32> to vector<2x8x1xf32>
    %cst_6 = arith.constant 1.280000e+02 : f32
    %11 = vector.broadcast %cst_6 : f32 to vector<2x8x1xf32>
    %12 = arith.divf %10, %11 : vector<2x8x1xf32>
    %cst_7 = arith.constant 9.99999996E-13 : f32
    %13 = vector.broadcast %cst_7 : f32 to vector<2x8x1xf32>
    %14 = arith.addf %12, %13 : vector<2x8x1xf32>
    %15 = math.rsqrt %14 : vector<2x8x1xf32>
    %16 = vector.broadcast %15 : vector<2x8x1xf32> to vector<2x8x128xf32>
    %17 = arith.mulf %7, %16 : vector<2x8x128xf32>
    %c0_8 = arith.constant 0 : index
    %c0_9 = arith.constant 0 : index
    %c0_10 = arith.constant 0 : index
    %18 = vector.load %arg5[%c0_8, %c0_9, %c0_10] : memref<3x1x128xf32, #tpu.memory_space<vmem>>, vector<1x1x128xf32>
    %19 = vector.shape_cast %18 : vector<1x1x128xf32> to vector<1x128xf32>
    %c0_11 = arith.constant 0 : index
    %c0_12 = arith.constant 0 : index
    %c0_13 = arith.constant 0 : index
    %20 = vector.load %arg6[%c0_11, %c0_12, %c0_13] : memref<3x1x128xf32, #tpu.memory_space<vmem>>, vector<1x1x128xf32>
    %21 = vector.shape_cast %20 : vector<1x1x128xf32> to vector<1x128xf32>
    %cst_14 = arith.constant dense<0.000000e+00> : vector<2x8xf32>
    %22 = vector.multi_reduction <add>, %17, %cst_14 [2] : vector<2x8x128xf32> to vector<2x8xf32>
    %23 = vector.shape_cast %22 : vector<2x8xf32> to vector<2x8x1xf32>
    %cst_15 = arith.constant 1.280000e+02 : f32
    %24 = vector.broadcast %cst_15 : f32 to vector<2x8x1xf32>
    %25 = arith.divf %23, %24 : vector<2x8x1xf32>
    %26 = vector.broadcast %25 : vector<2x8x1xf32> to vector<2x8x128xf32>
    %27 = arith.subf %17, %26 : vector<2x8x128xf32>
    %28 = arith.mulf %27, %27 : vector<2x8x128xf32>
    %cst_16 = arith.constant dense<0.000000e+00> : vector<2x8xf32>
    %29 = vector.multi_reduction <add>, %28, %cst_16 [2] : vector<2x8x128xf32> to vector<2x8xf32>
    %30 = vector.shape_cast %29 : vector<2x8xf32> to vector<2x8x1xf32>
    %cst_17 = arith.constant 1.280000e+02 : f32
    %31 = vector.broadcast %cst_17 : f32 to vector<2x8x1xf32>
    %32 = arith.divf %30, %31 : vector<2x8x1xf32>
    %cst_18 = arith.constant 9.99999974E-6 : f32
    %33 = vector.broadcast %cst_18 : f32 to vector<2x8x1xf32>
    %34 = arith.addf %32, %33 : vector<2x8x1xf32>
    %35 = math.rsqrt %34 : vector<2x8x1xf32>
    %36 = vector.broadcast %35 : vector<2x8x1xf32> to vector<2x8x128xf32>
    %37 = arith.mulf %27, %36 : vector<2x8x128xf32>
    %38 = vector.shape_cast %19 : vector<1x128xf32> to vector<1x1x128xf32>
    %39 = vector.broadcast %38 : vector<1x1x128xf32> to vector<2x8x128xf32>
    %40 = arith.mulf %37, %39 : vector<2x8x128xf32>
    %41 = vector.shape_cast %21 : vector<1x128xf32> to vector<1x1x128xf32>
    %42 = vector.broadcast %41 : vector<1x1x128xf32> to vector<2x8x128xf32>
    %43 = arith.addf %40, %42 : vector<2x8x128xf32>
    %44 = vector.shape_cast %43 : vector<2x8x128xf32> to vector<16x128xf32>
    %45 = arith.truncf %44 : vector<16x128xf32> to vector<16x128xbf16>
    %c0_19 = arith.constant 0 : index
    %c0_20 = arith.constant 0 : index
    %c0_21 = arith.constant 0 : index
    %46 = vector.load %arg9[%c0_19, %c0_20, %c0_21] : memref<3x128x384xbf16, #tpu.memory_space<vmem>>, vector<1x128x384xbf16>
    %47 = vector.shape_cast %46 : vector<1x128x384xbf16> to vector<128x384xbf16>
    %cst_22 = arith.constant dense<0.000000e+00> : vector<16x384xf32>
    %48 = tpu.matmul %45, %47, %cst_22 {dimension_numbers = #tpu.dot_dimension_numbers<[1], [0], [0], [1], [0, 0, 1, 1], [], []>} : vector<16x128xbf16>, vector<128x384xbf16>, vector<16x384xf32> -> vector<16x384xf32>
    %c0_23 = arith.constant 0 : index
    %c0_24 = arith.constant 0 : index
    %c0_25 = arith.constant 0 : index
    %49 = vector.load %arg10[%c0_23, %c0_24, %c0_25] : memref<3x1x384xf32, #tpu.memory_space<vmem>>, vector<1x1x384xf32>
    %50 = vector.shape_cast %49 : vector<1x1x384xf32> to vector<1x384xf32>
    %51 = vector.broadcast %50 : vector<1x384xf32> to vector<16x384xf32>
    %52 = arith.addf %48, %51 : vector<16x384xf32>
    %53 = vector.extract_strided_slice %52 {offsets = [0, 0], sizes = [16, 128], strides = [1, 1]} : vector<16x384xf32> to vector<16x128xf32>
    %54 = vector.extract_strided_slice %53 {offsets = [0, 0], sizes = [16, 32], strides = [1, 1]} : vector<16x128xf32> to vector<16x32xf32>
    %55 = vector.shape_cast %54 : vector<16x32xf32> to vector<2x8x32xf32>
    %56 = vector.extract_strided_slice %53 {offsets = [0, 32], sizes = [16, 32], strides = [1, 1]} : vector<16x128xf32> to vector<16x32xf32>
    %57 = vector.shape_cast %56 : vector<16x32xf32> to vector<2x8x32xf32>
    %58 = vector.extract_strided_slice %53 {offsets = [0, 64], sizes = [16, 32], strides = [1, 1]} : vector<16x128xf32> to vector<16x32xf32>
    %59 = vector.shape_cast %58 : vector<16x32xf32> to vector<2x8x32xf32>
    %60 = vector.extract_strided_slice %53 {offsets = [0, 96], sizes = [16, 32], strides = [1, 1]} : vector<16x128xf32> to vector<16x32xf32>
    %61 = vector.shape_cast %60 : vector<16x32xf32> to vector<2x8x32xf32>
    %62 = vector.shape_cast %55 : vector<2x8x32xf32> to vector<2x1x8x32xf32>
    %63 = vector.shape_cast %57 : vector<2x8x32xf32> to vector<2x1x8x32xf32>
    %64 = vector.shape_cast %59 : vector<2x8x32xf32> to vector<2x1x8x32xf32>
    %65 = vector.shape_cast %61 : vector<2x8x32xf32> to vector<2x1x8x32xf32>
    %66 = tpu.concatenate %62, %63, %64, %65 in 1 : vector<2x1x8x32xf32>, vector<2x1x8x32xf32>, vector<2x1x8x32xf32>, vector<2x1x8x32xf32> -> vector<2x4x8x32xf32>
    %67 = vector.shape_cast %66 : vector<2x4x8x32xf32> to vector<64x32xf32>
    %68 = arith.truncf %67 : vector<64x32xf32> to vector<64x32xbf16>
    %69 = vector.extract_strided_slice %52 {offsets = [0, 128], sizes = [16, 128], strides = [1, 1]} : vector<16x384xf32> to vector<16x128xf32>
    %70 = vector.extract_strided_slice %69 {offsets = [0, 0], sizes = [16, 32], strides = [1, 1]} : vector<16x128xf32> to vector<16x32xf32>
    %71 = vector.shape_cast %70 : vector<16x32xf32> to vector<2x8x32xf32>
    %72 = vector.extract_strided_slice %69 {offsets = [0, 32], sizes = [16, 32], strides = [1, 1]} : vector<16x128xf32> to vector<16x32xf32>
    %73 = vector.shape_cast %72 : vector<16x32xf32> to vector<2x8x32xf32>
    %74 = vector.extract_strided_slice %69 {offsets = [0, 64], sizes = [16, 32], strides = [1, 1]} : vector<16x128xf32> to vector<16x32xf32>
    %75 = vector.shape_cast %74 : vector<16x32xf32> to vector<2x8x32xf32>
    %76 = vector.extract_strided_slice %69 {offsets = [0, 96], sizes = [16, 32], strides = [1, 1]} : vector<16x128xf32> to vector<16x32xf32>
    %77 = vector.shape_cast %76 : vector<16x32xf32> to vector<2x8x32xf32>
    %78 = vector.shape_cast %71 : vector<2x8x32xf32> to vector<2x1x8x32xf32>
    %79 = vector.shape_cast %73 : vector<2x8x32xf32> to vector<2x1x8x32xf32>
    %80 = vector.shape_cast %75 : vector<2x8x32xf32> to vector<2x1x8x32xf32>
    %81 = vector.shape_cast %77 : vector<2x8x32xf32> to vector<2x1x8x32xf32>
    %82 = tpu.concatenate %78, %79, %80, %81 in 1 : vector<2x1x8x32xf32>, vector<2x1x8x32xf32>, vector<2x1x8x32xf32>, vector<2x1x8x32xf32> -> vector<2x4x8x32xf32>
    %83 = vector.shape_cast %82 : vector<2x4x8x32xf32> to vector<64x32xf32>
    %84 = arith.truncf %83 : vector<64x32xf32> to vector<64x32xbf16>
    %85 = vector.extract_strided_slice %52 {offsets = [0, 256], sizes = [16, 128], strides = [1, 1]} : vector<16x384xf32> to vector<16x128xf32>
    %86 = vector.extract_strided_slice %85 {offsets = [0, 0], sizes = [16, 32], strides = [1, 1]} : vector<16x128xf32> to vector<16x32xf32>
    %87 = vector.shape_cast %86 : vector<16x32xf32> to vector<2x8x32xf32>
    %88 = vector.extract_strided_slice %85 {offsets = [0, 32], sizes = [16, 32], strides = [1, 1]} : vector<16x128xf32> to vector<16x32xf32>
    %89 = vector.shape_cast %88 : vector<16x32xf32> to vector<2x8x32xf32>
    %90 = vector.extract_strided_slice %85 {offsets = [0, 64], sizes = [16, 32], strides = [1, 1]} : vector<16x128xf32> to vector<16x32xf32>
    %91 = vector.shape_cast %90 : vector<16x32xf32> to vector<2x8x32xf32>
    %92 = vector.extract_strided_slice %85 {offsets = [0, 96], sizes = [16, 32], strides = [1, 1]} : vector<16x128xf32> to vector<16x32xf32>
    %93 = vector.shape_cast %92 : vector<16x32xf32> to vector<2x8x32xf32>
    %94 = vector.shape_cast %87 : vector<2x8x32xf32> to vector<2x1x8x32xf32>
    %95 = vector.shape_cast %89 : vector<2x8x32xf32> to vector<2x1x8x32xf32>
    %96 = vector.shape_cast %91 : vector<2x8x32xf32> to vector<2x1x8x32xf32>
    %97 = vector.shape_cast %93 : vector<2x8x32xf32> to vector<2x1x8x32xf32>
    %98 = tpu.concatenate %94, %95, %96, %97 in 1 : vector<2x1x8x32xf32>, vector<2x1x8x32xf32>, vector<2x1x8x32xf32>, vector<2x1x8x32xf32> -> vector<2x4x8x32xf32>
    %99 = vector.shape_cast %98 : vector<2x4x8x32xf32> to vector<64x32xf32>
    %100 = arith.truncf %99 : vector<64x32xf32> to vector<64x32xbf16>
    "tpu.trace_start"() <{level = 10 : i32, message = "qd,kd->qk"}> : () -> ()
    %cst_26 = arith.constant dense<0.000000e+00> : vector<64x64xf32>
    %101 = tpu.matmul %68, %84, %cst_26 {dimension_numbers = #tpu.dot_dimension_numbers<[1], [1], [0], [0], [0, 0, 1, 0], [], []>} : vector<64x32xbf16>, vector<64x32xbf16>, vector<64x64xf32> -> vector<64x64xf32>
    "tpu.trace_stop"() : () -> ()
    %102 = arith.addf %101, %0 : vector<64x64xf32>
    %cst_27 = arith.constant dense<0xFF800000> : vector<64xf32>
    %103 = vector.multi_reduction <maximumf>, %102, %cst_27 [1] : vector<64x64xf32> to vector<64xf32>
    %104 = vector.shape_cast %103 : vector<64xf32> to vector<64x1xf32>
    %105 = vector.broadcast %104 : vector<64x1xf32> to vector<64x64xf32>
    %106 = arith.subf %102, %105 : vector<64x64xf32>
    %107 = math.exp %106 : vector<64x64xf32>
    %cst_28 = arith.constant dense<0.000000e+00> : vector<64xf32>
    %108 = vector.multi_reduction <add>, %107, %cst_28 [1] : vector<64x64xf32> to vector<64xf32>
    %109 = vector.shape_cast %108 : vector<64xf32> to vector<64x1xf32>
    %110 = tpu.reciprocal %109 {approx = true} : vector<64x1xf32> -> vector<64x1xf32>
    %111 = vector.broadcast %110 : vector<64x1xf32> to vector<64x64xf32>
    %112 = arith.mulf %107, %111 : vector<64x64xf32>
    %113 = arith.truncf %112 : vector<64x64xf32> to vector<64x64xbf16>
    %cst_29 = arith.constant dense<0.000000e+00> : vector<64x32xf32>
    %114 = tpu.matmul %113, %100, %cst_29 {dimension_numbers = #tpu.dot_dimension_numbers<[1], [0], [0], [1], [0, 0, 1, 1], [], []>} : vector<64x64xbf16>, vector<64x32xbf16>, vector<64x32xf32> -> vector<64x32xf32>
    %115 = vector.shape_cast %114 : vector<64x32xf32> to vector<2x4x8x32xf32>
    %116 = vector.extract_strided_slice %115 {offsets = [0, 0, 0, 0], sizes = [2, 1, 8, 32], strides = [1, 1, 1, 1]} : vector<2x4x8x32xf32> to vector<2x1x8x32xf32>
    %117 = vector.shape_cast %116 : vector<2x1x8x32xf32> to vector<2x8x32xf32>
    %118 = vector.extract_strided_slice %115 {offsets = [0, 1, 0, 0], sizes = [2, 1, 8, 32], strides = [1, 1, 1, 1]} : vector<2x4x8x32xf32> to vector<2x1x8x32xf32>
    %119 = vector.shape_cast %118 : vector<2x1x8x32xf32> to vector<2x8x32xf32>
    %120 = vector.extract_strided_slice %115 {offsets = [0, 2, 0, 0], sizes = [2, 1, 8, 32], strides = [1, 1, 1, 1]} : vector<2x4x8x32xf32> to vector<2x1x8x32xf32>
    %121 = vector.shape_cast %120 : vector<2x1x8x32xf32> to vector<2x8x32xf32>
    %122 = vector.extract_strided_slice %115 {offsets = [0, 3, 0, 0], sizes = [2, 1, 8, 32], strides = [1, 1, 1, 1]} : vector<2x4x8x32xf32> to vector<2x1x8x32xf32>
    %123 = vector.shape_cast %122 : vector<2x1x8x32xf32> to vector<2x8x32xf32>
    %124 = tpu.concatenate %117, %119, %121, %123 in 2 : vector<2x8x32xf32>, vector<2x8x32xf32>, vector<2x8x32xf32>, vector<2x8x32xf32> -> vector<2x8x128xf32>
    %125 = vector.shape_cast %124 : vector<2x8x128xf32> to vector<16x128xf32>
    %126 = arith.truncf %125 : vector<16x128xf32> to vector<16x128xbf16>
    %c0_30 = arith.constant 0 : index
    %c0_31 = arith.constant 0 : index
    %c0_32 = arith.constant 0 : index
    %127 = vector.load %arg11[%c0_30, %c0_31, %c0_32] : memref<3x128x128xbf16, #tpu.memory_space<vmem>>, vector<1x128x128xbf16>
    %128 = vector.shape_cast %127 : vector<1x128x128xbf16> to vector<128x128xbf16>
    %cst_33 = arith.constant dense<0.000000e+00> : vector<16x128xf32>
    %129 = tpu.matmul %126, %128, %cst_33 {dimension_numbers = #tpu.dot_dimension_numbers<[1], [0], [0], [1], [0, 0, 1, 1], [], []>} : vector<16x128xbf16>, vector<128x128xbf16>, vector<16x128xf32> -> vector<16x128xf32>
    %c0_34 = arith.constant 0 : index
    %c0_35 = arith.constant 0 : index
    %c0_36 = arith.constant 0 : index
    %130 = vector.load %arg12[%c0_34, %c0_35, %c0_36] : memref<3x1x128xf32, #tpu.memory_space<vmem>>, vector<1x1x128xf32>
    %131 = vector.shape_cast %130 : vector<1x1x128xf32> to vector<1x128xf32>
    %132 = vector.broadcast %131 : vector<1x128xf32> to vector<16x128xf32>
    %133 = arith.addf %129, %132 : vector<16x128xf32>
    %134 = vector.shape_cast %133 : vector<16x128xf32> to vector<2x8x128xf32>
    %135 = arith.addf %134, %17 : vector<2x8x128xf32>
    %c0_37 = arith.constant 0 : index
    %c0_38 = arith.constant 0 : index
    %c0_39 = arith.constant 0 : index
    %136 = vector.load %arg7[%c0_37, %c0_38, %c0_39] : memref<3x1x128xf32, #tpu.memory_space<vmem>>, vector<1x1x128xf32>
    %137 = vector.shape_cast %136 : vector<1x1x128xf32> to vector<1x128xf32>
    %c0_40 = arith.constant 0 : index
    %c0_41 = arith.constant 0 : index
    %c0_42 = arith.constant 0 : index
    %138 = vector.load %arg8[%c0_40, %c0_41, %c0_42] : memref<3x1x128xf32, #tpu.memory_space<vmem>>, vector<1x1x128xf32>
    %139 = vector.shape_cast %138 : vector<1x1x128xf32> to vector<1x128xf32>
    %cst_43 = arith.constant dense<0.000000e+00> : vector<2x8xf32>
    %140 = vector.multi_reduction <add>, %135, %cst_43 [2] : vector<2x8x128xf32> to vector<2x8xf32>
    %141 = vector.shape_cast %140 : vector<2x8xf32> to vector<2x8x1xf32>
    %cst_44 = arith.constant 1.280000e+02 : f32
    %142 = vector.broadcast %cst_44 : f32 to vector<2x8x1xf32>
    %143 = arith.divf %141, %142 : vector<2x8x1xf32>
    %144 = vector.broadcast %143 : vector<2x8x1xf32> to vector<2x8x128xf32>
    %145 = arith.subf %135, %144 : vector<2x8x128xf32>
    %146 = arith.mulf %145, %145 : vector<2x8x128xf32>
    %cst_45 = arith.constant dense<0.000000e+00> : vector<2x8xf32>
    %147 = vector.multi_reduction <add>, %146, %cst_45 [2] : vector<2x8x128xf32> to vector<2x8xf32>
    %148 = vector.shape_cast %147 : vector<2x8xf32> to vector<2x8x1xf32>
    %cst_46 = arith.constant 1.280000e+02 : f32
    %149 = vector.broadcast %cst_46 : f32 to vector<2x8x1xf32>
    %150 = arith.divf %148, %149 : vector<2x8x1xf32>
    %cst_47 = arith.constant 9.99999974E-6 : f32
    %151 = vector.broadcast %cst_47 : f32 to vector<2x8x1xf32>
    %152 = arith.addf %150, %151 : vector<2x8x1xf32>
    %153 = math.rsqrt %152 : vector<2x8x1xf32>
    %154 = vector.broadcast %153 : vector<2x8x1xf32> to vector<2x8x128xf32>
    %155 = arith.mulf %145, %154 : vector<2x8x128xf32>
    %156 = vector.shape_cast %137 : vector<1x128xf32> to vector<1x1x128xf32>
    %157 = vector.broadcast %156 : vector<1x1x128xf32> to vector<2x8x128xf32>
    %158 = arith.mulf %155, %157 : vector<2x8x128xf32>
    %159 = vector.shape_cast %139 : vector<1x128xf32> to vector<1x1x128xf32>
    %160 = vector.broadcast %159 : vector<1x1x128xf32> to vector<2x8x128xf32>
    %161 = arith.addf %158, %160 : vector<2x8x128xf32>
    %162 = vector.shape_cast %161 : vector<2x8x128xf32> to vector<16x128xf32>
    %163 = arith.truncf %162 : vector<16x128xf32> to vector<16x128xbf16>
    %c0_48 = arith.constant 0 : index
    %c0_49 = arith.constant 0 : index
    %c0_50 = arith.constant 0 : index
    %164 = vector.load %arg13[%c0_48, %c0_49, %c0_50] : memref<3x128x512xbf16, #tpu.memory_space<vmem>>, vector<1x128x512xbf16>
    %165 = vector.shape_cast %164 : vector<1x128x512xbf16> to vector<128x512xbf16>
    %cst_51 = arith.constant dense<0.000000e+00> : vector<16x512xf32>
    %166 = tpu.matmul %163, %165, %cst_51 {dimension_numbers = #tpu.dot_dimension_numbers<[1], [0], [0], [1], [0, 0, 1, 1], [], []>} : vector<16x128xbf16>, vector<128x512xbf16>, vector<16x512xf32> -> vector<16x512xf32>
    %c0_52 = arith.constant 0 : index
    %c0_53 = arith.constant 0 : index
    %c0_54 = arith.constant 0 : index
    %167 = vector.load %arg14[%c0_52, %c0_53, %c0_54] : memref<3x1x512xf32, #tpu.memory_space<vmem>>, vector<1x1x512xf32>
    %168 = vector.shape_cast %167 : vector<1x1x512xf32> to vector<1x512xf32>
    %169 = vector.broadcast %168 : vector<1x512xf32> to vector<16x512xf32>
    %170 = arith.addf %166, %169 : vector<16x512xf32>
    %cst_55 = arith.constant 0.000000e+00 : f32
    %171 = vector.broadcast %cst_55 : f32 to vector<16x512xf32>
    %172 = arith.maximumf %170, %171 : vector<16x512xf32>
    %173 = arith.truncf %172 : vector<16x512xf32> to vector<16x512xbf16>
    %c0_56 = arith.constant 0 : index
    %c0_57 = arith.constant 0 : index
    %c0_58 = arith.constant 0 : index
    %174 = vector.load %arg15[%c0_56, %c0_57, %c0_58] : memref<3x512x128xbf16, #tpu.memory_space<vmem>>, vector<1x512x128xbf16>
    %175 = vector.shape_cast %174 : vector<1x512x128xbf16> to vector<512x128xbf16>
    %cst_59 = arith.constant dense<0.000000e+00> : vector<16x128xf32>
    %176 = tpu.matmul %173, %175, %cst_59 {dimension_numbers = #tpu.dot_dimension_numbers<[1], [0], [0], [1], [0, 0, 1, 1], [], []>} : vector<16x512xbf16>, vector<512x128xbf16>, vector<16x128xf32> -> vector<16x128xf32>
    %c0_60 = arith.constant 0 : index
    %c0_61 = arith.constant 0 : index
    %c0_62 = arith.constant 0 : index
    %177 = vector.load %arg16[%c0_60, %c0_61, %c0_62] : memref<3x1x128xf32, #tpu.memory_space<vmem>>, vector<1x1x128xf32>
    %178 = vector.shape_cast %177 : vector<1x1x128xf32> to vector<1x128xf32>
    %179 = vector.broadcast %178 : vector<1x128xf32> to vector<16x128xf32>
    %180 = arith.addf %176, %179 : vector<16x128xf32>
    %181 = vector.shape_cast %180 : vector<16x128xf32> to vector<2x8x128xf32>
    %182 = arith.addf %181, %135 : vector<2x8x128xf32>
    %cst_63 = arith.constant 0.000000e+00 : f32
    %183 = vector.broadcast %cst_63 : f32 to vector<2x8x128xf32>
    %184 = arith.maximumf %182, %183 : vector<2x8x128xf32>
    %c1 = arith.constant 1 : index
    %c0_64 = arith.constant 0 : index
    %c0_65 = arith.constant 0 : index
    %185 = vector.load %arg5[%c1, %c0_64, %c0_65] : memref<3x1x128xf32, #tpu.memory_space<vmem>>, vector<1x1x128xf32>
    %186 = vector.shape_cast %185 : vector<1x1x128xf32> to vector<1x128xf32>
    %c1_66 = arith.constant 1 : index
    %c0_67 = arith.constant 0 : index
    %c0_68 = arith.constant 0 : index
    %187 = vector.load %arg6[%c1_66, %c0_67, %c0_68] : memref<3x1x128xf32, #tpu.memory_space<vmem>>, vector<1x1x128xf32>
    %188 = vector.shape_cast %187 : vector<1x1x128xf32> to vector<1x128xf32>
    %cst_69 = arith.constant dense<0.000000e+00> : vector<2x8xf32>
    %189 = vector.multi_reduction <add>, %184, %cst_69 [2] : vector<2x8x128xf32> to vector<2x8xf32>
    %190 = vector.shape_cast %189 : vector<2x8xf32> to vector<2x8x1xf32>
    %cst_70 = arith.constant 1.280000e+02 : f32
    %191 = vector.broadcast %cst_70 : f32 to vector<2x8x1xf32>
    %192 = arith.divf %190, %191 : vector<2x8x1xf32>
    %193 = vector.broadcast %192 : vector<2x8x1xf32> to vector<2x8x128xf32>
    %194 = arith.subf %184, %193 : vector<2x8x128xf32>
    %195 = arith.mulf %194, %194 : vector<2x8x128xf32>
    %cst_71 = arith.constant dense<0.000000e+00> : vector<2x8xf32>
    %196 = vector.multi_reduction <add>, %195, %cst_71 [2] : vector<2x8x128xf32> to vector<2x8xf32>
    %197 = vector.shape_cast %196 : vector<2x8xf32> to vector<2x8x1xf32>
    %cst_72 = arith.constant 1.280000e+02 : f32
    %198 = vector.broadcast %cst_72 : f32 to vector<2x8x1xf32>
    %199 = arith.divf %197, %198 : vector<2x8x1xf32>
    %cst_73 = arith.constant 9.99999974E-6 : f32
    %200 = vector.broadcast %cst_73 : f32 to vector<2x8x1xf32>
    %201 = arith.addf %199, %200 : vector<2x8x1xf32>
    %202 = math.rsqrt %201 : vector<2x8x1xf32>
    %203 = vector.broadcast %202 : vector<2x8x1xf32> to vector<2x8x128xf32>
    %204 = arith.mulf %194, %203 : vector<2x8x128xf32>
    %205 = vector.shape_cast %186 : vector<1x128xf32> to vector<1x1x128xf32>
    %206 = vector.broadcast %205 : vector<1x1x128xf32> to vector<2x8x128xf32>
    %207 = arith.mulf %204, %206 : vector<2x8x128xf32>
    %208 = vector.shape_cast %188 : vector<1x128xf32> to vector<1x1x128xf32>
    %209 = vector.broadcast %208 : vector<1x1x128xf32> to vector<2x8x128xf32>
    %210 = arith.addf %207, %209 : vector<2x8x128xf32>
    %211 = vector.shape_cast %210 : vector<2x8x128xf32> to vector<16x128xf32>
    %212 = arith.truncf %211 : vector<16x128xf32> to vector<16x128xbf16>
    %c1_74 = arith.constant 1 : index
    %c0_75 = arith.constant 0 : index
    %c0_76 = arith.constant 0 : index
    %213 = vector.load %arg9[%c1_74, %c0_75, %c0_76] : memref<3x128x384xbf16, #tpu.memory_space<vmem>>, vector<1x128x384xbf16>
    %214 = vector.shape_cast %213 : vector<1x128x384xbf16> to vector<128x384xbf16>
    %cst_77 = arith.constant dense<0.000000e+00> : vector<16x384xf32>
    %215 = tpu.matmul %212, %214, %cst_77 {dimension_numbers = #tpu.dot_dimension_numbers<[1], [0], [0], [1], [0, 0, 1, 1], [], []>} : vector<16x128xbf16>, vector<128x384xbf16>, vector<16x384xf32> -> vector<16x384xf32>
    %c1_78 = arith.constant 1 : index
    %c0_79 = arith.constant 0 : index
    %c0_80 = arith.constant 0 : index
    %216 = vector.load %arg10[%c1_78, %c0_79, %c0_80] : memref<3x1x384xf32, #tpu.memory_space<vmem>>, vector<1x1x384xf32>
    %217 = vector.shape_cast %216 : vector<1x1x384xf32> to vector<1x384xf32>
    %218 = vector.broadcast %217 : vector<1x384xf32> to vector<16x384xf32>
    %219 = arith.addf %215, %218 : vector<16x384xf32>
    %220 = vector.extract_strided_slice %219 {offsets = [0, 0], sizes = [16, 128], strides = [1, 1]} : vector<16x384xf32> to vector<16x128xf32>
    %221 = vector.extract_strided_slice %220 {offsets = [0, 0], sizes = [16, 32], strides = [1, 1]} : vector<16x128xf32> to vector<16x32xf32>
    %222 = vector.shape_cast %221 : vector<16x32xf32> to vector<2x8x32xf32>
    %223 = vector.extract_strided_slice %220 {offsets = [0, 32], sizes = [16, 32], strides = [1, 1]} : vector<16x128xf32> to vector<16x32xf32>
    %224 = vector.shape_cast %223 : vector<16x32xf32> to vector<2x8x32xf32>
    %225 = vector.extract_strided_slice %220 {offsets = [0, 64], sizes = [16, 32], strides = [1, 1]} : vector<16x128xf32> to vector<16x32xf32>
    %226 = vector.shape_cast %225 : vector<16x32xf32> to vector<2x8x32xf32>
    %227 = vector.extract_strided_slice %220 {offsets = [0, 96], sizes = [16, 32], strides = [1, 1]} : vector<16x128xf32> to vector<16x32xf32>
    %228 = vector.shape_cast %227 : vector<16x32xf32> to vector<2x8x32xf32>
    %229 = vector.shape_cast %222 : vector<2x8x32xf32> to vector<2x1x8x32xf32>
    %230 = vector.shape_cast %224 : vector<2x8x32xf32> to vector<2x1x8x32xf32>
    %231 = vector.shape_cast %226 : vector<2x8x32xf32> to vector<2x1x8x32xf32>
    %232 = vector.shape_cast %228 : vector<2x8x32xf32> to vector<2x1x8x32xf32>
    %233 = tpu.concatenate %229, %230, %231, %232 in 1 : vector<2x1x8x32xf32>, vector<2x1x8x32xf32>, vector<2x1x8x32xf32>, vector<2x1x8x32xf32> -> vector<2x4x8x32xf32>
    %234 = vector.shape_cast %233 : vector<2x4x8x32xf32> to vector<64x32xf32>
    %235 = arith.truncf %234 : vector<64x32xf32> to vector<64x32xbf16>
    %236 = vector.extract_strided_slice %219 {offsets = [0, 128], sizes = [16, 128], strides = [1, 1]} : vector<16x384xf32> to vector<16x128xf32>
    %237 = vector.extract_strided_slice %236 {offsets = [0, 0], sizes = [16, 32], strides = [1, 1]} : vector<16x128xf32> to vector<16x32xf32>
    %238 = vector.shape_cast %237 : vector<16x32xf32> to vector<2x8x32xf32>
    %239 = vector.extract_strided_slice %236 {offsets = [0, 32], sizes = [16, 32], strides = [1, 1]} : vector<16x128xf32> to vector<16x32xf32>
    %240 = vector.shape_cast %239 : vector<16x32xf32> to vector<2x8x32xf32>
    %241 = vector.extract_strided_slice %236 {offsets = [0, 64], sizes = [16, 32], strides = [1, 1]} : vector<16x128xf32> to vector<16x32xf32>
    %242 = vector.shape_cast %241 : vector<16x32xf32> to vector<2x8x32xf32>
    %243 = vector.extract_strided_slice %236 {offsets = [0, 96], sizes = [16, 32], strides = [1, 1]} : vector<16x128xf32> to vector<16x32xf32>
    %244 = vector.shape_cast %243 : vector<16x32xf32> to vector<2x8x32xf32>
    %245 = vector.shape_cast %238 : vector<2x8x32xf32> to vector<2x1x8x32xf32>
    %246 = vector.shape_cast %240 : vector<2x8x32xf32> to vector<2x1x8x32xf32>
    %247 = vector.shape_cast %242 : vector<2x8x32xf32> to vector<2x1x8x32xf32>
    %248 = vector.shape_cast %244 : vector<2x8x32xf32> to vector<2x1x8x32xf32>
    %249 = tpu.concatenate %245, %246, %247, %248 in 1 : vector<2x1x8x32xf32>, vector<2x1x8x32xf32>, vector<2x1x8x32xf32>, vector<2x1x8x32xf32> -> vector<2x4x8x32xf32>
    %250 = vector.shape_cast %249 : vector<2x4x8x32xf32> to vector<64x32xf32>
    %251 = arith.truncf %250 : vector<64x32xf32> to vector<64x32xbf16>
    %252 = vector.extract_strided_slice %219 {offsets = [0, 256], sizes = [16, 128], strides = [1, 1]} : vector<16x384xf32> to vector<16x128xf32>
    %253 = vector.extract_strided_slice %252 {offsets = [0, 0], sizes = [16, 32], strides = [1, 1]} : vector<16x128xf32> to vector<16x32xf32>
    %254 = vector.shape_cast %253 : vector<16x32xf32> to vector<2x8x32xf32>
    %255 = vector.extract_strided_slice %252 {offsets = [0, 32], sizes = [16, 32], strides = [1, 1]} : vector<16x128xf32> to vector<16x32xf32>
    %256 = vector.shape_cast %255 : vector<16x32xf32> to vector<2x8x32xf32>
    %257 = vector.extract_strided_slice %252 {offsets = [0, 64], sizes = [16, 32], strides = [1, 1]} : vector<16x128xf32> to vector<16x32xf32>
    %258 = vector.shape_cast %257 : vector<16x32xf32> to vector<2x8x32xf32>
    %259 = vector.extract_strided_slice %252 {offsets = [0, 96], sizes = [16, 32], strides = [1, 1]} : vector<16x128xf32> to vector<16x32xf32>
    %260 = vector.shape_cast %259 : vector<16x32xf32> to vector<2x8x32xf32>
    %261 = vector.shape_cast %254 : vector<2x8x32xf32> to vector<2x1x8x32xf32>
    %262 = vector.shape_cast %256 : vector<2x8x32xf32> to vector<2x1x8x32xf32>
    %263 = vector.shape_cast %258 : vector<2x8x32xf32> to vector<2x1x8x32xf32>
    %264 = vector.shape_cast %260 : vector<2x8x32xf32> to vector<2x1x8x32xf32>
    %265 = tpu.concatenate %261, %262, %263, %264 in 1 : vector<2x1x8x32xf32>, vector<2x1x8x32xf32>, vector<2x1x8x32xf32>, vector<2x1x8x32xf32> -> vector<2x4x8x32xf32>
    %266 = vector.shape_cast %265 : vector<2x4x8x32xf32> to vector<64x32xf32>
    %267 = arith.truncf %266 : vector<64x32xf32> to vector<64x32xbf16>
    "tpu.trace_start"() <{level = 10 : i32, message = "qd,kd->qk"}> : () -> ()
    %cst_81 = arith.constant dense<0.000000e+00> : vector<64x64xf32>
    %268 = tpu.matmul %235, %251, %cst_81 {dimension_numbers = #tpu.dot_dimension_numbers<[1], [1], [0], [0], [0, 0, 1, 0], [], []>} : vector<64x32xbf16>, vector<64x32xbf16>, vector<64x64xf32> -> vector<64x64xf32>
    "tpu.trace_stop"() : () -> ()
    %269 = arith.addf %268, %0 : vector<64x64xf32>
    %cst_82 = arith.constant dense<0xFF800000> : vector<64xf32>
    %270 = vector.multi_reduction <maximumf>, %269, %cst_82 [1] : vector<64x64xf32> to vector<64xf32>
    %271 = vector.shape_cast %270 : vector<64xf32> to vector<64x1xf32>
    %272 = vector.broadcast %271 : vector<64x1xf32> to vector<64x64xf32>
    %273 = arith.subf %269, %272 : vector<64x64xf32>
    %274 = math.exp %273 : vector<64x64xf32>
    %cst_83 = arith.constant dense<0.000000e+00> : vector<64xf32>
    %275 = vector.multi_reduction <add>, %274, %cst_83 [1] : vector<64x64xf32> to vector<64xf32>
    %276 = vector.shape_cast %275 : vector<64xf32> to vector<64x1xf32>
    %277 = tpu.reciprocal %276 {approx = true} : vector<64x1xf32> -> vector<64x1xf32>
    %278 = vector.broadcast %277 : vector<64x1xf32> to vector<64x64xf32>
    %279 = arith.mulf %274, %278 : vector<64x64xf32>
    %280 = arith.truncf %279 : vector<64x64xf32> to vector<64x64xbf16>
    %cst_84 = arith.constant dense<0.000000e+00> : vector<64x32xf32>
    %281 = tpu.matmul %280, %267, %cst_84 {dimension_numbers = #tpu.dot_dimension_numbers<[1], [0], [0], [1], [0, 0, 1, 1], [], []>} : vector<64x64xbf16>, vector<64x32xbf16>, vector<64x32xf32> -> vector<64x32xf32>
    %282 = vector.shape_cast %281 : vector<64x32xf32> to vector<2x4x8x32xf32>
    %283 = vector.extract_strided_slice %282 {offsets = [0, 0, 0, 0], sizes = [2, 1, 8, 32], strides = [1, 1, 1, 1]} : vector<2x4x8x32xf32> to vector<2x1x8x32xf32>
    %284 = vector.shape_cast %283 : vector<2x1x8x32xf32> to vector<2x8x32xf32>
    %285 = vector.extract_strided_slice %282 {offsets = [0, 1, 0, 0], sizes = [2, 1, 8, 32], strides = [1, 1, 1, 1]} : vector<2x4x8x32xf32> to vector<2x1x8x32xf32>
    %286 = vector.shape_cast %285 : vector<2x1x8x32xf32> to vector<2x8x32xf32>
    %287 = vector.extract_strided_slice %282 {offsets = [0, 2, 0, 0], sizes = [2, 1, 8, 32], strides = [1, 1, 1, 1]} : vector<2x4x8x32xf32> to vector<2x1x8x32xf32>
    %288 = vector.shape_cast %287 : vector<2x1x8x32xf32> to vector<2x8x32xf32>
    %289 = vector.extract_strided_slice %282 {offsets = [0, 3, 0, 0], sizes = [2, 1, 8, 32], strides = [1, 1, 1, 1]} : vector<2x4x8x32xf32> to vector<2x1x8x32xf32>
    %290 = vector.shape_cast %289 : vector<2x1x8x32xf32> to vector<2x8x32xf32>
    %291 = tpu.concatenate %284, %286, %288, %290 in 2 : vector<2x8x32xf32>, vector<2x8x32xf32>, vector<2x8x32xf32>, vector<2x8x32xf32> -> vector<2x8x128xf32>
    %292 = vector.shape_cast %291 : vector<2x8x128xf32> to vector<16x128xf32>
    %293 = arith.truncf %292 : vector<16x128xf32> to vector<16x128xbf16>
    %c1_85 = arith.constant 1 : index
    %c0_86 = arith.constant 0 : index
    %c0_87 = arith.constant 0 : index
    %294 = vector.load %arg11[%c1_85, %c0_86, %c0_87] : memref<3x128x128xbf16, #tpu.memory_space<vmem>>, vector<1x128x128xbf16>
    %295 = vector.shape_cast %294 : vector<1x128x128xbf16> to vector<128x128xbf16>
    %cst_88 = arith.constant dense<0.000000e+00> : vector<16x128xf32>
    %296 = tpu.matmul %293, %295, %cst_88 {dimension_numbers = #tpu.dot_dimension_numbers<[1], [0], [0], [1], [0, 0, 1, 1], [], []>} : vector<16x128xbf16>, vector<128x128xbf16>, vector<16x128xf32> -> vector<16x128xf32>
    %c1_89 = arith.constant 1 : index
    %c0_90 = arith.constant 0 : index
    %c0_91 = arith.constant 0 : index
    %297 = vector.load %arg12[%c1_89, %c0_90, %c0_91] : memref<3x1x128xf32, #tpu.memory_space<vmem>>, vector<1x1x128xf32>
    %298 = vector.shape_cast %297 : vector<1x1x128xf32> to vector<1x128xf32>
    %299 = vector.broadcast %298 : vector<1x128xf32> to vector<16x128xf32>
    %300 = arith.addf %296, %299 : vector<16x128xf32>
    %301 = vector.shape_cast %300 : vector<16x128xf32> to vector<2x8x128xf32>
    %302 = arith.addf %301, %184 : vector<2x8x128xf32>
    %c1_92 = arith.constant 1 : index
    %c0_93 = arith.constant 0 : index
    %c0_94 = arith.constant 0 : index
    %303 = vector.load %arg7[%c1_92, %c0_93, %c0_94] : memref<3x1x128xf32, #tpu.memory_space<vmem>>, vector<1x1x128xf32>
    %304 = vector.shape_cast %303 : vector<1x1x128xf32> to vector<1x128xf32>
    %c1_95 = arith.constant 1 : index
    %c0_96 = arith.constant 0 : index
    %c0_97 = arith.constant 0 : index
    %305 = vector.load %arg8[%c1_95, %c0_96, %c0_97] : memref<3x1x128xf32, #tpu.memory_space<vmem>>, vector<1x1x128xf32>
    %306 = vector.shape_cast %305 : vector<1x1x128xf32> to vector<1x128xf32>
    %cst_98 = arith.constant dense<0.000000e+00> : vector<2x8xf32>
    %307 = vector.multi_reduction <add>, %302, %cst_98 [2] : vector<2x8x128xf32> to vector<2x8xf32>
    %308 = vector.shape_cast %307 : vector<2x8xf32> to vector<2x8x1xf32>
    %cst_99 = arith.constant 1.280000e+02 : f32
    %309 = vector.broadcast %cst_99 : f32 to vector<2x8x1xf32>
    %310 = arith.divf %308, %309 : vector<2x8x1xf32>
    %311 = vector.broadcast %310 : vector<2x8x1xf32> to vector<2x8x128xf32>
    %312 = arith.subf %302, %311 : vector<2x8x128xf32>
    %313 = arith.mulf %312, %312 : vector<2x8x128xf32>
    %cst_100 = arith.constant dense<0.000000e+00> : vector<2x8xf32>
    %314 = vector.multi_reduction <add>, %313, %cst_100 [2] : vector<2x8x128xf32> to vector<2x8xf32>
    %315 = vector.shape_cast %314 : vector<2x8xf32> to vector<2x8x1xf32>
    %cst_101 = arith.constant 1.280000e+02 : f32
    %316 = vector.broadcast %cst_101 : f32 to vector<2x8x1xf32>
    %317 = arith.divf %315, %316 : vector<2x8x1xf32>
    %cst_102 = arith.constant 9.99999974E-6 : f32
    %318 = vector.broadcast %cst_102 : f32 to vector<2x8x1xf32>
    %319 = arith.addf %317, %318 : vector<2x8x1xf32>
    %320 = math.rsqrt %319 : vector<2x8x1xf32>
    %321 = vector.broadcast %320 : vector<2x8x1xf32> to vector<2x8x128xf32>
    %322 = arith.mulf %312, %321 : vector<2x8x128xf32>
    %323 = vector.shape_cast %304 : vector<1x128xf32> to vector<1x1x128xf32>
    %324 = vector.broadcast %323 : vector<1x1x128xf32> to vector<2x8x128xf32>
    %325 = arith.mulf %322, %324 : vector<2x8x128xf32>
    %326 = vector.shape_cast %306 : vector<1x128xf32> to vector<1x1x128xf32>
    %327 = vector.broadcast %326 : vector<1x1x128xf32> to vector<2x8x128xf32>
    %328 = arith.addf %325, %327 : vector<2x8x128xf32>
    %329 = vector.shape_cast %328 : vector<2x8x128xf32> to vector<16x128xf32>
    %330 = arith.truncf %329 : vector<16x128xf32> to vector<16x128xbf16>
    %c1_103 = arith.constant 1 : index
    %c0_104 = arith.constant 0 : index
    %c0_105 = arith.constant 0 : index
    %331 = vector.load %arg13[%c1_103, %c0_104, %c0_105] : memref<3x128x512xbf16, #tpu.memory_space<vmem>>, vector<1x128x512xbf16>
    %332 = vector.shape_cast %331 : vector<1x128x512xbf16> to vector<128x512xbf16>
    %cst_106 = arith.constant dense<0.000000e+00> : vector<16x512xf32>
    %333 = tpu.matmul %330, %332, %cst_106 {dimension_numbers = #tpu.dot_dimension_numbers<[1], [0], [0], [1], [0, 0, 1, 1], [], []>} : vector<16x128xbf16>, vector<128x512xbf16>, vector<16x512xf32> -> vector<16x512xf32>
    %c1_107 = arith.constant 1 : index
    %c0_108 = arith.constant 0 : index
    %c0_109 = arith.constant 0 : index
    %334 = vector.load %arg14[%c1_107, %c0_108, %c0_109] : memref<3x1x512xf32, #tpu.memory_space<vmem>>, vector<1x1x512xf32>
    %335 = vector.shape_cast %334 : vector<1x1x512xf32> to vector<1x512xf32>
    %336 = vector.broadcast %335 : vector<1x512xf32> to vector<16x512xf32>
    %337 = arith.addf %333, %336 : vector<16x512xf32>
    %cst_110 = arith.constant 0.000000e+00 : f32
    %338 = vector.broadcast %cst_110 : f32 to vector<16x512xf32>
    %339 = arith.maximumf %337, %338 : vector<16x512xf32>
    %340 = arith.truncf %339 : vector<16x512xf32> to vector<16x512xbf16>
    %c1_111 = arith.constant 1 : index
    %c0_112 = arith.constant 0 : index
    %c0_113 = arith.constant 0 : index
    %341 = vector.load %arg15[%c1_111, %c0_112, %c0_113] : memref<3x512x128xbf16, #tpu.memory_space<vmem>>, vector<1x512x128xbf16>
    %342 = vector.shape_cast %341 : vector<1x512x128xbf16> to vector<512x128xbf16>
    %cst_114 = arith.constant dense<0.000000e+00> : vector<16x128xf32>
    %343 = tpu.matmul %340, %342, %cst_114 {dimension_numbers = #tpu.dot_dimension_numbers<[1], [0], [0], [1], [0, 0, 1, 1], [], []>} : vector<16x512xbf16>, vector<512x128xbf16>, vector<16x128xf32> -> vector<16x128xf32>
    %c1_115 = arith.constant 1 : index
    %c0_116 = arith.constant 0 : index
    %c0_117 = arith.constant 0 : index
    %344 = vector.load %arg16[%c1_115, %c0_116, %c0_117] : memref<3x1x128xf32, #tpu.memory_space<vmem>>, vector<1x1x128xf32>
    %345 = vector.shape_cast %344 : vector<1x1x128xf32> to vector<1x128xf32>
    %346 = vector.broadcast %345 : vector<1x128xf32> to vector<16x128xf32>
    %347 = arith.addf %343, %346 : vector<16x128xf32>
    %348 = vector.shape_cast %347 : vector<16x128xf32> to vector<2x8x128xf32>
    %349 = arith.addf %348, %302 : vector<2x8x128xf32>
    %cst_118 = arith.constant 0.000000e+00 : f32
    %350 = vector.broadcast %cst_118 : f32 to vector<2x8x128xf32>
    %351 = arith.maximumf %349, %350 : vector<2x8x128xf32>
    %c0_119 = arith.constant 0 : index
    %c0_120 = arith.constant 0 : index
    %c0_121 = arith.constant 0 : index
    %352 = vector.load %arg2[%c0_119, %c0_120, %c0_121] : memref<2x8x128xf32, #tpu.memory_space<vmem>>, vector<2x8x128xf32>
    %353 = arith.addf %351, %352 : vector<2x8x128xf32>
    %c2 = arith.constant 2 : index
    %c0_122 = arith.constant 0 : index
    %c0_123 = arith.constant 0 : index
    %354 = vector.load %arg5[%c2, %c0_122, %c0_123] : memref<3x1x128xf32, #tpu.memory_space<vmem>>, vector<1x1x128xf32>
    %355 = vector.shape_cast %354 : vector<1x1x128xf32> to vector<1x128xf32>
    %c2_124 = arith.constant 2 : index
    %c0_125 = arith.constant 0 : index
    %c0_126 = arith.constant 0 : index
    %356 = vector.load %arg6[%c2_124, %c0_125, %c0_126] : memref<3x1x128xf32, #tpu.memory_space<vmem>>, vector<1x1x128xf32>
    %357 = vector.shape_cast %356 : vector<1x1x128xf32> to vector<1x128xf32>
    %cst_127 = arith.constant dense<0.000000e+00> : vector<2x8xf32>
    %358 = vector.multi_reduction <add>, %353, %cst_127 [2] : vector<2x8x128xf32> to vector<2x8xf32>
    %359 = vector.shape_cast %358 : vector<2x8xf32> to vector<2x8x1xf32>
    %cst_128 = arith.constant 1.280000e+02 : f32
    %360 = vector.broadcast %cst_128 : f32 to vector<2x8x1xf32>
    %361 = arith.divf %359, %360 : vector<2x8x1xf32>
    %362 = vector.broadcast %361 : vector<2x8x1xf32> to vector<2x8x128xf32>
    %363 = arith.subf %353, %362 : vector<2x8x128xf32>
    %364 = arith.mulf %363, %363 : vector<2x8x128xf32>
    %cst_129 = arith.constant dense<0.000000e+00> : vector<2x8xf32>
    %365 = vector.multi_reduction <add>, %364, %cst_129 [2] : vector<2x8x128xf32> to vector<2x8xf32>
    %366 = vector.shape_cast %365 : vector<2x8xf32> to vector<2x8x1xf32>
    %cst_130 = arith.constant 1.280000e+02 : f32
    %367 = vector.broadcast %cst_130 : f32 to vector<2x8x1xf32>
    %368 = arith.divf %366, %367 : vector<2x8x1xf32>
    %cst_131 = arith.constant 9.99999974E-6 : f32
    %369 = vector.broadcast %cst_131 : f32 to vector<2x8x1xf32>
    %370 = arith.addf %368, %369 : vector<2x8x1xf32>
    %371 = math.rsqrt %370 : vector<2x8x1xf32>
    %372 = vector.broadcast %371 : vector<2x8x1xf32> to vector<2x8x128xf32>
    %373 = arith.mulf %363, %372 : vector<2x8x128xf32>
    %374 = vector.shape_cast %355 : vector<1x128xf32> to vector<1x1x128xf32>
    %375 = vector.broadcast %374 : vector<1x1x128xf32> to vector<2x8x128xf32>
    %376 = arith.mulf %373, %375 : vector<2x8x128xf32>
    %377 = vector.shape_cast %357 : vector<1x128xf32> to vector<1x1x128xf32>
    %378 = vector.broadcast %377 : vector<1x1x128xf32> to vector<2x8x128xf32>
    %379 = arith.addf %376, %378 : vector<2x8x128xf32>
    %380 = vector.shape_cast %379 : vector<2x8x128xf32> to vector<16x128xf32>
    %381 = arith.truncf %380 : vector<16x128xf32> to vector<16x128xbf16>
    %c2_132 = arith.constant 2 : index
    %c0_133 = arith.constant 0 : index
    %c0_134 = arith.constant 0 : index
    %382 = vector.load %arg9[%c2_132, %c0_133, %c0_134] : memref<3x128x384xbf16, #tpu.memory_space<vmem>>, vector<1x128x384xbf16>
    %383 = vector.shape_cast %382 : vector<1x128x384xbf16> to vector<128x384xbf16>
    %cst_135 = arith.constant dense<0.000000e+00> : vector<16x384xf32>
    %384 = tpu.matmul %381, %383, %cst_135 {dimension_numbers = #tpu.dot_dimension_numbers<[1], [0], [0], [1], [0, 0, 1, 1], [], []>} : vector<16x128xbf16>, vector<128x384xbf16>, vector<16x384xf32> -> vector<16x384xf32>
    %c2_136 = arith.constant 2 : index
    %c0_137 = arith.constant 0 : index
    %c0_138 = arith.constant 0 : index
    %385 = vector.load %arg10[%c2_136, %c0_137, %c0_138] : memref<3x1x384xf32, #tpu.memory_space<vmem>>, vector<1x1x384xf32>
    %386 = vector.shape_cast %385 : vector<1x1x384xf32> to vector<1x384xf32>
    %387 = vector.broadcast %386 : vector<1x384xf32> to vector<16x384xf32>
    %388 = arith.addf %384, %387 : vector<16x384xf32>
    %389 = vector.extract_strided_slice %388 {offsets = [0, 0], sizes = [16, 128], strides = [1, 1]} : vector<16x384xf32> to vector<16x128xf32>
    %390 = vector.extract_strided_slice %389 {offsets = [0, 0], sizes = [16, 32], strides = [1, 1]} : vector<16x128xf32> to vector<16x32xf32>
    %391 = vector.shape_cast %390 : vector<16x32xf32> to vector<2x8x32xf32>
    %392 = vector.extract_strided_slice %389 {offsets = [0, 32], sizes = [16, 32], strides = [1, 1]} : vector<16x128xf32> to vector<16x32xf32>
    %393 = vector.shape_cast %392 : vector<16x32xf32> to vector<2x8x32xf32>
    %394 = vector.extract_strided_slice %389 {offsets = [0, 64], sizes = [16, 32], strides = [1, 1]} : vector<16x128xf32> to vector<16x32xf32>
    %395 = vector.shape_cast %394 : vector<16x32xf32> to vector<2x8x32xf32>
    %396 = vector.extract_strided_slice %389 {offsets = [0, 96], sizes = [16, 32], strides = [1, 1]} : vector<16x128xf32> to vector<16x32xf32>
    %397 = vector.shape_cast %396 : vector<16x32xf32> to vector<2x8x32xf32>
    %398 = vector.shape_cast %391 : vector<2x8x32xf32> to vector<2x1x8x32xf32>
    %399 = vector.shape_cast %393 : vector<2x8x32xf32> to vector<2x1x8x32xf32>
    %400 = vector.shape_cast %395 : vector<2x8x32xf32> to vector<2x1x8x32xf32>
    %401 = vector.shape_cast %397 : vector<2x8x32xf32> to vector<2x1x8x32xf32>
    %402 = tpu.concatenate %398, %399, %400, %401 in 1 : vector<2x1x8x32xf32>, vector<2x1x8x32xf32>, vector<2x1x8x32xf32>, vector<2x1x8x32xf32> -> vector<2x4x8x32xf32>
    %403 = vector.shape_cast %402 : vector<2x4x8x32xf32> to vector<64x32xf32>
    %404 = arith.truncf %403 : vector<64x32xf32> to vector<64x32xbf16>
    %405 = vector.extract_strided_slice %388 {offsets = [0, 128], sizes = [16, 128], strides = [1, 1]} : vector<16x384xf32> to vector<16x128xf32>
    %406 = vector.extract_strided_slice %405 {offsets = [0, 0], sizes = [16, 32], strides = [1, 1]} : vector<16x128xf32> to vector<16x32xf32>
    %407 = vector.shape_cast %406 : vector<16x32xf32> to vector<2x8x32xf32>
    %408 = vector.extract_strided_slice %405 {offsets = [0, 32], sizes = [16, 32], strides = [1, 1]} : vector<16x128xf32> to vector<16x32xf32>
    %409 = vector.shape_cast %408 : vector<16x32xf32> to vector<2x8x32xf32>
    %410 = vector.extract_strided_slice %405 {offsets = [0, 64], sizes = [16, 32], strides = [1, 1]} : vector<16x128xf32> to vector<16x32xf32>
    %411 = vector.shape_cast %410 : vector<16x32xf32> to vector<2x8x32xf32>
    %412 = vector.extract_strided_slice %405 {offsets = [0, 96], sizes = [16, 32], strides = [1, 1]} : vector<16x128xf32> to vector<16x32xf32>
    %413 = vector.shape_cast %412 : vector<16x32xf32> to vector<2x8x32xf32>
    %414 = vector.shape_cast %407 : vector<2x8x32xf32> to vector<2x1x8x32xf32>
    %415 = vector.shape_cast %409 : vector<2x8x32xf32> to vector<2x1x8x32xf32>
    %416 = vector.shape_cast %411 : vector<2x8x32xf32> to vector<2x1x8x32xf32>
    %417 = vector.shape_cast %413 : vector<2x8x32xf32> to vector<2x1x8x32xf32>
    %418 = tpu.concatenate %414, %415, %416, %417 in 1 : vector<2x1x8x32xf32>, vector<2x1x8x32xf32>, vector<2x1x8x32xf32>, vector<2x1x8x32xf32> -> vector<2x4x8x32xf32>
    %419 = vector.shape_cast %418 : vector<2x4x8x32xf32> to vector<64x32xf32>
    %420 = arith.truncf %419 : vector<64x32xf32> to vector<64x32xbf16>
    %421 = vector.extract_strided_slice %388 {offsets = [0, 256], sizes = [16, 128], strides = [1, 1]} : vector<16x384xf32> to vector<16x128xf32>
    %422 = vector.extract_strided_slice %421 {offsets = [0, 0], sizes = [16, 32], strides = [1, 1]} : vector<16x128xf32> to vector<16x32xf32>
    %423 = vector.shape_cast %422 : vector<16x32xf32> to vector<2x8x32xf32>
    %424 = vector.extract_strided_slice %421 {offsets = [0, 32], sizes = [16, 32], strides = [1, 1]} : vector<16x128xf32> to vector<16x32xf32>
    %425 = vector.shape_cast %424 : vector<16x32xf32> to vector<2x8x32xf32>
    %426 = vector.extract_strided_slice %421 {offsets = [0, 64], sizes = [16, 32], strides = [1, 1]} : vector<16x128xf32> to vector<16x32xf32>
    %427 = vector.shape_cast %426 : vector<16x32xf32> to vector<2x8x32xf32>
    %428 = vector.extract_strided_slice %421 {offsets = [0, 96], sizes = [16, 32], strides = [1, 1]} : vector<16x128xf32> to vector<16x32xf32>
    %429 = vector.shape_cast %428 : vector<16x32xf32> to vector<2x8x32xf32>
    %430 = vector.shape_cast %423 : vector<2x8x32xf32> to vector<2x1x8x32xf32>
    %431 = vector.shape_cast %425 : vector<2x8x32xf32> to vector<2x1x8x32xf32>
    %432 = vector.shape_cast %427 : vector<2x8x32xf32> to vector<2x1x8x32xf32>
    %433 = vector.shape_cast %429 : vector<2x8x32xf32> to vector<2x1x8x32xf32>
    %434 = tpu.concatenate %430, %431, %432, %433 in 1 : vector<2x1x8x32xf32>, vector<2x1x8x32xf32>, vector<2x1x8x32xf32>, vector<2x1x8x32xf32> -> vector<2x4x8x32xf32>
    %435 = vector.shape_cast %434 : vector<2x4x8x32xf32> to vector<64x32xf32>
    %436 = arith.truncf %435 : vector<64x32xf32> to vector<64x32xbf16>
    "tpu.trace_start"() <{level = 10 : i32, message = "qd,kd->qk"}> : () -> ()
    %cst_139 = arith.constant dense<0.000000e+00> : vector<64x64xf32>
    %437 = tpu.matmul %404, %420, %cst_139 {dimension_numbers = #tpu.dot_dimension_numbers<[1], [1], [0], [0], [0, 0, 1, 0], [], []>} : vector<64x32xbf16>, vector<64x32xbf16>, vector<64x64xf32> -> vector<64x64xf32>
    "tpu.trace_stop"() : () -> ()
    %438 = arith.addf %437, %0 : vector<64x64xf32>
    %cst_140 = arith.constant dense<0xFF800000> : vector<64xf32>
    %439 = vector.multi_reduction <maximumf>, %438, %cst_140 [1] : vector<64x64xf32> to vector<64xf32>
    %440 = vector.shape_cast %439 : vector<64xf32> to vector<64x1xf32>
    %441 = vector.broadcast %440 : vector<64x1xf32> to vector<64x64xf32>
    %442 = arith.subf %438, %441 : vector<64x64xf32>
    %443 = math.exp %442 : vector<64x64xf32>
    %cst_141 = arith.constant dense<0.000000e+00> : vector<64xf32>
    %444 = vector.multi_reduction <add>, %443, %cst_141 [1] : vector<64x64xf32> to vector<64xf32>
    %445 = vector.shape_cast %444 : vector<64xf32> to vector<64x1xf32>
    %446 = tpu.reciprocal %445 {approx = true} : vector<64x1xf32> -> vector<64x1xf32>
    %447 = vector.broadcast %446 : vector<64x1xf32> to vector<64x64xf32>
    %448 = arith.mulf %443, %447 : vector<64x64xf32>
    %449 = arith.truncf %448 : vector<64x64xf32> to vector<64x64xbf16>
    %cst_142 = arith.constant dense<0.000000e+00> : vector<64x32xf32>
    %450 = tpu.matmul %449, %436, %cst_142 {dimension_numbers = #tpu.dot_dimension_numbers<[1], [0], [0], [1], [0, 0, 1, 1], [], []>} : vector<64x64xbf16>, vector<64x32xbf16>, vector<64x32xf32> -> vector<64x32xf32>
    %451 = vector.shape_cast %450 : vector<64x32xf32> to vector<2x4x8x32xf32>
    %452 = vector.extract_strided_slice %451 {offsets = [0, 0, 0, 0], sizes = [2, 1, 8, 32], strides = [1, 1, 1, 1]} : vector<2x4x8x32xf32> to vector<2x1x8x32xf32>
    %453 = vector.shape_cast %452 : vector<2x1x8x32xf32> to vector<2x8x32xf32>
    %454 = vector.extract_strided_slice %451 {offsets = [0, 1, 0, 0], sizes = [2, 1, 8, 32], strides = [1, 1, 1, 1]} : vector<2x4x8x32xf32> to vector<2x1x8x32xf32>
    %455 = vector.shape_cast %454 : vector<2x1x8x32xf32> to vector<2x8x32xf32>
    %456 = vector.extract_strided_slice %451 {offsets = [0, 2, 0, 0], sizes = [2, 1, 8, 32], strides = [1, 1, 1, 1]} : vector<2x4x8x32xf32> to vector<2x1x8x32xf32>
    %457 = vector.shape_cast %456 : vector<2x1x8x32xf32> to vector<2x8x32xf32>
    %458 = vector.extract_strided_slice %451 {offsets = [0, 3, 0, 0], sizes = [2, 1, 8, 32], strides = [1, 1, 1, 1]} : vector<2x4x8x32xf32> to vector<2x1x8x32xf32>
    %459 = vector.shape_cast %458 : vector<2x1x8x32xf32> to vector<2x8x32xf32>
    %460 = tpu.concatenate %453, %455, %457, %459 in 2 : vector<2x8x32xf32>, vector<2x8x32xf32>, vector<2x8x32xf32>, vector<2x8x32xf32> -> vector<2x8x128xf32>
    %461 = vector.shape_cast %460 : vector<2x8x128xf32> to vector<16x128xf32>
    %462 = arith.truncf %461 : vector<16x128xf32> to vector<16x128xbf16>
    %c2_143 = arith.constant 2 : index
    %c0_144 = arith.constant 0 : index
    %c0_145 = arith.constant 0 : index
    %463 = vector.load %arg11[%c2_143, %c0_144, %c0_145] : memref<3x128x128xbf16, #tpu.memory_space<vmem>>, vector<1x128x128xbf16>
    %464 = vector.shape_cast %463 : vector<1x128x128xbf16> to vector<128x128xbf16>
    %cst_146 = arith.constant dense<0.000000e+00> : vector<16x128xf32>
    %465 = tpu.matmul %462, %464, %cst_146 {dimension_numbers = #tpu.dot_dimension_numbers<[1], [0], [0], [1], [0, 0, 1, 1], [], []>} : vector<16x128xbf16>, vector<128x128xbf16>, vector<16x128xf32> -> vector<16x128xf32>
    %c2_147 = arith.constant 2 : index
    %c0_148 = arith.constant 0 : index
    %c0_149 = arith.constant 0 : index
    %466 = vector.load %arg12[%c2_147, %c0_148, %c0_149] : memref<3x1x128xf32, #tpu.memory_space<vmem>>, vector<1x1x128xf32>
    %467 = vector.shape_cast %466 : vector<1x1x128xf32> to vector<1x128xf32>
    %468 = vector.broadcast %467 : vector<1x128xf32> to vector<16x128xf32>
    %469 = arith.addf %465, %468 : vector<16x128xf32>
    %470 = vector.shape_cast %469 : vector<16x128xf32> to vector<2x8x128xf32>
    %471 = arith.addf %470, %353 : vector<2x8x128xf32>
    %c2_150 = arith.constant 2 : index
    %c0_151 = arith.constant 0 : index
    %c0_152 = arith.constant 0 : index
    %472 = vector.load %arg7[%c2_150, %c0_151, %c0_152] : memref<3x1x128xf32, #tpu.memory_space<vmem>>, vector<1x1x128xf32>
    %473 = vector.shape_cast %472 : vector<1x1x128xf32> to vector<1x128xf32>
    %c2_153 = arith.constant 2 : index
    %c0_154 = arith.constant 0 : index
    %c0_155 = arith.constant 0 : index
    %474 = vector.load %arg8[%c2_153, %c0_154, %c0_155] : memref<3x1x128xf32, #tpu.memory_space<vmem>>, vector<1x1x128xf32>
    %475 = vector.shape_cast %474 : vector<1x1x128xf32> to vector<1x128xf32>
    %cst_156 = arith.constant dense<0.000000e+00> : vector<2x8xf32>
    %476 = vector.multi_reduction <add>, %471, %cst_156 [2] : vector<2x8x128xf32> to vector<2x8xf32>
    %477 = vector.shape_cast %476 : vector<2x8xf32> to vector<2x8x1xf32>
    %cst_157 = arith.constant 1.280000e+02 : f32
    %478 = vector.broadcast %cst_157 : f32 to vector<2x8x1xf32>
    %479 = arith.divf %477, %478 : vector<2x8x1xf32>
    %480 = vector.broadcast %479 : vector<2x8x1xf32> to vector<2x8x128xf32>
    %481 = arith.subf %471, %480 : vector<2x8x128xf32>
    %482 = arith.mulf %481, %481 : vector<2x8x128xf32>
    %cst_158 = arith.constant dense<0.000000e+00> : vector<2x8xf32>
    %483 = vector.multi_reduction <add>, %482, %cst_158 [2] : vector<2x8x128xf32> to vector<2x8xf32>
    %484 = vector.shape_cast %483 : vector<2x8xf32> to vector<2x8x1xf32>
    %cst_159 = arith.constant 1.280000e+02 : f32
    %485 = vector.broadcast %cst_159 : f32 to vector<2x8x1xf32>
    %486 = arith.divf %484, %485 : vector<2x8x1xf32>
    %cst_160 = arith.constant 9.99999974E-6 : f32
    %487 = vector.broadcast %cst_160 : f32 to vector<2x8x1xf32>
    %488 = arith.addf %486, %487 : vector<2x8x1xf32>
    %489 = math.rsqrt %488 : vector<2x8x1xf32>
    %490 = vector.broadcast %489 : vector<2x8x1xf32> to vector<2x8x128xf32>
    %491 = arith.mulf %481, %490 : vector<2x8x128xf32>
    %492 = vector.shape_cast %473 : vector<1x128xf32> to vector<1x1x128xf32>
    %493 = vector.broadcast %492 : vector<1x1x128xf32> to vector<2x8x128xf32>
    %494 = arith.mulf %491, %493 : vector<2x8x128xf32>
    %495 = vector.shape_cast %475 : vector<1x128xf32> to vector<1x1x128xf32>
    %496 = vector.broadcast %495 : vector<1x1x128xf32> to vector<2x8x128xf32>
    %497 = arith.addf %494, %496 : vector<2x8x128xf32>
    %498 = vector.shape_cast %497 : vector<2x8x128xf32> to vector<16x128xf32>
    %499 = arith.truncf %498 : vector<16x128xf32> to vector<16x128xbf16>
    %c2_161 = arith.constant 2 : index
    %c0_162 = arith.constant 0 : index
    %c0_163 = arith.constant 0 : index
    %500 = vector.load %arg13[%c2_161, %c0_162, %c0_163] : memref<3x128x512xbf16, #tpu.memory_space<vmem>>, vector<1x128x512xbf16>
    %501 = vector.shape_cast %500 : vector<1x128x512xbf16> to vector<128x512xbf16>
    %cst_164 = arith.constant dense<0.000000e+00> : vector<16x512xf32>
    %502 = tpu.matmul %499, %501, %cst_164 {dimension_numbers = #tpu.dot_dimension_numbers<[1], [0], [0], [1], [0, 0, 1, 1], [], []>} : vector<16x128xbf16>, vector<128x512xbf16>, vector<16x512xf32> -> vector<16x512xf32>
    %c2_165 = arith.constant 2 : index
    %c0_166 = arith.constant 0 : index
    %c0_167 = arith.constant 0 : index
    %503 = vector.load %arg14[%c2_165, %c0_166, %c0_167] : memref<3x1x512xf32, #tpu.memory_space<vmem>>, vector<1x1x512xf32>
    %504 = vector.shape_cast %503 : vector<1x1x512xf32> to vector<1x512xf32>
    %505 = vector.broadcast %504 : vector<1x512xf32> to vector<16x512xf32>
    %506 = arith.addf %502, %505 : vector<16x512xf32>
    %cst_168 = arith.constant 0.000000e+00 : f32
    %507 = vector.broadcast %cst_168 : f32 to vector<16x512xf32>
    %508 = arith.maximumf %506, %507 : vector<16x512xf32>
    %509 = arith.truncf %508 : vector<16x512xf32> to vector<16x512xbf16>
    %c2_169 = arith.constant 2 : index
    %c0_170 = arith.constant 0 : index
    %c0_171 = arith.constant 0 : index
    %510 = vector.load %arg15[%c2_169, %c0_170, %c0_171] : memref<3x512x128xbf16, #tpu.memory_space<vmem>>, vector<1x512x128xbf16>
    %511 = vector.shape_cast %510 : vector<1x512x128xbf16> to vector<512x128xbf16>
    %cst_172 = arith.constant dense<0.000000e+00> : vector<16x128xf32>
    %512 = tpu.matmul %509, %511, %cst_172 {dimension_numbers = #tpu.dot_dimension_numbers<[1], [0], [0], [1], [0, 0, 1, 1], [], []>} : vector<16x512xbf16>, vector<512x128xbf16>, vector<16x128xf32> -> vector<16x128xf32>
    %c2_173 = arith.constant 2 : index
    %c0_174 = arith.constant 0 : index
    %c0_175 = arith.constant 0 : index
    %513 = vector.load %arg16[%c2_173, %c0_174, %c0_175] : memref<3x1x128xf32, #tpu.memory_space<vmem>>, vector<1x1x128xf32>
    %514 = vector.shape_cast %513 : vector<1x1x128xf32> to vector<1x128xf32>
    %515 = vector.broadcast %514 : vector<1x128xf32> to vector<16x128xf32>
    %516 = arith.addf %512, %515 : vector<16x128xf32>
    %517 = vector.shape_cast %516 : vector<16x128xf32> to vector<2x8x128xf32>
    %518 = arith.addf %517, %471 : vector<2x8x128xf32>
    %cst_176 = arith.constant 0.000000e+00 : f32
    %519 = vector.broadcast %cst_176 : f32 to vector<2x8x128xf32>
    %520 = arith.maximumf %518, %519 : vector<2x8x128xf32>
    %cst_177 = arith.constant dense<0.000000e+00> : vector<2x8xf32>
    %521 = vector.multi_reduction <add>, %520, %cst_177 [2] : vector<2x8x128xf32> to vector<2x8xf32>
    %522 = vector.shape_cast %521 : vector<2x8xf32> to vector<2x8x1xf32>
    %cst_178 = arith.constant 1.280000e+02 : f32
    %523 = vector.broadcast %cst_178 : f32 to vector<2x8x1xf32>
    %524 = arith.divf %522, %523 : vector<2x8x1xf32>
    %525 = vector.broadcast %524 : vector<2x8x1xf32> to vector<2x8x128xf32>
    %526 = arith.subf %520, %525 : vector<2x8x128xf32>
    %527 = arith.mulf %526, %526 : vector<2x8x128xf32>
    %cst_179 = arith.constant dense<0.000000e+00> : vector<2x8xf32>
    %528 = vector.multi_reduction <add>, %527, %cst_179 [2] : vector<2x8x128xf32> to vector<2x8xf32>
    %529 = vector.shape_cast %528 : vector<2x8xf32> to vector<2x8x1xf32>
    %cst_180 = arith.constant 1.280000e+02 : f32
    %530 = vector.broadcast %cst_180 : f32 to vector<2x8x1xf32>
    %531 = arith.divf %529, %530 : vector<2x8x1xf32>
    %cst_181 = arith.constant 9.99999997E-7 : f32
    %532 = vector.broadcast %cst_181 : f32 to vector<2x8x1xf32>
    %533 = arith.addf %531, %532 : vector<2x8x1xf32>
    %534 = math.rsqrt %533 : vector<2x8x1xf32>
    %535 = vector.broadcast %534 : vector<2x8x1xf32> to vector<2x8x128xf32>
    %536 = arith.mulf %526, %535 : vector<2x8x128xf32>
    %c0_182 = arith.constant 0 : index
    %c0_183 = arith.constant 0 : index
    %c0_184 = arith.constant 0 : index
    %537 = vector.load %arg25[%c0_182, %c0_183, %c0_184] : memref<2x8x128xf32, #tpu.memory_space<vmem>>, vector<2x8x128xf32>
    tpu.vector_store %arg25[%c0_182, %c0_183, %c0_184], %536 {strides = array<i32>} : memref<2x8x128xf32, #tpu.memory_space<vmem>>, vector<2x8x128xf32>,
    %538 = vector.shape_cast %536 : vector<2x8x128xf32> to vector<16x128xf32>
    %539 = arith.truncf %538 : vector<16x128xf32> to vector<16x128xbf16>
    %c0_185 = arith.constant 0 : index
    %c0_186 = arith.constant 0 : index
    %540 = vector.load %arg17[%c0_185, %c0_186] : memref<128x1152xbf16, #tpu.memory_space<vmem>>, vector<128x1152xbf16>
    %cst_187 = arith.constant dense<0.000000e+00> : vector<16x1152xf32>
    %541 = tpu.matmul %539, %540, %cst_187 {dimension_numbers = #tpu.dot_dimension_numbers<[1], [0], [0], [1], [0, 0, 1, 1], [], []>} : vector<16x128xbf16>, vector<128x1152xbf16>, vector<16x1152xf32> -> vector<16x1152xf32>
    %c0_188 = arith.constant 0 : index
    %c0_189 = arith.constant 0 : index
    %542 = vector.load %arg18[%c0_188, %c0_189] : memref<1x1152xf32, #tpu.memory_space<vmem>>, vector<1x1152xf32>
    %543 = vector.broadcast %542 : vector<1x1152xf32> to vector<16x1152xf32>
    %544 = arith.addf %541, %543 : vector<16x1152xf32>
    %545 = vector.extract_strided_slice %544 {offsets = [0, 0], sizes = [16, 128], strides = [1, 1]} : vector<16x1152xf32> to vector<16x128xf32>
    %546 = vector.shape_cast %545 : vector<16x128xf32> to vector<2x8x128xf32>
    %c0_190 = arith.constant 0 : index
    %c0_191 = arith.constant 0 : index
    %c0_192 = arith.constant 0 : index
    %547 = vector.load %arg26[%c0_190, %c0_191, %c0_192] : memref<2x8x128xf32, #tpu.memory_space<vmem>>, vector<2x8x128xf32>
    tpu.vector_store %arg26[%c0_190, %c0_191, %c0_192], %546 {strides = array<i32>} : memref<2x8x128xf32, #tpu.memory_space<vmem>>, vector<2x8x128xf32>,
    %548 = vector.extract_strided_slice %544 {offsets = [0, 128], sizes = [16, 1024], strides = [1, 1]} : vector<16x1152xf32> to vector<16x1024xf32>
    %c0_193 = arith.constant 0 : index
    %c0_194 = arith.constant 0 : index
    %549 = vector.load %arg3[%c0_193, %c0_194] : memref<16x512xf32, #tpu.memory_space<vmem>>, vector<16x512xf32>
    %cst_195 = arith.constant 0.000000e+00 : f32
    %550 = vector.broadcast %cst_195 : f32 to vector<16x128xf32>
    %cst_196 = arith.constant 0.000000e+00 : f32
    %551 = vector.broadcast %cst_196 : f32 to vector<16x128xf32>
    %552 = vector.extract_strided_slice %549 {offsets = [0, 0], sizes = [16, 128], strides = [1, 1]} : vector<16x512xf32> to vector<16x128xf32>
    %553 = vector.extract_strided_slice %548 {offsets = [0, 0], sizes = [16, 128], strides = [1, 1]} : vector<16x1024xf32> to vector<16x128xf32>
    %554 = arith.mulf %553, %552 : vector<16x128xf32>
    %555 = arith.addf %550, %554 : vector<16x128xf32>
    %556 = vector.extract_strided_slice %548 {offsets = [0, 512], sizes = [16, 128], strides = [1, 1]} : vector<16x1024xf32> to vector<16x128xf32>
    %557 = arith.mulf %556, %552 : vector<16x128xf32>
    %558 = arith.addf %551, %557 : vector<16x128xf32>
    %559 = vector.extract_strided_slice %549 {offsets = [0, 128], sizes = [16, 128], strides = [1, 1]} : vector<16x512xf32> to vector<16x128xf32>
    %560 = vector.extract_strided_slice %548 {offsets = [0, 128], sizes = [16, 128], strides = [1, 1]} : vector<16x1024xf32> to vector<16x128xf32>
    %561 = arith.mulf %560, %559 : vector<16x128xf32>
    %562 = arith.addf %555, %561 : vector<16x128xf32>
    %563 = vector.extract_strided_slice %548 {offsets = [0, 640], sizes = [16, 128], strides = [1, 1]} : vector<16x1024xf32> to vector<16x128xf32>
    %564 = arith.mulf %563, %559 : vector<16x128xf32>
    %565 = arith.addf %558, %564 : vector<16x128xf32>
    %566 = vector.extract_strided_slice %549 {offsets = [0, 256], sizes = [16, 128], strides = [1, 1]} : vector<16x512xf32> to vector<16x128xf32>
    %567 = vector.extract_strided_slice %548 {offsets = [0, 256], sizes = [16, 128], strides = [1, 1]} : vector<16x1024xf32> to vector<16x128xf32>
    %568 = arith.mulf %567, %566 : vector<16x128xf32>
    %569 = arith.addf %562, %568 : vector<16x128xf32>
    %570 = vector.extract_strided_slice %548 {offsets = [0, 768], sizes = [16, 128], strides = [1, 1]} : vector<16x1024xf32> to vector<16x128xf32>
    %571 = arith.mulf %570, %566 : vector<16x128xf32>
    %572 = arith.addf %565, %571 : vector<16x128xf32>
    %573 = vector.extract_strided_slice %549 {offsets = [0, 384], sizes = [16, 128], strides = [1, 1]} : vector<16x512xf32> to vector<16x128xf32>
    %574 = vector.extract_strided_slice %548 {offsets = [0, 384], sizes = [16, 128], strides = [1, 1]} : vector<16x1024xf32> to vector<16x128xf32>
    %575 = arith.mulf %574, %573 : vector<16x128xf32>
    %576 = arith.addf %569, %575 : vector<16x128xf32>
    %577 = vector.extract_strided_slice %548 {offsets = [0, 896], sizes = [16, 128], strides = [1, 1]} : vector<16x1024xf32> to vector<16x128xf32>
    %578 = arith.mulf %577, %573 : vector<16x128xf32>
    %579 = arith.addf %572, %578 : vector<16x128xf32>
    %580 = vector.shape_cast %576 : vector<16x128xf32> to vector<2x8x128xf32>
    %c0_197 = arith.constant 0 : index
    %c0_198 = arith.constant 0 : index
    %c0_199 = arith.constant 0 : index
    %581 = vector.load %arg28[%c0_197, %c0_198, %c0_199] : memref<2x8x128xf32, #tpu.memory_space<vmem>>, vector<2x8x128xf32>
    tpu.vector_store %arg28[%c0_197, %c0_198, %c0_199], %580 {strides = array<i32>} : memref<2x8x128xf32, #tpu.memory_space<vmem>>, vector<2x8x128xf32>,
    %582 = vector.shape_cast %579 : vector<16x128xf32> to vector<2x8x128xf32>
    %c0_200 = arith.constant 0 : index
    %c0_201 = arith.constant 0 : index
    %c0_202 = arith.constant 0 : index
    %583 = vector.load %arg29[%c0_200, %c0_201, %c0_202] : memref<2x8x128xf32, #tpu.memory_space<vmem>>, vector<2x8x128xf32>
    tpu.vector_store %arg29[%c0_200, %c0_201, %c0_202], %582 {strides = array<i32>} : memref<2x8x128xf32, #tpu.memory_space<vmem>>, vector<2x8x128xf32>,
    %c0_203 = arith.constant 0 : index
    %c0_204 = arith.constant 0 : index
    %584 = vector.load %arg4[%c0_203, %c0_204] : memref<2x4xf32, #tpu.memory_space<vmem>>, vector<2x4xf32>
    %585 = arith.truncf %584 : vector<2x4xf32> to vector<2x4xbf16>
    %c0_205 = arith.constant 0 : index
    %c0_206 = arith.constant 0 : index
    %586 = vector.load %arg19[%c0_205, %c0_206] : memref<4x128xbf16, #tpu.memory_space<vmem>>, vector<4x128xbf16>
    %cst_207 = arith.constant dense<0.000000e+00> : vector<2x128xf32>
    %587 = tpu.matmul %585, %586, %cst_207 {dimension_numbers = #tpu.dot_dimension_numbers<[1], [0], [0], [1], [0, 0, 1, 1], [], []>} : vector<2x4xbf16>, vector<4x128xbf16>, vector<2x128xf32> -> vector<2x128xf32>
    %c0_208 = arith.constant 0 : index
    %c0_209 = arith.constant 0 : index
    %588 = vector.load %arg20[%c0_208, %c0_209] : memref<1x128xf32, #tpu.memory_space<vmem>>, vector<1x128xf32>
    %589 = vector.broadcast %588 : vector<1x128xf32> to vector<2x128xf32>
    %590 = arith.addf %587, %589 : vector<2x128xf32>
    %591 = vector.extract_strided_slice %536 {offsets = [0, 0, 0], sizes = [2, 4, 128], strides = [1, 1, 1]} : vector<2x8x128xf32> to vector<2x4x128xf32>
    %592 = vector.shape_cast %590 : vector<2x128xf32> to vector<2x1x128xf32>
    %593 = vector.broadcast %592 : vector<2x1x128xf32> to vector<2x4x128xf32>
    %594 = arith.addf %591, %593 : vector<2x4x128xf32>
    %595 = vector.shape_cast %594 : vector<2x4x128xf32> to vector<8x128xf32>
    %596 = arith.truncf %595 : vector<8x128xf32> to vector<8x128xbf16>
    %c0_210 = arith.constant 0 : index
    %c0_211 = arith.constant 0 : index
    %597 = vector.load %arg21[%c0_210, %c0_211] : memref<128x64xbf16, #tpu.memory_space<vmem>>, vector<128x64xbf16>
    %cst_212 = arith.constant dense<0.000000e+00> : vector<8x64xf32>
    %598 = tpu.matmul %596, %597, %cst_212 {dimension_numbers = #tpu.dot_dimension_numbers<[1], [0], [0], [1], [0, 0, 1, 1], [], []>} : vector<8x128xbf16>, vector<128x64xbf16>, vector<8x64xf32> -> vector<8x64xf32>
    %c0_213 = arith.constant 0 : index
    %c0_214 = arith.constant 0 : index
    %599 = vector.load %arg22[%c0_213, %c0_214] : memref<1x64xf32, #tpu.memory_space<vmem>>, vector<1x64xf32>
    %600 = vector.broadcast %599 : vector<1x64xf32> to vector<8x64xf32>
    %601 = arith.addf %598, %600 : vector<8x64xf32>
    %cst_215 = arith.constant 0.000000e+00 : f32
    %602 = vector.broadcast %cst_215 : f32 to vector<8x64xf32>
    %603 = arith.maximumf %601, %602 : vector<8x64xf32>
    %cst_216 = arith.constant dense<0.000000e+00> : vector<8xf32>
    %604 = vector.multi_reduction <add>, %603, %cst_216 [1] : vector<8x64xf32> to vector<8xf32>
    %605 = vector.shape_cast %604 : vector<8xf32> to vector<8x1xf32>
    %cst_217 = arith.constant 6.400000e+01 : f32
    %606 = vector.broadcast %cst_217 : f32 to vector<8x1xf32>
    %607 = arith.divf %605, %606 : vector<8x1xf32>
    %608 = vector.broadcast %607 : vector<8x1xf32> to vector<8x64xf32>
    %609 = arith.subf %603, %608 : vector<8x64xf32>
    %610 = arith.mulf %609, %609 : vector<8x64xf32>
    %cst_218 = arith.constant dense<0.000000e+00> : vector<8xf32>
    %611 = vector.multi_reduction <add>, %610, %cst_218 [1] : vector<8x64xf32> to vector<8xf32>
    %612 = vector.shape_cast %611 : vector<8xf32> to vector<8x1xf32>
    %cst_219 = arith.constant 6.400000e+01 : f32
    %613 = vector.broadcast %cst_219 : f32 to vector<8x1xf32>
    %614 = arith.divf %612, %613 : vector<8x1xf32>
    %cst_220 = arith.constant 9.99999974E-6 : f32
    %615 = vector.broadcast %cst_220 : f32 to vector<8x1xf32>
    %616 = arith.addf %614, %615 : vector<8x1xf32>
    %617 = math.rsqrt %616 : vector<8x1xf32>
    %618 = vector.broadcast %617 : vector<8x1xf32> to vector<8x64xf32>
    %619 = arith.mulf %609, %618 : vector<8x64xf32>
    %620 = vector.shape_cast %619 : vector<8x64xf32> to vector<2x4x64xf32>
    %c0_221 = arith.constant 0 : index
    %c0_222 = arith.constant 0 : index
    %621 = vector.load %arg23[%c0_221, %c0_222] : memref<1x64xf32, #tpu.memory_space<vmem>>, vector<1x64xf32>
    %622 = vector.shape_cast %621 : vector<1x64xf32> to vector<1x1x64xf32>
    %623 = vector.broadcast %622 : vector<1x1x64xf32> to vector<2x4x64xf32>
    %624 = arith.mulf %620, %623 : vector<2x4x64xf32>
    %cst_223 = arith.constant dense<0.000000e+00> : vector<2x4xf32>
    %625 = vector.multi_reduction <add>, %624, %cst_223 [2] : vector<2x4x64xf32> to vector<2x4xf32>
    %c0_224 = arith.constant 0 : index
    %c0_225 = arith.constant 0 : index
    %626 = vector.load %arg24[%c0_224, %c0_225] : memref<1x1xf32, #tpu.memory_space<vmem>>, vector<1x1xf32>
    %627 = vector.broadcast %626 : vector<1x1xf32> to vector<2x4xf32>
    %628 = arith.addf %625, %627 : vector<2x4xf32>
    %cst_226 = arith.constant dense<0xFF800000> : vector<2xf32>
    %629 = vector.multi_reduction <maximumf>, %628, %cst_226 [1] : vector<2x4xf32> to vector<2xf32>
    %630 = vector.shape_cast %629 : vector<2xf32> to vector<2x1xf32>
    %631 = vector.broadcast %630 : vector<2x1xf32> to vector<2x4xf32>
    %632 = arith.subf %628, %631 : vector<2x4xf32>
    %633 = math.exp %632 : vector<2x4xf32>
    %cst_227 = arith.constant dense<0.000000e+00> : vector<2xf32>
    %634 = vector.multi_reduction <add>, %633, %cst_227 [1] : vector<2x4xf32> to vector<2xf32>
    %635 = vector.shape_cast %634 : vector<2xf32> to vector<2x1xf32>
    %636 = vector.broadcast %635 : vector<2x1xf32> to vector<2x4xf32>
    %637 = arith.divf %633, %636 : vector<2x4xf32>
    %cst_228 = arith.constant 0.000000e+00 : f32
    %638 = vector.broadcast %cst_228 : f32 to vector<2x124xf32>
    %639 = tpu.concatenate %637, %638 in 1 : vector<2x4xf32>, vector<2x124xf32> -> vector<2x128xf32>
    %c0_229 = arith.constant 0 : index
    %c0_230 = arith.constant 0 : index
    %640 = vector.load %arg27[%c0_229, %c0_230] : memref<2x128xf32, #tpu.memory_space<vmem>>, vector<2x128xf32>
    tpu.vector_store %arg27[%c0_229, %c0_230], %639 {strides = array<i32>} : memref<2x128xf32, #tpu.memory_space<vmem>>, vector<2x128xf32>,
    return
  }
}

</mosaic_0001>

<llo_original>
// kernel: tvae_point_encoder_forward.1
$region0: #{tvae_point_encoder_forward.1}
  #allocation0 [shape = 'u32[]', space=smem, size = 0x4, offset = 0x4, fixed_abs, tag = 'smem constant byte address 0x4 - core index']
  #allocation1 [shape = 'u32[144,128]{1,0:T(1,128)}', space=vmem, size = 0x12000, scoped, tag = 'internal scratch']
  #allocation2 [shape = 'f32[1,1]{1,0:T(1,128)S(1)}', space=vmem, size = 0x200, scoped, tag = 'scoped memory for tvae_point_encoder_forward.1']
  %s0 = inlined_call_operand.smem [shape: u32[30], index: -1, kind: input, shape index: {}]
  %s1 = sld [smem:[%s0]]
  %s2 = scalar_lea.smem %s0, 1
  %s3 = sld [smem:[%s2]]
  %s4 = scalar_lea.smem %s0, 2
  %s5 = sld [smem:[%s4]]
  %s6 = scalar_lea.smem %s0, 3
  %s7 = sld [smem:[%s6]]
  %s8 = scalar_lea.smem %s0, 4
  %s9 = sld [smem:[%s8]]
  %s10 = scalar_lea.smem %s0, 5
  %s11 = sld [smem:[%s10]]
  %s12 = scalar_lea.smem %s0, 6
  %s13 = sld [smem:[%s12]]
  %s14 = scalar_lea.smem %s0, 7
  %s15 = sld [smem:[%s14]]
  %s16 = scalar_lea.smem %s0, 8
  %s17 = sld [smem:[%s16]]
  %s18 = scalar_lea.smem %s0, 9
  %s19 = sld [smem:[%s18]]
  %s20 = scalar_lea.smem %s0, 10
  %s21 = sld [smem:[%s20]]
  %s22 = scalar_lea.smem %s0, 11
  %s23 = sld [smem:[%s22]]
  %s24 = scalar_lea.smem %s0, 12
  %s25 = sld [smem:[%s24]]
  %s26 = scalar_lea.smem %s0, 13
  %s27 = sld [smem:[%s26]]
  %s28 = scalar_lea.smem %s0, 14
  %s29 = sld [smem:[%s28]]
  %s30 = scalar_lea.smem %s0, 15
  %s31 = sld [smem:[%s30]]
  %s32 = scalar_lea.smem %s0, 16
  %s33 = sld [smem:[%s32]]
  %s34 = scalar_lea.smem %s0, 17
  %s35 = sld [smem:[%s34]]
  %s36 = scalar_lea.smem %s0, 18
  %s37 = sld [smem:[%s36]]
  %s38 = scalar_lea.smem %s0, 19
  %s39 = sld [smem:[%s38]]
  %s40 = scalar_lea.smem %s0, 20
  %s41 = sld [smem:[%s40]]
  %s42 = scalar_lea.smem %s0, 21
  %s43 = sld [smem:[%s42]]
  %s44 = scalar_lea.smem %s0, 22
  %s45 = sld [smem:[%s44]]
  %s46 = scalar_lea.smem %s0, 23
  %s47 = sld [smem:[%s46]]
  %s48 = scalar_lea.smem %s0, 24
  %s49 = sld [smem:[%s48]]
  %s50 = scalar_lea.smem %s0, 25
  %s51 = sld [smem:[%s50]]
  %s52 = scalar_lea.smem %s0, 26
  %s53 = sld [smem:[%s52]]
  %s54 = scalar_lea.smem %s0, 27
  %s55 = sld [smem:[%s54]]
  %s56 = scalar_lea.smem %s0, 28
  %s57 = sld [smem:[%s56]]
  %s58 = scalar_lea.smem %s0, 29
  %s59 = sld [smem:[%s58]]
  %60 = xla_tuple %s51, %s53, %s55, %s57, %s59
  %s61 = sld [smem:[#allocation0]]
  $region150: #{tvae_point_encoder_forward.1} parent=0
    _
  %s63 = ssub.s32 1, %s61
  %s64 = scalar_select 0, %s63, %s61
  %v65 = vstv %s49
  %66 = vst [vmem:[#allocation2] sm:$0x1] %v65
  $region1: #{tvae_point_encoder_forward.1} parent=0
    #allocation3 [shape = 'u8[294912]{0}', space=vmem, size = 0x48000, scoped, tag = 'input window, operand 9, single buffered']
    #allocation4 [shape = 's32[1]{0}', space=sflag, size = 0x4, scoped, tag = 'scoped memory for tvae_point_encoder_forward.1']
    #allocation5 [shape = 's32[1]{0}', space=sflag, size = 0x4, scoped, tag = 'scoped memory for tvae_point_encoder_forward.1']
    #allocation6 [shape = 'u8[294912]{0}', space=vmem, size = 0x48000, scoped, tag = 'input window, operand 17, single buffered']
    #allocation7 [shape = 's32[1]{0}', space=sflag, size = 0x4, scoped, tag = 'scoped memory for tvae_point_encoder_forward.1']
    #allocation8 [shape = 'u8[8192]{0}', space=vmem, size = 0x2000, scoped, tag = 'output window, operand 0, single buffered']
    #allocation9 [shape = 'u8[8192]{0}', space=vmem, size = 0x2000, scoped, tag = 'output window, operand 1, single buffered']
    #allocation10 [shape = 's32[1]{0}', space=sflag, size = 0x4, scoped, tag = 'scoped memory for tvae_point_encoder_forward.1']
    #allocation11 [shape = 'u8[1024]{0}', space=vmem, size = 0x400, scoped, tag = 'output window, operand 2, single buffered']
    #allocation12 [shape = 'u8[8192]{0}', space=vmem, size = 0x2000, scoped, tag = 'output window, operand 3, single buffered']
    #allocation13 [shape = 's32[1]{0}', space=sflag, size = 0x4, scoped, tag = 'scoped memory for tvae_point_encoder_forward.1']
    #allocation14 [shape = 'u8[8192]{0}', space=vmem, size = 0x2000, scoped, tag = 'output window, operand 4, single buffered']
    %67 = vsyncpa [#allocation4], 0
    %68 = vsyncpa [#allocation7], 0
    %69 = vsyncpa [#allocation5], 0
    %70 = vsyncpa [#allocation10], 0
    %71 = vsyncpa [#allocation13], 0
    // Predicated region
    $region2: #{tvae_point_encoder_forward.1} parent=1 // pred_check
      _
    $region3: #{tvae_point_encoder_forward.1} parent=1 // pred_check_branch
      %73 = sbr.rel (0) target = $region5
    $region4: #{tvae_point_encoder_forward.1} parent=1 // pred_region
      _
    $region5: #{tvae_point_encoder_forward.1} parent=1 // pred_fallthru
      _
    // Predicated region
    $region6: #{tvae_point_encoder_forward.1} parent=1 // pred_check
      _
    $region7: #{tvae_point_encoder_forward.1} parent=1 // pred_check_branch
      %75 = sbr.rel (0) target = $region9
    $region8: #{tvae_point_encoder_forward.1} parent=1 // pred_region
      _
    $region9: #{tvae_point_encoder_forward.1} parent=1 // pred_fallthru
      _
    // Predicated region
    $region10: #{tvae_point_encoder_forward.1} parent=1 // pred_check
      _
    $region11: #{tvae_point_encoder_forward.1} parent=1 // pred_check_branch
      %77 = sbr.rel (0) target = $region13
    $region12: #{tvae_point_encoder_forward.1} parent=1 // pred_region
      _
    $region13: #{tvae_point_encoder_forward.1} parent=1 // pred_fallthru
      _
    // Predicated region
    $region14: #{tvae_point_encoder_forward.1} parent=1 // pred_check
      _
    $region15: #{tvae_point_encoder_forward.1} parent=1 // pred_check_branch
      %79 = sbr.rel (0) target = $region17
    $region16: #{tvae_point_encoder_forward.1} parent=1 // pred_region
      _
    $region17: #{tvae_point_encoder_forward.1} parent=1 // pred_fallthru
      _
    // Predicated region
    $region18: #{tvae_point_encoder_forward.1} parent=1 // pred_check
      _
    $region19: #{tvae_point_encoder_forward.1} parent=1 // pred_check_branch
      %81 = sbr.rel (0) target = $region21
    $region20: #{tvae_point_encoder_forward.1} parent=1 // pred_region
      _
    $region21: #{tvae_point_encoder_forward.1} parent=1 // pred_fallthru
      _
    // Predicated region
    $region22: #{tvae_point_encoder_forward.1} parent=1 // pred_check
      _
    $region23: #{tvae_point_encoder_forward.1} parent=1 // pred_check_branch
      %83 = sbr.rel (0) target = $region25
    $region24: #{tvae_point_encoder_forward.1} parent=1 // pred_region
      _
    $region25: #{tvae_point_encoder_forward.1} parent=1 // pred_fallthru
      _
    // Predicated region
    $region26: #{tvae_point_encoder_forward.1} parent=1 // pred_check
      _
    $region27: #{tvae_point_encoder_forward.1} parent=1 // pred_check_branch
      %85 = sbr.rel (0) target = $region29
    $region28: #{tvae_point_encoder_forward.1} parent=1 // pred_region
      _
    $region29: #{tvae_point_encoder_forward.1} parent=1 // pred_fallthru
      _
    // Predicated region
    $region30: #{tvae_point_encoder_forward.1} parent=1 // pred_check
      _
    $region31: #{tvae_point_encoder_forward.1} parent=1 // pred_check_branch
      %87 = sbr.rel (0) target = $region33
    $region32: #{tvae_point_encoder_forward.1} parent=1 // pred_region
      _
    $region33: #{tvae_point_encoder_forward.1} parent=1 // pred_fallthru
      _
    // Predicated region
    $region34: #{tvae_point_encoder_forward.1} parent=1 // pred_check
      _
    $region35: #{tvae_point_encoder_forward.1} parent=1 // pred_check_branch
      %89 = sbr.rel (0) target = $region37
    $region36: #{tvae_point_encoder_forward.1} parent=1 // pred_region
      _
    $region37: #{tvae_point_encoder_forward.1} parent=1 // pred_fallthru
      _
    // Predicated region
    $region38: #{tvae_point_encoder_forward.1} parent=1 // pred_check
      _
    $region39: #{tvae_point_encoder_forward.1} parent=1 // pred_check_branch
      %91 = sbr.rel (0) target = $region41
    $region40: #{tvae_point_encoder_forward.1} parent=1 // pred_region
      %s93 = ssub.s32 9216, 9216
      %94 = vsyncadd [#allocation4], %s93
      %s95 = sshll.u32 [#allocation3], 4
      %s96 = int_to_ptr.vmem [resolvable:$true] %s95
      %101 = dma.hbm_to_vmem [thread:$0]  %s19, 9216, %s96, [#allocation4], 192, 192, 12
    $region41: #{tvae_point_encoder_forward.1} parent=1 // pred_fallthru
      _
    // Predicated region
    $region42: #{tvae_point_encoder_forward.1} parent=1 // pred_check
      _
    $region43: #{tvae_point_encoder_forward.1} parent=1 // pred_check_branch
      %103 = sbr.rel (0) target = $region45
    $region44: #{tvae_point_encoder_forward.1} parent=1 // pred_region
      _
    $region45: #{tvae_point_encoder_forward.1} parent=1 // pred_fallthru
      _
    // Predicated region
    $region46: #{tvae_point_encoder_forward.1} parent=1 // pred_check
      _
    $region47: #{tvae_point_encoder_forward.1} parent=1 // pred_check_branch
      %105 = sbr.rel (0) target = $region49
    $region48: #{tvae_point_encoder_forward.1} parent=1 // pred_region
      _
    $region49: #{tvae_point_encoder_forward.1} parent=1 // pred_fallthru
      _
    // Predicated region
    $region50: #{tvae_point_encoder_forward.1} parent=1 // pred_check
      _
    $region51: #{tvae_point_encoder_forward.1} parent=1 // pred_check_branch
      %107 = sbr.rel (0) target = $region53
    $region52: #{tvae_point_encoder_forward.1} parent=1 // pred_region
      _
    $region53: #{tvae_point_encoder_forward.1} parent=1 // pred_fallthru
      _
    // Predicated region
    $region54: #{tvae_point_encoder_forward.1} parent=1 // pred_check
      _
    $region55: #{tvae_point_encoder_forward.1} parent=1 // pred_check_branch
      %109 = sbr.rel (0) target = $region57
    $region56: #{tvae_point_encoder_forward.1} parent=1 // pred_region
      _
    $region57: #{tvae_point_encoder_forward.1} parent=1 // pred_fallthru
      _
    // Predicated region
    $region58: #{tvae_point_encoder_forward.1} parent=1 // pred_check
      _
    $region59: #{tvae_point_encoder_forward.1} parent=1 // pred_check_branch
      %111 = sbr.rel (0) target = $region61
    $region60: #{tvae_point_encoder_forward.1} parent=1 // pred_region
      _
    $region61: #{tvae_point_encoder_forward.1} parent=1 // pred_fallthru
      _
    // Predicated region
    $region62: #{tvae_point_encoder_forward.1} parent=1 // pred_check
      _
    $region63: #{tvae_point_encoder_forward.1} parent=1 // pred_check_branch
      %113 = sbr.rel (0) target = $region65
    $region64: #{tvae_point_encoder_forward.1} parent=1 // pred_region
      _
    $region65: #{tvae_point_encoder_forward.1} parent=1 // pred_fallthru
      _
    // Predicated region
    $region66: #{tvae_point_encoder_forward.1} parent=1 // pred_check
      _
    $region67: #{tvae_point_encoder_forward.1} parent=1 // pred_check_branch
      %115 = sbr.rel (0) target = $region69
    $region68: #{tvae_point_encoder_forward.1} parent=1 // pred_region
      _
    $region69: #{tvae_point_encoder_forward.1} parent=1 // pred_fallthru
      _
    // Predicated region
    $region70: #{tvae_point_encoder_forward.1} parent=1 // pred_check
      _
    $region71: #{tvae_point_encoder_forward.1} parent=1 // pred_check_branch
      %117 = sbr.rel (0) target = $region73
    $region72: #{tvae_point_encoder_forward.1} parent=1 // pred_region
      %s119 = ssub.s32 9216, 9216
      %120 = vsyncadd [#allocation7], %s119
      %s121 = sshll.u32 [#allocation6], 4
      %s122 = int_to_ptr.vmem [resolvable:$true] %s121
      %127 = dma.hbm_to_vmem [thread:$0]  %s35, 9216, %s122, [#allocation7], 576, 576, 36
    $region73: #{tvae_point_encoder_forward.1} parent=1 // pred_fallthru
      _
    // Predicated region
    $region74: #{tvae_point_encoder_forward.1} parent=1 // pred_check
      _
    $region75: #{tvae_point_encoder_forward.1} parent=1 // pred_check_branch
      %129 = sbr.rel (0) target = $region77
    $region76: #{tvae_point_encoder_forward.1} parent=1 // pred_region
      _
    $region77: #{tvae_point_encoder_forward.1} parent=1 // pred_fallthru
      _
    // Predicated region
    $region78: #{tvae_point_encoder_forward.1} parent=1 // pred_check
      _
    $region79: #{tvae_point_encoder_forward.1} parent=1 // pred_check_branch
      %131 = sbr.rel (0) target = $region81
    $region80: #{tvae_point_encoder_forward.1} parent=1 // pred_region
      _
    $region81: #{tvae_point_encoder_forward.1} parent=1 // pred_fallthru
      _
    // Predicated region
    $region82: #{tvae_point_encoder_forward.1} parent=1 // pred_check
      _
    $region83: #{tvae_point_encoder_forward.1} parent=1 // pred_check_branch
      %133 = sbr.rel (0) target = $region85
    $region84: #{tvae_point_encoder_forward.1} parent=1 // pred_region
      _
    $region85: #{tvae_point_encoder_forward.1} parent=1 // pred_fallthru
      _
    // Predicated region
    $region86: #{tvae_point_encoder_forward.1} parent=1 // pred_check
      _
    $region87: #{tvae_point_encoder_forward.1} parent=1 // pred_check_branch
      %135 = sbr.rel (0) target = $region89
    $region88: #{tvae_point_encoder_forward.1} parent=1 // pred_region
      _
    $region89: #{tvae_point_encoder_forward.1} parent=1 // pred_fallthru
      _
    // Predicated region
    $region90: #{tvae_point_encoder_forward.1} parent=1 // pred_check
      _
    $region91: #{tvae_point_encoder_forward.1} parent=1 // pred_check_branch
      %137 = sbr.rel (0) target = $region93
    $region92: #{tvae_point_encoder_forward.1} parent=1 // pred_region
      _
    $region93: #{tvae_point_encoder_forward.1} parent=1 // pred_fallthru
      _
    // Predicated region
    $region94: #{tvae_point_encoder_forward.1} parent=1 // pred_check
      _
    $region95: #{tvae_point_encoder_forward.1} parent=1 // pred_check_branch
      %139 = sbr.rel (0) target = $region97
    $region96: #{tvae_point_encoder_forward.1} parent=1 // pred_region
      _
    $region97: #{tvae_point_encoder_forward.1} parent=1 // pred_fallthru
      _
    // Predicated region
    $region98: #{tvae_point_encoder_forward.1} parent=1 // pred_check
      _
    $region99: #{tvae_point_encoder_forward.1} parent=1 // pred_check_branch
      %141 = sbr.rel (0) target = $region101
    $region100: #{tvae_point_encoder_forward.1} parent=1 // pred_region
      _
    $region101: #{tvae_point_encoder_forward.1} parent=1 // pred_fallthru
      _
    // Predicated region
    $region102: #{tvae_point_encoder_forward.1} parent=1 // pred_check
      _
    $region103: #{tvae_point_encoder_forward.1} parent=1 // pred_check_branch
      %143 = sbr.rel (0) target = $region105
    $region104: #{tvae_point_encoder_forward.1} parent=1 // pred_region
      %144 = dma.done [#allocation4], 9216
    $region105: #{tvae_point_encoder_forward.1} parent=1 // pred_fallthru
      _
    // Predicated region
    $region106: #{tvae_point_encoder_forward.1} parent=1 // pred_check
      _
    $region107: #{tvae_point_encoder_forward.1} parent=1 // pred_check_branch
      %146 = sbr.rel (0) target = $region109
    $region108: #{tvae_point_encoder_forward.1} parent=1 // pred_region
      %147 = dma.done [#allocation7], 9216
    $region109: #{tvae_point_encoder_forward.1} parent=1 // pred_fallthru
      _
    %v149 = vld [vmem:[%s3] sm:$0xff]
    %v150 = vld [vmem:[%s3 + $0x8] sm:$0xff]
    %v151 = vld [vmem:[%s3 + $0x10] sm:$0xff]
    %v152 = vld [vmem:[%s3 + $0x18] sm:$0xff]
    %v153 = vld [vmem:[%s3 + $0x20] sm:$0xff]
    %v154 = vld [vmem:[%s3 + $0x28] sm:$0xff]
    %v155 = vld [vmem:[%s3 + $0x30] sm:$0xff]
    %v156 = vld [vmem:[%s3 + $0x38] sm:$0xff]
    %v157 = vld [vmem:[%s1] sm:$0xff]
    %v158 = vld [vmem:[%s1 + $0x8] sm:$0xff]
    %159 = vadd.xlane.f32.xlu0 %v157
    %v160 = vpop.xlane.xlu0 %159
    %161 = vadd.xlane.f32.xlu0 %v158
    %v162 = vpop.xlane.xlu0 %161
    %v163 = vrcp.pop 128.0
    %v164 = vmul.f32 %v160, %v163
    %v165 = vmul.f32 %v162, %v163
    %v166 = vsub.f32 %v157, %v164
    %v167 = vsub.f32 %v158, %v165
    %v168 = vmul.f32 %v166, %v166
    %v169 = vmul.f32 %v167, %v167
    %170 = vadd.xlane.f32.xlu0 %v168
    %v171 = vpop.xlane.xlu0 %170
    %172 = vadd.xlane.f32.xlu0 %v169
    %v173 = vpop.xlane.xlu0 %172
    %v174 = vmul.f32 %v171, %v163
    %v175 = vmul.f32 %v173, %v163
    %v176 = vadd.f32 %v174, 1e-12
    %v177 = vadd.f32 %v175, 1e-12
    %v178 = vrsqrt.pop %v176
    %v179 = vrsqrt.pop %v177
    %v180 = vmul.f32 %v166, %v178
    %v181 = vmul.f32 %v167, %v179
    %v182 = vld [vmem:[%s11] sm:$0x1]
    %v183 = vld [vmem:[%s13] sm:$0x1]
    %184 = vadd.xlane.f32.xlu0 %v180
    %v185 = vpop.xlane.xlu0 %184
    %186 = vadd.xlane.f32.xlu0 %v181
    %v187 = vpop.xlane.xlu0 %186
    %v188 = vmul.f32 %v185, %v163
    %v189 = vmul.f32 %v187, %v163
    %v190 = vsub.f32 %v180, %v188
    %v191 = vsub.f32 %v181, %v189
    %v192 = vmul.f32 %v190, %v190
    %v193 = vmul.f32 %v191, %v191
    %194 = vadd.xlane.f32.xlu0 %v192
    %v195 = vpop.xlane.xlu0 %194
    %196 = vadd.xlane.f32.xlu0 %v193
    %v197 = vpop.xlane.xlu0 %196
    %v198 = vmul.f32 %v195, %v163
    %v199 = vmul.f32 %v197, %v163
    %v200 = vadd.f32 %v198, 1e-05
    %v201 = vadd.f32 %v199, 1e-05
    %v202 = vrsqrt.pop %v200
    %v203 = vrsqrt.pop %v201
    %v204 = vmul.f32 %v190, %v202
    %v205 = vmul.f32 %v191, %v203
    %v207 = vlaneseq
    %v208 = vshrl.u32 %v207, 7
    %v209 = vsub.s32 0, %v208
    %v210 = vrot.slane %v182, %v209
    %v212 = vmul.f32 %v204, %v210
    %v213 = vmul.f32 %v205, %v210
    %v215 = vlaneseq
    %v216 = vshrl.u32 %v215, 7
    %v217 = vsub.s32 0, %v216
    %v218 = vrot.slane %v183, %v217
    %v220 = vadd.f32 %v212, %v218
    %v221 = vadd.f32 %v213, %v218
    %v222 = vpack.c.bf16 %v221, %v220
    %v223 = vld [vmem:[#allocation3] sm:$0xff]
    %v224 = vld [vmem:[#allocation3 + $0x8] sm:$0xf]
    %v225 = vld [vmem:[#allocation3 + $0xc] sm:$0xff]
    %v226 = vld [vmem:[#allocation3 + $0x14] sm:$0xf]
    %v227 = vld [vmem:[#allocation3 + $0x18] sm:$0xff]
    %v228 = vld [vmem:[#allocation3 + $0x20] sm:$0xf]
    %v229 = vld [vmem:[#allocation3 + $0x24] sm:$0xff]
    %v230 = vld [vmem:[#allocation3 + $0x2c] sm:$0xf]
    %v231 = vld [vmem:[#allocation3 + $0x30] sm:$0xff]
    %v232 = vld [vmem:[#allocation3 + $0x38] sm:$0xf]
    %v233 = vld [vmem:[#allocation3 + $0x3c] sm:$0xff]
    %v234 = vld [vmem:[#allocation3 + $0x44] sm:$0xf]
    %v235 = vld [vmem:[#allocation3 + $0x48] sm:$0xff]
    %v236 = vld [vmem:[#allocation3 + $0x50] sm:$0xf]
    %v237 = vld [vmem:[#allocation3 + $0x54] sm:$0xff]
    %v238 = vld [vmem:[#allocation3 + $0x5c] sm:$0xf]
    %v239 = vld [vmem:[#allocation3 + $0x60] sm:$0xff]
    %v240 = vld [vmem:[#allocation3 + $0x68] sm:$0xf]
    %v241 = vld [vmem:[#allocation3 + $0x6c] sm:$0xff]
    %v242 = vld [vmem:[#allocation3 + $0x74] sm:$0xf]
    %v243 = vld [vmem:[#allocation3 + $0x78] sm:$0xff]
    %v244 = vld [vmem:[#allocation3 + $0x80] sm:$0xf]
    %v245 = vld [vmem:[#allocation3 + $0x84] sm:$0xff]
    %v246 = vld [vmem:[#allocation3 + $0x8c] sm:$0xf]
    %v247 = vld [vmem:[#allocation3 + $0x90] sm:$0xff]
    %v248 = vld [vmem:[#allocation3 + $0x98] sm:$0xf]
    %v249 = vld [vmem:[#allocation3 + $0x9c] sm:$0xff]
    %v250 = vld [vmem:[#allocation3 + $0xa4] sm:$0xf]
    %v251 = vld [vmem:[#allocation3 + $0xa8] sm:$0xff]
    %v252 = vld [vmem:[#allocation3 + $0xb0] sm:$0xf]
    %v253 = vld [vmem:[#allocation3 + $0xb4] sm:$0xff]
    %v254 = vld [vmem:[#allocation3 + $0xbc] sm:$0xf]
    %v255 = vld [vmem:[%s21] sm:$0x7]
    %v257 = vlaneseq
    %v258 = vshrl.u32 %v257, 7
    %v259 = vsub.s32 0, %v258
    %v260 = vrot.slane %v255, %v259
    %v261 = vlaneseq
    %v262 = vshrl.u32 %v261, 7
    %v263 = vsub.s32 1, %v262
    %v264 = vrot.slane %v255, %v263
    %v265 = vlaneseq
    %v266 = vshrl.u32 %v265, 7
    %v267 = vsub.s32 2, %v266
    %v268 = vrot.slane %v255, %v267
    %v304 = vunpack.c.l.b16 %v223
    %v305 = vunpack.c.h.b16 %v223
    %v306 = vunpack.c.l.b16 %v224
    %v307 = vunpack.c.l.b16 %v225
    %v308 = vunpack.c.h.b16 %v225
    %v309 = vunpack.c.l.b16 %v226
    %v310 = vunpack.c.l.b16 %v227
    %v311 = vunpack.c.h.b16 %v227
    %v312 = vunpack.c.l.b16 %v228
    %v313 = vunpack.c.l.b16 %v229
    %v314 = vunpack.c.h.b16 %v229
    %v315 = vunpack.c.l.b16 %v230
    %v316 = vunpack.c.l.b16 %v231
    %v317 = vunpack.c.h.b16 %v231
    %v318 = vunpack.c.l.b16 %v232
    %v319 = vunpack.c.l.b16 %v233
    %v320 = vunpack.c.h.b16 %v233
    %v321 = vunpack.c.l.b16 %v234
    %v322 = vunpack.c.l.b16 %v235
    %v323 = vunpack.c.h.b16 %v235
    %v324 = vunpack.c.l.b16 %v236
    %v325 = vunpack.c.l.b16 %v237
    %v326 = vunpack.c.h.b16 %v237
    %v327 = vunpack.c.l.b16 %v238
    %v328 = vunpack.c.l.b16 %v239
    %v329 = vunpack.c.h.b16 %v239
    %v330 = vunpack.c.l.b16 %v240
    %v331 = vunpack.c.l.b16 %v241
    %v332 = vunpack.c.h.b16 %v241
    %v333 = vunpack.c.l.b16 %v242
    %v334 = vunpack.c.l.b16 %v243
    %v335 = vunpack.c.h.b16 %v243
    %v336 = vunpack.c.l.b16 %v244
    %v337 = vunpack.c.l.b16 %v245
    %v338 = vunpack.c.h.b16 %v245
    %v339 = vunpack.c.l.b16 %v246
    %v340 = vunpack.c.l.b16 %v247
    %v341 = vunpack.c.h.b16 %v247
    %v342 = vunpack.c.l.b16 %v248
    %v343 = vunpack.c.l.b16 %v249
    %v344 = vunpack.c.h.b16 %v249
    %v345 = vunpack.c.l.b16 %v250
    %v346 = vunpack.c.l.b16 %v251
    %v347 = vunpack.c.h.b16 %v251
    %v348 = vunpack.c.l.b16 %v252
    %v349 = vunpack.c.l.b16 %v253
    %v350 = vunpack.c.h.b16 %v253
    %v351 = vunpack.c.l.b16 %v254
    %v352 = vpack.c.b16 %v307, %v304
    %v353 = vpack.c.b16 %v308, %v305
    %v354 = vpack.c.b16 %v309, %v306
    %v355 = vpack.c.b16 %v313, %v310
    %v356 = vpack.c.b16 %v314, %v311
    %v357 = vpack.c.b16 %v315, %v312
    %v358 = vpack.c.b16 %v319, %v316
    %v359 = vpack.c.b16 %v320, %v317
    %v360 = vpack.c.b16 %v321, %v318
    %v361 = vpack.c.b16 %v325, %v322
    %v362 = vpack.c.b16 %v326, %v323
    %v363 = vpack.c.b16 %v327, %v324
    %v364 = vpack.c.b16 %v331, %v328
    %v365 = vpack.c.b16 %v332, %v329
    %v366 = vpack.c.b16 %v333, %v330
    %v367 = vpack.c.b16 %v337, %v334
    %v368 = vpack.c.b16 %v338, %v335
    %v369 = vpack.c.b16 %v339, %v336
    %v370 = vpack.c.b16 %v343, %v340
    %v371 = vpack.c.b16 %v344, %v341
    %v372 = vpack.c.b16 %v345, %v342
    %v373 = vpack.c.b16 %v349, %v346
    %v374 = vpack.c.b16 %v350, %v347
    %v375 = vpack.c.b16 %v351, %v348
    %400 = vmatprep.subr.bf16.mxu0 %v353
    %401 = vmatpush1.bf16.msra.mxu0 %v352
    %402 = vmatprep.subr.bf16.mxu0 %v356
    %403 = vmatpush1.bf16.msra.mxu0 %v355
    %404 = vmatprep.subr.bf16.mxu0 %v359
    %405 = vmatpush1.bf16.msra.mxu0 %v358
    %406 = vmatprep.subr.bf16.mxu0 %v362
    %407 = vmatpush1.bf16.msra.mxu0 %v361
    %408 = vmatprep.subr.bf16.mxu0 %v365
    %409 = vmatpush1.bf16.msra.mxu0 %v364
    %410 = vmatprep.subr.bf16.mxu0 %v368
    %411 = vmatpush1.bf16.msra.mxu0 %v367
    %412 = vmatprep.subr.bf16.mxu0 %v371
    %413 = vmatpush1.bf16.msra.mxu0 %v370
    %414 = vmatprep.subr.bf16.mxu0 %v374
    %415 = vmatpush1.bf16.msra.mxu0 %v373
    %416 = vmatprep.subr.bf16.mxu0 0
    %417 = vmatpush1.bf16.msra.mxu0 0
    %418 = vmatprep.subr.bf16.mxu0 0
    %419 = vmatpush1.bf16.msra.mxu0 0
    %420 = vmatprep.subr.bf16.mxu0 0
    %421 = vmatpush1.bf16.msra.mxu0 0
    %422 = vmatprep.subr.bf16.mxu0 0
    %423 = vmatpush1.bf16.msra.mxu0 0
    %424 = vmatprep.subr.bf16.mxu0 0
    %425 = vmatpush1.bf16.msra.mxu0 0
    %426 = vmatprep.subr.bf16.mxu0 0
    %427 = vmatpush1.bf16.msra.mxu0 0
    %428 = vmatprep.subr.bf16.mxu0 0
    %429 = vmatpush1.bf16.msra.mxu0 0
    %430 = vmatprep.subr.bf16.mxu0 0
    %431 = vmatpush1.bf16.msra.mxu0 0
    %432 = vmatprep.mubr.bf16.mxu0 0
    %433 = vmatmul.mubr.bf16.gmra.mrb[0].mxu0 %v222
    %v434 = vpop.f32.mrb[0].mxu0
    %v435 = vadd.f32 %v260, %v434
    %v436 = vpop.f32.mrb[0].mxu0
    %v437 = vadd.f32 %v264, %v436
    %v438 = vpop.f32.mrb[0].mxu0
    %v439 = vadd.f32 %v260, %v438
    %v440 = vpop.f32.mrb[0].mxu0
    %v441 = vadd.f32 %v264, %v440
    %442 = vdwg.mxu0
    %443 = vmatprep.subr.bf16.mxu0 0
    %444 = vmatpush1.bf16.msra.mxu0 %v354
    %445 = vmatprep.subr.bf16.mxu0 0
    %446 = vmatpush1.bf16.msra.mxu0 %v357
    %447 = vmatprep.subr.bf16.mxu0 0
    %448 = vmatpush1.bf16.msra.mxu0 %v360
    %449 = vmatprep.subr.bf16.mxu0 0
    %450 = vmatpush1.bf16.msra.mxu0 %v363
    %451 = vmatprep.subr.bf16.mxu0 0
    %452 = vmatpush1.bf16.msra.mxu0 %v366
    %453 = vmatprep.subr.bf16.mxu0 0
    %454 = vmatpush1.bf16.msra.mxu0 %v369
    %455 = vmatprep.subr.bf16.mxu0 0
    %456 = vmatpush1.bf16.msra.mxu0 %v372
    %457 = vmatprep.subr.bf16.mxu0 0
    %458 = vmatpush1.bf16.msra.mxu0 %v375
    %459 = vmatprep.subr.bf16.mxu0 0
    %460 = vmatpush1.bf16.msra.mxu0 0
    %461 = vmatprep.subr.bf16.mxu0 0
    %462 = vmatpush1.bf16.msra.mxu0 0
    %463 = vmatprep.subr.bf16.mxu0 0
    %464 = vmatpush1.bf16.msra.mxu0 0
    %465 = vmatprep.subr.bf16.mxu0 0
    %466 = vmatpush1.bf16.msra.mxu0 0
    %467 = vmatprep.subr.bf16.mxu0 0
    %468 = vmatpush1.bf16.msra.mxu0 0
    %469 = vmatprep.subr.bf16.mxu0 0
    %470 = vmatpush1.bf16.msra.mxu0 0
    %471 = vmatprep.subr.bf16.mxu0 0
    %472 = vmatpush1.bf16.msra.mxu0 0
    %473 = vmatprep.subr.bf16.mxu0 0
    %474 = vmatpush1.bf16.msra.mxu0 0
    %475 = vmatprep.mubr.bf16.mxu0 0
    %476 = vmatmul.mubr.bf16.gmra.mrb[0].mxu0 %v222
    %v477 = vpop.f32.mrb[0].mxu0
    %v478 = vadd.f32 %v268, %v477
    %v479 = vpop.f32.mrb[0].mxu0
    %v480 = vpop.f32.mrb[0].mxu0
    %v481 = vadd.f32 %v268, %v480
    %v482 = vpop.f32.mrb[0].mxu0
    %483 = vdwg.mxu0
    %486 = vrot.lane.b32.xlu0 %v435, 96
    %v487 = vpop.permute.xlu0 %486
    %488 = vrot.lane.b32.xlu0 %v439, 96
    %v489 = vpop.permute.xlu0 %488
    %492 = vrot.lane.b32.xlu0 %v435, 64
    %v493 = vpop.permute.xlu0 %492
    %494 = vrot.lane.b32.xlu0 %v439, 64
    %v495 = vpop.permute.xlu0 %494
    %498 = vrot.lane.b32.xlu0 %v435, 32
    %v499 = vpop.permute.xlu0 %498
    %500 = vrot.lane.b32.xlu0 %v439, 32
    %v501 = vpop.permute.xlu0 %500
    %v504 = vpack.c.bf16 %v487, %v435
    %v505 = vpack.c.bf16 %v499, %v493
    %v506 = vpack.c.bf16 %v489, %v439
    %v507 = vpack.c.bf16 %v501, %v495
    %510 = vrot.lane.b32.xlu0 %v437, 96
    %v511 = vpop.permute.xlu0 %510
    %512 = vrot.lane.b32.xlu0 %v441, 96
    %v513 = vpop.permute.xlu0 %512
    %516 = vrot.lane.b32.xlu0 %v437, 64
    %v517 = vpop.permute.xlu0 %516
    %518 = vrot.lane.b32.xlu0 %v441, 64
    %v519 = vpop.permute.xlu0 %518
    %522 = vrot.lane.b32.xlu0 %v437, 32
    %v523 = vpop.permute.xlu0 %522
    %524 = vrot.lane.b32.xlu0 %v441, 32
    %v525 = vpop.permute.xlu0 %524
    %v528 = vpack.c.bf16 %v511, %v437
    %v529 = vpack.c.bf16 %v523, %v517
    %v530 = vpack.c.bf16 %v513, %v441
    %v531 = vpack.c.bf16 %v525, %v519
    %534 = vrot.lane.b32.xlu0 %v478, 96
    %v535 = vpop.permute.xlu0 %534
    %536 = vrot.lane.b32.xlu0 %v481, 96
    %v537 = vpop.permute.xlu0 %536
    %540 = vrot.lane.b32.xlu0 %v478, 64
    %v541 = vpop.permute.xlu0 %540
    %542 = vrot.lane.b32.xlu0 %v481, 64
    %v543 = vpop.permute.xlu0 %542
    %546 = vrot.lane.b32.xlu0 %v478, 32
    %v547 = vpop.permute.xlu0 %546
    %548 = vrot.lane.b32.xlu0 %v481, 32
    %v549 = vpop.permute.xlu0 %548
    %v552 = vpack.c.bf16 %v535, %v478
    %v553 = vpack.c.bf16 %v547, %v541
    %v554 = vpack.c.bf16 %v537, %v481
    %v555 = vpack.c.bf16 %v549, %v543
    %vm556 = vcmask 261120
    %v558 = vsel %vm556, %v504, 0
    %v561 = vsel %vm556, %v505, 0
    %v564 = vsel %vm556, %v506, 0
    %v567 = vsel %vm556, %v507, 0
    %v570 = vsel %vm556, %v528, 0
    %v573 = vsel %vm556, %v529, 0
    %v576 = vsel %vm556, %v530, 0
    %v579 = vsel %vm556, %v531, 0
    %581 = vmatprep.subr.bf16.mxu0 0
    %582 = vmatpush1.bf16.xpose.msra.mxu0 %v570
    %583 = vmatprep.subr.bf16.mxu0 0
    %584 = vmatpush1.bf16.xpose.msra.mxu0 %v573
    %585 = vmatprep.subr.bf16.mxu0 0
    %586 = vmatpush1.bf16.xpose.msra.mxu0 %v576
    %587 = vmatprep.subr.bf16.mxu0 0
    %588 = vmatpush1.bf16.xpose.msra.mxu0 %v579
    %589 = vmatprep.subr.bf16.mxu0 0
    %590 = vmatpush1.bf16.xpose.msra.mxu0 0
    %591 = vmatprep.subr.bf16.mxu0 0
    %592 = vmatpush1.bf16.xpose.msra.mxu0 0
    %593 = vmatprep.subr.bf16.mxu0 0
    %594 = vmatpush1.bf16.xpose.msra.mxu0 0
    %595 = vmatprep.subr.bf16.mxu0 0
    %596 = vmatpush1.bf16.xpose.msra.mxu0 0
    %597 = vmatprep.subr.bf16.mxu0 0
    %598 = vmatpush1.bf16.xpose.msra.mxu0 0
    %599 = vmatprep.subr.bf16.mxu0 0
    %600 = vmatpush1.bf16.xpose.msra.mxu0 0
    %601 = vmatprep.subr.bf16.mxu0 0
    %602 = vmatpush1.bf16.xpose.msra.mxu0 0
    %603 = vmatprep.subr.bf16.mxu0 0
    %604 = vmatpush1.bf16.xpose.msra.mxu0 0
    %605 = vmatprep.subr.bf16.mxu0 0
    %606 = vmatpush1.bf16.xpose.msra.mxu0 0
    %607 = vmatprep.subr.bf16.mxu0 0
    %608 = vmatpush1.bf16.xpose.msra.mxu0 0
    %609 = vmatprep.subr.bf16.mxu0 0
    %610 = vmatpush1.bf16.xpose.msra.mxu0 0
    %611 = vmatprep.subr.bf16.mxu0 0
    %612 = vmatpush1.bf16.xpose.msra.mxu0 0
    %613 = vmatprep.mubr.bf16.mxu0 0
    %614 = vmatmul.mubr.bf16.gmra.mrb[0].mxu0 %v558
    %v615 = vpop.f32.mrb[0].mxu0
    %v616 = vadd.f32 %v149, %v615
    %v617 = vpop.f32.mrb[0].mxu0
    %v618 = vpop.f32.mrb[0].mxu0
    %v619 = vadd.f32 %v150, %v618
    %v620 = vpop.f32.mrb[0].mxu0
    %621 = vmatprep.mubr.bf16.mxu0 0
    %622 = vmatmul.mubr.bf16.gmra.mrb[0].mxu0 %v561
    %v623 = vpop.f32.mrb[0].mxu0
    %v624 = vadd.f32 %v151, %v623
    %v625 = vpop.f32.mrb[0].mxu0
    %v626 = vpop.f32.mrb[0].mxu0
    %v627 = vadd.f32 %v152, %v626
    %v628 = vpop.f32.mrb[0].mxu0
    %629 = vmatprep.mubr.bf16.mxu0 0
    %630 = vmatmul.mubr.bf16.gmra.mrb[0].mxu0 %v564
    %v631 = vpop.f32.mrb[0].mxu0
    %v632 = vadd.f32 %v153, %v631
    %v633 = vpop.f32.mrb[0].mxu0
    %v634 = vpop.f32.mrb[0].mxu0
    %v635 = vadd.f32 %v154, %v634
    %v636 = vpop.f32.mrb[0].mxu0
    %637 = vmatprep.mubr.bf16.mxu0 0
    %638 = vmatmul.mubr.bf16.gmra.mrb[0].mxu0 %v567
    %v639 = vpop.f32.mrb[0].mxu0
    %v640 = vadd.f32 %v155, %v639
    %v641 = vpop.f32.mrb[0].mxu0
    %v642 = vpop.f32.mrb[0].mxu0
    %v643 = vadd.f32 %v156, %v642
    %v644 = vpop.f32.mrb[0].mxu0
    %645 = vdwg.mxu0
    %vm646 = vcmask 523264
    %v647 = vsel %vm646, %v616, -inf
    %648 = vmax.xlane.f32.xlu0 %v647
    %v649 = vpop.xlane.xlu0 %648
    %v650 = vsel %vm646, %v619, -inf
    %651 = vmax.xlane.f32.xlu0 %v650
    %v652 = vpop.xlane.xlu0 %651
    %v653 = vsel %vm646, %v624, -inf
    %654 = vmax.xlane.f32.xlu0 %v653
    %v655 = vpop.xlane.xlu0 %654
    %v656 = vsel %vm646, %v627, -inf
    %657 = vmax.xlane.f32.xlu0 %v656
    %v658 = vpop.xlane.xlu0 %657
    %v659 = vsel %vm646, %v632, -inf
    %660 = vmax.xlane.f32.xlu0 %v659
    %v661 = vpop.xlane.xlu0 %660
    %v662 = vsel %vm646, %v635, -inf
    %663 = vmax.xlane.f32.xlu0 %v662
    %v664 = vpop.xlane.xlu0 %663
    %v665 = vsel %vm646, %v640, -inf
    %666 = vmax.xlane.f32.xlu0 %v665
    %v667 = vpop.xlane.xlu0 %666
    %v668 = vsel %vm646, %v643, -inf
    %669 = vmax.xlane.f32.xlu0 %v668
    %v670 = vpop.xlane.xlu0 %669
    %v671 = vsub.f32 %v616, %v649
    %v672 = vsub.f32 %v619, %v652
    %v673 = vsub.f32 %v624, %v655
    %v674 = vsub.f32 %v627, %v658
    %v675 = vsub.f32 %v632, %v661
    %v676 = vsub.f32 %v635, %v664
    %v677 = vsub.f32 %v640, %v667
    %v678 = vsub.f32 %v643, %v670
    %v679 = vmul.f32 %v671, 1.442695
    %v680 = vpow.pop %v679
    %v681 = vmul.f32 %v672, 1.442695
    %v682 = vpow.pop %v681
    %v683 = vmul.f32 %v673, 1.442695
    %v684 = vpow.pop %v683
    %v685 = vmul.f32 %v674, 1.442695
    %v686 = vpow.pop %v685
    %v687 = vmul.f32 %v675, 1.442695
    %v688 = vpow.pop %v687
    %v689 = vmul.f32 %v676, 1.442695
    %v690 = vpow.pop %v689
    %v691 = vmul.f32 %v677, 1.442695
    %v692 = vpow.pop %v691
    %v693 = vmul.f32 %v678, 1.442695
    %v694 = vpow.pop %v693
    %v695 = vsel %vm646, %v680, 0.0
    %696 = vadd.xlane.f32.xlu0 %v695
    %v697 = vpop.xlane.xlu0 %696
    %v698 = vsel %vm646, %v682, 0.0
    %699 = vadd.xlane.f32.xlu0 %v698
    %v700 = vpop.xlane.xlu0 %699
    %v701 = vsel %vm646, %v684, 0.0
    %702 = vadd.xlane.f32.xlu0 %v701
    %v703 = vpop.xlane.xlu0 %702
    %v704 = vsel %vm646, %v686, 0.0
    %705 = vadd.xlane.f32.xlu0 %v704
    %v706 = vpop.xlane.xlu0 %705
    %v707 = vsel %vm646, %v688, 0.0
    %708 = vadd.xlane.f32.xlu0 %v707
    %v709 = vpop.xlane.xlu0 %708
    %v710 = vsel %vm646, %v690, 0.0
    %711 = vadd.xlane.f32.xlu0 %v710
    %v712 = vpop.xlane.xlu0 %711
    %v713 = vsel %vm646, %v692, 0.0
    %714 = vadd.xlane.f32.xlu0 %v713
    %v715 = vpop.xlane.xlu0 %714
    %v716 = vsel %vm646, %v694, 0.0
    %717 = vadd.xlane.f32.xlu0 %v716
    %v718 = vpop.xlane.xlu0 %717
    %v719 = vrcp.pop %v697
    %v720 = vrcp.pop %v700
    %v721 = vrcp.pop %v703
    %v722 = vrcp.pop %v706
    %v723 = vrcp.pop %v709
    %v724 = vrcp.pop %v712
    %v725 = vrcp.pop %v715
    %v726 = vrcp.pop %v718
    %v727 = vmul.f32 %v680, %v719
    %v728 = vmul.f32 %v682, %v720
    %v729 = vmul.f32 %v684, %v721
    %v730 = vmul.f32 %v686, %v722
    %v731 = vmul.f32 %v688, %v723
    %v732 = vmul.f32 %v690, %v724
    %v733 = vmul.f32 %v692, %v725
    %v734 = vmul.f32 %v694, %v726
    %v735 = vpack.c.bf16 %v728, %v727
    %v736 = vpack.c.bf16 %v730, %v729
    %v737 = vpack.c.bf16 %v732, %v731
    %v738 = vpack.c.bf16 %v734, %v733
    %v740 = vsel %vm646, %v735, 0
    %v743 = vsel %vm646, %v736, 0
    %v746 = vsel %vm646, %v737, 0
    %v749 = vsel %vm646, %v738, 0
    %751 = vmatprep.subr.bf16.mxu0 0
    %752 = vmatpush1.bf16.msra.mxu0 %v552
    %753 = vmatprep.subr.bf16.mxu0 0
    %754 = vmatpush1.bf16.msra.mxu0 %v553
    %755 = vmatprep.subr.bf16.mxu0 0
    %756 = vmatpush1.bf16.msra.mxu0 %v554
    %757 = vmatprep.subr.bf16.mxu0 0
    %758 = vmatpush1.bf16.msra.mxu0 %v555
    %759 = vmatprep.subr.bf16.mxu0 0
    %760 = vmatpush1.bf16.msra.mxu0 0
    %761 = vmatprep.subr.bf16.mxu0 0
    %762 = vmatpush1.bf16.msra.mxu0 0
    %763 = vmatprep.subr.bf16.mxu0 0
    %764 = vmatpush1.bf16.msra.mxu0 0
    %765 = vmatprep.subr.bf16.mxu0 0
    %766 = vmatpush1.bf16.msra.mxu0 0
    %767 = vmatprep.subr.bf16.mxu0 0
    %768 = vmatpush1.bf16.msra.mxu0 0
    %769 = vmatprep.subr.bf16.mxu0 0
    %770 = vmatpush1.bf16.msra.mxu0 0
    %771 = vmatprep.subr.bf16.mxu0 0
    %772 = vmatpush1.bf16.msra.mxu0 0
    %773 = vmatprep.subr.bf16.mxu0 0
    %774 = vmatpush1.bf16.msra.mxu0 0
    %775 = vmatprep.subr.bf16.mxu0 0
    %776 = vmatpush1.bf16.msra.mxu0 0
    %777 = vmatprep.subr.bf16.mxu0 0
    %778 = vmatpush1.bf16.msra.mxu0 0
    %779 = vmatprep.subr.bf16.mxu0 0
    %780 = vmatpush1.bf16.msra.mxu0 0
    %781 = vmatprep.subr.bf16.mxu0 0
    %782 = vmatpush1.bf16.msra.mxu0 0
    %783 = vmatprep.mubr.bf16.mxu0 0
    %784 = vmatmul.mubr.bf16.gmra.mrb[0].mxu0 %v740
    %v785 = vpop.f32.mrb[0].mxu0
    %v786 = vadd.f32 0.0, %v785
    %v787 = vpop.f32.mrb[0].mxu0
    %v788 = vpop.f32.mrb[0].mxu0
    %v789 = vadd.f32 0.0, %v788
    %v790 = vpop.f32.mrb[0].mxu0
    %791 = vmatprep.mubr.bf16.mxu0 0
    %792 = vmatmul.mubr.bf16.gmra.mrb[0].mxu0 %v743
    %v793 = vpop.f32.mrb[0].mxu0
    %v794 = vadd.f32 0.0, %v793
    %v795 = vpop.f32.mrb[0].mxu0
    %v796 = vpop.f32.mrb[0].mxu0
    %v797 = vadd.f32 0.0, %v796
    %v798 = vpop.f32.mrb[0].mxu0
    %799 = vmatprep.mubr.bf16.mxu0 0
    %800 = vmatmul.mubr.bf16.gmra.mrb[0].mxu0 %v746
    %v801 = vpop.f32.mrb[0].mxu0
    %v802 = vadd.f32 0.0, %v801
    %v803 = vpop.f32.mrb[0].mxu0
    %v804 = vpop.f32.mrb[0].mxu0
    %v805 = vadd.f32 0.0, %v804
    %v806 = vpop.f32.mrb[0].mxu0
    %807 = vmatprep.mubr.bf16.mxu0 0
    %808 = vmatmul.mubr.bf16.gmra.mrb[0].mxu0 %v749
    %v809 = vpop.f32.mrb[0].mxu0
    %v810 = vadd.f32 0.0, %v809
    %v811 = vpop.f32.mrb[0].mxu0
    %v812 = vpop.f32.mrb[0].mxu0
    %v813 = vadd.f32 0.0, %v812
    %v814 = vpop.f32.mrb[0].mxu0
    %815 = vdwg.mxu0
    %818 = vrot.lane.b32.xlu0 %v789, 32
    %v819 = vpop.permute.xlu0 %818
    %820 = vrot.lane.b32.xlu0 %v805, 32
    %v821 = vpop.permute.xlu0 %820
    %826 = vrot.lane.b32.xlu0 %v794, 64
    %v827 = vpop.permute.xlu0 %826
    %828 = vrot.lane.b32.xlu0 %v810, 64
    %v829 = vpop.permute.xlu0 %828
    %834 = vrot.lane.b32.xlu0 %v797, 96
    %v835 = vpop.permute.xlu0 %834
    %836 = vrot.lane.b32.xlu0 %v813, 96
    %v837 = vpop.permute.xlu0 %836
    %v840 = vsel %vm556, %v786, %v819
    %v841 = vsel %vm556, %v802, %v821
    %v842 = vsel %vm646, %v840, %v827
    %v843 = vsel %vm646, %v841, %v829
    %vm844 = vcmask 785408
    %v845 = vsel %vm844, %v842, %v835
    %v846 = vsel %vm844, %v843, %v837
    %v847 = vpack.c.bf16 %v846, %v845
    %v848 = vld [vmem:[%s23] sm:$0xf]
    %v849 = vld [vmem:[%s23 + $0x4] sm:$0xf]
    %v850 = vld [vmem:[%s23 + $0x8] sm:$0xf]
    %v851 = vld [vmem:[%s23 + $0xc] sm:$0xf]
    %v852 = vld [vmem:[%s23 + $0x10] sm:$0xf]
    %v853 = vld [vmem:[%s23 + $0x14] sm:$0xf]
    %v854 = vld [vmem:[%s23 + $0x18] sm:$0xf]
    %v855 = vld [vmem:[%s23 + $0x1c] sm:$0xf]
    %v856 = vld [vmem:[%s23 + $0x20] sm:$0xf]
    %v857 = vld [vmem:[%s23 + $0x24] sm:$0xf]
    %v858 = vld [vmem:[%s23 + $0x28] sm:$0xf]
    %v859 = vld [vmem:[%s23 + $0x2c] sm:$0xf]
    %v860 = vld [vmem:[%s23 + $0x30] sm:$0xf]
    %v861 = vld [vmem:[%s23 + $0x34] sm:$0xf]
    %v862 = vld [vmem:[%s23 + $0x38] sm:$0xf]
    %v863 = vld [vmem:[%s23 + $0x3c] sm:$0xf]
    %v864 = vld [vmem:[%s25] sm:$0x1]
    %v866 = vlaneseq
    %v867 = vshrl.u32 %v866, 7
    %v868 = vsub.s32 0, %v867
    %v869 = vrot.slane %v864, %v868
    %v887 = vunpack.c.l.b16 %v848
    %v888 = vunpack.c.l.b16 %v849
    %v889 = vunpack.c.l.b16 %v850
    %v890 = vunpack.c.l.b16 %v851
    %v891 = vunpack.c.l.b16 %v852
    %v892 = vunpack.c.l.b16 %v853
    %v893 = vunpack.c.l.b16 %v854
    %v894 = vunpack.c.l.b16 %v855
    %v895 = vunpack.c.l.b16 %v856
    %v896 = vunpack.c.l.b16 %v857
    %v897 = vunpack.c.l.b16 %v858
    %v898 = vunpack.c.l.b16 %v859
    %v899 = vunpack.c.l.b16 %v860
    %v900 = vunpack.c.l.b16 %v861
    %v901 = vunpack.c.l.b16 %v862
    %v902 = vunpack.c.l.b16 %v863
    %v903 = vpack.c.b16 %v888, %v887
    %v904 = vpack.c.b16 %v890, %v889
    %v905 = vpack.c.b16 %v892, %v891
    %v906 = vpack.c.b16 %v894, %v893
    %v907 = vpack.c.b16 %v896, %v895
    %v908 = vpack.c.b16 %v898, %v897
    %v909 = vpack.c.b16 %v900, %v899
    %v910 = vpack.c.b16 %v902, %v901
    %919 = vmatprep.subr.bf16.mxu0 0
    %920 = vmatpush1.bf16.msra.mxu0 %v903
    %921 = vmatprep.subr.bf16.mxu0 0
    %922 = vmatpush1.bf16.msra.mxu0 %v904
    %923 = vmatprep.subr.bf16.mxu0 0
    %924 = vmatpush1.bf16.msra.mxu0 %v905
    %925 = vmatprep.subr.bf16.mxu0 0
    %926 = vmatpush1.bf16.msra.mxu0 %v906
    %927 = vmatprep.subr.bf16.mxu0 0
    %928 = vmatpush1.bf16.msra.mxu0 %v907
    %929 = vmatprep.subr.bf16.mxu0 0
    %930 = vmatpush1.bf16.msra.mxu0 %v908
    %931 = vmatprep.subr.bf16.mxu0 0
    %932 = vmatpush1.bf16.msra.mxu0 %v909
    %933 = vmatprep.subr.bf16.mxu0 0
    %934 = vmatpush1.bf16.msra.mxu0 %v910
    %935 = vmatprep.subr.bf16.mxu0 0
    %936 = vmatpush1.bf16.msra.mxu0 0
    %937 = vmatprep.subr.bf16.mxu0 0
    %938 = vmatpush1.bf16.msra.mxu0 0
    %939 = vmatprep.subr.bf16.mxu0 0
    %940 = vmatpush1.bf16.msra.mxu0 0
    %941 = vmatprep.subr.bf16.mxu0 0
    %942 = vmatpush1.bf16.msra.mxu0 0
    %943 = vmatprep.subr.bf16.mxu0 0
    %944 = vmatpush1.bf16.msra.mxu0 0
    %945 = vmatprep.subr.bf16.mxu0 0
    %946 = vmatpush1.bf16.msra.mxu0 0
    %947 = vmatprep.subr.bf16.mxu0 0
    %948 = vmatpush1.bf16.msra.mxu0 0
    %949 = vmatprep.subr.bf16.mxu0 0
    %950 = vmatpush1.bf16.msra.mxu0 0
    %951 = vmatprep.mubr.bf16.mxu0 0
    %952 = vmatmul.mubr.bf16.gmra.mrb[0].mxu0 %v847
    %v953 = vpop.f32.mrb[0].mxu0
    %v954 = vadd.f32 %v869, %v953
    %v955 = vpop.f32.mrb[0].mxu0
    %v956 = vpop.f32.mrb[0].mxu0
    %v957 = vadd.f32 %v869, %v956
    %v958 = vpop.f32.mrb[0].mxu0
    %959 = vdwg.mxu0
    %v960 = vadd.f32 %v954, %v180
    %v961 = vadd.f32 %v957, %v181
    %v962 = vld [vmem:[%s15] sm:$0x1]
    %v963 = vld [vmem:[%s17] sm:$0x1]
    %964 = vadd.xlane.f32.xlu0 %v960
    %v965 = vpop.xlane.xlu0 %964
    %966 = vadd.xlane.f32.xlu0 %v961
    %v967 = vpop.xlane.xlu0 %966
    %v968 = vmul.f32 %v965, %v163
    %v969 = vmul.f32 %v967, %v163
    %v970 = vsub.f32 %v960, %v968
    %v971 = vsub.f32 %v961, %v969
    %v972 = vmul.f32 %v970, %v970
    %v973 = vmul.f32 %v971, %v971
    %974 = vadd.xlane.f32.xlu0 %v972
    %v975 = vpop.xlane.xlu0 %974
    %976 = vadd.xlane.f32.xlu0 %v973
    %v977 = vpop.xlane.xlu0 %976
    %v978 = vmul.f32 %v975, %v163
    %v979 = vmul.f32 %v977, %v163
    %v980 = vadd.f32 %v978, 1e-05
    %v981 = vadd.f32 %v979, 1e-05
    %v982 = vrsqrt.pop %v980
    %v983 = vrsqrt.pop %v981
    %v984 = vmul.f32 %v970, %v982
    %v985 = vmul.f32 %v971, %v983
    %v987 = vlaneseq
    %v988 = vshrl.u32 %v987, 7
    %v989 = vsub.s32 0, %v988
    %v990 = vrot.slane %v962, %v989
    %v992 = vmul.f32 %v984, %v990
    %v993 = vmul.f32 %v985, %v990
    %v995 = vlaneseq
    %v996 = vshrl.u32 %v995, 7
    %v997 = vsub.s32 0, %v996
    %v998 = vrot.slane %v963, %v997
    %v1000 = vadd.f32 %v992, %v998
    %v1001 = vadd.f32 %v993, %v998
    %v1002 = vpack.c.bf16 %v1001, %v1000
    %v1003 = vld [vmem:[%s27] sm:$0xff]
    %v1004 = vld [vmem:[%s27 + $0x8] sm:$0xff]
    %v1005 = vld [vmem:[%s27 + $0x10] sm:$0xff]
    %v1006 = vld [vmem:[%s27 + $0x18] sm:$0xff]
    %v1007 = vld [vmem:[%s27 + $0x20] sm:$0xff]
    %v1008 = vld [vmem:[%s27 + $0x28] sm:$0xff]
    %v1009 = vld [vmem:[%s27 + $0x30] sm:$0xff]
    %v1010 = vld [vmem:[%s27 + $0x38] sm:$0xff]
    %v1011 = vld [vmem:[%s27 + $0x40] sm:$0xff]
    %v1012 = vld [vmem:[%s27 + $0x48] sm:$0xff]
    %v1013 = vld [vmem:[%s27 + $0x50] sm:$0xff]
    %v1014 = vld [vmem:[%s27 + $0x58] sm:$0xff]
    %v1015 = vld [vmem:[%s27 + $0x60] sm:$0xff]
    %v1016 = vld [vmem:[%s27 + $0x68] sm:$0xff]
    %v1017 = vld [vmem:[%s27 + $0x70] sm:$0xff]
    %v1018 = vld [vmem:[%s27 + $0x78] sm:$0xff]
    %v1019 = vld [vmem:[%s27 + $0x80] sm:$0xff]
    %v1020 = vld [vmem:[%s27 + $0x88] sm:$0xff]
    %v1021 = vld [vmem:[%s27 + $0x90] sm:$0xff]
    %v1022 = vld [vmem:[%s27 + $0x98] sm:$0xff]
    %v1023 = vld [vmem:[%s27 + $0xa0] sm:$0xff]
    %v1024 = vld [vmem:[%s27 + $0xa8] sm:$0xff]
    %v1025 = vld [vmem:[%s27 + $0xb0] sm:$0xff]
    %v1026 = vld [vmem:[%s27 + $0xb8] sm:$0xff]
    %v1027 = vld [vmem:[%s27 + $0xc0] sm:$0xff]
    %v1028 = vld [vmem:[%s27 + $0xc8] sm:$0xff]
    %v1029 = vld [vmem:[%s27 + $0xd0] sm:$0xff]
    %v1030 = vld [vmem:[%s27 + $0xd8] sm:$0xff]
    %v1031 = vld [vmem:[%s27 + $0xe0] sm:$0xff]
    %v1032 = vld [vmem:[%s27 + $0xe8] sm:$0xff]
    %v1033 = vld [vmem:[%s27 + $0xf0] sm:$0xff]
    %v1034 = vld [vmem:[%s27 + $0xf8] sm:$0xff]
    %v1035 = vld [vmem:[%s29] sm:$0xf]
    %v1037 = vlaneseq
    %v1038 = vshrl.u32 %v1037, 7
    %v1039 = vsub.s32 0, %v1038
    %v1040 = vrot.slane %v1035, %v1039
    %v1041 = vlaneseq
    %v1042 = vshrl.u32 %v1041, 7
    %v1043 = vsub.s32 1, %v1042
    %v1044 = vrot.slane %v1035, %v1043
    %v1045 = vlaneseq
    %v1046 = vshrl.u32 %v1045, 7
    %v1047 = vsub.s32 2, %v1046
    %v1048 = vrot.slane %v1035, %v1047
    %v1049 = vlaneseq
    %v1050 = vshrl.u32 %v1049, 7
    %v1051 = vsub.s32 3, %v1050
    %v1052 = vrot.slane %v1035, %v1051
    %v1089 = vunpack.c.l.b16 %v1003
    %v1090 = vunpack.c.h.b16 %v1003
    %v1091 = vunpack.c.l.b16 %v1004
    %v1092 = vunpack.c.h.b16 %v1004
    %v1093 = vunpack.c.l.b16 %v1005
    %v1094 = vunpack.c.h.b16 %v1005
    %v1095 = vunpack.c.l.b16 %v1006
    %v1096 = vunpack.c.h.b16 %v1006
    %v1097 = vunpack.c.l.b16 %v1007
    %v1098 = vunpack.c.h.b16 %v1007
    %v1099 = vunpack.c.l.b16 %v1008
    %v1100 = vunpack.c.h.b16 %v1008
    %v1101 = vunpack.c.l.b16 %v1009
    %v1102 = vunpack.c.h.b16 %v1009
    %v1103 = vunpack.c.l.b16 %v1010
    %v1104 = vunpack.c.h.b16 %v1010
    %v1105 = vunpack.c.l.b16 %v1011
    %v1106 = vunpack.c.h.b16 %v1011
    %v1107 = vunpack.c.l.b16 %v1012
    %v1108 = vunpack.c.h.b16 %v1012
    %v1109 = vunpack.c.l.b16 %v1013
    %v1110 = vunpack.c.h.b16 %v1013
    %v1111 = vunpack.c.l.b16 %v1014
    %v1112 = vunpack.c.h.b16 %v1014
    %v1113 = vunpack.c.l.b16 %v1015
    %v1114 = vunpack.c.h.b16 %v1015
    %v1115 = vunpack.c.l.b16 %v1016
    %v1116 = vunpack.c.h.b16 %v1016
    %v1117 = vunpack.c.l.b16 %v1017
    %v1118 = vunpack.c.h.b16 %v1017
    %v1119 = vunpack.c.l.b16 %v1018
    %v1120 = vunpack.c.h.b16 %v1018
    %v1121 = vunpack.c.l.b16 %v1019
    %v1122 = vunpack.c.h.b16 %v1019
    %v1123 = vunpack.c.l.b16 %v1020
    %v1124 = vunpack.c.h.b16 %v1020
    %v1125 = vunpack.c.l.b16 %v1021
    %v1126 = vunpack.c.h.b16 %v1021
    %v1127 = vunpack.c.l.b16 %v1022
    %v1128 = vunpack.c.h.b16 %v1022
    %v1129 = vunpack.c.l.b16 %v1023
    %v1130 = vunpack.c.h.b16 %v1023
    %v1131 = vunpack.c.l.b16 %v1024
    %v1132 = vunpack.c.h.b16 %v1024
    %v1133 = vunpack.c.l.b16 %v1025
    %v1134 = vunpack.c.h.b16 %v1025
    %v1135 = vunpack.c.l.b16 %v1026
    %v1136 = vunpack.c.h.b16 %v1026
    %v1137 = vunpack.c.l.b16 %v1027
    %v1138 = vunpack.c.h.b16 %v1027
    %v1139 = vunpack.c.l.b16 %v1028
    %v1140 = vunpack.c.h.b16 %v1028
    %v1141 = vunpack.c.l.b16 %v1029
    %v1142 = vunpack.c.h.b16 %v1029
    %v1143 = vunpack.c.l.b16 %v1030
    %v1144 = vunpack.c.h.b16 %v1030
    %v1145 = vunpack.c.l.b16 %v1031
    %v1146 = vunpack.c.h.b16 %v1031
    %v1147 = vunpack.c.l.b16 %v1032
    %v1148 = vunpack.c.h.b16 %v1032
    %v1149 = vunpack.c.l.b16 %v1033
    %v1150 = vunpack.c.h.b16 %v1033
    %v1151 = vunpack.c.l.b16 %v1034
    %v1152 = vunpack.c.h.b16 %v1034
    %v1153 = vpack.c.b16 %v1093, %v1089
    %v1154 = vpack.c.b16 %v1094, %v1090
    %v1155 = vpack.c.b16 %v1095, %v1091
    %v1156 = vpack.c.b16 %v1096, %v1092
    %v1157 = vpack.c.b16 %v1101, %v1097
    %v1158 = vpack.c.b16 %v1102, %v1098
    %v1159 = vpack.c.b16 %v1103, %v1099
    %v1160 = vpack.c.b16 %v1104, %v1100
    %v1161 = vpack.c.b16 %v1109, %v1105
    %v1162 = vpack.c.b16 %v1110, %v1106
    %v1163 = vpack.c.b16 %v1111, %v1107
    %v1164 = vpack.c.b16 %v1112, %v1108
    %v1165 = vpack.c.b16 %v1117, %v1113
    %v1166 = vpack.c.b16 %v1118, %v1114
    %v1167 = vpack.c.b16 %v1119, %v1115
    %v1168 = vpack.c.b16 %v1120, %v1116
    %v1169 = vpack.c.b16 %v1125, %v1121
    %v1170 = vpack.c.b16 %v1126, %v1122
    %v1171 = vpack.c.b16 %v1127, %v1123
    %v1172 = vpack.c.b16 %v1128, %v1124
    %v1173 = vpack.c.b16 %v1133, %v1129
    %v1174 = vpack.c.b16 %v1134, %v1130
    %v1175 = vpack.c.b16 %v1135, %v1131
    %v1176 = vpack.c.b16 %v1136, %v1132
    %v1177 = vpack.c.b16 %v1141, %v1137
    %v1178 = vpack.c.b16 %v1142, %v1138
    %v1179 = vpack.c.b16 %v1143, %v1139
    %v1180 = vpack.c.b16 %v1144, %v1140
    %v1181 = vpack.c.b16 %v1149, %v1145
    %v1182 = vpack.c.b16 %v1150, %v1146
    %v1183 = vpack.c.b16 %v1151, %v1147
    %v1184 = vpack.c.b16 %v1152, %v1148
    %1217 = vmatprep.subr.bf16.mxu0 %v1154
    %1218 = vmatpush1.bf16.msra.mxu0 %v1153
    %1219 = vmatprep.subr.bf16.mxu0 %v1158
    %1220 = vmatpush1.bf16.msra.mxu0 %v1157
    %1221 = vmatprep.subr.bf16.mxu0 %v1162
    %1222 = vmatpush1.bf16.msra.mxu0 %v1161
    %1223 = vmatprep.subr.bf16.mxu0 %v1166
    %1224 = vmatpush1.bf16.msra.mxu0 %v1165
    %1225 = vmatprep.subr.bf16.mxu0 %v1170
    %1226 = vmatpush1.bf16.msra.mxu0 %v1169
    %1227 = vmatprep.subr.bf16.mxu0 %v1174
    %1228 = vmatpush1.bf16.msra.mxu0 %v1173
    %1229 = vmatprep.subr.bf16.mxu0 %v1178
    %1230 = vmatpush1.bf16.msra.mxu0 %v1177
    %1231 = vmatprep.subr.bf16.mxu0 %v1182
    %1232 = vmatpush1.bf16.msra.mxu0 %v1181
    %1233 = vmatprep.subr.bf16.mxu0 0
    %1234 = vmatpush1.bf16.msra.mxu0 0
    %1235 = vmatprep.subr.bf16.mxu0 0
    %1236 = vmatpush1.bf16.msra.mxu0 0
    %1237 = vmatprep.subr.bf16.mxu0 0
    %1238 = vmatpush1.bf16.msra.mxu0 0
    %1239 = vmatprep.subr.bf16.mxu0 0
    %1240 = vmatpush1.bf16.msra.mxu0 0
    %1241 = vmatprep.subr.bf16.mxu0 0
    %1242 = vmatpush1.bf16.msra.mxu0 0
    %1243 = vmatprep.subr.bf16.mxu0 0
    %1244 = vmatpush1.bf16.msra.mxu0 0
    %1245 = vmatprep.subr.bf16.mxu0 0
    %1246 = vmatpush1.bf16.msra.mxu0 0
    %1247 = vmatprep.subr.bf16.mxu0 0
    %1248 = vmatpush1.bf16.msra.mxu0 0
    %1249 = vmatprep.mubr.bf16.mxu0 0
    %1250 = vmatmul.mubr.bf16.gmra.mrb[0].mxu0 %v1002
    %v1251 = vpop.f32.mrb[0].mxu0
    %v1252 = vadd.f32 %v1040, %v1251
    %v1253 = vpop.f32.mrb[0].mxu0
    %v1254 = vadd.f32 %v1044, %v1253
    %v1255 = vpop.f32.mrb[0].mxu0
    %v1256 = vadd.f32 %v1040, %v1255
    %v1257 = vpop.f32.mrb[0].mxu0
    %v1258 = vadd.f32 %v1044, %v1257
    %1259 = vdwg.mxu0
    %1260 = vmatprep.subr.bf16.mxu0 %v1156
    %1261 = vmatpush1.bf16.msra.mxu0 %v1155
    %1262 = vmatprep.subr.bf16.mxu0 %v1160
    %1263 = vmatpush1.bf16.msra.mxu0 %v1159
    %1264 = vmatprep.subr.bf16.mxu0 %v1164
    %1265 = vmatpush1.bf16.msra.mxu0 %v1163
    %1266 = vmatprep.subr.bf16.mxu0 %v1168
    %1267 = vmatpush1.bf16.msra.mxu0 %v1167
    %1268 = vmatprep.subr.bf16.mxu0 %v1172
    %1269 = vmatpush1.bf16.msra.mxu0 %v1171
    %1270 = vmatprep.subr.bf16.mxu0 %v1176
    %1271 = vmatpush1.bf16.msra.mxu0 %v1175
    %1272 = vmatprep.subr.bf16.mxu0 %v1180
    %1273 = vmatpush1.bf16.msra.mxu0 %v1179
    %1274 = vmatprep.subr.bf16.mxu0 %v1184
    %1275 = vmatpush1.bf16.msra.mxu0 %v1183
    %1276 = vmatprep.subr.bf16.mxu0 0
    %1277 = vmatpush1.bf16.msra.mxu0 0
    %1278 = vmatprep.subr.bf16.mxu0 0
    %1279 = vmatpush1.bf16.msra.mxu0 0
    %1280 = vmatprep.subr.bf16.mxu0 0
    %1281 = vmatpush1.bf16.msra.mxu0 0
    %1282 = vmatprep.subr.bf16.mxu0 0
    %1283 = vmatpush1.bf16.msra.mxu0 0
    %1284 = vmatprep.subr.bf16.mxu0 0
    %1285 = vmatpush1.bf16.msra.mxu0 0
    %1286 = vmatprep.subr.bf16.mxu0 0
    %1287 = vmatpush1.bf16.msra.mxu0 0
    %1288 = vmatprep.subr.bf16.mxu0 0
    %1289 = vmatpush1.bf16.msra.mxu0 0
    %1290 = vmatprep.subr.bf16.mxu0 0
    %1291 = vmatpush1.bf16.msra.mxu0 0
    %1292 = vmatprep.mubr.bf16.mxu0 0
    %1293 = vmatmul.mubr.bf16.gmra.mrb[0].mxu0 %v1002
    %v1294 = vpop.f32.mrb[0].mxu0
    %v1295 = vadd.f32 %v1048, %v1294
    %v1296 = vpop.f32.mrb[0].mxu0
    %v1297 = vadd.f32 %v1052, %v1296
    %v1298 = vpop.f32.mrb[0].mxu0
    %v1299 = vadd.f32 %v1048, %v1298
    %v1300 = vpop.f32.mrb[0].mxu0
    %v1301 = vadd.f32 %v1052, %v1300
    %1302 = vdwg.mxu0
    %v1303 = vmax.f32 %v1252, 0.0
    %v1304 = vmax.f32 %v1254, 0.0
    %v1305 = vmax.f32 %v1295, 0.0
    %v1306 = vmax.f32 %v1297, 0.0
    %v1307 = vmax.f32 %v1256, 0.0
    %v1308 = vmax.f32 %v1258, 0.0
    %v1309 = vmax.f32 %v1299, 0.0
    %v1310 = vmax.f32 %v1301, 0.0
    %v1311 = vpack.c.bf16 %v1307, %v1303
    %v1312 = vpack.c.bf16 %v1308, %v1304
    %v1313 = vpack.c.bf16 %v1309, %v1305
    %v1314 = vpack.c.bf16 %v1310, %v1306
    %v1315 = vld [vmem:[%s31] sm:$0xf]
    %v1316 = vld [vmem:[%s31 + $0x4] sm:$0xf]
    %v1317 = vld [vmem:[%s31 + $0x8] sm:$0xf]
    %v1318 = vld [vmem:[%s31 + $0xc] sm:$0xf]
    %v1319 = vld [vmem:[%s31 + $0x10] sm:$0xf]
    %v1320 = vld [vmem:[%s31 + $0x14] sm:$0xf]
    %v1321 = vld [vmem:[%s31 + $0x18] sm:$0xf]
    %v1322 = vld [vmem:[%s31 + $0x1c] sm:$0xf]
    %v1323 = vld [vmem:[%s31 + $0x20] sm:$0xf]
    %v1324 = vld [vmem:[%s31 + $0x24] sm:$0xf]
    %v1325 = vld [vmem:[%s31 + $0x28] sm:$0xf]
    %v1326 = vld [vmem:[%s31 + $0x2c] sm:$0xf]
    %v1327 = vld [vmem:[%s31 + $0x30] sm:$0xf]
    %v1328 = vld [vmem:[%s31 + $0x34] sm:$0xf]
    %v1329 = vld [vmem:[%s31 + $0x38] sm:$0xf]
    %v1330 = vld [vmem:[%s31 + $0x3c] sm:$0xf]
    %v1331 = vld [vmem:[%s31 + $0x40] sm:$0xf]
    %v1332 = vld [vmem:[%s31 + $0x44] sm:$0xf]
    %v1333 = vld [vmem:[%s31 + $0x48] sm:$0xf]
    %v1334 = vld [vmem:[%s31 + $0x4c] sm:$0xf]
    %v1335 = vld [vmem:[%s31 + $0x50] sm:$0xf]
    %v1336 = vld [vmem:[%s31 + $0x54] sm:$0xf]
    %v1337 = vld [vmem:[%s31 + $0x58] sm:$0xf]
    %v1338 = vld [vmem:[%s31 + $0x5c] sm:$0xf]
    %v1339 = vld [vmem:[%s31 + $0x60] sm:$0xf]
    %v1340 = vld [vmem:[%s31 + $0x64] sm:$0xf]
    %v1341 = vld [vmem:[%s31 + $0x68] sm:$0xf]
    %v1342 = vld [vmem:[%s31 + $0x6c] sm:$0xf]
    %v1343 = vld [vmem:[%s31 + $0x70] sm:$0xf]
    %v1344 = vld [vmem:[%s31 + $0x74] sm:$0xf]
    %v1345 = vld [vmem:[%s31 + $0x78] sm:$0xf]
    %v1346 = vld [vmem:[%s31 + $0x7c] sm:$0xf]
    %v1347 = vld [vmem:[%s31 + $0x80] sm:$0xf]
    %v1348 = vld [vmem:[%s31 + $0x84] sm:$0xf]
    %v1349 = vld [vmem:[%s31 + $0x88] sm:$0xf]
    %v1350 = vld [vmem:[%s31 + $0x8c] sm:$0xf]
    %v1351 = vld [vmem:[%s31 + $0x90] sm:$0xf]
    %v1352 = vld [vmem:[%s31 + $0x94] sm:$0xf]
    %v1353 = vld [vmem:[%s31 + $0x98] sm:$0xf]
    %v1354 = vld [vmem:[%s31 + $0x9c] sm:$0xf]
    %v1355 = vld [vmem:[%s31 + $0xa0] sm:$0xf]
    %v1356 = vld [vmem:[%s31 + $0xa4] sm:$0xf]
    %v1357 = vld [vmem:[%s31 + $0xa8] sm:$0xf]
    %v1358 = vld [vmem:[%s31 + $0xac] sm:$0xf]
    %v1359 = vld [vmem:[%s31 + $0xb0] sm:$0xf]
    %v1360 = vld [vmem:[%s31 + $0xb4] sm:$0xf]
    %v1361 = vld [vmem:[%s31 + $0xb8] sm:$0xf]
    %v1362 = vld [vmem:[%s31 + $0xbc] sm:$0xf]
    %v1363 = vld [vmem:[%s31 + $0xc0] sm:$0xf]
    %v1364 = vld [vmem:[%s31 + $0xc4] sm:$0xf]
    %v1365 = vld [vmem:[%s31 + $0xc8] sm:$0xf]
    %v1366 = vld [vmem:[%s31 + $0xcc] sm:$0xf]
    %v1367 = vld [vmem:[%s31 + $0xd0] sm:$0xf]
    %v1368 = vld [vmem:[%s31 + $0xd4] sm:$0xf]
    %v1369 = vld [vmem:[%s31 + $0xd8] sm:$0xf]
    %v1370 = vld [vmem:[%s31 + $0xdc] sm:$0xf]
    %v1371 = vld [vmem:[%s31 + $0xe0] sm:$0xf]
    %v1372 = vld [vmem:[%s31 + $0xe4] sm:$0xf]
    %v1373 = vld [vmem:[%s31 + $0xe8] sm:$0xf]
    %v1374 = vld [vmem:[%s31 + $0xec] sm:$0xf]
    %v1375 = vld [vmem:[%s31 + $0xf0] sm:$0xf]
    %v1376 = vld [vmem:[%s31 + $0xf4] sm:$0xf]
    %v1377 = vld [vmem:[%s31 + $0xf8] sm:$0xf]
    %v1378 = vld [vmem:[%s31 + $0xfc] sm:$0xf]
    %v1379 = vld [vmem:[%s33] sm:$0x1]
    %v1381 = vlaneseq
    %v1382 = vshrl.u32 %v1381, 7
    %v1383 = vsub.s32 0, %v1382
    %v1384 = vrot.slane %v1379, %v1383
    %v1450 = vunpack.c.l.b16 %v1315
    %v1451 = vunpack.c.l.b16 %v1316
    %v1452 = vunpack.c.l.b16 %v1317
    %v1453 = vunpack.c.l.b16 %v1318
    %v1454 = vunpack.c.l.b16 %v1319
    %v1455 = vunpack.c.l.b16 %v1320
    %v1456 = vunpack.c.l.b16 %v1321
    %v1457 = vunpack.c.l.b16 %v1322
    %v1458 = vunpack.c.l.b16 %v1323
    %v1459 = vunpack.c.l.b16 %v1324
    %v1460 = vunpack.c.l.b16 %v1325
    %v1461 = vunpack.c.l.b16 %v1326
    %v1462 = vunpack.c.l.b16 %v1327
    %v1463 = vunpack.c.l.b16 %v1328
    %v1464 = vunpack.c.l.b16 %v1329
    %v1465 = vunpack.c.l.b16 %v1330
    %v1466 = vunpack.c.l.b16 %v1331
    %v1467 = vunpack.c.l.b16 %v1332
    %v1468 = vunpack.c.l.b16 %v1333
    %v1469 = vunpack.c.l.b16 %v1334
    %v1470 = vunpack.c.l.b16 %v1335
    %v1471 = vunpack.c.l.b16 %v1336
    %v1472 = vunpack.c.l.b16 %v1337
    %v1473 = vunpack.c.l.b16 %v1338
    %v1474 = vunpack.c.l.b16 %v1339
    %v1475 = vunpack.c.l.b16 %v1340
    %v1476 = vunpack.c.l.b16 %v1341
    %v1477 = vunpack.c.l.b16 %v1342
    %v1478 = vunpack.c.l.b16 %v1343
    %v1479 = vunpack.c.l.b16 %v1344
    %v1480 = vunpack.c.l.b16 %v1345
    %v1481 = vunpack.c.l.b16 %v1346
    %v1482 = vunpack.c.l.b16 %v1347
    %v1483 = vunpack.c.l.b16 %v1348
    %v1484 = vunpack.c.l.b16 %v1349
    %v1485 = vunpack.c.l.b16 %v1350
    %v1486 = vunpack.c.l.b16 %v1351
    %v1487 = vunpack.c.l.b16 %v1352
    %v1488 = vunpack.c.l.b16 %v1353
    %v1489 = vunpack.c.l.b16 %v1354
    %v1490 = vunpack.c.l.b16 %v1355
    %v1491 = vunpack.c.l.b16 %v1356
    %v1492 = vunpack.c.l.b16 %v1357
    %v1493 = vunpack.c.l.b16 %v1358
    %v1494 = vunpack.c.l.b16 %v1359
    %v1495 = vunpack.c.l.b16 %v1360
    %v1496 = vunpack.c.l.b16 %v1361
    %v1497 = vunpack.c.l.b16 %v1362
    %v1498 = vunpack.c.l.b16 %v1363
    %v1499 = vunpack.c.l.b16 %v1364
    %v1500 = vunpack.c.l.b16 %v1365
    %v1501 = vunpack.c.l.b16 %v1366
    %v1502 = vunpack.c.l.b16 %v1367
    %v1503 = vunpack.c.l.b16 %v1368
    %v1504 = vunpack.c.l.b16 %v1369
    %v1505 = vunpack.c.l.b16 %v1370
    %v1506 = vunpack.c.l.b16 %v1371
    %v1507 = vunpack.c.l.b16 %v1372
    %v1508 = vunpack.c.l.b16 %v1373
    %v1509 = vunpack.c.l.b16 %v1374
    %v1510 = vunpack.c.l.b16 %v1375
    %v1511 = vunpack.c.l.b16 %v1376
    %v1512 = vunpack.c.l.b16 %v1377
    %v1513 = vunpack.c.l.b16 %v1378
    %v1514 = vpack.c.b16 %v1451, %v1450
    %v1515 = vpack.c.b16 %v1453, %v1452
    %v1516 = vpack.c.b16 %v1455, %v1454
    %v1517 = vpack.c.b16 %v1457, %v1456
    %v1518 = vpack.c.b16 %v1459, %v1458
    %v1519 = vpack.c.b16 %v1461, %v1460
    %v1520 = vpack.c.b16 %v1463, %v1462
    %v1521 = vpack.c.b16 %v1465, %v1464
    %v1522 = vpack.c.b16 %v1467, %v1466
    %v1523 = vpack.c.b16 %v1469, %v1468
    %v1524 = vpack.c.b16 %v1471, %v1470
    %v1525 = vpack.c.b16 %v1473, %v1472
    %v1526 = vpack.c.b16 %v1475, %v1474
    %v1527 = vpack.c.b16 %v1477, %v1476
    %v1528 = vpack.c.b16 %v1479, %v1478
    %v1529 = vpack.c.b16 %v1481, %v1480
    %v1530 = vpack.c.b16 %v1483, %v1482
    %v1531 = vpack.c.b16 %v1485, %v1484
    %v1532 = vpack.c.b16 %v1487, %v1486
    %v1533 = vpack.c.b16 %v1489, %v1488
    %v1534 = vpack.c.b16 %v1491, %v1490
    %v1535 = vpack.c.b16 %v1493, %v1492
    %v1536 = vpack.c.b16 %v1495, %v1494
    %v1537 = vpack.c.b16 %v1497, %v1496
    %v1538 = vpack.c.b16 %v1499, %v1498
    %v1539 = vpack.c.b16 %v1501, %v1500
    %v1540 = vpack.c.b16 %v1503, %v1502
    %v1541 = vpack.c.b16 %v1505, %v1504
    %v1542 = vpack.c.b16 %v1507, %v1506
    %v1543 = vpack.c.b16 %v1509, %v1508
    %v1544 = vpack.c.b16 %v1511, %v1510
    %v1545 = vpack.c.b16 %v1513, %v1512
    %1578 = vmatprep.subr.bf16.mxu0 0
    %1579 = vmatpush1.bf16.msra.mxu0 %v1514
    %1580 = vmatprep.subr.bf16.mxu0 0
    %1581 = vmatpush1.bf16.msra.mxu0 %v1515
    %1582 = vmatprep.subr.bf16.mxu0 0
    %1583 = vmatpush1.bf16.msra.mxu0 %v1516
    %1584 = vmatprep.subr.bf16.mxu0 0
    %1585 = vmatpush1.bf16.msra.mxu0 %v1517
    %1586 = vmatprep.subr.bf16.mxu0 0
    %1587 = vmatpush1.bf16.msra.mxu0 %v1518
    %1588 = vmatprep.subr.bf16.mxu0 0
    %1589 = vmatpush1.bf16.msra.mxu0 %v1519
    %1590 = vmatprep.subr.bf16.mxu0 0
    %1591 = vmatpush1.bf16.msra.mxu0 %v1520
    %1592 = vmatprep.subr.bf16.mxu0 0
    %1593 = vmatpush1.bf16.msra.mxu0 %v1521
    %1594 = vmatprep.subr.bf16.mxu0 0
    %1595 = vmatpush1.bf16.msra.mxu0 %v1522
    %1596 = vmatprep.subr.bf16.mxu0 0
    %1597 = vmatpush1.bf16.msra.mxu0 %v1523
    %1598 = vmatprep.subr.bf16.mxu0 0
    %1599 = vmatpush1.bf16.msra.mxu0 %v1524
    %1600 = vmatprep.subr.bf16.mxu0 0
    %1601 = vmatpush1.bf16.msra.mxu0 %v1525
    %1602 = vmatprep.subr.bf16.mxu0 0
    %1603 = vmatpush1.bf16.msra.mxu0 %v1526
    %1604 = vmatprep.subr.bf16.mxu0 0
    %1605 = vmatpush1.bf16.msra.mxu0 %v1527
    %1606 = vmatprep.subr.bf16.mxu0 0
    %1607 = vmatpush1.bf16.msra.mxu0 %v1528
    %1608 = vmatprep.subr.bf16.mxu0 0
    %1609 = vmatpush1.bf16.msra.mxu0 %v1529
    %1610 = vmatprep.mubr.bf16.mxu0 %v1312
    %1611 = vmatmul.mubr.bf16.gmra.mrb[0].mxu0 %v1311
    %v1612 = vpop.f32.mrb[0].mxu0
    %v1613 = vadd.f32 %v1384, %v1612
    %v1614 = vpop.f32.mrb[0].mxu0
    %v1615 = vpop.f32.mrb[0].mxu0
    %v1616 = vadd.f32 %v1384, %v1615
    %v1617 = vpop.f32.mrb[0].mxu0
    %1618 = vdwg.mxu0
    %1619 = vmatprep.subr.bf16.mxu0 0
    %1620 = vmatpush1.bf16.msra.mxu0 %v1530
    %1621 = vmatprep.subr.bf16.mxu0 0
    %1622 = vmatpush1.bf16.msra.mxu0 %v1531
    %1623 = vmatprep.subr.bf16.mxu0 0
    %1624 = vmatpush1.bf16.msra.mxu0 %v1532
    %1625 = vmatprep.subr.bf16.mxu0 0
    %1626 = vmatpush1.bf16.msra.mxu0 %v1533
    %1627 = vmatprep.subr.bf16.mxu0 0
    %1628 = vmatpush1.bf16.msra.mxu0 %v1534
    %1629 = vmatprep.subr.bf16.mxu0 0
    %1630 = vmatpush1.bf16.msra.mxu0 %v1535
    %1631 = vmatprep.subr.bf16.mxu0 0
    %1632 = vmatpush1.bf16.msra.mxu0 %v1536
    %1633 = vmatprep.subr.bf16.mxu0 0
    %1634 = vmatpush1.bf16.msra.mxu0 %v1537
    %1635 = vmatprep.subr.bf16.mxu0 0
    %1636 = vmatpush1.bf16.msra.mxu0 %v1538
    %1637 = vmatprep.subr.bf16.mxu0 0
    %1638 = vmatpush1.bf16.msra.mxu0 %v1539
    %1639 = vmatprep.subr.bf16.mxu0 0
    %1640 = vmatpush1.bf16.msra.mxu0 %v1540
    %1641 = vmatprep.subr.bf16.mxu0 0
    %1642 = vmatpush1.bf16.msra.mxu0 %v1541
    %1643 = vmatprep.subr.bf16.mxu0 0
    %1644 = vmatpush1.bf16.msra.mxu0 %v1542
    %1645 = vmatprep.subr.bf16.mxu0 0
    %1646 = vmatpush1.bf16.msra.mxu0 %v1543
    %1647 = vmatprep.subr.bf16.mxu0 0
    %1648 = vmatpush1.bf16.msra.mxu0 %v1544
    %1649 = vmatprep.subr.bf16.mxu0 0
    %1650 = vmatpush1.bf16.msra.mxu0 %v1545
    %1651 = vmatprep.mubr.bf16.mxu0 %v1314
    %1652 = vmatmul.mubr.bf16.gmra.mrb[0].mxu0 %v1313
    %v1653 = vpop.f32.mrb[0].mxu0
    %v1654 = vadd.f32 %v1613, %v1653
    %v1655 = vpop.f32.mrb[0].mxu0
    %v1656 = vpop.f32.mrb[0].mxu0
    %v1657 = vadd.f32 %v1616, %v1656
    %v1658 = vpop.f32.mrb[0].mxu0
    %1659 = vdwg.mxu0
    %v1660 = vadd.f32 %v1654, %v960
    %v1661 = vadd.f32 %v1657, %v961
    %v1662 = vmax.f32 %v1660, 0.0
    %v1663 = vmax.f32 %v1661, 0.0
    %s1664 = scalar_lea.vmem %s11, 1
    %v1665 = vld [vmem:[%s1664] sm:$0x1]
    %s1666 = scalar_lea.vmem %s13, 1
    %v1667 = vld [vmem:[%s1666] sm:$0x1]
    %1668 = vadd.xlane.f32.xlu0 %v1662
    %v1669 = vpop.xlane.xlu0 %1668
    %1670 = vadd.xlane.f32.xlu0 %v1663
    %v1671 = vpop.xlane.xlu0 %1670
    %v1672 = vmul.f32 %v1669, %v163
    %v1673 = vmul.f32 %v1671, %v163
    %v1674 = vsub.f32 %v1662, %v1672
    %v1675 = vsub.f32 %v1663, %v1673
    %v1676 = vmul.f32 %v1674, %v1674
    %v1677 = vmul.f32 %v1675, %v1675
    %1678 = vadd.xlane.f32.xlu0 %v1676
    %v1679 = vpop.xlane.xlu0 %1678
    %1680 = vadd.xlane.f32.xlu0 %v1677
    %v1681 = vpop.xlane.xlu0 %1680
    %v1682 = vmul.f32 %v1679, %v163
    %v1683 = vmul.f32 %v1681, %v163
    %v1684 = vadd.f32 %v1682, 1e-05
    %v1685 = vadd.f32 %v1683, 1e-05
    %v1686 = vrsqrt.pop %v1684
    %v1687 = vrsqrt.pop %v1685
    %v1688 = vmul.f32 %v1674, %v1686
    %v1689 = vmul.f32 %v1675, %v1687
    %v1691 = vlaneseq
    %v1692 = vshrl.u32 %v1691, 7
    %v1693 = vsub.s32 0, %v1692
    %v1694 = vrot.slane %v1665, %v1693
    %v1696 = vmul.f32 %v1688, %v1694
    %v1697 = vmul.f32 %v1689, %v1694
    %v1699 = vlaneseq
    %v1700 = vshrl.u32 %v1699, 7
    %v1701 = vsub.s32 0, %v1700
    %v1702 = vrot.slane %v1667, %v1701
    %v1704 = vadd.f32 %v1696, %v1702
    %v1705 = vadd.f32 %v1697, %v1702
    %v1706 = vpack.c.bf16 %v1705, %v1704
    %s1707 = scalar_lea.vmem [#allocation3], 192
    %v1708 = vld [vmem:[%s1707] sm:$0xff]
    %v1709 = vld [vmem:[%s1707 + $0x8] sm:$0xf]
    %v1710 = vld [vmem:[%s1707 + $0xc] sm:$0xff]
    %v1711 = vld [vmem:[%s1707 + $0x14] sm:$0xf]
    %v1712 = vld [vmem:[%s1707 + $0x18] sm:$0xff]
    %v1713 = vld [vmem:[%s1707 + $0x20] sm:$0xf]
    %v1714 = vld [vmem:[%s1707 + $0x24] sm:$0xff]
    %v1715 = vld [vmem:[%s1707 + $0x2c] sm:$0xf]
    %v1716 = vld [vmem:[%s1707 + $0x30] sm:$0xff]
    %v1717 = vld [vmem:[%s1707 + $0x38] sm:$0xf]
    %v1718 = vld [vmem:[%s1707 + $0x3c] sm:$0xff]
    %v1719 = vld [vmem:[%s1707 + $0x44] sm:$0xf]
    %v1720 = vld [vmem:[%s1707 + $0x48] sm:$0xff]
    %v1721 = vld [vmem:[%s1707 + $0x50] sm:$0xf]
    %v1722 = vld [vmem:[%s1707 + $0x54] sm:$0xff]
    %v1723 = vld [vmem:[%s1707 + $0x5c] sm:$0xf]
    %v1724 = vld [vmem:[%s1707 + $0x60] sm:$0xff]
    %v1725 = vld [vmem:[%s1707 + $0x68] sm:$0xf]
    %v1726 = vld [vmem:[%s1707 + $0x6c] sm:$0xff]
    %v1727 = vld [vmem:[%s1707 + $0x74] sm:$0xf]
    %v1728 = vld [vmem:[%s1707 + $0x78] sm:$0xff]
    %v1729 = vld [vmem:[%s1707 + $0x80] sm:$0xf]
    %v1730 = vld [vmem:[%s1707 + $0x84] sm:$0xff]
    %v1731 = vld [vmem:[%s1707 + $0x8c] sm:$0xf]
    %v1732 = vld [vmem:[%s1707 + $0x90] sm:$0xff]
    %v1733 = vld [vmem:[%s1707 + $0x98] sm:$0xf]
    %v1734 = vld [vmem:[%s1707 + $0x9c] sm:$0xff]
    %v1735 = vld [vmem:[%s1707 + $0xa4] sm:$0xf]
    %v1736 = vld [vmem:[%s1707 + $0xa8] sm:$0xff]
    %v1737 = vld [vmem:[%s1707 + $0xb0] sm:$0xf]
    %v1738 = vld [vmem:[%s1707 + $0xb4] sm:$0xff]
    %v1739 = vld [vmem:[%s1707 + $0xbc] sm:$0xf]
    %s1740 = scalar_lea.vmem %s21, 3
    %v1741 = vld [vmem:[%s1740] sm:$0x7]
    %v1743 = vlaneseq
    %v1744 = vshrl.u32 %v1743, 7
    %v1745 = vsub.s32 0, %v1744
    %v1746 = vrot.slane %v1741, %v1745
    %v1747 = vlaneseq
    %v1748 = vshrl.u32 %v1747, 7
    %v1749 = vsub.s32 1, %v1748
    %v1750 = vrot.slane %v1741, %v1749
    %v1751 = vlaneseq
    %v1752 = vshrl.u32 %v1751, 7
    %v1753 = vsub.s32 2, %v1752
    %v1754 = vrot.slane %v1741, %v1753
    %v1790 = vunpack.c.l.b16 %v1708
    %v1791 = vunpack.c.h.b16 %v1708
    %v1792 = vunpack.c.l.b16 %v1709
    %v1793 = vunpack.c.l.b16 %v1710
    %v1794 = vunpack.c.h.b16 %v1710
    %v1795 = vunpack.c.l.b16 %v1711
    %v1796 = vunpack.c.l.b16 %v1712
    %v1797 = vunpack.c.h.b16 %v1712
    %v1798 = vunpack.c.l.b16 %v1713
    %v1799 = vunpack.c.l.b16 %v1714
    %v1800 = vunpack.c.h.b16 %v1714
    %v1801 = vunpack.c.l.b16 %v1715
    %v1802 = vunpack.c.l.b16 %v1716
    %v1803 = vunpack.c.h.b16 %v1716
    %v1804 = vunpack.c.l.b16 %v1717
    %v1805 = vunpack.c.l.b16 %v1718
    %v1806 = vunpack.c.h.b16 %v1718
    %v1807 = vunpack.c.l.b16 %v1719
    %v1808 = vunpack.c.l.b16 %v1720
    %v1809 = vunpack.c.h.b16 %v1720
    %v1810 = vunpack.c.l.b16 %v1721
    %v1811 = vunpack.c.l.b16 %v1722
    %v1812 = vunpack.c.h.b16 %v1722
    %v1813 = vunpack.c.l.b16 %v1723
    %v1814 = vunpack.c.l.b16 %v1724
    %v1815 = vunpack.c.h.b16 %v1724
    %v1816 = vunpack.c.l.b16 %v1725
    %v1817 = vunpack.c.l.b16 %v1726
    %v1818 = vunpack.c.h.b16 %v1726
    %v1819 = vunpack.c.l.b16 %v1727
    %v1820 = vunpack.c.l.b16 %v1728
    %v1821 = vunpack.c.h.b16 %v1728
    %v1822 = vunpack.c.l.b16 %v1729
    %v1823 = vunpack.c.l.b16 %v1730
    %v1824 = vunpack.c.h.b16 %v1730
    %v1825 = vunpack.c.l.b16 %v1731
    %v1826 = vunpack.c.l.b16 %v1732
    %v1827 = vunpack.c.h.b16 %v1732
    %v1828 = vunpack.c.l.b16 %v1733
    %v1829 = vunpack.c.l.b16 %v1734
    %v1830 = vunpack.c.h.b16 %v1734
    %v1831 = vunpack.c.l.b16 %v1735
    %v1832 = vunpack.c.l.b16 %v1736
    %v1833 = vunpack.c.h.b16 %v1736
    %v1834 = vunpack.c.l.b16 %v1737
    %v1835 = vunpack.c.l.b16 %v1738
    %v1836 = vunpack.c.h.b16 %v1738
    %v1837 = vunpack.c.l.b16 %v1739
    %v1838 = vpack.c.b16 %v1793, %v1790
    %v1839 = vpack.c.b16 %v1794, %v1791
    %v1840 = vpack.c.b16 %v1795, %v1792
    %v1841 = vpack.c.b16 %v1799, %v1796
    %v1842 = vpack.c.b16 %v1800, %v1797
    %v1843 = vpack.c.b16 %v1801, %v1798
    %v1844 = vpack.c.b16 %v1805, %v1802
    %v1845 = vpack.c.b16 %v1806, %v1803
    %v1846 = vpack.c.b16 %v1807, %v1804
    %v1847 = vpack.c.b16 %v1811, %v1808
    %v1848 = vpack.c.b16 %v1812, %v1809
    %v1849 = vpack.c.b16 %v1813, %v1810
    %v1850 = vpack.c.b16 %v1817, %v1814
    %v1851 = vpack.c.b16 %v1818, %v1815
    %v1852 = vpack.c.b16 %v1819, %v1816
    %v1853 = vpack.c.b16 %v1823, %v1820
    %v1854 = vpack.c.b16 %v1824, %v1821
    %v1855 = vpack.c.b16 %v1825, %v1822
    %v1856 = vpack.c.b16 %v1829, %v1826
    %v1857 = vpack.c.b16 %v1830, %v1827
    %v1858 = vpack.c.b16 %v1831, %v1828
    %v1859 = vpack.c.b16 %v1835, %v1832
    %v1860 = vpack.c.b16 %v1836, %v1833
    %v1861 = vpack.c.b16 %v1837, %v1834
    %1886 = vmatprep.subr.bf16.mxu0 %v1839
    %1887 = vmatpush1.bf16.msra.mxu0 %v1838
    %1888 = vmatprep.subr.bf16.mxu0 %v1842
    %1889 = vmatpush1.bf16.msra.mxu0 %v1841
    %1890 = vmatprep.subr.bf16.mxu0 %v1845
    %1891 = vmatpush1.bf16.msra.mxu0 %v1844
    %1892 = vmatprep.subr.bf16.mxu0 %v1848
    %1893 = vmatpush1.bf16.msra.mxu0 %v1847
    %1894 = vmatprep.subr.bf16.mxu0 %v1851
    %1895 = vmatpush1.bf16.msra.mxu0 %v1850
    %1896 = vmatprep.subr.bf16.mxu0 %v1854
    %1897 = vmatpush1.bf16.msra.mxu0 %v1853
    %1898 = vmatprep.subr.bf16.mxu0 %v1857
    %1899 = vmatpush1.bf16.msra.mxu0 %v1856
    %1900 = vmatprep.subr.bf16.mxu0 %v1860
    %1901 = vmatpush1.bf16.msra.mxu0 %v1859
    %1902 = vmatprep.subr.bf16.mxu0 0
    %1903 = vmatpush1.bf16.msra.mxu0 0
    %1904 = vmatprep.subr.bf16.mxu0 0
    %1905 = vmatpush1.bf16.msra.mxu0 0
    %1906 = vmatprep.subr.bf16.mxu0 0
    %1907 = vmatpush1.bf16.msra.mxu0 0
    %1908 = vmatprep.subr.bf16.mxu0 0
    %1909 = vmatpush1.bf16.msra.mxu0 0
    %1910 = vmatprep.subr.bf16.mxu0 0
    %1911 = vmatpush1.bf16.msra.mxu0 0
    %1912 = vmatprep.subr.bf16.mxu0 0
    %1913 = vmatpush1.bf16.msra.mxu0 0
    %1914 = vmatprep.subr.bf16.mxu0 0
    %1915 = vmatpush1.bf16.msra.mxu0 0
    %1916 = vmatprep.subr.bf16.mxu0 0
    %1917 = vmatpush1.bf16.msra.mxu0 0
    %1918 = vmatprep.mubr.bf16.mxu0 0
    %1919 = vmatmul.mubr.bf16.gmra.mrb[0].mxu0 %v1706
    %v1920 = vpop.f32.mrb[0].mxu0
    %v1921 = vadd.f32 %v1746, %v1920
    %v1922 = vpop.f32.mrb[0].mxu0
    %v1923 = vadd.f32 %v1750, %v1922
    %v1924 = vpop.f32.mrb[0].mxu0
    %v1925 = vadd.f32 %v1746, %v1924
    %v1926 = vpop.f32.mrb[0].mxu0
    %v1927 = vadd.f32 %v1750, %v1926
    %1928 = vdwg.mxu0
    %1929 = vmatprep.subr.bf16.mxu0 0
    %1930 = vmatpush1.bf16.msra.mxu0 %v1840
    %1931 = vmatprep.subr.bf16.mxu0 0
    %1932 = vmatpush1.bf16.msra.mxu0 %v1843
    %1933 = vmatprep.subr.bf16.mxu0 0
    %1934 = vmatpush1.bf16.msra.mxu0 %v1846
    %1935 = vmatprep.subr.bf16.mxu0 0
    %1936 = vmatpush1.bf16.msra.mxu0 %v1849
    %1937 = vmatprep.subr.bf16.mxu0 0
    %1938 = vmatpush1.bf16.msra.mxu0 %v1852
    %1939 = vmatprep.subr.bf16.mxu0 0
    %1940 = vmatpush1.bf16.msra.mxu0 %v1855
    %1941 = vmatprep.subr.bf16.mxu0 0
    %1942 = vmatpush1.bf16.msra.mxu0 %v1858
    %1943 = vmatprep.subr.bf16.mxu0 0
    %1944 = vmatpush1.bf16.msra.mxu0 %v1861
    %1945 = vmatprep.subr.bf16.mxu0 0
    %1946 = vmatpush1.bf16.msra.mxu0 0
    %1947 = vmatprep.subr.bf16.mxu0 0
    %1948 = vmatpush1.bf16.msra.mxu0 0
    %1949 = vmatprep.subr.bf16.mxu0 0
    %1950 = vmatpush1.bf16.msra.mxu0 0
    %1951 = vmatprep.subr.bf16.mxu0 0
    %1952 = vmatpush1.bf16.msra.mxu0 0
    %1953 = vmatprep.subr.bf16.mxu0 0
    %1954 = vmatpush1.bf16.msra.mxu0 0
    %1955 = vmatprep.subr.bf16.mxu0 0
    %1956 = vmatpush1.bf16.msra.mxu0 0
    %1957 = vmatprep.subr.bf16.mxu0 0
    %1958 = vmatpush1.bf16.msra.mxu0 0
    %1959 = vmatprep.subr.bf16.mxu0 0
    %1960 = vmatpush1.bf16.msra.mxu0 0
    %1961 = vmatprep.mubr.bf16.mxu0 0
    %1962 = vmatmul.mubr.bf16.gmra.mrb[0].mxu0 %v1706
    %v1963 = vpop.f32.mrb[0].mxu0
    %v1964 = vadd.f32 %v1754, %v1963
    %v1965 = vpop.f32.mrb[0].mxu0
    %v1966 = vpop.f32.mrb[0].mxu0
    %v1967 = vadd.f32 %v1754, %v1966
    %v1968 = vpop.f32.mrb[0].mxu0
    %1969 = vdwg.mxu0
    %1972 = vrot.lane.b32.xlu0 %v1921, 96
    %v1973 = vpop.permute.xlu0 %1972
    %1974 = vrot.lane.b32.xlu0 %v1925, 96
    %v1975 = vpop.permute.xlu0 %1974
    %1978 = vrot.lane.b32.xlu0 %v1921, 64
    %v1979 = vpop.permute.xlu0 %1978
    %1980 = vrot.lane.b32.xlu0 %v1925, 64
    %v1981 = vpop.permute.xlu0 %1980
    %1984 = vrot.lane.b32.xlu0 %v1921, 32
    %v1985 = vpop.permute.xlu0 %1984
    %1986 = vrot.lane.b32.xlu0 %v1925, 32
    %v1987 = vpop.permute.xlu0 %1986
    %v1990 = vpack.c.bf16 %v1973, %v1921
    %v1991 = vpack.c.bf16 %v1985, %v1979
    %v1992 = vpack.c.bf16 %v1975, %v1925
    %v1993 = vpack.c.bf16 %v1987, %v1981
    %1996 = vrot.lane.b32.xlu0 %v1923, 96
    %v1997 = vpop.permute.xlu0 %1996
    %1998 = vrot.lane.b32.xlu0 %v1927, 96
    %v1999 = vpop.permute.xlu0 %1998
    %2002 = vrot.lane.b32.xlu0 %v1923, 64
    %v2003 = vpop.permute.xlu0 %2002
    %2004 = vrot.lane.b32.xlu0 %v1927, 64
    %v2005 = vpop.permute.xlu0 %2004
    %2008 = vrot.lane.b32.xlu0 %v1923, 32
    %v2009 = vpop.permute.xlu0 %2008
    %2010 = vrot.lane.b32.xlu0 %v1927, 32
    %v2011 = vpop.permute.xlu0 %2010
    %v2014 = vpack.c.bf16 %v1997, %v1923
    %v2015 = vpack.c.bf16 %v2009, %v2003
    %v2016 = vpack.c.bf16 %v1999, %v1927
    %v2017 = vpack.c.bf16 %v2011, %v2005
    %2020 = vrot.lane.b32.xlu0 %v1964, 96
    %v2021 = vpop.permute.xlu0 %2020
    %2022 = vrot.lane.b32.xlu0 %v1967, 96
    %v2023 = vpop.permute.xlu0 %2022
    %2026 = vrot.lane.b32.xlu0 %v1964, 64
    %v2027 = vpop.permute.xlu0 %2026
    %2028 = vrot.lane.b32.xlu0 %v1967, 64
    %v2029 = vpop.permute.xlu0 %2028
    %2032 = vrot.lane.b32.xlu0 %v1964, 32
    %v2033 = vpop.permute.xlu0 %2032
    %2034 = vrot.lane.b32.xlu0 %v1967, 32
    %v2035 = vpop.permute.xlu0 %2034
    %v2038 = vpack.c.bf16 %v2021, %v1964
    %v2039 = vpack.c.bf16 %v2033, %v2027
    %v2040 = vpack.c.bf16 %v2023, %v1967
    %v2041 = vpack.c.bf16 %v2035, %v2029
    %v2043 = vsel %vm556, %v1990, 0
    %v2046 = vsel %vm556, %v1991, 0
    %v2049 = vsel %vm556, %v1992, 0
    %v2052 = vsel %vm556, %v1993, 0
    %v2055 = vsel %vm556, %v2014, 0
    %v2058 = vsel %vm556, %v2015, 0
    %v2061 = vsel %vm556, %v2016, 0
    %v2064 = vsel %vm556, %v2017, 0
    %2066 = vmatprep.subr.bf16.mxu0 0
    %2067 = vmatpush1.bf16.xpose.msra.mxu0 %v2055
    %2068 = vmatprep.subr.bf16.mxu0 0
    %2069 = vmatpush1.bf16.xpose.msra.mxu0 %v2058
    %2070 = vmatprep.subr.bf16.mxu0 0
    %2071 = vmatpush1.bf16.xpose.msra.mxu0 %v2061
    %2072 = vmatprep.subr.bf16.mxu0 0
    %2073 = vmatpush1.bf16.xpose.msra.mxu0 %v2064
    %2074 = vmatprep.subr.bf16.mxu0 0
    %2075 = vmatpush1.bf16.xpose.msra.mxu0 0
    %2076 = vmatprep.subr.bf16.mxu0 0
    %2077 = vmatpush1.bf16.xpose.msra.mxu0 0
    %2078 = vmatprep.subr.bf16.mxu0 0
    %2079 = vmatpush1.bf16.xpose.msra.mxu0 0
    %2080 = vmatprep.subr.bf16.mxu0 0
    %2081 = vmatpush1.bf16.xpose.msra.mxu0 0
    %2082 = vmatprep.subr.bf16.mxu0 0
    %2083 = vmatpush1.bf16.xpose.msra.mxu0 0
    %2084 = vmatprep.subr.bf16.mxu0 0
    %2085 = vmatpush1.bf16.xpose.msra.mxu0 0
    %2086 = vmatprep.subr.bf16.mxu0 0
    %2087 = vmatpush1.bf16.xpose.msra.mxu0 0
    %2088 = vmatprep.subr.bf16.mxu0 0
    %2089 = vmatpush1.bf16.xpose.msra.mxu0 0
    %2090 = vmatprep.subr.bf16.mxu0 0
    %2091 = vmatpush1.bf16.xpose.msra.mxu0 0
    %2092 = vmatprep.subr.bf16.mxu0 0
    %2093 = vmatpush1.bf16.xpose.msra.mxu0 0
    %2094 = vmatprep.subr.bf16.mxu0 0
    %2095 = vmatpush1.bf16.xpose.msra.mxu0 0
    %2096 = vmatprep.subr.bf16.mxu0 0
    %2097 = vmatpush1.bf16.xpose.msra.mxu0 0
    %2098 = vmatprep.mubr.bf16.mxu0 0
    %2099 = vmatmul.mubr.bf16.gmra.mrb[0].mxu0 %v2043
    %v2100 = vpop.f32.mrb[0].mxu0
    %v2101 = vadd.f32 %v149, %v2100
    %v2102 = vpop.f32.mrb[0].mxu0
    %v2103 = vpop.f32.mrb[0].mxu0
    %v2104 = vadd.f32 %v150, %v2103
    %v2105 = vpop.f32.mrb[0].mxu0
    %2106 = vmatprep.mubr.bf16.mxu0 0
    %2107 = vmatmul.mubr.bf16.gmra.mrb[0].mxu0 %v2046
    %v2108 = vpop.f32.mrb[0].mxu0
    %v2109 = vadd.f32 %v151, %v2108
    %v2110 = vpop.f32.mrb[0].mxu0
    %v2111 = vpop.f32.mrb[0].mxu0
    %v2112 = vadd.f32 %v152, %v2111
    %v2113 = vpop.f32.mrb[0].mxu0
    %2114 = vmatprep.mubr.bf16.mxu0 0
    %2115 = vmatmul.mubr.bf16.gmra.mrb[0].mxu0 %v2049
    %v2116 = vpop.f32.mrb[0].mxu0
    %v2117 = vadd.f32 %v153, %v2116
    %v2118 = vpop.f32.mrb[0].mxu0
    %v2119 = vpop.f32.mrb[0].mxu0
    %v2120 = vadd.f32 %v154, %v2119
    %v2121 = vpop.f32.mrb[0].mxu0
    %2122 = vmatprep.mubr.bf16.mxu0 0
    %2123 = vmatmul.mubr.bf16.gmra.mrb[0].mxu0 %v2052
    %v2124 = vpop.f32.mrb[0].mxu0
    %v2125 = vadd.f32 %v155, %v2124
    %v2126 = vpop.f32.mrb[0].mxu0
    %v2127 = vpop.f32.mrb[0].mxu0
    %v2128 = vadd.f32 %v156, %v2127
    %v2129 = vpop.f32.mrb[0].mxu0
    %2130 = vdwg.mxu0
    %v2131 = vsel %vm646, %v2101, -inf
    %2132 = vmax.xlane.f32.xlu0 %v2131
    %v2133 = vpop.xlane.xlu0 %2132
    %v2134 = vsel %vm646, %v2104, -inf
    %2135 = vmax.xlane.f32.xlu0 %v2134
    %v2136 = vpop.xlane.xlu0 %2135
    %v2137 = vsel %vm646, %v2109, -inf
    %2138 = vmax.xlane.f32.xlu0 %v2137
    %v2139 = vpop.xlane.xlu0 %2138
    %v2140 = vsel %vm646, %v2112, -inf
    %2141 = vmax.xlane.f32.xlu0 %v2140
    %v2142 = vpop.xlane.xlu0 %2141
    %v2143 = vsel %vm646, %v2117, -inf
    %2144 = vmax.xlane.f32.xlu0 %v2143
    %v2145 = vpop.xlane.xlu0 %2144
    %v2146 = vsel %vm646, %v2120, -inf
    %2147 = vmax.xlane.f32.xlu0 %v2146
    %v2148 = vpop.xlane.xlu0 %2147
    %v2149 = vsel %vm646, %v2125, -inf
    %2150 = vmax.xlane.f32.xlu0 %v2149
    %v2151 = vpop.xlane.xlu0 %2150
    %v2152 = vsel %vm646, %v2128, -inf
    %2153 = vmax.xlane.f32.xlu0 %v2152
    %v2154 = vpop.xlane.xlu0 %2153
    %v2155 = vsub.f32 %v2101, %v2133
    %v2156 = vsub.f32 %v2104, %v2136
    %v2157 = vsub.f32 %v2109, %v2139
    %v2158 = vsub.f32 %v2112, %v2142
    %v2159 = vsub.f32 %v2117, %v2145
    %v2160 = vsub.f32 %v2120, %v2148
    %v2161 = vsub.f32 %v2125, %v2151
    %v2162 = vsub.f32 %v2128, %v2154
    %v2163 = vmul.f32 %v2155, 1.442695
    %v2164 = vpow.pop %v2163
    %v2165 = vmul.f32 %v2156, 1.442695
    %v2166 = vpow.pop %v2165
    %v2167 = vmul.f32 %v2157, 1.442695
    %v2168 = vpow.pop %v2167
    %v2169 = vmul.f32 %v2158, 1.442695
    %v2170 = vpow.pop %v2169
    %v2171 = vmul.f32 %v2159, 1.442695
    %v2172 = vpow.pop %v2171
    %v2173 = vmul.f32 %v2160, 1.442695
    %v2174 = vpow.pop %v2173
    %v2175 = vmul.f32 %v2161, 1.442695
    %v2176 = vpow.pop %v2175
    %v2177 = vmul.f32 %v2162, 1.442695
    %v2178 = vpow.pop %v2177
    %v2179 = vsel %vm646, %v2164, 0.0
    %2180 = vadd.xlane.f32.xlu0 %v2179
    %v2181 = vpop.xlane.xlu0 %2180
    %v2182 = vsel %vm646, %v2166, 0.0
    %2183 = vadd.xlane.f32.xlu0 %v2182
    %v2184 = vpop.xlane.xlu0 %2183
    %v2185 = vsel %vm646, %v2168, 0.0
    %2186 = vadd.xlane.f32.xlu0 %v2185
    %v2187 = vpop.xlane.xlu0 %2186
    %v2188 = vsel %vm646, %v2170, 0.0
    %2189 = vadd.xlane.f32.xlu0 %v2188
    %v2190 = vpop.xlane.xlu0 %2189
    %v2191 = vsel %vm646, %v2172, 0.0
    %2192 = vadd.xlane.f32.xlu0 %v2191
    %v2193 = vpop.xlane.xlu0 %2192
    %v2194 = vsel %vm646, %v2174, 0.0
    %2195 = vadd.xlane.f32.xlu0 %v2194
    %v2196 = vpop.xlane.xlu0 %2195
    %v2197 = vsel %vm646, %v2176, 0.0
    %2198 = vadd.xlane.f32.xlu0 %v2197
    %v2199 = vpop.xlane.xlu0 %2198
    %v2200 = vsel %vm646, %v2178, 0.0
    %2201 = vadd.xlane.f32.xlu0 %v2200
    %v2202 = vpop.xlane.xlu0 %2201
    %v2203 = vrcp.pop %v2181
    %v2204 = vrcp.pop %v2184
    %v2205 = vrcp.pop %v2187
    %v2206 = vrcp.pop %v2190
    %v2207 = vrcp.pop %v2193
    %v2208 = vrcp.pop %v2196
    %v2209 = vrcp.pop %v2199
    %v2210 = vrcp.pop %v2202
    %v2211 = vmul.f32 %v2164, %v2203
    %v2212 = vmul.f32 %v2166, %v2204
    %v2213 = vmul.f32 %v2168, %v2205
    %v2214 = vmul.f32 %v2170, %v2206
    %v2215 = vmul.f32 %v2172, %v2207
    %v2216 = vmul.f32 %v2174, %v2208
    %v2217 = vmul.f32 %v2176, %v2209
    %v2218 = vmul.f32 %v2178, %v2210
    %v2219 = vpack.c.bf16 %v2212, %v2211
    %v2220 = vpack.c.bf16 %v2214, %v2213
    %v2221 = vpack.c.bf16 %v2216, %v2215
    %v2222 = vpack.c.bf16 %v2218, %v2217
    %v2224 = vsel %vm646, %v2219, 0
    %v2227 = vsel %vm646, %v2220, 0
    %v2230 = vsel %vm646, %v2221, 0
    %v2233 = vsel %vm646, %v2222, 0
    %2235 = vmatprep.subr.bf16.mxu0 0
    %2236 = vmatpush1.bf16.msra.mxu0 %v2038
    %2237 = vmatprep.subr.bf16.mxu0 0
    %2238 = vmatpush1.bf16.msra.mxu0 %v2039
    %2239 = vmatprep.subr.bf16.mxu0 0
    %2240 = vmatpush1.bf16.msra.mxu0 %v2040
    %2241 = vmatprep.subr.bf16.mxu0 0
    %2242 = vmatpush1.bf16.msra.mxu0 %v2041
    %2243 = vmatprep.subr.bf16.mxu0 0
    %2244 = vmatpush1.bf16.msra.mxu0 0
    %2245 = vmatprep.subr.bf16.mxu0 0
    %2246 = vmatpush1.bf16.msra.mxu0 0
    %2247 = vmatprep.subr.bf16.mxu0 0
    %2248 = vmatpush1.bf16.msra.mxu0 0
    %2249 = vmatprep.subr.bf16.mxu0 0
    %2250 = vmatpush1.bf16.msra.mxu0 0
    %2251 = vmatprep.subr.bf16.mxu0 0
    %2252 = vmatpush1.bf16.msra.mxu0 0
    %2253 = vmatprep.subr.bf16.mxu0 0
    %2254 = vmatpush1.bf16.msra.mxu0 0
    %2255 = vmatprep.subr.bf16.mxu0 0
    %2256 = vmatpush1.bf16.msra.mxu0 0
    %2257 = vmatprep.subr.bf16.mxu0 0
    %2258 = vmatpush1.bf16.msra.mxu0 0
    %2259 = vmatprep.subr.bf16.mxu0 0
    %2260 = vmatpush1.bf16.msra.mxu0 0
    %2261 = vmatprep.subr.bf16.mxu0 0
    %2262 = vmatpush1.bf16.msra.mxu0 0
    %2263 = vmatprep.subr.bf16.mxu0 0
    %2264 = vmatpush1.bf16.msra.mxu0 0
    %2265 = vmatprep.subr.bf16.mxu0 0
    %2266 = vmatpush1.bf16.msra.mxu0 0
    %2267 = vmatprep.mubr.bf16.mxu0 0
    %2268 = vmatmul.mubr.bf16.gmra.mrb[0].mxu0 %v2224
    %v2269 = vpop.f32.mrb[0].mxu0
    %v2270 = vadd.f32 0.0, %v2269
    %v2271 = vpop.f32.mrb[0].mxu0
    %v2272 = vpop.f32.mrb[0].mxu0
    %v2273 = vadd.f32 0.0, %v2272
    %v2274 = vpop.f32.mrb[0].mxu0
    %2275 = vmatprep.mubr.bf16.mxu0 0
    %2276 = vmatmul.mubr.bf16.gmra.mrb[0].mxu0 %v2227
    %v2277 = vpop.f32.mrb[0].mxu0
    %v2278 = vadd.f32 0.0, %v2277
    %v2279 = vpop.f32.mrb[0].mxu0
    %v2280 = vpop.f32.mrb[0].mxu0
    %v2281 = vadd.f32 0.0, %v2280
    %v2282 = vpop.f32.mrb[0].mxu0
    %2283 = vmatprep.mubr.bf16.mxu0 0
    %2284 = vmatmul.mubr.bf16.gmra.mrb[0].mxu0 %v2230
    %v2285 = vpop.f32.mrb[0].mxu0
    %v2286 = vadd.f32 0.0, %v2285
    %v2287 = vpop.f32.mrb[0].mxu0
    %v2288 = vpop.f32.mrb[0].mxu0
    %v2289 = vadd.f32 0.0, %v2288
    %v2290 = vpop.f32.mrb[0].mxu0
    %2291 = vmatprep.mubr.bf16.mxu0 0
    %2292 = vmatmul.mubr.bf16.gmra.mrb[0].mxu0 %v2233
    %v2293 = vpop.f32.mrb[0].mxu0
    %v2294 = vadd.f32 0.0, %v2293
    %v2295 = vpop.f32.mrb[0].mxu0
    %v2296 = vpop.f32.mrb[0].mxu0
    %v2297 = vadd.f32 0.0, %v2296
    %v2298 = vpop.f32.mrb[0].mxu0
    %2299 = vdwg.mxu0
    %2302 = vrot.lane.b32.xlu0 %v2273, 32
    %v2303 = vpop.permute.xlu0 %2302
    %2304 = vrot.lane.b32.xlu0 %v2289, 32
    %v2305 = vpop.permute.xlu0 %2304
    %2310 = vrot.lane.b32.xlu0 %v2278, 64
    %v2311 = vpop.permute.xlu0 %2310
    %2312 = vrot.lane.b32.xlu0 %v2294, 64
    %v2313 = vpop.permute.xlu0 %2312
    %2318 = vrot.lane.b32.xlu0 %v2281, 96
    %v2319 = vpop.permute.xlu0 %2318
    %2320 = vrot.lane.b32.xlu0 %v2297, 96
    %v2321 = vpop.permute.xlu0 %2320
    %v2324 = vsel %vm556, %v2270, %v2303
    %v2325 = vsel %vm556, %v2286, %v2305
    %v2326 = vsel %vm646, %v2324, %v2311
    %v2327 = vsel %vm646, %v2325, %v2313
    %v2328 = vsel %vm844, %v2326, %v2319
    %v2329 = vsel %vm844, %v2327, %v2321
    %v2330 = vpack.c.bf16 %v2329, %v2328
    %s2331 = scalar_lea.vmem %s23, 64
    %v2332 = vld [vmem:[%s2331] sm:$0xf]
    %v2333 = vld [vmem:[%s2331 + $0x4] sm:$0xf]
    %v2334 = vld [vmem:[%s2331 + $0x8] sm:$0xf]
    %v2335 = vld [vmem:[%s2331 + $0xc] sm:$0xf]
    %v2336 = vld [vmem:[%s2331 + $0x10] sm:$0xf]
    %v2337 = vld [vmem:[%s2331 + $0x14] sm:$0xf]
    %v2338 = vld [vmem:[%s2331 + $0x18] sm:$0xf]
    %v2339 = vld [vmem:[%s2331 + $0x1c] sm:$0xf]
    %v2340 = vld [vmem:[%s2331 + $0x20] sm:$0xf]
    %v2341 = vld [vmem:[%s2331 + $0x24] sm:$0xf]
    %v2342 = vld [vmem:[%s2331 + $0x28] sm:$0xf]
    %v2343 = vld [vmem:[%s2331 + $0x2c] sm:$0xf]
    %v2344 = vld [vmem:[%s2331 + $0x30] sm:$0xf]
    %v2345 = vld [vmem:[%s2331 + $0x34] sm:$0xf]
    %v2346 = vld [vmem:[%s2331 + $0x38] sm:$0xf]
    %v2347 = vld [vmem:[%s2331 + $0x3c] sm:$0xf]
    %s2348 = scalar_lea.vmem %s25, 1
    %v2349 = vld [vmem:[%s2348] sm:$0x1]
    %v2351 = vlaneseq
    %v2352 = vshrl.u32 %v2351, 7
    %v2353 = vsub.s32 0, %v2352
    %v2354 = vrot.slane %v2349, %v2353
    %v2372 = vunpack.c.l.b16 %v2332
    %v2373 = vunpack.c.l.b16 %v2333
    %v2374 = vunpack.c.l.b16 %v2334
    %v2375 = vunpack.c.l.b16 %v2335
    %v2376 = vunpack.c.l.b16 %v2336
    %v2377 = vunpack.c.l.b16 %v2337
    %v2378 = vunpack.c.l.b16 %v2338
    %v2379 = vunpack.c.l.b16 %v2339
    %v2380 = vunpack.c.l.b16 %v2340
    %v2381 = vunpack.c.l.b16 %v2341
    %v2382 = vunpack.c.l.b16 %v2342
    %v2383 = vunpack.c.l.b16 %v2343
    %v2384 = vunpack.c.l.b16 %v2344
    %v2385 = vunpack.c.l.b16 %v2345
    %v2386 = vunpack.c.l.b16 %v2346
    %v2387 = vunpack.c.l.b16 %v2347
    %v2388 = vpack.c.b16 %v2373, %v2372
    %v2389 = vpack.c.b16 %v2375, %v2374
    %v2390 = vpack.c.b16 %v2377, %v2376
    %v2391 = vpack.c.b16 %v2379, %v2378
    %v2392 = vpack.c.b16 %v2381, %v2380
    %v2393 = vpack.c.b16 %v2383, %v2382
    %v2394 = vpack.c.b16 %v2385, %v2384
    %v2395 = vpack.c.b16 %v2387, %v2386
    %2404 = vmatprep.subr.bf16.mxu0 0
    %2405 = vmatpush1.bf16.msra.mxu0 %v2388
    %2406 = vmatprep.subr.bf16.mxu0 0
    %2407 = vmatpush1.bf16.msra.mxu0 %v2389
    %2408 = vmatprep.subr.bf16.mxu0 0
    %2409 = vmatpush1.bf16.msra.mxu0 %v2390
    %2410 = vmatprep.subr.bf16.mxu0 0
    %2411 = vmatpush1.bf16.msra.mxu0 %v2391
    %2412 = vmatprep.subr.bf16.mxu0 0
    %2413 = vmatpush1.bf16.msra.mxu0 %v2392
    %2414 = vmatprep.subr.bf16.mxu0 0
    %2415 = vmatpush1.bf16.msra.mxu0 %v2393
    %2416 = vmatprep.subr.bf16.mxu0 0
    %2417 = vmatpush1.bf16.msra.mxu0 %v2394
    %2418 = vmatprep.subr.bf16.mxu0 0
    %2419 = vmatpush1.bf16.msra.mxu0 %v2395
    %2420 = vmatprep.subr.bf16.mxu0 0
    %2421 = vmatpush1.bf16.msra.mxu0 0
    %2422 = vmatprep.subr.bf16.mxu0 0
    %2423 = vmatpush1.bf16.msra.mxu0 0
    %2424 = vmatprep.subr.bf16.mxu0 0
    %2425 = vmatpush1.bf16.msra.mxu0 0
    %2426 = vmatprep.subr.bf16.mxu0 0
    %2427 = vmatpush1.bf16.msra.mxu0 0
    %2428 = vmatprep.subr.bf16.mxu0 0
    %2429 = vmatpush1.bf16.msra.mxu0 0
    %2430 = vmatprep.subr.bf16.mxu0 0
    %2431 = vmatpush1.bf16.msra.mxu0 0
    %2432 = vmatprep.subr.bf16.mxu0 0
    %2433 = vmatpush1.bf16.msra.mxu0 0
    %2434 = vmatprep.subr.bf16.mxu0 0
    %2435 = vmatpush1.bf16.msra.mxu0 0
    %2436 = vmatprep.mubr.bf16.mxu0 0
    %2437 = vmatmul.mubr.bf16.gmra.mrb[0].mxu0 %v2330
    %v2438 = vpop.f32.mrb[0].mxu0
    %v2439 = vadd.f32 %v2354, %v2438
    %v2440 = vpop.f32.mrb[0].mxu0
    %v2441 = vpop.f32.mrb[0].mxu0
    %v2442 = vadd.f32 %v2354, %v2441
    %v2443 = vpop.f32.mrb[0].mxu0
    %2444 = vdwg.mxu0
    %v2445 = vadd.f32 %v2439, %v1662
    %v2446 = vadd.f32 %v2442, %v1663
    %s2447 = scalar_lea.vmem %s15, 1
    %v2448 = vld [vmem:[%s2447] sm:$0x1]
    %s2449 = scalar_lea.vmem %s17, 1
    %v2450 = vld [vmem:[%s2449] sm:$0x1]
    %2451 = vadd.xlane.f32.xlu0 %v2445
    %v2452 = vpop.xlane.xlu0 %2451
    %2453 = vadd.xlane.f32.xlu0 %v2446
    %v2454 = vpop.xlane.xlu0 %2453
    %v2455 = vmul.f32 %v2452, %v163
    %v2456 = vmul.f32 %v2454, %v163
    %v2457 = vsub.f32 %v2445, %v2455
    %v2458 = vsub.f32 %v2446, %v2456
    %v2459 = vmul.f32 %v2457, %v2457
    %v2460 = vmul.f32 %v2458, %v2458
    %2461 = vadd.xlane.f32.xlu0 %v2459
    %v2462 = vpop.xlane.xlu0 %2461
    %2463 = vadd.xlane.f32.xlu0 %v2460
    %v2464 = vpop.xlane.xlu0 %2463
    %v2465 = vmul.f32 %v2462, %v163
    %v2466 = vmul.f32 %v2464, %v163
    %v2467 = vadd.f32 %v2465, 1e-05
    %v2468 = vadd.f32 %v2466, 1e-05
    %v2469 = vrsqrt.pop %v2467
    %v2470 = vrsqrt.pop %v2468
    %v2471 = vmul.f32 %v2457, %v2469
    %v2472 = vmul.f32 %v2458, %v2470
    %v2474 = vlaneseq
    %v2475 = vshrl.u32 %v2474, 7
    %v2476 = vsub.s32 0, %v2475
    %v2477 = vrot.slane %v2448, %v2476
    %v2479 = vmul.f32 %v2471, %v2477
    %v2480 = vmul.f32 %v2472, %v2477
    %v2482 = vlaneseq
    %v2483 = vshrl.u32 %v2482, 7
    %v2484 = vsub.s32 0, %v2483
    %v2485 = vrot.slane %v2450, %v2484
    %v2487 = vadd.f32 %v2479, %v2485
    %v2488 = vadd.f32 %v2480, %v2485
    %v2489 = vpack.c.bf16 %v2488, %v2487
    %s2490 = scalar_lea.vmem %s27, 256
    %v2491 = vld [vmem:[%s2490] sm:$0xff]
    %v2492 = vld [vmem:[%s2490 + $0x8] sm:$0xff]
    %v2493 = vld [vmem:[%s2490 + $0x10] sm:$0xff]
    %v2494 = vld [vmem:[%s2490 + $0x18] sm:$0xff]
    %v2495 = vld [vmem:[%s2490 + $0x20] sm:$0xff]
    %v2496 = vld [vmem:[%s2490 + $0x28] sm:$0xff]
    %v2497 = vld [vmem:[%s2490 + $0x30] sm:$0xff]
    %v2498 = vld [vmem:[%s2490 + $0x38] sm:$0xff]
    %v2499 = vld [vmem:[%s2490 + $0x40] sm:$0xff]
    %v2500 = vld [vmem:[%s2490 + $0x48] sm:$0xff]
    %v2501 = vld [vmem:[%s2490 + $0x50] sm:$0xff]
    %v2502 = vld [vmem:[%s2490 + $0x58] sm:$0xff]
    %v2503 = vld [vmem:[%s2490 + $0x60] sm:$0xff]
    %v2504 = vld [vmem:[%s2490 + $0x68] sm:$0xff]
    %v2505 = vld [vmem:[%s2490 + $0x70] sm:$0xff]
    %v2506 = vld [vmem:[%s2490 + $0x78] sm:$0xff]
    %v2507 = vld [vmem:[%s2490 + $0x80] sm:$0xff]
    %v2508 = vld [vmem:[%s2490 + $0x88] sm:$0xff]
    %v2509 = vld [vmem:[%s2490 + $0x90] sm:$0xff]
    %v2510 = vld [vmem:[%s2490 + $0x98] sm:$0xff]
    %v2511 = vld [vmem:[%s2490 + $0xa0] sm:$0xff]
    %v2512 = vld [vmem:[%s2490 + $0xa8] sm:$0xff]
    %v2513 = vld [vmem:[%s2490 + $0xb0] sm:$0xff]
    %v2514 = vld [vmem:[%s2490 + $0xb8] sm:$0xff]
    %v2515 = vld [vmem:[%s2490 + $0xc0] sm:$0xff]
    %v2516 = vld [vmem:[%s2490 + $0xc8] sm:$0xff]
    %v2517 = vld [vmem:[%s2490 + $0xd0] sm:$0xff]
    %v2518 = vld [vmem:[%s2490 + $0xd8] sm:$0xff]
    %v2519 = vld [vmem:[%s2490 + $0xe0] sm:$0xff]
    %v2520 = vld [vmem:[%s2490 + $0xe8] sm:$0xff]
    %v2521 = vld [vmem:[%s2490 + $0xf0] sm:$0xff]
    %v2522 = vld [vmem:[%s2490 + $0xf8] sm:$0xff]
    %s2523 = scalar_lea.vmem %s29, 4
    %v2524 = vld [vmem:[%s2523] sm:$0xf]
    %v2526 = vlaneseq
    %v2527 = vshrl.u32 %v2526, 7
    %v2528 = vsub.s32 0, %v2527
    %v2529 = vrot.slane %v2524, %v2528
    %v2530 = vlaneseq
    %v2531 = vshrl.u32 %v2530, 7
    %v2532 = vsub.s32 1, %v2531
    %v2533 = vrot.slane %v2524, %v2532
    %v2534 = vlaneseq
    %v2535 = vshrl.u32 %v2534, 7
    %v2536 = vsub.s32 2, %v2535
    %v2537 = vrot.slane %v2524, %v2536
    %v2538 = vlaneseq
    %v2539 = vshrl.u32 %v2538, 7
    %v2540 = vsub.s32 3, %v2539
    %v2541 = vrot.slane %v2524, %v2540
    %v2578 = vunpack.c.l.b16 %v2491
    %v2579 = vunpack.c.h.b16 %v2491
    %v2580 = vunpack.c.l.b16 %v2492
    %v2581 = vunpack.c.h.b16 %v2492
    %v2582 = vunpack.c.l.b16 %v2493
    %v2583 = vunpack.c.h.b16 %v2493
    %v2584 = vunpack.c.l.b16 %v2494
    %v2585 = vunpack.c.h.b16 %v2494
    %v2586 = vunpack.c.l.b16 %v2495
    %v2587 = vunpack.c.h.b16 %v2495
    %v2588 = vunpack.c.l.b16 %v2496
    %v2589 = vunpack.c.h.b16 %v2496
    %v2590 = vunpack.c.l.b16 %v2497
    %v2591 = vunpack.c.h.b16 %v2497
    %v2592 = vunpack.c.l.b16 %v2498
    %v2593 = vunpack.c.h.b16 %v2498
    %v2594 = vunpack.c.l.b16 %v2499
    %v2595 = vunpack.c.h.b16 %v2499
    %v2596 = vunpack.c.l.b16 %v2500
    %v2597 = vunpack.c.h.b16 %v2500
    %v2598 = vunpack.c.l.b16 %v2501
    %v2599 = vunpack.c.h.b16 %v2501
    %v2600 = vunpack.c.l.b16 %v2502
    %v2601 = vunpack.c.h.b16 %v2502
    %v2602 = vunpack.c.l.b16 %v2503
    %v2603 = vunpack.c.h.b16 %v2503
    %v2604 = vunpack.c.l.b16 %v2504
    %v2605 = vunpack.c.h.b16 %v2504
    %v2606 = vunpack.c.l.b16 %v2505
    %v2607 = vunpack.c.h.b16 %v2505
    %v2608 = vunpack.c.l.b16 %v2506
    %v2609 = vunpack.c.h.b16 %v2506
    %v2610 = vunpack.c.l.b16 %v2507
    %v2611 = vunpack.c.h.b16 %v2507
    %v2612 = vunpack.c.l.b16 %v2508
    %v2613 = vunpack.c.h.b16 %v2508
    %v2614 = vunpack.c.l.b16 %v2509
    %v2615 = vunpack.c.h.b16 %v2509
    %v2616 = vunpack.c.l.b16 %v2510
    %v2617 = vunpack.c.h.b16 %v2510
    %v2618 = vunpack.c.l.b16 %v2511
    %v2619 = vunpack.c.h.b16 %v2511
    %v2620 = vunpack.c.l.b16 %v2512
    %v2621 = vunpack.c.h.b16 %v2512
    %v2622 = vunpack.c.l.b16 %v2513
    %v2623 = vunpack.c.h.b16 %v2513
    %v2624 = vunpack.c.l.b16 %v2514
    %v2625 = vunpack.c.h.b16 %v2514
    %v2626 = vunpack.c.l.b16 %v2515
    %v2627 = vunpack.c.h.b16 %v2515
    %v2628 = vunpack.c.l.b16 %v2516
    %v2629 = vunpack.c.h.b16 %v2516
    %v2630 = vunpack.c.l.b16 %v2517
    %v2631 = vunpack.c.h.b16 %v2517
    %v2632 = vunpack.c.l.b16 %v2518
    %v2633 = vunpack.c.h.b16 %v2518
    %v2634 = vunpack.c.l.b16 %v2519
    %v2635 = vunpack.c.h.b16 %v2519
    %v2636 = vunpack.c.l.b16 %v2520
    %v2637 = vunpack.c.h.b16 %v2520
    %v2638 = vunpack.c.l.b16 %v2521
    %v2639 = vunpack.c.h.b16 %v2521
    %v2640 = vunpack.c.l.b16 %v2522
    %v2641 = vunpack.c.h.b16 %v2522
    %v2642 = vpack.c.b16 %v2582, %v2578
    %v2643 = vpack.c.b16 %v2583, %v2579
    %v2644 = vpack.c.b16 %v2584, %v2580
    %v2645 = vpack.c.b16 %v2585, %v2581
    %v2646 = vpack.c.b16 %v2590, %v2586
    %v2647 = vpack.c.b16 %v2591, %v2587
    %v2648 = vpack.c.b16 %v2592, %v2588
    %v2649 = vpack.c.b16 %v2593, %v2589
    %v2650 = vpack.c.b16 %v2598, %v2594
    %v2651 = vpack.c.b16 %v2599, %v2595
    %v2652 = vpack.c.b16 %v2600, %v2596
    %v2653 = vpack.c.b16 %v2601, %v2597
    %v2654 = vpack.c.b16 %v2606, %v2602
    %v2655 = vpack.c.b16 %v2607, %v2603
    %v2656 = vpack.c.b16 %v2608, %v2604
    %v2657 = vpack.c.b16 %v2609, %v2605
    %v2658 = vpack.c.b16 %v2614, %v2610
    %v2659 = vpack.c.b16 %v2615, %v2611
    %v2660 = vpack.c.b16 %v2616, %v2612
    %v2661 = vpack.c.b16 %v2617, %v2613
    %v2662 = vpack.c.b16 %v2622, %v2618
    %v2663 = vpack.c.b16 %v2623, %v2619
    %v2664 = vpack.c.b16 %v2624, %v2620
    %v2665 = vpack.c.b16 %v2625, %v2621
    %v2666 = vpack.c.b16 %v2630, %v2626
    %v2667 = vpack.c.b16 %v2631, %v2627
    %v2668 = vpack.c.b16 %v2632, %v2628
    %v2669 = vpack.c.b16 %v2633, %v2629
    %v2670 = vpack.c.b16 %v2638, %v2634
    %v2671 = vpack.c.b16 %v2639, %v2635
    %v2672 = vpack.c.b16 %v2640, %v2636
    %v2673 = vpack.c.b16 %v2641, %v2637
    %2706 = vmatprep.subr.bf16.mxu0 %v2643
    %2707 = vmatpush1.bf16.msra.mxu0 %v2642
    %2708 = vmatprep.subr.bf16.mxu0 %v2647
    %2709 = vmatpush1.bf16.msra.mxu0 %v2646
    %2710 = vmatprep.subr.bf16.mxu0 %v2651
    %2711 = vmatpush1.bf16.msra.mxu0 %v2650
    %2712 = vmatprep.subr.bf16.mxu0 %v2655
    %2713 = vmatpush1.bf16.msra.mxu0 %v2654
    %2714 = vmatprep.subr.bf16.mxu0 %v2659
    %2715 = vmatpush1.bf16.msra.mxu0 %v2658
    %2716 = vmatprep.subr.bf16.mxu0 %v2663
    %2717 = vmatpush1.bf16.msra.mxu0 %v2662
    %2718 = vmatprep.subr.bf16.mxu0 %v2667
    %2719 = vmatpush1.bf16.msra.mxu0 %v2666
    %2720 = vmatprep.subr.bf16.mxu0 %v2671
    %2721 = vmatpush1.bf16.msra.mxu0 %v2670
    %2722 = vmatprep.subr.bf16.mxu0 0
    %2723 = vmatpush1.bf16.msra.mxu0 0
    %2724 = vmatprep.subr.bf16.mxu0 0
    %2725 = vmatpush1.bf16.msra.mxu0 0
    %2726 = vmatprep.subr.bf16.mxu0 0
    %2727 = vmatpush1.bf16.msra.mxu0 0
    %2728 = vmatprep.subr.bf16.mxu0 0
    %2729 = vmatpush1.bf16.msra.mxu0 0
    %2730 = vmatprep.subr.bf16.mxu0 0
    %2731 = vmatpush1.bf16.msra.mxu0 0
    %2732 = vmatprep.subr.bf16.mxu0 0
    %2733 = vmatpush1.bf16.msra.mxu0 0
    %2734 = vmatprep.subr.bf16.mxu0 0
    %2735 = vmatpush1.bf16.msra.mxu0 0
    %2736 = vmatprep.subr.bf16.mxu0 0
    %2737 = vmatpush1.bf16.msra.mxu0 0
    %2738 = vmatprep.mubr.bf16.mxu0 0
    %2739 = vmatmul.mubr.bf16.gmra.mrb[0].mxu0 %v2489
    %v2740 = vpop.f32.mrb[0].mxu0
    %v2741 = vadd.f32 %v2529, %v2740
    %v2742 = vpop.f32.mrb[0].mxu0
    %v2743 = vadd.f32 %v2533, %v2742
    %v2744 = vpop.f32.mrb[0].mxu0
    %v2745 = vadd.f32 %v2529, %v2744
    %v2746 = vpop.f32.mrb[0].mxu0
    %v2747 = vadd.f32 %v2533, %v2746
    %2748 = vdwg.mxu0
    %2749 = vmatprep.subr.bf16.mxu0 %v2645
    %2750 = vmatpush1.bf16.msra.mxu0 %v2644
    %2751 = vmatprep.subr.bf16.mxu0 %v2649
    %2752 = vmatpush1.bf16.msra.mxu0 %v2648
    %2753 = vmatprep.subr.bf16.mxu0 %v2653
    %2754 = vmatpush1.bf16.msra.mxu0 %v2652
    %2755 = vmatprep.subr.bf16.mxu0 %v2657
    %2756 = vmatpush1.bf16.msra.mxu0 %v2656
    %2757 = vmatprep.subr.bf16.mxu0 %v2661
    %2758 = vmatpush1.bf16.msra.mxu0 %v2660
    %2759 = vmatprep.subr.bf16.mxu0 %v2665
    %2760 = vmatpush1.bf16.msra.mxu0 %v2664
    %2761 = vmatprep.subr.bf16.mxu0 %v2669
    %2762 = vmatpush1.bf16.msra.mxu0 %v2668
    %2763 = vmatprep.subr.bf16.mxu0 %v2673
    %2764 = vmatpush1.bf16.msra.mxu0 %v2672
    %2765 = vmatprep.subr.bf16.mxu0 0
    %2766 = vmatpush1.bf16.msra.mxu0 0
    %2767 = vmatprep.subr.bf16.mxu0 0
    %2768 = vmatpush1.bf16.msra.mxu0 0
    %2769 = vmatprep.subr.bf16.mxu0 0
    %2770 = vmatpush1.bf16.msra.mxu0 0
    %2771 = vmatprep.subr.bf16.mxu0 0
    %2772 = vmatpush1.bf16.msra.mxu0 0
    %2773 = vmatprep.subr.bf16.mxu0 0
    %2774 = vmatpush1.bf16.msra.mxu0 0
    %2775 = vmatprep.subr.bf16.mxu0 0
    %2776 = vmatpush1.bf16.msra.mxu0 0
    %2777 = vmatprep.subr.bf16.mxu0 0
    %2778 = vmatpush1.bf16.msra.mxu0 0
    %2779 = vmatprep.subr.bf16.mxu0 0
    %2780 = vmatpush1.bf16.msra.mxu0 0
    %2781 = vmatprep.mubr.bf16.mxu0 0
    %2782 = vmatmul.mubr.bf16.gmra.mrb[0].mxu0 %v2489
    %v2783 = vpop.f32.mrb[0].mxu0
    %v2784 = vadd.f32 %v2537, %v2783
    %v2785 = vpop.f32.mrb[0].mxu0
    %v2786 = vadd.f32 %v2541, %v2785
    %v2787 = vpop.f32.mrb[0].mxu0
    %v2788 = vadd.f32 %v2537, %v2787
    %v2789 = vpop.f32.mrb[0].mxu0
    %v2790 = vadd.f32 %v2541, %v2789
    %2791 = vdwg.mxu0
    %v2792 = vmax.f32 %v2741, 0.0
    %v2793 = vmax.f32 %v2743, 0.0
    %v2794 = vmax.f32 %v2784, 0.0
    %v2795 = vmax.f32 %v2786, 0.0
    %v2796 = vmax.f32 %v2745, 0.0
    %v2797 = vmax.f32 %v2747, 0.0
    %v2798 = vmax.f32 %v2788, 0.0
    %v2799 = vmax.f32 %v2790, 0.0
    %v2800 = vpack.c.bf16 %v2796, %v2792
    %v2801 = vpack.c.bf16 %v2797, %v2793
    %v2802 = vpack.c.bf16 %v2798, %v2794
    %v2803 = vpack.c.bf16 %v2799, %v2795
    %s2804 = scalar_lea.vmem %s31, 256
    %v2805 = vld [vmem:[%s2804] sm:$0xf]
    %v2806 = vld [vmem:[%s2804 + $0x4] sm:$0xf]
    %v2807 = vld [vmem:[%s2804 + $0x8] sm:$0xf]
    %v2808 = vld [vmem:[%s2804 + $0xc] sm:$0xf]
    %v2809 = vld [vmem:[%s2804 + $0x10] sm:$0xf]
    %v2810 = vld [vmem:[%s2804 + $0x14] sm:$0xf]
    %v2811 = vld [vmem:[%s2804 + $0x18] sm:$0xf]
    %v2812 = vld [vmem:[%s2804 + $0x1c] sm:$0xf]
    %v2813 = vld [vmem:[%s2804 + $0x20] sm:$0xf]
    %v2814 = vld [vmem:[%s2804 + $0x24] sm:$0xf]
    %v2815 = vld [vmem:[%s2804 + $0x28] sm:$0xf]
    %v2816 = vld [vmem:[%s2804 + $0x2c] sm:$0xf]
    %v2817 = vld [vmem:[%s2804 + $0x30] sm:$0xf]
    %v2818 = vld [vmem:[%s2804 + $0x34] sm:$0xf]
    %v2819 = vld [vmem:[%s2804 + $0x38] sm:$0xf]
    %v2820 = vld [vmem:[%s2804 + $0x3c] sm:$0xf]
    %v2821 = vld [vmem:[%s2804 + $0x40] sm:$0xf]
    %v2822 = vld [vmem:[%s2804 + $0x44] sm:$0xf]
    %v2823 = vld [vmem:[%s2804 + $0x48] sm:$0xf]
    %v2824 = vld [vmem:[%s2804 + $0x4c] sm:$0xf]
    %v2825 = vld [vmem:[%s2804 + $0x50] sm:$0xf]
    %v2826 = vld [vmem:[%s2804 + $0x54] sm:$0xf]
    %v2827 = vld [vmem:[%s2804 + $0x58] sm:$0xf]
    %v2828 = vld [vmem:[%s2804 + $0x5c] sm:$0xf]
    %v2829 = vld [vmem:[%s2804 + $0x60] sm:$0xf]
    %v2830 = vld [vmem:[%s2804 + $0x64] sm:$0xf]
    %v2831 = vld [vmem:[%s2804 + $0x68] sm:$0xf]
    %v2832 = vld [vmem:[%s2804 + $0x6c] sm:$0xf]
    %v2833 = vld [vmem:[%s2804 + $0x70] sm:$0xf]
    %v2834 = vld [vmem:[%s2804 + $0x74] sm:$0xf]
    %v2835 = vld [vmem:[%s2804 + $0x78] sm:$0xf]
    %v2836 = vld [vmem:[%s2804 + $0x7c] sm:$0xf]
    %v2837 = vld [vmem:[%s2804 + $0x80] sm:$0xf]
    %v2838 = vld [vmem:[%s2804 + $0x84] sm:$0xf]
    %v2839 = vld [vmem:[%s2804 + $0x88] sm:$0xf]
    %v2840 = vld [vmem:[%s2804 + $0x8c] sm:$0xf]
    %v2841 = vld [vmem:[%s2804 + $0x90] sm:$0xf]
    %v2842 = vld [vmem:[%s2804 + $0x94] sm:$0xf]
    %v2843 = vld [vmem:[%s2804 + $0x98] sm:$0xf]
    %v2844 = vld [vmem:[%s2804 + $0x9c] sm:$0xf]
    %v2845 = vld [vmem:[%s2804 + $0xa0] sm:$0xf]
    %v2846 = vld [vmem:[%s2804 + $0xa4] sm:$0xf]
    %v2847 = vld [vmem:[%s2804 + $0xa8] sm:$0xf]
    %v2848 = vld [vmem:[%s2804 + $0xac] sm:$0xf]
    %v2849 = vld [vmem:[%s2804 + $0xb0] sm:$0xf]
    %v2850 = vld [vmem:[%s2804 + $0xb4] sm:$0xf]
    %v2851 = vld [vmem:[%s2804 + $0xb8] sm:$0xf]
    %v2852 = vld [vmem:[%s2804 + $0xbc] sm:$0xf]
    %v2853 = vld [vmem:[%s2804 + $0xc0] sm:$0xf]
    %v2854 = vld [vmem:[%s2804 + $0xc4] sm:$0xf]
    %v2855 = vld [vmem:[%s2804 + $0xc8] sm:$0xf]
    %v2856 = vld [vmem:[%s2804 + $0xcc] sm:$0xf]
    %v2857 = vld [vmem:[%s2804 + $0xd0] sm:$0xf]
    %v2858 = vld [vmem:[%s2804 + $0xd4] sm:$0xf]
    %v2859 = vld [vmem:[%s2804 + $0xd8] sm:$0xf]
    %v2860 = vld [vmem:[%s2804 + $0xdc] sm:$0xf]
    %v2861 = vld [vmem:[%s2804 + $0xe0] sm:$0xf]
    %v2862 = vld [vmem:[%s2804 + $0xe4] sm:$0xf]
    %v2863 = vld [vmem:[%s2804 + $0xe8] sm:$0xf]
    %v2864 = vld [vmem:[%s2804 + $0xec] sm:$0xf]
    %v2865 = vld [vmem:[%s2804 + $0xf0] sm:$0xf]
    %v2866 = vld [vmem:[%s2804 + $0xf4] sm:$0xf]
    %v2867 = vld [vmem:[%s2804 + $0xf8] sm:$0xf]
    %v2868 = vld [vmem:[%s2804 + $0xfc] sm:$0xf]
    %s2869 = scalar_lea.vmem %s33, 1
    %v2870 = vld [vmem:[%s2869] sm:$0x1]
    %v2872 = vlaneseq
    %v2873 = vshrl.u32 %v2872, 7
    %v2874 = vsub.s32 0, %v2873
    %v2875 = vrot.slane %v2870, %v2874
    %v2941 = vunpack.c.l.b16 %v2805
    %v2942 = vunpack.c.l.b16 %v2806
    %v2943 = vunpack.c.l.b16 %v2807
    %v2944 = vunpack.c.l.b16 %v2808
    %v2945 = vunpack.c.l.b16 %v2809
    %v2946 = vunpack.c.l.b16 %v2810
    %v2947 = vunpack.c.l.b16 %v2811
    %v2948 = vunpack.c.l.b16 %v2812
    %v2949 = vunpack.c.l.b16 %v2813
    %v2950 = vunpack.c.l.b16 %v2814
    %v2951 = vunpack.c.l.b16 %v2815
    %v2952 = vunpack.c.l.b16 %v2816
    %v2953 = vunpack.c.l.b16 %v2817
    %v2954 = vunpack.c.l.b16 %v2818
    %v2955 = vunpack.c.l.b16 %v2819
    %v2956 = vunpack.c.l.b16 %v2820
    %v2957 = vunpack.c.l.b16 %v2821
    %v2958 = vunpack.c.l.b16 %v2822
    %v2959 = vunpack.c.l.b16 %v2823
    %v2960 = vunpack.c.l.b16 %v2824
    %v2961 = vunpack.c.l.b16 %v2825
    %v2962 = vunpack.c.l.b16 %v2826
    %v2963 = vunpack.c.l.b16 %v2827
    %v2964 = vunpack.c.l.b16 %v2828
    %v2965 = vunpack.c.l.b16 %v2829
    %v2966 = vunpack.c.l.b16 %v2830
    %v2967 = vunpack.c.l.b16 %v2831
    %v2968 = vunpack.c.l.b16 %v2832
    %v2969 = vunpack.c.l.b16 %v2833
    %v2970 = vunpack.c.l.b16 %v2834
    %v2971 = vunpack.c.l.b16 %v2835
    %v2972 = vunpack.c.l.b16 %v2836
    %v2973 = vunpack.c.l.b16 %v2837
    %v2974 = vunpack.c.l.b16 %v2838
    %v2975 = vunpack.c.l.b16 %v2839
    %v2976 = vunpack.c.l.b16 %v2840
    %v2977 = vunpack.c.l.b16 %v2841
    %v2978 = vunpack.c.l.b16 %v2842
    %v2979 = vunpack.c.l.b16 %v2843
    %v2980 = vunpack.c.l.b16 %v2844
    %v2981 = vunpack.c.l.b16 %v2845
    %v2982 = vunpack.c.l.b16 %v2846
    %v2983 = vunpack.c.l.b16 %v2847
    %v2984 = vunpack.c.l.b16 %v2848
    %v2985 = vunpack.c.l.b16 %v2849
    %v2986 = vunpack.c.l.b16 %v2850
    %v2987 = vunpack.c.l.b16 %v2851
    %v2988 = vunpack.c.l.b16 %v2852
    %v2989 = vunpack.c.l.b16 %v2853
    %v2990 = vunpack.c.l.b16 %v2854
    %v2991 = vunpack.c.l.b16 %v2855
    %v2992 = vunpack.c.l.b16 %v2856
    %v2993 = vunpack.c.l.b16 %v2857
    %v2994 = vunpack.c.l.b16 %v2858
    %v2995 = vunpack.c.l.b16 %v2859
    %v2996 = vunpack.c.l.b16 %v2860
    %v2997 = vunpack.c.l.b16 %v2861
    %v2998 = vunpack.c.l.b16 %v2862
    %v2999 = vunpack.c.l.b16 %v2863
    %v3000 = vunpack.c.l.b16 %v2864
    %v3001 = vunpack.c.l.b16 %v2865
    %v3002 = vunpack.c.l.b16 %v2866
    %v3003 = vunpack.c.l.b16 %v2867
    %v3004 = vunpack.c.l.b16 %v2868
    %v3005 = vpack.c.b16 %v2942, %v2941
    %v3006 = vpack.c.b16 %v2944, %v2943
    %v3007 = vpack.c.b16 %v2946, %v2945
    %v3008 = vpack.c.b16 %v2948, %v2947
    %v3009 = vpack.c.b16 %v2950, %v2949
    %v3010 = vpack.c.b16 %v2952, %v2951
    %v3011 = vpack.c.b16 %v2954, %v2953
    %v3012 = vpack.c.b16 %v2956, %v2955
    %v3013 = vpack.c.b16 %v2958, %v2957
    %v3014 = vpack.c.b16 %v2960, %v2959
    %v3015 = vpack.c.b16 %v2962, %v2961
    %v3016 = vpack.c.b16 %v2964, %v2963
    %v3017 = vpack.c.b16 %v2966, %v2965
    %v3018 = vpack.c.b16 %v2968, %v2967
    %v3019 = vpack.c.b16 %v2970, %v2969
    %v3020 = vpack.c.b16 %v2972, %v2971
    %v3021 = vpack.c.b16 %v2974, %v2973
    %v3022 = vpack.c.b16 %v2976, %v2975
    %v3023 = vpack.c.b16 %v2978, %v2977
    %v3024 = vpack.c.b16 %v2980, %v2979
    %v3025 = vpack.c.b16 %v2982, %v2981
    %v3026 = vpack.c.b16 %v2984, %v2983
    %v3027 = vpack.c.b16 %v2986, %v2985
    %v3028 = vpack.c.b16 %v2988, %v2987
    %v3029 = vpack.c.b16 %v2990, %v2989
    %v3030 = vpack.c.b16 %v2992, %v2991
    %v3031 = vpack.c.b16 %v2994, %v2993
    %v3032 = vpack.c.b16 %v2996, %v2995
    %v3033 = vpack.c.b16 %v2998, %v2997
    %v3034 = vpack.c.b16 %v3000, %v2999
    %v3035 = vpack.c.b16 %v3002, %v3001
    %v3036 = vpack.c.b16 %v3004, %v3003
    %3069 = vmatprep.subr.bf16.mxu0 0
    %3070 = vmatpush1.bf16.msra.mxu0 %v3005
    %3071 = vmatprep.subr.bf16.mxu0 0
    %3072 = vmatpush1.bf16.msra.mxu0 %v3006
    %3073 = vmatprep.subr.bf16.mxu0 0
    %3074 = vmatpush1.bf16.msra.mxu0 %v3007
    %3075 = vmatprep.subr.bf16.mxu0 0
    %3076 = vmatpush1.bf16.msra.mxu0 %v3008
    %3077 = vmatprep.subr.bf16.mxu0 0
    %3078 = vmatpush1.bf16.msra.mxu0 %v3009
    %3079 = vmatprep.subr.bf16.mxu0 0
    %3080 = vmatpush1.bf16.msra.mxu0 %v3010
    %3081 = vmatprep.subr.bf16.mxu0 0
    %3082 = vmatpush1.bf16.msra.mxu0 %v3011
    %3083 = vmatprep.subr.bf16.mxu0 0
    %3084 = vmatpush1.bf16.msra.mxu0 %v3012
    %3085 = vmatprep.subr.bf16.mxu0 0
    %3086 = vmatpush1.bf16.msra.mxu0 %v3013
    %3087 = vmatprep.subr.bf16.mxu0 0
    %3088 = vmatpush1.bf16.msra.mxu0 %v3014
    %3089 = vmatprep.subr.bf16.mxu0 0
    %3090 = vmatpush1.bf16.msra.mxu0 %v3015
    %3091 = vmatprep.subr.bf16.mxu0 0
    %3092 = vmatpush1.bf16.msra.mxu0 %v3016
    %3093 = vmatprep.subr.bf16.mxu0 0
    %3094 = vmatpush1.bf16.msra.mxu0 %v3017
    %3095 = vmatprep.subr.bf16.mxu0 0
    %3096 = vmatpush1.bf16.msra.mxu0 %v3018
    %3097 = vmatprep.subr.bf16.mxu0 0
    %3098 = vmatpush1.bf16.msra.mxu0 %v3019
    %3099 = vmatprep.subr.bf16.mxu0 0
    %3100 = vmatpush1.bf16.msra.mxu0 %v3020
    %3101 = vmatprep.mubr.bf16.mxu0 %v2801
    %3102 = vmatmul.mubr.bf16.gmra.mrb[0].mxu0 %v2800
    %v3103 = vpop.f32.mrb[0].mxu0
    %v3104 = vadd.f32 %v2875, %v3103
    %v3105 = vpop.f32.mrb[0].mxu0
    %v3106 = vpop.f32.mrb[0].mxu0
    %v3107 = vadd.f32 %v2875, %v3106
    %v3108 = vpop.f32.mrb[0].mxu0
    %3109 = vdwg.mxu0
    %3110 = vmatprep.subr.bf16.mxu0 0
    %3111 = vmatpush1.bf16.msra.mxu0 %v3021
    %3112 = vmatprep.subr.bf16.mxu0 0
    %3113 = vmatpush1.bf16.msra.mxu0 %v3022
    %3114 = vmatprep.subr.bf16.mxu0 0
    %3115 = vmatpush1.bf16.msra.mxu0 %v3023
    %3116 = vmatprep.subr.bf16.mxu0 0
    %3117 = vmatpush1.bf16.msra.mxu0 %v3024
    %3118 = vmatprep.subr.bf16.mxu0 0
    %3119 = vmatpush1.bf16.msra.mxu0 %v3025
    %3120 = vmatprep.subr.bf16.mxu0 0
    %3121 = vmatpush1.bf16.msra.mxu0 %v3026
    %3122 = vmatprep.subr.bf16.mxu0 0
    %3123 = vmatpush1.bf16.msra.mxu0 %v3027
    %3124 = vmatprep.subr.bf16.mxu0 0
    %3125 = vmatpush1.bf16.msra.mxu0 %v3028
    %3126 = vmatprep.subr.bf16.mxu0 0
    %3127 = vmatpush1.bf16.msra.mxu0 %v3029
    %3128 = vmatprep.subr.bf16.mxu0 0
    %3129 = vmatpush1.bf16.msra.mxu0 %v3030
    %3130 = vmatprep.subr.bf16.mxu0 0
    %3131 = vmatpush1.bf16.msra.mxu0 %v3031
    %3132 = vmatprep.subr.bf16.mxu0 0
    %3133 = vmatpush1.bf16.msra.mxu0 %v3032
    %3134 = vmatprep.subr.bf16.mxu0 0
    %3135 = vmatpush1.bf16.msra.mxu0 %v3033
    %3136 = vmatprep.subr.bf16.mxu0 0
    %3137 = vmatpush1.bf16.msra.mxu0 %v3034
    %3138 = vmatprep.subr.bf16.mxu0 0
    %3139 = vmatpush1.bf16.msra.mxu0 %v3035
    %3140 = vmatprep.subr.bf16.mxu0 0
    %3141 = vmatpush1.bf16.msra.mxu0 %v3036
    %3142 = vmatprep.mubr.bf16.mxu0 %v2803
    %3143 = vmatmul.mubr.bf16.gmra.mrb[0].mxu0 %v2802
    %v3144 = vpop.f32.mrb[0].mxu0
    %v3145 = vadd.f32 %v3104, %v3144
    %v3146 = vpop.f32.mrb[0].mxu0
    %v3147 = vpop.f32.mrb[0].mxu0
    %v3148 = vadd.f32 %v3107, %v3147
    %v3149 = vpop.f32.mrb[0].mxu0
    %3150 = vdwg.mxu0
    %v3151 = vadd.f32 %v3145, %v2445
    %v3152 = vadd.f32 %v3148, %v2446
    %v3153 = vmax.f32 %v3151, 0.0
    %v3154 = vmax.f32 %v3152, 0.0
    %v3155 = vld [vmem:[%s5] sm:$0xff]
    %v3156 = vld [vmem:[%s5 + $0x8] sm:$0xff]
    %v3157 = vadd.f32 %v3153, %v3155
    %v3158 = vadd.f32 %v3154, %v3156
    %s3159 = scalar_lea.vmem %s11, 2
    %v3160 = vld [vmem:[%s3159] sm:$0x1]
    %s3161 = scalar_lea.vmem %s13, 2
    %v3162 = vld [vmem:[%s3161] sm:$0x1]
    %3163 = vadd.xlane.f32.xlu0 %v3157
    %v3164 = vpop.xlane.xlu0 %3163
    %3165 = vadd.xlane.f32.xlu0 %v3158
    %v3166 = vpop.xlane.xlu0 %3165
    %v3167 = vmul.f32 %v3164, %v163
    %v3168 = vmul.f32 %v3166, %v163
    %v3169 = vsub.f32 %v3157, %v3167
    %v3170 = vsub.f32 %v3158, %v3168
    %v3171 = vmul.f32 %v3169, %v3169
    %v3172 = vmul.f32 %v3170, %v3170
    %3173 = vadd.xlane.f32.xlu0 %v3171
    %v3174 = vpop.xlane.xlu0 %3173
    %3175 = vadd.xlane.f32.xlu0 %v3172
    %v3176 = vpop.xlane.xlu0 %3175
    %v3177 = vmul.f32 %v3174, %v163
    %v3178 = vmul.f32 %v3176, %v163
    %v3179 = vadd.f32 %v3177, 1e-05
    %v3180 = vadd.f32 %v3178, 1e-05
    %v3181 = vrsqrt.pop %v3179
    %v3182 = vrsqrt.pop %v3180
    %v3183 = vmul.f32 %v3169, %v3181
    %v3184 = vmul.f32 %v3170, %v3182
    %v3186 = vlaneseq
    %v3187 = vshrl.u32 %v3186, 7
    %v3188 = vsub.s32 0, %v3187
    %v3189 = vrot.slane %v3160, %v3188
    %v3191 = vmul.f32 %v3183, %v3189
    %v3192 = vmul.f32 %v3184, %v3189
    %v3194 = vlaneseq
    %v3195 = vshrl.u32 %v3194, 7
    %v3196 = vsub.s32 0, %v3195
    %v3197 = vrot.slane %v3162, %v3196
    %v3199 = vadd.f32 %v3191, %v3197
    %v3200 = vadd.f32 %v3192, %v3197
    %v3201 = vpack.c.bf16 %v3200, %v3199
    %s3202 = scalar_lea.vmem [#allocation3], 384
    %v3203 = vld [vmem:[%s3202] sm:$0xff]
    %v3204 = vld [vmem:[%s3202 + $0x8] sm:$0xf]
    %v3205 = vld [vmem:[%s3202 + $0xc] sm:$0xff]
    %v3206 = vld [vmem:[%s3202 + $0x14] sm:$0xf]
    %v3207 = vld [vmem:[%s3202 + $0x18] sm:$0xff]
    %v3208 = vld [vmem:[%s3202 + $0x20] sm:$0xf]
    %v3209 = vld [vmem:[%s3202 + $0x24] sm:$0xff]
    %v3210 = vld [vmem:[%s3202 + $0x2c] sm:$0xf]
    %v3211 = vld [vmem:[%s3202 + $0x30] sm:$0xff]
    %v3212 = vld [vmem:[%s3202 + $0x38] sm:$0xf]
    %v3213 = vld [vmem:[%s3202 + $0x3c] sm:$0xff]
    %v3214 = vld [vmem:[%s3202 + $0x44] sm:$0xf]
    %v3215 = vld [vmem:[%s3202 + $0x48] sm:$0xff]
    %v3216 = vld [vmem:[%s3202 + $0x50] sm:$0xf]
    %v3217 = vld [vmem:[%s3202 + $0x54] sm:$0xff]
    %v3218 = vld [vmem:[%s3202 + $0x5c] sm:$0xf]
    %v3219 = vld [vmem:[%s3202 + $0x60] sm:$0xff]
    %v3220 = vld [vmem:[%s3202 + $0x68] sm:$0xf]
    %v3221 = vld [vmem:[%s3202 + $0x6c] sm:$0xff]
    %v3222 = vld [vmem:[%s3202 + $0x74] sm:$0xf]
    %v3223 = vld [vmem:[%s3202 + $0x78] sm:$0xff]
    %v3224 = vld [vmem:[%s3202 + $0x80] sm:$0xf]
    %v3225 = vld [vmem:[%s3202 + $0x84] sm:$0xff]
    %v3226 = vld [vmem:[%s3202 + $0x8c] sm:$0xf]
    %v3227 = vld [vmem:[%s3202 + $0x90] sm:$0xff]
    %v3228 = vld [vmem:[%s3202 + $0x98] sm:$0xf]
    %v3229 = vld [vmem:[%s3202 + $0x9c] sm:$0xff]
    %v3230 = vld [vmem:[%s3202 + $0xa4] sm:$0xf]
    %v3231 = vld [vmem:[%s3202 + $0xa8] sm:$0xff]
    %v3232 = vld [vmem:[%s3202 + $0xb0] sm:$0xf]
    %v3233 = vld [vmem:[%s3202 + $0xb4] sm:$0xff]
    %v3234 = vld [vmem:[%s3202 + $0xbc] sm:$0xf]
    %s3235 = scalar_lea.vmem %s21, 6
    %v3236 = vld [vmem:[%s3235] sm:$0x7]
    %v3238 = vlaneseq
    %v3239 = vshrl.u32 %v3238, 7
    %v3240 = vsub.s32 0, %v3239
    %v3241 = vrot.slane %v3236, %v3240
    %v3242 = vlaneseq
    %v3243 = vshrl.u32 %v3242, 7
    %v3244 = vsub.s32 1, %v3243
    %v3245 = vrot.slane %v3236, %v3244
    %v3246 = vlaneseq
    %v3247 = vshrl.u32 %v3246, 7
    %v3248 = vsub.s32 2, %v3247
    %v3249 = vrot.slane %v3236, %v3248
    %v3285 = vunpack.c.l.b16 %v3203
    %v3286 = vunpack.c.h.b16 %v3203
    %v3287 = vunpack.c.l.b16 %v3204
    %v3288 = vunpack.c.l.b16 %v3205
    %v3289 = vunpack.c.h.b16 %v3205
    %v3290 = vunpack.c.l.b16 %v3206
    %v3291 = vunpack.c.l.b16 %v3207
    %v3292 = vunpack.c.h.b16 %v3207
    %v3293 = vunpack.c.l.b16 %v3208
    %v3294 = vunpack.c.l.b16 %v3209
    %v3295 = vunpack.c.h.b16 %v3209
    %v3296 = vunpack.c.l.b16 %v3210
    %v3297 = vunpack.c.l.b16 %v3211
    %v3298 = vunpack.c.h.b16 %v3211
    %v3299 = vunpack.c.l.b16 %v3212
    %v3300 = vunpack.c.l.b16 %v3213
    %v3301 = vunpack.c.h.b16 %v3213
    %v3302 = vunpack.c.l.b16 %v3214
    %v3303 = vunpack.c.l.b16 %v3215
    %v3304 = vunpack.c.h.b16 %v3215
    %v3305 = vunpack.c.l.b16 %v3216
    %v3306 = vunpack.c.l.b16 %v3217
    %v3307 = vunpack.c.h.b16 %v3217
    %v3308 = vunpack.c.l.b16 %v3218
    %v3309 = vunpack.c.l.b16 %v3219
    %v3310 = vunpack.c.h.b16 %v3219
    %v3311 = vunpack.c.l.b16 %v3220
    %v3312 = vunpack.c.l.b16 %v3221
    %v3313 = vunpack.c.h.b16 %v3221
    %v3314 = vunpack.c.l.b16 %v3222
    %v3315 = vunpack.c.l.b16 %v3223
    %v3316 = vunpack.c.h.b16 %v3223
    %v3317 = vunpack.c.l.b16 %v3224
    %v3318 = vunpack.c.l.b16 %v3225
    %v3319 = vunpack.c.h.b16 %v3225
    %v3320 = vunpack.c.l.b16 %v3226
    %v3321 = vunpack.c.l.b16 %v3227
    %v3322 = vunpack.c.h.b16 %v3227
    %v3323 = vunpack.c.l.b16 %v3228
    %v3324 = vunpack.c.l.b16 %v3229
    %v3325 = vunpack.c.h.b16 %v3229
    %v3326 = vunpack.c.l.b16 %v3230
    %v3327 = vunpack.c.l.b16 %v3231
    %v3328 = vunpack.c.h.b16 %v3231
    %v3329 = vunpack.c.l.b16 %v3232
    %v3330 = vunpack.c.l.b16 %v3233
    %v3331 = vunpack.c.h.b16 %v3233
    %v3332 = vunpack.c.l.b16 %v3234
    %v3333 = vpack.c.b16 %v3288, %v3285
    %v3334 = vpack.c.b16 %v3289, %v3286
    %v3335 = vpack.c.b16 %v3290, %v3287
    %v3336 = vpack.c.b16 %v3294, %v3291
    %v3337 = vpack.c.b16 %v3295, %v3292
    %v3338 = vpack.c.b16 %v3296, %v3293
    %v3339 = vpack.c.b16 %v3300, %v3297
    %v3340 = vpack.c.b16 %v3301, %v3298
    %v3341 = vpack.c.b16 %v3302, %v3299
    %v3342 = vpack.c.b16 %v3306, %v3303
    %v3343 = vpack.c.b16 %v3307, %v3304
    %v3344 = vpack.c.b16 %v3308, %v3305
    %v3345 = vpack.c.b16 %v3312, %v3309
    %v3346 = vpack.c.b16 %v3313, %v3310
    %v3347 = vpack.c.b16 %v3314, %v3311
    %v3348 = vpack.c.b16 %v3318, %v3315
    %v3349 = vpack.c.b16 %v3319, %v3316
    %v3350 = vpack.c.b16 %v3320, %v3317
    %v3351 = vpack.c.b16 %v3324, %v3321
    %v3352 = vpack.c.b16 %v3325, %v3322
    %v3353 = vpack.c.b16 %v3326, %v3323
    %v3354 = vpack.c.b16 %v3330, %v3327
    %v3355 = vpack.c.b16 %v3331, %v3328
    %v3356 = vpack.c.b16 %v3332, %v3329
    %3381 = vmatprep.subr.bf16.mxu0 %v3334
    %3382 = vmatpush1.bf16.msra.mxu0 %v3333
    %3383 = vmatprep.subr.bf16.mxu0 %v3337
    %3384 = vmatpush1.bf16.msra.mxu0 %v3336
    %3385 = vmatprep.subr.bf16.mxu0 %v3340
    %3386 = vmatpush1.bf16.msra.mxu0 %v3339
    %3387 = vmatprep.subr.bf16.mxu0 %v3343
    %3388 = vmatpush1.bf16.msra.mxu0 %v3342
    %3389 = vmatprep.subr.bf16.mxu0 %v3346
    %3390 = vmatpush1.bf16.msra.mxu0 %v3345
    %3391 = vmatprep.subr.bf16.mxu0 %v3349
    %3392 = vmatpush1.bf16.msra.mxu0 %v3348
    %3393 = vmatprep.subr.bf16.mxu0 %v3352
    %3394 = vmatpush1.bf16.msra.mxu0 %v3351
    %3395 = vmatprep.subr.bf16.mxu0 %v3355
    %3396 = vmatpush1.bf16.msra.mxu0 %v3354
    %3397 = vmatprep.subr.bf16.mxu0 0
    %3398 = vmatpush1.bf16.msra.mxu0 0
    %3399 = vmatprep.subr.bf16.mxu0 0
    %3400 = vmatpush1.bf16.msra.mxu0 0
    %3401 = vmatprep.subr.bf16.mxu0 0
    %3402 = vmatpush1.bf16.msra.mxu0 0
    %3403 = vmatprep.subr.bf16.mxu0 0
    %3404 = vmatpush1.bf16.msra.mxu0 0
    %3405 = vmatprep.subr.bf16.mxu0 0
    %3406 = vmatpush1.bf16.msra.mxu0 0
    %3407 = vmatprep.subr.bf16.mxu0 0
    %3408 = vmatpush1.bf16.msra.mxu0 0
    %3409 = vmatprep.subr.bf16.mxu0 0
    %3410 = vmatpush1.bf16.msra.mxu0 0
    %3411 = vmatprep.subr.bf16.mxu0 0
    %3412 = vmatpush1.bf16.msra.mxu0 0
    %3413 = vmatprep.mubr.bf16.mxu0 0
    %3414 = vmatmul.mubr.bf16.gmra.mrb[0].mxu0 %v3201
    %v3415 = vpop.f32.mrb[0].mxu0
    %v3416 = vadd.f32 %v3241, %v3415
    %v3417 = vpop.f32.mrb[0].mxu0
    %v3418 = vadd.f32 %v3245, %v3417
    %v3419 = vpop.f32.mrb[0].mxu0
    %v3420 = vadd.f32 %v3241, %v3419
    %v3421 = vpop.f32.mrb[0].mxu0
    %v3422 = vadd.f32 %v3245, %v3421
    %3423 = vdwg.mxu0
    %3424 = vmatprep.subr.bf16.mxu0 0
    %3425 = vmatpush1.bf16.msra.mxu0 %v3335
    %3426 = vmatprep.subr.bf16.mxu0 0
    %3427 = vmatpush1.bf16.msra.mxu0 %v3338
    %3428 = vmatprep.subr.bf16.mxu0 0
    %3429 = vmatpush1.bf16.msra.mxu0 %v3341
    %3430 = vmatprep.subr.bf16.mxu0 0
    %3431 = vmatpush1.bf16.msra.mxu0 %v3344
    %3432 = vmatprep.subr.bf16.mxu0 0
    %3433 = vmatpush1.bf16.msra.mxu0 %v3347
    %3434 = vmatprep.subr.bf16.mxu0 0
    %3435 = vmatpush1.bf16.msra.mxu0 %v3350
    %3436 = vmatprep.subr.bf16.mxu0 0
    %3437 = vmatpush1.bf16.msra.mxu0 %v3353
    %3438 = vmatprep.subr.bf16.mxu0 0
    %3439 = vmatpush1.bf16.msra.mxu0 %v3356
    %3440 = vmatprep.subr.bf16.mxu0 0
    %3441 = vmatpush1.bf16.msra.mxu0 0
    %3442 = vmatprep.subr.bf16.mxu0 0
    %3443 = vmatpush1.bf16.msra.mxu0 0
    %3444 = vmatprep.subr.bf16.mxu0 0
    %3445 = vmatpush1.bf16.msra.mxu0 0
    %3446 = vmatprep.subr.bf16.mxu0 0
    %3447 = vmatpush1.bf16.msra.mxu0 0
    %3448 = vmatprep.subr.bf16.mxu0 0
    %3449 = vmatpush1.bf16.msra.mxu0 0
    %3450 = vmatprep.subr.bf16.mxu0 0
    %3451 = vmatpush1.bf16.msra.mxu0 0
    %3452 = vmatprep.subr.bf16.mxu0 0
    %3453 = vmatpush1.bf16.msra.mxu0 0
    %3454 = vmatprep.subr.bf16.mxu0 0
    %3455 = vmatpush1.bf16.msra.mxu0 0
    %3456 = vmatprep.mubr.bf16.mxu0 0
    %3457 = vmatmul.mubr.bf16.gmra.mrb[0].mxu0 %v3201
    %v3458 = vpop.f32.mrb[0].mxu0
    %v3459 = vadd.f32 %v3249, %v3458
    %v3460 = vpop.f32.mrb[0].mxu0
    %v3461 = vpop.f32.mrb[0].mxu0
    %v3462 = vadd.f32 %v3249, %v3461
    %v3463 = vpop.f32.mrb[0].mxu0
    %3464 = vdwg.mxu0
    %3467 = vrot.lane.b32.xlu0 %v3416, 96
    %v3468 = vpop.permute.xlu0 %3467
    %3469 = vrot.lane.b32.xlu0 %v3420, 96
    %v3470 = vpop.permute.xlu0 %3469
    %3473 = vrot.lane.b32.xlu0 %v3416, 64
    %v3474 = vpop.permute.xlu0 %3473
    %3475 = vrot.lane.b32.xlu0 %v3420, 64
    %v3476 = vpop.permute.xlu0 %3475
    %3479 = vrot.lane.b32.xlu0 %v3416, 32
    %v3480 = vpop.permute.xlu0 %3479
    %3481 = vrot.lane.b32.xlu0 %v3420, 32
    %v3482 = vpop.permute.xlu0 %3481
    %v3485 = vpack.c.bf16 %v3468, %v3416
    %v3486 = vpack.c.bf16 %v3480, %v3474
    %v3487 = vpack.c.bf16 %v3470, %v3420
    %v3488 = vpack.c.bf16 %v3482, %v3476
    %3491 = vrot.lane.b32.xlu0 %v3418, 96
    %v3492 = vpop.permute.xlu0 %3491
    %3493 = vrot.lane.b32.xlu0 %v3422, 96
    %v3494 = vpop.permute.xlu0 %3493
    %3497 = vrot.lane.b32.xlu0 %v3418, 64
    %v3498 = vpop.permute.xlu0 %3497
    %3499 = vrot.lane.b32.xlu0 %v3422, 64
    %v3500 = vpop.permute.xlu0 %3499
    %3503 = vrot.lane.b32.xlu0 %v3418, 32
    %v3504 = vpop.permute.xlu0 %3503
    %3505 = vrot.lane.b32.xlu0 %v3422, 32
    %v3506 = vpop.permute.xlu0 %3505
    %v3509 = vpack.c.bf16 %v3492, %v3418
    %v3510 = vpack.c.bf16 %v3504, %v3498
    %v3511 = vpack.c.bf16 %v3494, %v3422
    %v3512 = vpack.c.bf16 %v3506, %v3500
    %3515 = vrot.lane.b32.xlu0 %v3459, 96
    %v3516 = vpop.permute.xlu0 %3515
    %3517 = vrot.lane.b32.xlu0 %v3462, 96
    %v3518 = vpop.permute.xlu0 %3517
    %3521 = vrot.lane.b32.xlu0 %v3459, 64
    %v3522 = vpop.permute.xlu0 %3521
    %3523 = vrot.lane.b32.xlu0 %v3462, 64
    %v3524 = vpop.permute.xlu0 %3523
    %3527 = vrot.lane.b32.xlu0 %v3459, 32
    %v3528 = vpop.permute.xlu0 %3527
    %3529 = vrot.lane.b32.xlu0 %v3462, 32
    %v3530 = vpop.permute.xlu0 %3529
    %v3533 = vpack.c.bf16 %v3516, %v3459
    %v3534 = vpack.c.bf16 %v3528, %v3522
    %v3535 = vpack.c.bf16 %v3518, %v3462
    %v3536 = vpack.c.bf16 %v3530, %v3524
    %v3538 = vsel %vm556, %v3485, 0
    %v3541 = vsel %vm556, %v3486, 0
    %v3544 = vsel %vm556, %v3487, 0
    %v3547 = vsel %vm556, %v3488, 0
    %v3550 = vsel %vm556, %v3509, 0
    %v3553 = vsel %vm556, %v3510, 0
    %v3556 = vsel %vm556, %v3511, 0
    %v3559 = vsel %vm556, %v3512, 0
    %3561 = vmatprep.subr.bf16.mxu0 0
    %3562 = vmatpush1.bf16.xpose.msra.mxu0 %v3550
    %3563 = vmatprep.subr.bf16.mxu0 0
    %3564 = vmatpush1.bf16.xpose.msra.mxu0 %v3553
    %3565 = vmatprep.subr.bf16.mxu0 0
    %3566 = vmatpush1.bf16.xpose.msra.mxu0 %v3556
    %3567 = vmatprep.subr.bf16.mxu0 0
    %3568 = vmatpush1.bf16.xpose.msra.mxu0 %v3559
    %3569 = vmatprep.subr.bf16.mxu0 0
    %3570 = vmatpush1.bf16.xpose.msra.mxu0 0
    %3571 = vmatprep.subr.bf16.mxu0 0
    %3572 = vmatpush1.bf16.xpose.msra.mxu0 0
    %3573 = vmatprep.subr.bf16.mxu0 0
    %3574 = vmatpush1.bf16.xpose.msra.mxu0 0
    %3575 = vmatprep.subr.bf16.mxu0 0
    %3576 = vmatpush1.bf16.xpose.msra.mxu0 0
    %3577 = vmatprep.subr.bf16.mxu0 0
    %3578 = vmatpush1.bf16.xpose.msra.mxu0 0
    %3579 = vmatprep.subr.bf16.mxu0 0
    %3580 = vmatpush1.bf16.xpose.msra.mxu0 0
    %3581 = vmatprep.subr.bf16.mxu0 0
    %3582 = vmatpush1.bf16.xpose.msra.mxu0 0
    %3583 = vmatprep.subr.bf16.mxu0 0
    %3584 = vmatpush1.bf16.xpose.msra.mxu0 0
    %3585 = vmatprep.subr.bf16.mxu0 0
    %3586 = vmatpush1.bf16.xpose.msra.mxu0 0
    %3587 = vmatprep.subr.bf16.mxu0 0
    %3588 = vmatpush1.bf16.xpose.msra.mxu0 0
    %3589 = vmatprep.subr.bf16.mxu0 0
    %3590 = vmatpush1.bf16.xpose.msra.mxu0 0
    %3591 = vmatprep.subr.bf16.mxu0 0
    %3592 = vmatpush1.bf16.xpose.msra.mxu0 0
    %3593 = vmatprep.mubr.bf16.mxu0 0
    %3594 = vmatmul.mubr.bf16.gmra.mrb[0].mxu0 %v3538
    %v3595 = vpop.f32.mrb[0].mxu0
    %v3596 = vadd.f32 %v149, %v3595
    %v3597 = vpop.f32.mrb[0].mxu0
    %v3598 = vpop.f32.mrb[0].mxu0
    %v3599 = vadd.f32 %v150, %v3598
    %v3600 = vpop.f32.mrb[0].mxu0
    %3601 = vmatprep.mubr.bf16.mxu0 0
    %3602 = vmatmul.mubr.bf16.gmra.mrb[0].mxu0 %v3541
    %v3603 = vpop.f32.mrb[0].mxu0
    %v3604 = vadd.f32 %v151, %v3603
    %v3605 = vpop.f32.mrb[0].mxu0
    %v3606 = vpop.f32.mrb[0].mxu0
    %v3607 = vadd.f32 %v152, %v3606
    %v3608 = vpop.f32.mrb[0].mxu0
    %3609 = vmatprep.mubr.bf16.mxu0 0
    %3610 = vmatmul.mubr.bf16.gmra.mrb[0].mxu0 %v3544
    %v3611 = vpop.f32.mrb[0].mxu0
    %v3612 = vadd.f32 %v153, %v3611
    %v3613 = vpop.f32.mrb[0].mxu0
    %v3614 = vpop.f32.mrb[0].mxu0
    %v3615 = vadd.f32 %v154, %v3614
    %v3616 = vpop.f32.mrb[0].mxu0
    %3617 = vmatprep.mubr.bf16.mxu0 0
    %3618 = vmatmul.mubr.bf16.gmra.mrb[0].mxu0 %v3547
    %v3619 = vpop.f32.mrb[0].mxu0
    %v3620 = vadd.f32 %v155, %v3619
    %v3621 = vpop.f32.mrb[0].mxu0
    %v3622 = vpop.f32.mrb[0].mxu0
    %v3623 = vadd.f32 %v156, %v3622
    %v3624 = vpop.f32.mrb[0].mxu0
    %3625 = vdwg.mxu0
    %v3626 = vsel %vm646, %v3596, -inf
    %3627 = vmax.xlane.f32.xlu0 %v3626
    %v3628 = vpop.xlane.xlu0 %3627
    %v3629 = vsel %vm646, %v3599, -inf
    %3630 = vmax.xlane.f32.xlu0 %v3629
    %v3631 = vpop.xlane.xlu0 %3630
    %v3632 = vsel %vm646, %v3604, -inf
    %3633 = vmax.xlane.f32.xlu0 %v3632
    %v3634 = vpop.xlane.xlu0 %3633
    %v3635 = vsel %vm646, %v3607, -inf
    %3636 = vmax.xlane.f32.xlu0 %v3635
    %v3637 = vpop.xlane.xlu0 %3636
    %v3638 = vsel %vm646, %v3612, -inf
    %3639 = vmax.xlane.f32.xlu0 %v3638
    %v3640 = vpop.xlane.xlu0 %3639
    %v3641 = vsel %vm646, %v3615, -inf
    %3642 = vmax.xlane.f32.xlu0 %v3641
    %v3643 = vpop.xlane.xlu0 %3642
    %v3644 = vsel %vm646, %v3620, -inf
    %3645 = vmax.xlane.f32.xlu0 %v3644
    %v3646 = vpop.xlane.xlu0 %3645
    %v3647 = vsel %vm646, %v3623, -inf
    %3648 = vmax.xlane.f32.xlu0 %v3647
    %v3649 = vpop.xlane.xlu0 %3648
    %v3650 = vsub.f32 %v3596, %v3628
    %v3651 = vsub.f32 %v3599, %v3631
    %v3652 = vsub.f32 %v3604, %v3634
    %v3653 = vsub.f32 %v3607, %v3637
    %v3654 = vsub.f32 %v3612, %v3640
    %v3655 = vsub.f32 %v3615, %v3643
    %v3656 = vsub.f32 %v3620, %v3646
    %v3657 = vsub.f32 %v3623, %v3649
    %v3658 = vmul.f32 %v3650, 1.442695
    %v3659 = vpow.pop %v3658
    %v3660 = vmul.f32 %v3651, 1.442695
    %v3661 = vpow.pop %v3660
    %v3662 = vmul.f32 %v3652, 1.442695
    %v3663 = vpow.pop %v3662
    %v3664 = vmul.f32 %v3653, 1.442695
    %v3665 = vpow.pop %v3664
    %v3666 = vmul.f32 %v3654, 1.442695
    %v3667 = vpow.pop %v3666
    %v3668 = vmul.f32 %v3655, 1.442695
    %v3669 = vpow.pop %v3668
    %v3670 = vmul.f32 %v3656, 1.442695
    %v3671 = vpow.pop %v3670
    %v3672 = vmul.f32 %v3657, 1.442695
    %v3673 = vpow.pop %v3672
    %v3674 = vsel %vm646, %v3659, 0.0
    %3675 = vadd.xlane.f32.xlu0 %v3674
    %v3676 = vpop.xlane.xlu0 %3675
    %v3677 = vsel %vm646, %v3661, 0.0
    %3678 = vadd.xlane.f32.xlu0 %v3677
    %v3679 = vpop.xlane.xlu0 %3678
    %v3680 = vsel %vm646, %v3663, 0.0
    %3681 = vadd.xlane.f32.xlu0 %v3680
    %v3682 = vpop.xlane.xlu0 %3681
    %v3683 = vsel %vm646, %v3665, 0.0
    %3684 = vadd.xlane.f32.xlu0 %v3683
    %v3685 = vpop.xlane.xlu0 %3684
    %v3686 = vsel %vm646, %v3667, 0.0
    %3687 = vadd.xlane.f32.xlu0 %v3686
    %v3688 = vpop.xlane.xlu0 %3687
    %v3689 = vsel %vm646, %v3669, 0.0
    %3690 = vadd.xlane.f32.xlu0 %v3689
    %v3691 = vpop.xlane.xlu0 %3690
    %v3692 = vsel %vm646, %v3671, 0.0
    %3693 = vadd.xlane.f32.xlu0 %v3692
    %v3694 = vpop.xlane.xlu0 %3693
    %v3695 = vsel %vm646, %v3673, 0.0
    %3696 = vadd.xlane.f32.xlu0 %v3695
    %v3697 = vpop.xlane.xlu0 %3696
    %v3698 = vrcp.pop %v3676
    %v3699 = vrcp.pop %v3679
    %v3700 = vrcp.pop %v3682
    %v3701 = vrcp.pop %v3685
    %v3702 = vrcp.pop %v3688
    %v3703 = vrcp.pop %v3691
    %v3704 = vrcp.pop %v3694
    %v3705 = vrcp.pop %v3697
    %v3706 = vmul.f32 %v3659, %v3698
    %v3707 = vmul.f32 %v3661, %v3699
    %v3708 = vmul.f32 %v3663, %v3700
    %v3709 = vmul.f32 %v3665, %v3701
    %v3710 = vmul.f32 %v3667, %v3702
    %v3711 = vmul.f32 %v3669, %v3703
    %v3712 = vmul.f32 %v3671, %v3704
    %v3713 = vmul.f32 %v3673, %v3705
    %v3714 = vpack.c.bf16 %v3707, %v3706
    %v3715 = vpack.c.bf16 %v3709, %v3708
    %v3716 = vpack.c.bf16 %v3711, %v3710
    %v3717 = vpack.c.bf16 %v3713, %v3712
    %v3719 = vsel %vm646, %v3714, 0
    %v3722 = vsel %vm646, %v3715, 0
    %v3725 = vsel %vm646, %v3716, 0
    %v3728 = vsel %vm646, %v3717, 0
    %3730 = vmatprep.subr.bf16.mxu0 0
    %3731 = vmatpush1.bf16.msra.mxu0 %v3533
    %3732 = vmatprep.subr.bf16.mxu0 0
    %3733 = vmatpush1.bf16.msra.mxu0 %v3534
    %3734 = vmatprep.subr.bf16.mxu0 0
    %3735 = vmatpush1.bf16.msra.mxu0 %v3535
    %3736 = vmatprep.subr.bf16.mxu0 0
    %3737 = vmatpush1.bf16.msra.mxu0 %v3536
    %3738 = vmatprep.subr.bf16.mxu0 0
    %3739 = vmatpush1.bf16.msra.mxu0 0
    %3740 = vmatprep.subr.bf16.mxu0 0
    %3741 = vmatpush1.bf16.msra.mxu0 0
    %3742 = vmatprep.subr.bf16.mxu0 0
    %3743 = vmatpush1.bf16.msra.mxu0 0
    %3744 = vmatprep.subr.bf16.mxu0 0
    %3745 = vmatpush1.bf16.msra.mxu0 0
    %3746 = vmatprep.subr.bf16.mxu0 0
    %3747 = vmatpush1.bf16.msra.mxu0 0
    %3748 = vmatprep.subr.bf16.mxu0 0
    %3749 = vmatpush1.bf16.msra.mxu0 0
    %3750 = vmatprep.subr.bf16.mxu0 0
    %3751 = vmatpush1.bf16.msra.mxu0 0
    %3752 = vmatprep.subr.bf16.mxu0 0
    %3753 = vmatpush1.bf16.msra.mxu0 0
    %3754 = vmatprep.subr.bf16.mxu0 0
    %3755 = vmatpush1.bf16.msra.mxu0 0
    %3756 = vmatprep.subr.bf16.mxu0 0
    %3757 = vmatpush1.bf16.msra.mxu0 0
    %3758 = vmatprep.subr.bf16.mxu0 0
    %3759 = vmatpush1.bf16.msra.mxu0 0
    %3760 = vmatprep.subr.bf16.mxu0 0
    %3761 = vmatpush1.bf16.msra.mxu0 0
    %3762 = vmatprep.mubr.bf16.mxu0 0
    %3763 = vmatmul.mubr.bf16.gmra.mrb[0].mxu0 %v3719
    %v3764 = vpop.f32.mrb[0].mxu0
    %v3765 = vadd.f32 0.0, %v3764
    %v3766 = vpop.f32.mrb[0].mxu0
    %v3767 = vpop.f32.mrb[0].mxu0
    %v3768 = vadd.f32 0.0, %v3767
    %v3769 = vpop.f32.mrb[0].mxu0
    %3770 = vmatprep.mubr.bf16.mxu0 0
    %3771 = vmatmul.mubr.bf16.gmra.mrb[0].mxu0 %v3722
    %v3772 = vpop.f32.mrb[0].mxu0
    %v3773 = vadd.f32 0.0, %v3772
    %v3774 = vpop.f32.mrb[0].mxu0
    %v3775 = vpop.f32.mrb[0].mxu0
    %v3776 = vadd.f32 0.0, %v3775
    %v3777 = vpop.f32.mrb[0].mxu0
    %3778 = vmatprep.mubr.bf16.mxu0 0
    %3779 = vmatmul.mubr.bf16.gmra.mrb[0].mxu0 %v3725
    %v3780 = vpop.f32.mrb[0].mxu0
    %v3781 = vadd.f32 0.0, %v3780
    %v3782 = vpop.f32.mrb[0].mxu0
    %v3783 = vpop.f32.mrb[0].mxu0
    %v3784 = vadd.f32 0.0, %v3783
    %v3785 = vpop.f32.mrb[0].mxu0
    %3786 = vmatprep.mubr.bf16.mxu0 0
    %3787 = vmatmul.mubr.bf16.gmra.mrb[0].mxu0 %v3728
    %v3788 = vpop.f32.mrb[0].mxu0
    %v3789 = vadd.f32 0.0, %v3788
    %v3790 = vpop.f32.mrb[0].mxu0
    %v3791 = vpop.f32.mrb[0].mxu0
    %v3792 = vadd.f32 0.0, %v3791
    %v3793 = vpop.f32.mrb[0].mxu0
    %3794 = vdwg.mxu0
    %3797 = vrot.lane.b32.xlu0 %v3768, 32
    %v3798 = vpop.permute.xlu0 %3797
    %3799 = vrot.lane.b32.xlu0 %v3784, 32
    %v3800 = vpop.permute.xlu0 %3799
    %3805 = vrot.lane.b32.xlu0 %v3773, 64
    %v3806 = vpop.permute.xlu0 %3805
    %3807 = vrot.lane.b32.xlu0 %v3789, 64
    %v3808 = vpop.permute.xlu0 %3807
    %3813 = vrot.lane.b32.xlu0 %v3776, 96
    %v3814 = vpop.permute.xlu0 %3813
    %3815 = vrot.lane.b32.xlu0 %v3792, 96
    %v3816 = vpop.permute.xlu0 %3815
    %v3819 = vsel %vm556, %v3765, %v3798
    %v3820 = vsel %vm556, %v3781, %v3800
    %v3821 = vsel %vm646, %v3819, %v3806
    %v3822 = vsel %vm646, %v3820, %v3808
    %v3823 = vsel %vm844, %v3821, %v3814
    %v3824 = vsel %vm844, %v3822, %v3816
    %v3825 = vpack.c.bf16 %v3824, %v3823
    %s3826 = scalar_lea.vmem %s23, 128
    %v3827 = vld [vmem:[%s3826] sm:$0xf]
    %v3828 = vld [vmem:[%s3826 + $0x4] sm:$0xf]
    %v3829 = vld [vmem:[%s3826 + $0x8] sm:$0xf]
    %v3830 = vld [vmem:[%s3826 + $0xc] sm:$0xf]
    %v3831 = vld [vmem:[%s3826 + $0x10] sm:$0xf]
    %v3832 = vld [vmem:[%s3826 + $0x14] sm:$0xf]
    %v3833 = vld [vmem:[%s3826 + $0x18] sm:$0xf]
    %v3834 = vld [vmem:[%s3826 + $0x1c] sm:$0xf]
    %v3835 = vld [vmem:[%s3826 + $0x20] sm:$0xf]
    %v3836 = vld [vmem:[%s3826 + $0x24] sm:$0xf]
    %v3837 = vld [vmem:[%s3826 + $0x28] sm:$0xf]
    %v3838 = vld [vmem:[%s3826 + $0x2c] sm:$0xf]
    %v3839 = vld [vmem:[%s3826 + $0x30] sm:$0xf]
    %v3840 = vld [vmem:[%s3826 + $0x34] sm:$0xf]
    %v3841 = vld [vmem:[%s3826 + $0x38] sm:$0xf]
    %v3842 = vld [vmem:[%s3826 + $0x3c] sm:$0xf]
    %s3843 = scalar_lea.vmem %s25, 2
    %v3844 = vld [vmem:[%s3843] sm:$0x1]
    %v3846 = vlaneseq
    %v3847 = vshrl.u32 %v3846, 7
    %v3848 = vsub.s32 0, %v3847
    %v3849 = vrot.slane %v3844, %v3848
    %v3867 = vunpack.c.l.b16 %v3827
    %v3868 = vunpack.c.l.b16 %v3828
    %v3869 = vunpack.c.l.b16 %v3829
    %v3870 = vunpack.c.l.b16 %v3830
    %v3871 = vunpack.c.l.b16 %v3831
    %v3872 = vunpack.c.l.b16 %v3832
    %v3873 = vunpack.c.l.b16 %v3833
    %v3874 = vunpack.c.l.b16 %v3834
    %v3875 = vunpack.c.l.b16 %v3835
    %v3876 = vunpack.c.l.b16 %v3836
    %v3877 = vunpack.c.l.b16 %v3837
    %v3878 = vunpack.c.l.b16 %v3838
    %v3879 = vunpack.c.l.b16 %v3839
    %v3880 = vunpack.c.l.b16 %v3840
    %v3881 = vunpack.c.l.b16 %v3841
    %v3882 = vunpack.c.l.b16 %v3842
    %v3883 = vpack.c.b16 %v3868, %v3867
    %v3884 = vpack.c.b16 %v3870, %v3869
    %v3885 = vpack.c.b16 %v3872, %v3871
    %v3886 = vpack.c.b16 %v3874, %v3873
    %v3887 = vpack.c.b16 %v3876, %v3875
    %v3888 = vpack.c.b16 %v3878, %v3877
    %v3889 = vpack.c.b16 %v3880, %v3879
    %v3890 = vpack.c.b16 %v3882, %v3881
    %3899 = vmatprep.subr.bf16.mxu0 0
    %3900 = vmatpush1.bf16.msra.mxu0 %v3883
    %3901 = vmatprep.subr.bf16.mxu0 0
    %3902 = vmatpush1.bf16.msra.mxu0 %v3884
    %3903 = vmatprep.subr.bf16.mxu0 0
    %3904 = vmatpush1.bf16.msra.mxu0 %v3885
    %3905 = vmatprep.subr.bf16.mxu0 0
    %3906 = vmatpush1.bf16.msra.mxu0 %v3886
    %3907 = vmatprep.subr.bf16.mxu0 0
    %3908 = vmatpush1.bf16.msra.mxu0 %v3887
    %3909 = vmatprep.subr.bf16.mxu0 0
    %3910 = vmatpush1.bf16.msra.mxu0 %v3888
    %3911 = vmatprep.subr.bf16.mxu0 0
    %3912 = vmatpush1.bf16.msra.mxu0 %v3889
    %3913 = vmatprep.subr.bf16.mxu0 0
    %3914 = vmatpush1.bf16.msra.mxu0 %v3890
    %3915 = vmatprep.subr.bf16.mxu0 0
    %3916 = vmatpush1.bf16.msra.mxu0 0
    %3917 = vmatprep.subr.bf16.mxu0 0
    %3918 = vmatpush1.bf16.msra.mxu0 0
    %3919 = vmatprep.subr.bf16.mxu0 0
    %3920 = vmatpush1.bf16.msra.mxu0 0
    %3921 = vmatprep.subr.bf16.mxu0 0
    %3922 = vmatpush1.bf16.msra.mxu0 0
    %3923 = vmatprep.subr.bf16.mxu0 0
    %3924 = vmatpush1.bf16.msra.mxu0 0
    %3925 = vmatprep.subr.bf16.mxu0 0
    %3926 = vmatpush1.bf16.msra.mxu0 0
    %3927 = vmatprep.subr.bf16.mxu0 0
    %3928 = vmatpush1.bf16.msra.mxu0 0
    %3929 = vmatprep.subr.bf16.mxu0 0
    %3930 = vmatpush1.bf16.msra.mxu0 0
    %3931 = vmatprep.mubr.bf16.mxu0 0
    %3932 = vmatmul.mubr.bf16.gmra.mrb[0].mxu0 %v3825
    %v3933 = vpop.f32.mrb[0].mxu0
    %v3934 = vadd.f32 %v3849, %v3933
    %v3935 = vpop.f32.mrb[0].mxu0
    %v3936 = vpop.f32.mrb[0].mxu0
    %v3937 = vadd.f32 %v3849, %v3936
    %v3938 = vpop.f32.mrb[0].mxu0
    %3939 = vdwg.mxu0
    %v3940 = vadd.f32 %v3934, %v3157
    %v3941 = vadd.f32 %v3937, %v3158
    %s3942 = scalar_lea.vmem %s15, 2
    %v3943 = vld [vmem:[%s3942] sm:$0x1]
    %s3944 = scalar_lea.vmem %s17, 2
    %v3945 = vld [vmem:[%s3944] sm:$0x1]
    %3946 = vadd.xlane.f32.xlu0 %v3940
    %v3947 = vpop.xlane.xlu0 %3946
    %3948 = vadd.xlane.f32.xlu0 %v3941
    %v3949 = vpop.xlane.xlu0 %3948
    %v3950 = vmul.f32 %v3947, %v163
    %v3951 = vmul.f32 %v3949, %v163
    %v3952 = vsub.f32 %v3940, %v3950
    %v3953 = vsub.f32 %v3941, %v3951
    %v3954 = vmul.f32 %v3952, %v3952
    %v3955 = vmul.f32 %v3953, %v3953
    %3956 = vadd.xlane.f32.xlu0 %v3954
    %v3957 = vpop.xlane.xlu0 %3956
    %3958 = vadd.xlane.f32.xlu0 %v3955
    %v3959 = vpop.xlane.xlu0 %3958
    %v3960 = vmul.f32 %v3957, %v163
    %v3961 = vmul.f32 %v3959, %v163
    %v3962 = vadd.f32 %v3960, 1e-05
    %v3963 = vadd.f32 %v3961, 1e-05
    %v3964 = vrsqrt.pop %v3962
    %v3965 = vrsqrt.pop %v3963
    %v3966 = vmul.f32 %v3952, %v3964
    %v3967 = vmul.f32 %v3953, %v3965
    %v3969 = vlaneseq
    %v3970 = vshrl.u32 %v3969, 7
    %v3971 = vsub.s32 0, %v3970
    %v3972 = vrot.slane %v3943, %v3971
    %v3974 = vmul.f32 %v3966, %v3972
    %v3975 = vmul.f32 %v3967, %v3972
    %v3977 = vlaneseq
    %v3978 = vshrl.u32 %v3977, 7
    %v3979 = vsub.s32 0, %v3978
    %v3980 = vrot.slane %v3945, %v3979
    %v3982 = vadd.f32 %v3974, %v3980
    %v3983 = vadd.f32 %v3975, %v3980
    %v3984 = vpack.c.bf16 %v3983, %v3982
    %s3985 = scalar_lea.vmem %s27, 512
    %v3986 = vld [vmem:[%s3985] sm:$0xff]
    %v3987 = vld [vmem:[%s3985 + $0x8] sm:$0xff]
    %v3988 = vld [vmem:[%s3985 + $0x10] sm:$0xff]
    %v3989 = vld [vmem:[%s3985 + $0x18] sm:$0xff]
    %v3990 = vld [vmem:[%s3985 + $0x20] sm:$0xff]
    %v3991 = vld [vmem:[%s3985 + $0x28] sm:$0xff]
    %v3992 = vld [vmem:[%s3985 + $0x30] sm:$0xff]
    %v3993 = vld [vmem:[%s3985 + $0x38] sm:$0xff]
    %v3994 = vld [vmem:[%s3985 + $0x40] sm:$0xff]
    %v3995 = vld [vmem:[%s3985 + $0x48] sm:$0xff]
    %v3996 = vld [vmem:[%s3985 + $0x50] sm:$0xff]
    %v3997 = vld [vmem:[%s3985 + $0x58] sm:$0xff]
    %v3998 = vld [vmem:[%s3985 + $0x60] sm:$0xff]
    %v3999 = vld [vmem:[%s3985 + $0x68] sm:$0xff]
    %v4000 = vld [vmem:[%s3985 + $0x70] sm:$0xff]
    %v4001 = vld [vmem:[%s3985 + $0x78] sm:$0xff]
    %v4002 = vld [vmem:[%s3985 + $0x80] sm:$0xff]
    %v4003 = vld [vmem:[%s3985 + $0x88] sm:$0xff]
    %v4004 = vld [vmem:[%s3985 + $0x90] sm:$0xff]
    %v4005 = vld [vmem:[%s3985 + $0x98] sm:$0xff]
    %v4006 = vld [vmem:[%s3985 + $0xa0] sm:$0xff]
    %v4007 = vld [vmem:[%s3985 + $0xa8] sm:$0xff]
    %v4008 = vld [vmem:[%s3985 + $0xb0] sm:$0xff]
    %v4009 = vld [vmem:[%s3985 + $0xb8] sm:$0xff]
    %v4010 = vld [vmem:[%s3985 + $0xc0] sm:$0xff]
    %v4011 = vld [vmem:[%s3985 + $0xc8] sm:$0xff]
    %v4012 = vld [vmem:[%s3985 + $0xd0] sm:$0xff]
    %v4013 = vld [vmem:[%s3985 + $0xd8] sm:$0xff]
    %v4014 = vld [vmem:[%s3985 + $0xe0] sm:$0xff]
    %v4015 = vld [vmem:[%s3985 + $0xe8] sm:$0xff]
    %v4016 = vld [vmem:[%s3985 + $0xf0] sm:$0xff]
    %v4017 = vld [vmem:[%s3985 + $0xf8] sm:$0xff]
    %s4018 = scalar_lea.vmem %s29, 8
    %v4019 = vld [vmem:[%s4018] sm:$0xf]
    %v4021 = vlaneseq
    %v4022 = vshrl.u32 %v4021, 7
    %v4023 = vsub.s32 0, %v4022
    %v4024 = vrot.slane %v4019, %v4023
    %v4025 = vlaneseq
    %v4026 = vshrl.u32 %v4025, 7
    %v4027 = vsub.s32 1, %v4026
    %v4028 = vrot.slane %v4019, %v4027
    %v4029 = vlaneseq
    %v4030 = vshrl.u32 %v4029, 7
    %v4031 = vsub.s32 2, %v4030
    %v4032 = vrot.slane %v4019, %v4031
    %v4033 = vlaneseq
    %v4034 = vshrl.u32 %v4033, 7
    %v4035 = vsub.s32 3, %v4034
    %v4036 = vrot.slane %v4019, %v4035
    %v4073 = vunpack.c.l.b16 %v3986
    %v4074 = vunpack.c.h.b16 %v3986
    %v4075 = vunpack.c.l.b16 %v3987
    %v4076 = vunpack.c.h.b16 %v3987
    %v4077 = vunpack.c.l.b16 %v3988
    %v4078 = vunpack.c.h.b16 %v3988
    %v4079 = vunpack.c.l.b16 %v3989
    %v4080 = vunpack.c.h.b16 %v3989
    %v4081 = vunpack.c.l.b16 %v3990
    %v4082 = vunpack.c.h.b16 %v3990
    %v4083 = vunpack.c.l.b16 %v3991
    %v4084 = vunpack.c.h.b16 %v3991
    %v4085 = vunpack.c.l.b16 %v3992
    %v4086 = vunpack.c.h.b16 %v3992
    %v4087 = vunpack.c.l.b16 %v3993
    %v4088 = vunpack.c.h.b16 %v3993
    %v4089 = vunpack.c.l.b16 %v3994
    %v4090 = vunpack.c.h.b16 %v3994
    %v4091 = vunpack.c.l.b16 %v3995
    %v4092 = vunpack.c.h.b16 %v3995
    %v4093 = vunpack.c.l.b16 %v3996
    %v4094 = vunpack.c.h.b16 %v3996
    %v4095 = vunpack.c.l.b16 %v3997
    %v4096 = vunpack.c.h.b16 %v3997
    %v4097 = vunpack.c.l.b16 %v3998
    %v4098 = vunpack.c.h.b16 %v3998
    %v4099 = vunpack.c.l.b16 %v3999
    %v4100 = vunpack.c.h.b16 %v3999
    %v4101 = vunpack.c.l.b16 %v4000
    %v4102 = vunpack.c.h.b16 %v4000
    %v4103 = vunpack.c.l.b16 %v4001
    %v4104 = vunpack.c.h.b16 %v4001
    %v4105 = vunpack.c.l.b16 %v4002
    %v4106 = vunpack.c.h.b16 %v4002
    %v4107 = vunpack.c.l.b16 %v4003
    %v4108 = vunpack.c.h.b16 %v4003
    %v4109 = vunpack.c.l.b16 %v4004
    %v4110 = vunpack.c.h.b16 %v4004
    %v4111 = vunpack.c.l.b16 %v4005
    %v4112 = vunpack.c.h.b16 %v4005
    %v4113 = vunpack.c.l.b16 %v4006
    %v4114 = vunpack.c.h.b16 %v4006
    %v4115 = vunpack.c.l.b16 %v4007
    %v4116 = vunpack.c.h.b16 %v4007
    %v4117 = vunpack.c.l.b16 %v4008
    %v4118 = vunpack.c.h.b16 %v4008
    %v4119 = vunpack.c.l.b16 %v4009
    %v4120 = vunpack.c.h.b16 %v4009
    %v4121 = vunpack.c.l.b16 %v4010
    %v4122 = vunpack.c.h.b16 %v4010
    %v4123 = vunpack.c.l.b16 %v4011
    %v4124 = vunpack.c.h.b16 %v4011
    %v4125 = vunpack.c.l.b16 %v4012
    %v4126 = vunpack.c.h.b16 %v4012
    %v4127 = vunpack.c.l.b16 %v4013
    %v4128 = vunpack.c.h.b16 %v4013
    %v4129 = vunpack.c.l.b16 %v4014
    %v4130 = vunpack.c.h.b16 %v4014
    %v4131 = vunpack.c.l.b16 %v4015
    %v4132 = vunpack.c.h.b16 %v4015
    %v4133 = vunpack.c.l.b16 %v4016
    %v4134 = vunpack.c.h.b16 %v4016
    %v4135 = vunpack.c.l.b16 %v4017
    %v4136 = vunpack.c.h.b16 %v4017
    %v4137 = vpack.c.b16 %v4077, %v4073
    %v4138 = vpack.c.b16 %v4078, %v4074
    %v4139 = vpack.c.b16 %v4079, %v4075
    %v4140 = vpack.c.b16 %v4080, %v4076
    %v4141 = vpack.c.b16 %v4085, %v4081
    %v4142 = vpack.c.b16 %v4086, %v4082
    %v4143 = vpack.c.b16 %v4087, %v4083
    %v4144 = vpack.c.b16 %v4088, %v4084
    %v4145 = vpack.c.b16 %v4093, %v4089
    %v4146 = vpack.c.b16 %v4094, %v4090
    %v4147 = vpack.c.b16 %v4095, %v4091
    %v4148 = vpack.c.b16 %v4096, %v4092
    %v4149 = vpack.c.b16 %v4101, %v4097
    %v4150 = vpack.c.b16 %v4102, %v4098
    %v4151 = vpack.c.b16 %v4103, %v4099
    %v4152 = vpack.c.b16 %v4104, %v4100
    %v4153 = vpack.c.b16 %v4109, %v4105
    %v4154 = vpack.c.b16 %v4110, %v4106
    %v4155 = vpack.c.b16 %v4111, %v4107
    %v4156 = vpack.c.b16 %v4112, %v4108
    %v4157 = vpack.c.b16 %v4117, %v4113
    %v4158 = vpack.c.b16 %v4118, %v4114
    %v4159 = vpack.c.b16 %v4119, %v4115
    %v4160 = vpack.c.b16 %v4120, %v4116
    %v4161 = vpack.c.b16 %v4125, %v4121
    %v4162 = vpack.c.b16 %v4126, %v4122
    %v4163 = vpack.c.b16 %v4127, %v4123
    %v4164 = vpack.c.b16 %v4128, %v4124
    %v4165 = vpack.c.b16 %v4133, %v4129
    %v4166 = vpack.c.b16 %v4134, %v4130
    %v4167 = vpack.c.b16 %v4135, %v4131
    %v4168 = vpack.c.b16 %v4136, %v4132
    %4201 = vmatprep.subr.bf16.mxu0 %v4138
    %4202 = vmatpush1.bf16.msra.mxu0 %v4137
    %4203 = vmatprep.subr.bf16.mxu0 %v4142
    %4204 = vmatpush1.bf16.msra.mxu0 %v4141
    %4205 = vmatprep.subr.bf16.mxu0 %v4146
    %4206 = vmatpush1.bf16.msra.mxu0 %v4145
    %4207 = vmatprep.subr.bf16.mxu0 %v4150
    %4208 = vmatpush1.bf16.msra.mxu0 %v4149
    %4209 = vmatprep.subr.bf16.mxu0 %v4154
    %4210 = vmatpush1.bf16.msra.mxu0 %v4153
    %4211 = vmatprep.subr.bf16.mxu0 %v4158
    %4212 = vmatpush1.bf16.msra.mxu0 %v4157
    %4213 = vmatprep.subr.bf16.mxu0 %v4162
    %4214 = vmatpush1.bf16.msra.mxu0 %v4161
    %4215 = vmatprep.subr.bf16.mxu0 %v4166
    %4216 = vmatpush1.bf16.msra.mxu0 %v4165
    %4217 = vmatprep.subr.bf16.mxu0 0
    %4218 = vmatpush1.bf16.msra.mxu0 0
    %4219 = vmatprep.subr.bf16.mxu0 0
    %4220 = vmatpush1.bf16.msra.mxu0 0
    %4221 = vmatprep.subr.bf16.mxu0 0
    %4222 = vmatpush1.bf16.msra.mxu0 0
    %4223 = vmatprep.subr.bf16.mxu0 0
    %4224 = vmatpush1.bf16.msra.mxu0 0
    %4225 = vmatprep.subr.bf16.mxu0 0
    %4226 = vmatpush1.bf16.msra.mxu0 0
    %4227 = vmatprep.subr.bf16.mxu0 0
    %4228 = vmatpush1.bf16.msra.mxu0 0
    %4229 = vmatprep.subr.bf16.mxu0 0
    %4230 = vmatpush1.bf16.msra.mxu0 0
    %4231 = vmatprep.subr.bf16.mxu0 0
    %4232 = vmatpush1.bf16.msra.mxu0 0
    %4233 = vmatprep.mubr.bf16.mxu0 0
    %4234 = vmatmul.mubr.bf16.gmra.mrb[0].mxu0 %v3984
    %v4235 = vpop.f32.mrb[0].mxu0
    %v4236 = vadd.f32 %v4024, %v4235
    %v4237 = vpop.f32.mrb[0].mxu0
    %v4238 = vadd.f32 %v4028, %v4237
    %v4239 = vpop.f32.mrb[0].mxu0
    %v4240 = vadd.f32 %v4024, %v4239
    %v4241 = vpop.f32.mrb[0].mxu0
    %v4242 = vadd.f32 %v4028, %v4241
    %4243 = vdwg.mxu0
    %4244 = vmatprep.subr.bf16.mxu0 %v4140
    %4245 = vmatpush1.bf16.msra.mxu0 %v4139
    %4246 = vmatprep.subr.bf16.mxu0 %v4144
    %4247 = vmatpush1.bf16.msra.mxu0 %v4143
    %4248 = vmatprep.subr.bf16.mxu0 %v4148
    %4249 = vmatpush1.bf16.msra.mxu0 %v4147
    %4250 = vmatprep.subr.bf16.mxu0 %v4152
    %4251 = vmatpush1.bf16.msra.mxu0 %v4151
    %4252 = vmatprep.subr.bf16.mxu0 %v4156
    %4253 = vmatpush1.bf16.msra.mxu0 %v4155
    %4254 = vmatprep.subr.bf16.mxu0 %v4160
    %4255 = vmatpush1.bf16.msra.mxu0 %v4159
    %4256 = vmatprep.subr.bf16.mxu0 %v4164
    %4257 = vmatpush1.bf16.msra.mxu0 %v4163
    %4258 = vmatprep.subr.bf16.mxu0 %v4168
    %4259 = vmatpush1.bf16.msra.mxu0 %v4167
    %4260 = vmatprep.subr.bf16.mxu0 0
    %4261 = vmatpush1.bf16.msra.mxu0 0
    %4262 = vmatprep.subr.bf16.mxu0 0
    %4263 = vmatpush1.bf16.msra.mxu0 0
    %4264 = vmatprep.subr.bf16.mxu0 0
    %4265 = vmatpush1.bf16.msra.mxu0 0
    %4266 = vmatprep.subr.bf16.mxu0 0
    %4267 = vmatpush1.bf16.msra.mxu0 0
    %4268 = vmatprep.subr.bf16.mxu0 0
    %4269 = vmatpush1.bf16.msra.mxu0 0
    %4270 = vmatprep.subr.bf16.mxu0 0
    %4271 = vmatpush1.bf16.msra.mxu0 0
    %4272 = vmatprep.subr.bf16.mxu0 0
    %4273 = vmatpush1.bf16.msra.mxu0 0
    %4274 = vmatprep.subr.bf16.mxu0 0
    %4275 = vmatpush1.bf16.msra.mxu0 0
    %4276 = vmatprep.mubr.bf16.mxu0 0
    %4277 = vmatmul.mubr.bf16.gmra.mrb[0].mxu0 %v3984
    %v4278 = vpop.f32.mrb[0].mxu0
    %v4279 = vadd.f32 %v4032, %v4278
    %v4280 = vpop.f32.mrb[0].mxu0
    %v4281 = vadd.f32 %v4036, %v4280
    %v4282 = vpop.f32.mrb[0].mxu0
    %v4283 = vadd.f32 %v4032, %v4282
    %v4284 = vpop.f32.mrb[0].mxu0
    %v4285 = vadd.f32 %v4036, %v4284
    %4286 = vdwg.mxu0
    %v4287 = vmax.f32 %v4236, 0.0
    %v4288 = vmax.f32 %v4238, 0.0
    %v4289 = vmax.f32 %v4279, 0.0
    %v4290 = vmax.f32 %v4281, 0.0
    %v4291 = vmax.f32 %v4240, 0.0
    %v4292 = vmax.f32 %v4242, 0.0
    %v4293 = vmax.f32 %v4283, 0.0
    %v4294 = vmax.f32 %v4285, 0.0
    %v4295 = vpack.c.bf16 %v4291, %v4287
    %v4296 = vpack.c.bf16 %v4292, %v4288
    %v4297 = vpack.c.bf16 %v4293, %v4289
    %v4298 = vpack.c.bf16 %v4294, %v4290
    %s4299 = scalar_lea.vmem %s31, 512
    %v4300 = vld [vmem:[%s4299] sm:$0xf]
    %v4301 = vld [vmem:[%s4299 + $0x4] sm:$0xf]
    %v4302 = vld [vmem:[%s4299 + $0x8] sm:$0xf]
    %v4303 = vld [vmem:[%s4299 + $0xc] sm:$0xf]
    %v4304 = vld [vmem:[%s4299 + $0x10] sm:$0xf]
    %v4305 = vld [vmem:[%s4299 + $0x14] sm:$0xf]
    %v4306 = vld [vmem:[%s4299 + $0x18] sm:$0xf]
    %v4307 = vld [vmem:[%s4299 + $0x1c] sm:$0xf]
    %v4308 = vld [vmem:[%s4299 + $0x20] sm:$0xf]
    %v4309 = vld [vmem:[%s4299 + $0x24] sm:$0xf]
    %v4310 = vld [vmem:[%s4299 + $0x28] sm:$0xf]
    %v4311 = vld [vmem:[%s4299 + $0x2c] sm:$0xf]
    %v4312 = vld [vmem:[%s4299 + $0x30] sm:$0xf]
    %v4313 = vld [vmem:[%s4299 + $0x34] sm:$0xf]
    %v4314 = vld [vmem:[%s4299 + $0x38] sm:$0xf]
    %v4315 = vld [vmem:[%s4299 + $0x3c] sm:$0xf]
    %v4316 = vld [vmem:[%s4299 + $0x40] sm:$0xf]
    %v4317 = vld [vmem:[%s4299 + $0x44] sm:$0xf]
    %v4318 = vld [vmem:[%s4299 + $0x48] sm:$0xf]
    %v4319 = vld [vmem:[%s4299 + $0x4c] sm:$0xf]
    %v4320 = vld [vmem:[%s4299 + $0x50] sm:$0xf]
    %v4321 = vld [vmem:[%s4299 + $0x54] sm:$0xf]
    %v4322 = vld [vmem:[%s4299 + $0x58] sm:$0xf]
    %v4323 = vld [vmem:[%s4299 + $0x5c] sm:$0xf]
    %v4324 = vld [vmem:[%s4299 + $0x60] sm:$0xf]
    %v4325 = vld [vmem:[%s4299 + $0x64] sm:$0xf]
    %v4326 = vld [vmem:[%s4299 + $0x68] sm:$0xf]
    %v4327 = vld [vmem:[%s4299 + $0x6c] sm:$0xf]
    %v4328 = vld [vmem:[%s4299 + $0x70] sm:$0xf]
    %v4329 = vld [vmem:[%s4299 + $0x74] sm:$0xf]
    %v4330 = vld [vmem:[%s4299 + $0x78] sm:$0xf]
    %v4331 = vld [vmem:[%s4299 + $0x7c] sm:$0xf]
    %v4332 = vld [vmem:[%s4299 + $0x80] sm:$0xf]
    %v4333 = vld [vmem:[%s4299 + $0x84] sm:$0xf]
    %v4334 = vld [vmem:[%s4299 + $0x88] sm:$0xf]
    %v4335 = vld [vmem:[%s4299 + $0x8c] sm:$0xf]
    %v4336 = vld [vmem:[%s4299 + $0x90] sm:$0xf]
    %v4337 = vld [vmem:[%s4299 + $0x94] sm:$0xf]
    %v4338 = vld [vmem:[%s4299 + $0x98] sm:$0xf]
    %v4339 = vld [vmem:[%s4299 + $0x9c] sm:$0xf]
    %v4340 = vld [vmem:[%s4299 + $0xa0] sm:$0xf]
    %v4341 = vld [vmem:[%s4299 + $0xa4] sm:$0xf]
    %v4342 = vld [vmem:[%s4299 + $0xa8] sm:$0xf]
    %v4343 = vld [vmem:[%s4299 + $0xac] sm:$0xf]
    %v4344 = vld [vmem:[%s4299 + $0xb0] sm:$0xf]
    %v4345 = vld [vmem:[%s4299 + $0xb4] sm:$0xf]
    %v4346 = vld [vmem:[%s4299 + $0xb8] sm:$0xf]
    %v4347 = vld [vmem:[%s4299 + $0xbc] sm:$0xf]
    %v4348 = vld [vmem:[%s4299 + $0xc0] sm:$0xf]
    %v4349 = vld [vmem:[%s4299 + $0xc4] sm:$0xf]
    %v4350 = vld [vmem:[%s4299 + $0xc8] sm:$0xf]
    %v4351 = vld [vmem:[%s4299 + $0xcc] sm:$0xf]
    %v4352 = vld [vmem:[%s4299 + $0xd0] sm:$0xf]
    %v4353 = vld [vmem:[%s4299 + $0xd4] sm:$0xf]
    %v4354 = vld [vmem:[%s4299 + $0xd8] sm:$0xf]
    %v4355 = vld [vmem:[%s4299 + $0xdc] sm:$0xf]
    %v4356 = vld [vmem:[%s4299 + $0xe0] sm:$0xf]
    %v4357 = vld [vmem:[%s4299 + $0xe4] sm:$0xf]
    %v4358 = vld [vmem:[%s4299 + $0xe8] sm:$0xf]
    %v4359 = vld [vmem:[%s4299 + $0xec] sm:$0xf]
    %v4360 = vld [vmem:[%s4299 + $0xf0] sm:$0xf]
    %v4361 = vld [vmem:[%s4299 + $0xf4] sm:$0xf]
    %v4362 = vld [vmem:[%s4299 + $0xf8] sm:$0xf]
    %v4363 = vld [vmem:[%s4299 + $0xfc] sm:$0xf]
    %s4364 = scalar_lea.vmem %s33, 2
    %v4365 = vld [vmem:[%s4364] sm:$0x1]
    %v4367 = vlaneseq
    %v4368 = vshrl.u32 %v4367, 7
    %v4369 = vsub.s32 0, %v4368
    %v4370 = vrot.slane %v4365, %v4369
    %v4436 = vunpack.c.l.b16 %v4300
    %v4437 = vunpack.c.l.b16 %v4301
    %v4438 = vunpack.c.l.b16 %v4302
    %v4439 = vunpack.c.l.b16 %v4303
    %v4440 = vunpack.c.l.b16 %v4304
    %v4441 = vunpack.c.l.b16 %v4305
    %v4442 = vunpack.c.l.b16 %v4306
    %v4443 = vunpack.c.l.b16 %v4307
    %v4444 = vunpack.c.l.b16 %v4308
    %v4445 = vunpack.c.l.b16 %v4309
    %v4446 = vunpack.c.l.b16 %v4310
    %v4447 = vunpack.c.l.b16 %v4311
    %v4448 = vunpack.c.l.b16 %v4312
    %v4449 = vunpack.c.l.b16 %v4313
    %v4450 = vunpack.c.l.b16 %v4314
    %v4451 = vunpack.c.l.b16 %v4315
    %v4452 = vunpack.c.l.b16 %v4316
    %v4453 = vunpack.c.l.b16 %v4317
    %v4454 = vunpack.c.l.b16 %v4318
    %v4455 = vunpack.c.l.b16 %v4319
    %v4456 = vunpack.c.l.b16 %v4320
    %v4457 = vunpack.c.l.b16 %v4321
    %v4458 = vunpack.c.l.b16 %v4322
    %v4459 = vunpack.c.l.b16 %v4323
    %v4460 = vunpack.c.l.b16 %v4324
    %v4461 = vunpack.c.l.b16 %v4325
    %v4462 = vunpack.c.l.b16 %v4326
    %v4463 = vunpack.c.l.b16 %v4327
    %v4464 = vunpack.c.l.b16 %v4328
    %v4465 = vunpack.c.l.b16 %v4329
    %v4466 = vunpack.c.l.b16 %v4330
    %v4467 = vunpack.c.l.b16 %v4331
    %v4468 = vunpack.c.l.b16 %v4332
    %v4469 = vunpack.c.l.b16 %v4333
    %v4470 = vunpack.c.l.b16 %v4334
    %v4471 = vunpack.c.l.b16 %v4335
    %v4472 = vunpack.c.l.b16 %v4336
    %v4473 = vunpack.c.l.b16 %v4337
    %v4474 = vunpack.c.l.b16 %v4338
    %v4475 = vunpack.c.l.b16 %v4339
    %v4476 = vunpack.c.l.b16 %v4340
    %v4477 = vunpack.c.l.b16 %v4341
    %v4478 = vunpack.c.l.b16 %v4342
    %v4479 = vunpack.c.l.b16 %v4343
    %v4480 = vunpack.c.l.b16 %v4344
    %v4481 = vunpack.c.l.b16 %v4345
    %v4482 = vunpack.c.l.b16 %v4346
    %v4483 = vunpack.c.l.b16 %v4347
    %v4484 = vunpack.c.l.b16 %v4348
    %v4485 = vunpack.c.l.b16 %v4349
    %v4486 = vunpack.c.l.b16 %v4350
    %v4487 = vunpack.c.l.b16 %v4351
    %v4488 = vunpack.c.l.b16 %v4352
    %v4489 = vunpack.c.l.b16 %v4353
    %v4490 = vunpack.c.l.b16 %v4354
    %v4491 = vunpack.c.l.b16 %v4355
    %v4492 = vunpack.c.l.b16 %v4356
    %v4493 = vunpack.c.l.b16 %v4357
    %v4494 = vunpack.c.l.b16 %v4358
    %v4495 = vunpack.c.l.b16 %v4359
    %v4496 = vunpack.c.l.b16 %v4360
    %v4497 = vunpack.c.l.b16 %v4361
    %v4498 = vunpack.c.l.b16 %v4362
    %v4499 = vunpack.c.l.b16 %v4363
    %v4500 = vpack.c.b16 %v4437, %v4436
    %v4501 = vpack.c.b16 %v4439, %v4438
    %v4502 = vpack.c.b16 %v4441, %v4440
    %v4503 = vpack.c.b16 %v4443, %v4442
    %v4504 = vpack.c.b16 %v4445, %v4444
    %v4505 = vpack.c.b16 %v4447, %v4446
    %v4506 = vpack.c.b16 %v4449, %v4448
    %v4507 = vpack.c.b16 %v4451, %v4450
    %v4508 = vpack.c.b16 %v4453, %v4452
    %v4509 = vpack.c.b16 %v4455, %v4454
    %v4510 = vpack.c.b16 %v4457, %v4456
    %v4511 = vpack.c.b16 %v4459, %v4458
    %v4512 = vpack.c.b16 %v4461, %v4460
    %v4513 = vpack.c.b16 %v4463, %v4462
    %v4514 = vpack.c.b16 %v4465, %v4464
    %v4515 = vpack.c.b16 %v4467, %v4466
    %v4516 = vpack.c.b16 %v4469, %v4468
    %v4517 = vpack.c.b16 %v4471, %v4470
    %v4518 = vpack.c.b16 %v4473, %v4472
    %v4519 = vpack.c.b16 %v4475, %v4474
    %v4520 = vpack.c.b16 %v4477, %v4476
    %v4521 = vpack.c.b16 %v4479, %v4478
    %v4522 = vpack.c.b16 %v4481, %v4480
    %v4523 = vpack.c.b16 %v4483, %v4482
    %v4524 = vpack.c.b16 %v4485, %v4484
    %v4525 = vpack.c.b16 %v4487, %v4486
    %v4526 = vpack.c.b16 %v4489, %v4488
    %v4527 = vpack.c.b16 %v4491, %v4490
    %v4528 = vpack.c.b16 %v4493, %v4492
    %v4529 = vpack.c.b16 %v4495, %v4494
    %v4530 = vpack.c.b16 %v4497, %v4496
    %v4531 = vpack.c.b16 %v4499, %v4498
    %4564 = vmatprep.subr.bf16.mxu0 0
    %4565 = vmatpush1.bf16.msra.mxu0 %v4500
    %4566 = vmatprep.subr.bf16.mxu0 0
    %4567 = vmatpush1.bf16.msra.mxu0 %v4501
    %4568 = vmatprep.subr.bf16.mxu0 0
    %4569 = vmatpush1.bf16.msra.mxu0 %v4502
    %4570 = vmatprep.subr.bf16.mxu0 0
    %4571 = vmatpush1.bf16.msra.mxu0 %v4503
    %4572 = vmatprep.subr.bf16.mxu0 0
    %4573 = vmatpush1.bf16.msra.mxu0 %v4504
    %4574 = vmatprep.subr.bf16.mxu0 0
    %4575 = vmatpush1.bf16.msra.mxu0 %v4505
    %4576 = vmatprep.subr.bf16.mxu0 0
    %4577 = vmatpush1.bf16.msra.mxu0 %v4506
    %4578 = vmatprep.subr.bf16.mxu0 0
    %4579 = vmatpush1.bf16.msra.mxu0 %v4507
    %4580 = vmatprep.subr.bf16.mxu0 0
    %4581 = vmatpush1.bf16.msra.mxu0 %v4508
    %4582 = vmatprep.subr.bf16.mxu0 0
    %4583 = vmatpush1.bf16.msra.mxu0 %v4509
    %4584 = vmatprep.subr.bf16.mxu0 0
    %4585 = vmatpush1.bf16.msra.mxu0 %v4510
    %4586 = vmatprep.subr.bf16.mxu0 0
    %4587 = vmatpush1.bf16.msra.mxu0 %v4511
    %4588 = vmatprep.subr.bf16.mxu0 0
    %4589 = vmatpush1.bf16.msra.mxu0 %v4512
    %4590 = vmatprep.subr.bf16.mxu0 0
    %4591 = vmatpush1.bf16.msra.mxu0 %v4513
    %4592 = vmatprep.subr.bf16.mxu0 0
    %4593 = vmatpush1.bf16.msra.mxu0 %v4514
    %4594 = vmatprep.subr.bf16.mxu0 0
    %4595 = vmatpush1.bf16.msra.mxu0 %v4515
    %4596 = vmatprep.mubr.bf16.mxu0 %v4296
    %4597 = vmatmul.mubr.bf16.gmra.mrb[0].mxu0 %v4295
    %v4598 = vpop.f32.mrb[0].mxu0
    %v4599 = vadd.f32 %v4370, %v4598
    %v4600 = vpop.f32.mrb[0].mxu0
    %v4601 = vpop.f32.mrb[0].mxu0
    %v4602 = vadd.f32 %v4370, %v4601
    %v4603 = vpop.f32.mrb[0].mxu0
    %4604 = vdwg.mxu0
    %4605 = vmatprep.subr.bf16.mxu0 0
    %4606 = vmatpush1.bf16.msra.mxu0 %v4516
    %4607 = vmatprep.subr.bf16.mxu0 0
    %4608 = vmatpush1.bf16.msra.mxu0 %v4517
    %4609 = vmatprep.subr.bf16.mxu0 0
    %4610 = vmatpush1.bf16.msra.mxu0 %v4518
    %4611 = vmatprep.subr.bf16.mxu0 0
    %4612 = vmatpush1.bf16.msra.mxu0 %v4519
    %4613 = vmatprep.subr.bf16.mxu0 0
    %4614 = vmatpush1.bf16.msra.mxu0 %v4520
    %4615 = vmatprep.subr.bf16.mxu0 0
    %4616 = vmatpush1.bf16.msra.mxu0 %v4521
    %4617 = vmatprep.subr.bf16.mxu0 0
    %4618 = vmatpush1.bf16.msra.mxu0 %v4522
    %4619 = vmatprep.subr.bf16.mxu0 0
    %4620 = vmatpush1.bf16.msra.mxu0 %v4523
    %4621 = vmatprep.subr.bf16.mxu0 0
    %4622 = vmatpush1.bf16.msra.mxu0 %v4524
    %4623 = vmatprep.subr.bf16.mxu0 0
    %4624 = vmatpush1.bf16.msra.mxu0 %v4525
    %4625 = vmatprep.subr.bf16.mxu0 0
    %4626 = vmatpush1.bf16.msra.mxu0 %v4526
    %4627 = vmatprep.subr.bf16.mxu0 0
    %4628 = vmatpush1.bf16.msra.mxu0 %v4527
    %4629 = vmatprep.subr.bf16.mxu0 0
    %4630 = vmatpush1.bf16.msra.mxu0 %v4528
    %4631 = vmatprep.subr.bf16.mxu0 0
    %4632 = vmatpush1.bf16.msra.mxu0 %v4529
    %4633 = vmatprep.subr.bf16.mxu0 0
    %4634 = vmatpush1.bf16.msra.mxu0 %v4530
    %4635 = vmatprep.subr.bf16.mxu0 0
    %4636 = vmatpush1.bf16.msra.mxu0 %v4531
    %4637 = vmatprep.mubr.bf16.mxu0 %v4298
    %4638 = vmatmul.mubr.bf16.gmra.mrb[0].mxu0 %v4297
    %v4639 = vpop.f32.mrb[0].mxu0
    %v4640 = vadd.f32 %v4599, %v4639
    %v4641 = vpop.f32.mrb[0].mxu0
    %v4642 = vpop.f32.mrb[0].mxu0
    %v4643 = vadd.f32 %v4602, %v4642
    %v4644 = vpop.f32.mrb[0].mxu0
    %4645 = vdwg.mxu0
    %v4646 = vadd.f32 %v4640, %v3940
    %v4647 = vadd.f32 %v4643, %v3941
    %v4648 = vmax.f32 %v4646, 0.0
    %v4649 = vmax.f32 %v4647, 0.0
    %4650 = vadd.xlane.f32.xlu0 %v4648
    %v4651 = vpop.xlane.xlu0 %4650
    %4652 = vadd.xlane.f32.xlu0 %v4649
    %v4653 = vpop.xlane.xlu0 %4652
    %v4654 = vmul.f32 %v4651, %v163
    %v4655 = vmul.f32 %v4653, %v163
    %v4656 = vsub.f32 %v4648, %v4654
    %v4657 = vsub.f32 %v4649, %v4655
    %v4658 = vmul.f32 %v4656, %v4656
    %v4659 = vmul.f32 %v4657, %v4657
    %4660 = vadd.xlane.f32.xlu0 %v4658
    %v4661 = vpop.xlane.xlu0 %4660
    %4662 = vadd.xlane.f32.xlu0 %v4659
    %v4663 = vpop.xlane.xlu0 %4662
    %v4664 = vmul.f32 %v4661, %v163
    %v4665 = vmul.f32 %v4663, %v163
    %v4666 = vadd.f32 %v4664, 1e-06
    %v4667 = vadd.f32 %v4665, 1e-06
    %v4668 = vrsqrt.pop %v4666
    %v4669 = vrsqrt.pop %v4667
    %v4670 = vmul.f32 %v4656, %v4668
    %v4671 = vmul.f32 %v4657, %v4669
    %4672 = vst [vmem:[#allocation8] sm:$0xff] %v4670
    %4673 = vst [vmem:[#allocation8 + $0x8] sm:$0xff] %v4671
    %v4674 = vpack.c.bf16 %v4671, %v4670
    %v4675 = vld [vmem:[#allocation6] sm:$0xff]
    %v4676 = vld [vmem:[#allocation6 + $0x8] sm:$0xff]
    %v4677 = vld [vmem:[#allocation6 + $0x10] sm:$0xff]
    %v4678 = vld [vmem:[#allocation6 + $0x18] sm:$0xff]
    %v4679 = vld [vmem:[#allocation6 + $0x20] sm:$0xf]
    %v4680 = vld [vmem:[#allocation6 + $0x24] sm:$0xff]
    %v4681 = vld [vmem:[#allocation6 + $0x2c] sm:$0xff]
    %v4682 = vld [vmem:[#allocation6 + $0x34] sm:$0xff]
    %v4683 = vld [vmem:[#allocation6 + $0x3c] sm:$0xff]
    %v4684 = vld [vmem:[#allocation6 + $0x44] sm:$0xf]
    %v4685 = vld [vmem:[#allocation6 + $0x48] sm:$0xff]
    %v4686 = vld [vmem:[#allocation6 + $0x50] sm:$0xff]
    %v4687 = vld [vmem:[#allocation6 + $0x58] sm:$0xff]
    %v4688 = vld [vmem:[#allocation6 + $0x60] sm:$0xff]
    %v4689 = vld [vmem:[#allocation6 + $0x68] sm:$0xf]
    %v4690 = vld [vmem:[#allocation6 + $0x6c] sm:$0xff]
    %v4691 = vld [vmem:[#allocation6 + $0x74] sm:$0xff]
    %v4692 = vld [vmem:[#allocation6 + $0x7c] sm:$0xff]
    %v4693 = vld [vmem:[#allocation6 + $0x84] sm:$0xff]
    %v4694 = vld [vmem:[#allocation6 + $0x8c] sm:$0xf]
    %v4695 = vld [vmem:[#allocation6 + $0x90] sm:$0xff]
    %v4696 = vld [vmem:[#allocation6 + $0x98] sm:$0xff]
    %v4697 = vld [vmem:[#allocation6 + $0xa0] sm:$0xff]
    %v4698 = vld [vmem:[#allocation6 + $0xa8] sm:$0xff]
    %v4699 = vld [vmem:[#allocation6 + $0xb0] sm:$0xf]
    %v4700 = vld [vmem:[#allocation6 + $0xb4] sm:$0xff]
    %v4701 = vld [vmem:[#allocation6 + $0xbc] sm:$0xff]
    %v4702 = vld [vmem:[#allocation6 + $0xc4] sm:$0xff]
    %v4703 = vld [vmem:[#allocation6 + $0xcc] sm:$0xff]
    %v4704 = vld [vmem:[#allocation6 + $0xd4] sm:$0xf]
    %v4705 = vld [vmem:[#allocation6 + $0xd8] sm:$0xff]
    %v4706 = vld [vmem:[#allocation6 + $0xe0] sm:$0xff]
    %v4707 = vld [vmem:[#allocation6 + $0xe8] sm:$0xff]
    %v4708 = vld [vmem:[#allocation6 + $0xf0] sm:$0xff]
    %v4709 = vld [vmem:[#allocation6 + $0xf8] sm:$0xf]
    %v4710 = vld [vmem:[#allocation6 + $0xfc] sm:$0xff]
    %v4711 = vld [vmem:[#allocation6 + $0x104] sm:$0xff]
    %v4712 = vld [vmem:[#allocation6 + $0x10c] sm:$0xff]
    %v4713 = vld [vmem:[#allocation6 + $0x114] sm:$0xff]
    %v4714 = vld [vmem:[#allocation6 + $0x11c] sm:$0xf]
    %v4715 = vld [vmem:[#allocation6 + $0x120] sm:$0xff]
    %v4716 = vld [vmem:[#allocation6 + $0x128] sm:$0xff]
    %v4717 = vld [vmem:[#allocation6 + $0x130] sm:$0xff]
    %v4718 = vld [vmem:[#allocation6 + $0x138] sm:$0xff]
    %v4719 = vld [vmem:[#allocation6 + $0x140] sm:$0xf]
    %v4720 = vld [vmem:[#allocation6 + $0x144] sm:$0xff]
    %v4721 = vld [vmem:[#allocation6 + $0x14c] sm:$0xff]
    %v4722 = vld [vmem:[#allocation6 + $0x154] sm:$0xff]
    %v4723 = vld [vmem:[#allocation6 + $0x15c] sm:$0xff]
    %v4724 = vld [vmem:[#allocation6 + $0x164] sm:$0xf]
    %v4725 = vld [vmem:[#allocation6 + $0x168] sm:$0xff]
    %v4726 = vld [vmem:[#allocation6 + $0x170] sm:$0xff]
    %v4727 = vld [vmem:[#allocation6 + $0x178] sm:$0xff]
    %v4728 = vld [vmem:[#allocation6 + $0x180] sm:$0xff]
    %v4729 = vld [vmem:[#allocation6 + $0x188] sm:$0xf]
    %v4730 = vld [vmem:[#allocation6 + $0x18c] sm:$0xff]
    %v4731 = vld [vmem:[#allocation6 + $0x194] sm:$0xff]
    %v4732 = vld [vmem:[#allocation6 + $0x19c] sm:$0xff]
    %v4733 = vld [vmem:[#allocation6 + $0x1a4] sm:$0xff]
    %v4734 = vld [vmem:[#allocation6 + $0x1ac] sm:$0xf]
    %v4735 = vld [vmem:[#allocation6 + $0x1b0] sm:$0xff]
    %v4736 = vld [vmem:[#allocation6 + $0x1b8] sm:$0xff]
    %v4737 = vld [vmem:[#allocation6 + $0x1c0] sm:$0xff]
    %v4738 = vld [vmem:[#allocation6 + $0x1c8] sm:$0xff]
    %v4739 = vld [vmem:[#allocation6 + $0x1d0] sm:$0xf]
    %v4740 = vld [vmem:[#allocation6 + $0x1d4] sm:$0xff]
    %v4741 = vld [vmem:[#allocation6 + $0x1dc] sm:$0xff]
    %v4742 = vld [vmem:[#allocation6 + $0x1e4] sm:$0xff]
    %v4743 = vld [vmem:[#allocation6 + $0x1ec] sm:$0xff]
    %v4744 = vld [vmem:[#allocation6 + $0x1f4] sm:$0xf]
    %v4745 = vld [vmem:[#allocation6 + $0x1f8] sm:$0xff]
    %v4746 = vld [vmem:[#allocation6 + $0x200] sm:$0xff]
    %v4747 = vld [vmem:[#allocation6 + $0x208] sm:$0xff]
    %v4748 = vld [vmem:[#allocation6 + $0x210] sm:$0xff]
    %v4749 = vld [vmem:[#allocation6 + $0x218] sm:$0xf]
    %v4750 = vld [vmem:[#allocation6 + $0x21c] sm:$0xff]
    %v4751 = vld [vmem:[#allocation6 + $0x224] sm:$0xff]
    %v4752 = vld [vmem:[#allocation6 + $0x22c] sm:$0xff]
    %v4753 = vld [vmem:[#allocation6 + $0x234] sm:$0xff]
    %v4754 = vld [vmem:[#allocation6 + $0x23c] sm:$0xf]
    %v4755 = vld [vmem:[%s37] sm:$0xff]
    %v4756 = vld [vmem:[%s37 + $0x8] sm:$0x1]
    %v4759 = vlaneseq
    %v4760 = vshrl.u32 %v4759, 7
    %v4761 = vsub.s32 0, %v4760
    %v4762 = vrot.slane %v4755, %v4761
    %v4763 = vlaneseq
    %v4764 = vshrl.u32 %v4763, 7
    %v4765 = vsub.s32 1, %v4764
    %v4766 = vrot.slane %v4755, %v4765
    %v4767 = vlaneseq
    %v4768 = vshrl.u32 %v4767, 7
    %v4769 = vsub.s32 2, %v4768
    %v4770 = vrot.slane %v4755, %v4769
    %v4771 = vlaneseq
    %v4772 = vshrl.u32 %v4771, 7
    %v4773 = vsub.s32 3, %v4772
    %v4774 = vrot.slane %v4755, %v4773
    %v4775 = vlaneseq
    %v4776 = vshrl.u32 %v4775, 7
    %v4777 = vsub.s32 4, %v4776
    %v4778 = vrot.slane %v4755, %v4777
    %v4779 = vlaneseq
    %v4780 = vshrl.u32 %v4779, 7
    %v4781 = vsub.s32 5, %v4780
    %v4782 = vrot.slane %v4755, %v4781
    %v4783 = vlaneseq
    %v4784 = vshrl.u32 %v4783, 7
    %v4785 = vsub.s32 6, %v4784
    %v4786 = vrot.slane %v4755, %v4785
    %v4787 = vlaneseq
    %v4788 = vshrl.u32 %v4787, 7
    %v4789 = vsub.s32 7, %v4788
    %v4790 = vrot.slane %v4755, %v4789
    %v4791 = vlaneseq
    %v4792 = vshrl.u32 %v4791, 7
    %v4793 = vsub.s32 0, %v4792
    %v4794 = vrot.slane %v4756, %v4793
    %v4884 = vunpack.c.l.b16 %v4675
    %v4885 = vunpack.c.h.b16 %v4675
    %v4886 = vunpack.c.l.b16 %v4676
    %v4887 = vunpack.c.h.b16 %v4676
    %v4888 = vunpack.c.l.b16 %v4677
    %v4889 = vunpack.c.h.b16 %v4677
    %v4890 = vunpack.c.l.b16 %v4678
    %v4891 = vunpack.c.h.b16 %v4678
    %v4892 = vunpack.c.l.b16 %v4679
    %v4893 = vunpack.c.l.b16 %v4680
    %v4894 = vunpack.c.h.b16 %v4680
    %v4895 = vunpack.c.l.b16 %v4681
    %v4896 = vunpack.c.h.b16 %v4681
    %v4897 = vunpack.c.l.b16 %v4682
    %v4898 = vunpack.c.h.b16 %v4682
    %v4899 = vunpack.c.l.b16 %v4683
    %v4900 = vunpack.c.h.b16 %v4683
    %v4901 = vunpack.c.l.b16 %v4684
    %v4902 = vunpack.c.l.b16 %v4685
    %v4903 = vunpack.c.h.b16 %v4685
    %v4904 = vunpack.c.l.b16 %v4686
    %v4905 = vunpack.c.h.b16 %v4686
    %v4906 = vunpack.c.l.b16 %v4687
    %v4907 = vunpack.c.h.b16 %v4687
    %v4908 = vunpack.c.l.b16 %v4688
    %v4909 = vunpack.c.h.b16 %v4688
    %v4910 = vunpack.c.l.b16 %v4689
    %v4911 = vunpack.c.l.b16 %v4690
    %v4912 = vunpack.c.h.b16 %v4690
    %v4913 = vunpack.c.l.b16 %v4691
    %v4914 = vunpack.c.h.b16 %v4691
    %v4915 = vunpack.c.l.b16 %v4692
    %v4916 = vunpack.c.h.b16 %v4692
    %v4917 = vunpack.c.l.b16 %v4693
    %v4918 = vunpack.c.h.b16 %v4693
    %v4919 = vunpack.c.l.b16 %v4694
    %v4920 = vunpack.c.l.b16 %v4695
    %v4921 = vunpack.c.h.b16 %v4695
    %v4922 = vunpack.c.l.b16 %v4696
    %v4923 = vunpack.c.h.b16 %v4696
    %v4924 = vunpack.c.l.b16 %v4697
    %v4925 = vunpack.c.h.b16 %v4697
    %v4926 = vunpack.c.l.b16 %v4698
    %v4927 = vunpack.c.h.b16 %v4698
    %v4928 = vunpack.c.l.b16 %v4699
    %v4929 = vunpack.c.l.b16 %v4700
    %v4930 = vunpack.c.h.b16 %v4700
    %v4931 = vunpack.c.l.b16 %v4701
    %v4932 = vunpack.c.h.b16 %v4701
    %v4933 = vunpack.c.l.b16 %v4702
    %v4934 = vunpack.c.h.b16 %v4702
    %v4935 = vunpack.c.l.b16 %v4703
    %v4936 = vunpack.c.h.b16 %v4703
    %v4937 = vunpack.c.l.b16 %v4704
    %v4938 = vunpack.c.l.b16 %v4705
    %v4939 = vunpack.c.h.b16 %v4705
    %v4940 = vunpack.c.l.b16 %v4706
    %v4941 = vunpack.c.h.b16 %v4706
    %v4942 = vunpack.c.l.b16 %v4707
    %v4943 = vunpack.c.h.b16 %v4707
    %v4944 = vunpack.c.l.b16 %v4708
    %v4945 = vunpack.c.h.b16 %v4708
    %v4946 = vunpack.c.l.b16 %v4709
    %v4947 = vunpack.c.l.b16 %v4710
    %v4948 = vunpack.c.h.b16 %v4710
    %v4949 = vunpack.c.l.b16 %v4711
    %v4950 = vunpack.c.h.b16 %v4711
    %v4951 = vunpack.c.l.b16 %v4712
    %v4952 = vunpack.c.h.b16 %v4712
    %v4953 = vunpack.c.l.b16 %v4713
    %v4954 = vunpack.c.h.b16 %v4713
    %v4955 = vunpack.c.l.b16 %v4714
    %v4956 = vunpack.c.l.b16 %v4715
    %v4957 = vunpack.c.h.b16 %v4715
    %v4958 = vunpack.c.l.b16 %v4716
    %v4959 = vunpack.c.h.b16 %v4716
    %v4960 = vunpack.c.l.b16 %v4717
    %v4961 = vunpack.c.h.b16 %v4717
    %v4962 = vunpack.c.l.b16 %v4718
    %v4963 = vunpack.c.h.b16 %v4718
    %v4964 = vunpack.c.l.b16 %v4719
    %v4965 = vunpack.c.l.b16 %v4720
    %v4966 = vunpack.c.h.b16 %v4720
    %v4967 = vunpack.c.l.b16 %v4721
    %v4968 = vunpack.c.h.b16 %v4721
    %v4969 = vunpack.c.l.b16 %v4722
    %v4970 = vunpack.c.h.b16 %v4722
    %v4971 = vunpack.c.l.b16 %v4723
    %v4972 = vunpack.c.h.b16 %v4723
    %v4973 = vunpack.c.l.b16 %v4724
    %v4974 = vunpack.c.l.b16 %v4725
    %v4975 = vunpack.c.h.b16 %v4725
    %v4976 = vunpack.c.l.b16 %v4726
    %v4977 = vunpack.c.h.b16 %v4726
    %v4978 = vunpack.c.l.b16 %v4727
    %v4979 = vunpack.c.h.b16 %v4727
    %v4980 = vunpack.c.l.b16 %v4728
    %v4981 = vunpack.c.h.b16 %v4728
    %v4982 = vunpack.c.l.b16 %v4729
    %v4983 = vunpack.c.l.b16 %v4730
    %v4984 = vunpack.c.h.b16 %v4730
    %v4985 = vunpack.c.l.b16 %v4731
    %v4986 = vunpack.c.h.b16 %v4731
    %v4987 = vunpack.c.l.b16 %v4732
    %v4988 = vunpack.c.h.b16 %v4732
    %v4989 = vunpack.c.l.b16 %v4733
    %v4990 = vunpack.c.h.b16 %v4733
    %v4991 = vunpack.c.l.b16 %v4734
    %v4992 = vunpack.c.l.b16 %v4735
    %v4993 = vunpack.c.h.b16 %v4735
    %v4994 = vunpack.c.l.b16 %v4736
    %v4995 = vunpack.c.h.b16 %v4736
    %v4996 = vunpack.c.l.b16 %v4737
    %v4997 = vunpack.c.h.b16 %v4737
    %v4998 = vunpack.c.l.b16 %v4738
    %v4999 = vunpack.c.h.b16 %v4738
    %v5000 = vunpack.c.l.b16 %v4739
    %v5001 = vunpack.c.l.b16 %v4740
    %v5002 = vunpack.c.h.b16 %v4740
    %v5003 = vunpack.c.l.b16 %v4741
    %v5004 = vunpack.c.h.b16 %v4741
    %v5005 = vunpack.c.l.b16 %v4742
    %v5006 = vunpack.c.h.b16 %v4742
    %v5007 = vunpack.c.l.b16 %v4743
    %v5008 = vunpack.c.h.b16 %v4743
    %v5009 = vunpack.c.l.b16 %v4744
    %v5010 = vunpack.c.l.b16 %v4745
    %v5011 = vunpack.c.h.b16 %v4745
    %v5012 = vunpack.c.l.b16 %v4746
    %v5013 = vunpack.c.h.b16 %v4746
    %v5014 = vunpack.c.l.b16 %v4747
    %v5015 = vunpack.c.h.b16 %v4747
    %v5016 = vunpack.c.l.b16 %v4748
    %v5017 = vunpack.c.h.b16 %v4748
    %v5018 = vunpack.c.l.b16 %v4749
    %v5019 = vunpack.c.l.b16 %v4750
    %v5020 = vunpack.c.h.b16 %v4750
    %v5021 = vunpack.c.l.b16 %v4751
    %v5022 = vunpack.c.h.b16 %v4751
    %v5023 = vunpack.c.l.b16 %v4752
    %v5024 = vunpack.c.h.b16 %v4752
    %v5025 = vunpack.c.l.b16 %v4753
    %v5026 = vunpack.c.h.b16 %v4753
    %v5027 = vunpack.c.l.b16 %v4754
    %v5028 = vpack.c.b16 %v4893, %v4884
    %v5029 = vpack.c.b16 %v4894, %v4885
    %v5030 = vpack.c.b16 %v4895, %v4886
    %v5031 = vpack.c.b16 %v4896, %v4887
    %v5032 = vpack.c.b16 %v4897, %v4888
    %v5033 = vpack.c.b16 %v4898, %v4889
    %v5034 = vpack.c.b16 %v4899, %v4890
    %v5035 = vpack.c.b16 %v4900, %v4891
    %v5036 = vpack.c.b16 %v4901, %v4892
    %v5037 = vpack.c.b16 %v4911, %v4902
    %v5038 = vpack.c.b16 %v4912, %v4903
    %v5039 = vpack.c.b16 %v4913, %v4904
    %v5040 = vpack.c.b16 %v4914, %v4905
    %v5041 = vpack.c.b16 %v4915, %v4906
    %v5042 = vpack.c.b16 %v4916, %v4907
    %v5043 = vpack.c.b16 %v4917, %v4908
    %v5044 = vpack.c.b16 %v4918, %v4909
    %v5045 = vpack.c.b16 %v4919, %v4910
    %v5046 = vpack.c.b16 %v4929, %v4920
    %v5047 = vpack.c.b16 %v4930, %v4921
    %v5048 = vpack.c.b16 %v4931, %v4922
    %v5049 = vpack.c.b16 %v4932, %v4923
    %v5050 = vpack.c.b16 %v4933, %v4924
    %v5051 = vpack.c.b16 %v4934, %v4925
    %v5052 = vpack.c.b16 %v4935, %v4926
    %v5053 = vpack.c.b16 %v4936, %v4927
    %v5054 = vpack.c.b16 %v4937, %v4928
    %v5055 = vpack.c.b16 %v4947, %v4938
    %v5056 = vpack.c.b16 %v4948, %v4939
    %v5057 = vpack.c.b16 %v4949, %v4940
    %v5058 = vpack.c.b16 %v4950, %v4941
    %v5059 = vpack.c.b16 %v4951, %v4942
    %v5060 = vpack.c.b16 %v4952, %v4943
    %v5061 = vpack.c.b16 %v4953, %v4944
    %v5062 = vpack.c.b16 %v4954, %v4945
    %v5063 = vpack.c.b16 %v4955, %v4946
    %v5064 = vpack.c.b16 %v4965, %v4956
    %v5065 = vpack.c.b16 %v4966, %v4957
    %v5066 = vpack.c.b16 %v4967, %v4958
    %v5067 = vpack.c.b16 %v4968, %v4959
    %v5068 = vpack.c.b16 %v4969, %v4960
    %v5069 = vpack.c.b16 %v4970, %v4961
    %v5070 = vpack.c.b16 %v4971, %v4962
    %v5071 = vpack.c.b16 %v4972, %v4963
    %v5072 = vpack.c.b16 %v4973, %v4964
    %v5073 = vpack.c.b16 %v4983, %v4974
    %v5074 = vpack.c.b16 %v4984, %v4975
    %v5075 = vpack.c.b16 %v4985, %v4976
    %v5076 = vpack.c.b16 %v4986, %v4977
    %v5077 = vpack.c.b16 %v4987, %v4978
    %v5078 = vpack.c.b16 %v4988, %v4979
    %v5079 = vpack.c.b16 %v4989, %v4980
    %v5080 = vpack.c.b16 %v4990, %v4981
    %v5081 = vpack.c.b16 %v4991, %v4982
    %v5082 = vpack.c.b16 %v5001, %v4992
    %v5083 = vpack.c.b16 %v5002, %v4993
    %v5084 = vpack.c.b16 %v5003, %v4994
    %v5085 = vpack.c.b16 %v5004, %v4995
    %v5086 = vpack.c.b16 %v5005, %v4996
    %v5087 = vpack.c.b16 %v5006, %v4997
    %v5088 = vpack.c.b16 %v5007, %v4998
    %v5089 = vpack.c.b16 %v5008, %v4999
    %v5090 = vpack.c.b16 %v5009, %v5000
    %v5091 = vpack.c.b16 %v5019, %v5010
    %v5092 = vpack.c.b16 %v5020, %v5011
    %v5093 = vpack.c.b16 %v5021, %v5012
    %v5094 = vpack.c.b16 %v5022, %v5013
    %v5095 = vpack.c.b16 %v5023, %v5014
    %v5096 = vpack.c.b16 %v5024, %v5015
    %v5097 = vpack.c.b16 %v5025, %v5016
    %v5098 = vpack.c.b16 %v5026, %v5017
    %v5099 = vpack.c.b16 %v5027, %v5018
    %5172 = vmatprep.subr.bf16.mxu0 %v5029
    %5173 = vmatpush1.bf16.msra.mxu0 %v5028
    %5174 = vmatprep.subr.bf16.mxu0 %v5038
    %5175 = vmatpush1.bf16.msra.mxu0 %v5037
    %5176 = vmatprep.subr.bf16.mxu0 %v5047
    %5177 = vmatpush1.bf16.msra.mxu0 %v5046
    %5178 = vmatprep.subr.bf16.mxu0 %v5056
    %5179 = vmatpush1.bf16.msra.mxu0 %v5055
    %5180 = vmatprep.subr.bf16.mxu0 %v5065
    %5181 = vmatpush1.bf16.msra.mxu0 %v5064
    %5182 = vmatprep.subr.bf16.mxu0 %v5074
    %5183 = vmatpush1.bf16.msra.mxu0 %v5073
    %5184 = vmatprep.subr.bf16.mxu0 %v5083
    %5185 = vmatpush1.bf16.msra.mxu0 %v5082
    %5186 = vmatprep.subr.bf16.mxu0 %v5092
    %5187 = vmatpush1.bf16.msra.mxu0 %v5091
    %5188 = vmatprep.subr.bf16.mxu0 0
    %5189 = vmatpush1.bf16.msra.mxu0 0
    %5190 = vmatprep.subr.bf16.mxu0 0
    %5191 = vmatpush1.bf16.msra.mxu0 0
    %5192 = vmatprep.subr.bf16.mxu0 0
    %5193 = vmatpush1.bf16.msra.mxu0 0
    %5194 = vmatprep.subr.bf16.mxu0 0
    %5195 = vmatpush1.bf16.msra.mxu0 0
    %5196 = vmatprep.subr.bf16.mxu0 0
    %5197 = vmatpush1.bf16.msra.mxu0 0
    %5198 = vmatprep.subr.bf16.mxu0 0
    %5199 = vmatpush1.bf16.msra.mxu0 0
    %5200 = vmatprep.subr.bf16.mxu0 0
    %5201 = vmatpush1.bf16.msra.mxu0 0
    %5202 = vmatprep.subr.bf16.mxu0 0
    %5203 = vmatpush1.bf16.msra.mxu0 0
    %5204 = vmatprep.mubr.bf16.mxu0 0
    %5205 = vmatmul.mubr.bf16.gmra.mrb[0].mxu0 %v4674
    %v5206 = vpop.f32.mrb[0].mxu0
    %v5207 = vadd.f32 %v4762, %v5206
    %v5208 = vpop.f32.mrb[0].mxu0
    %v5209 = vadd.f32 %v4766, %v5208
    %v5210 = vpop.f32.mrb[0].mxu0
    %v5211 = vadd.f32 %v4762, %v5210
    %v5212 = vpop.f32.mrb[0].mxu0
    %v5213 = vadd.f32 %v4766, %v5212
    %5214 = vdwg.mxu0
    %5215 = vmatprep.subr.bf16.mxu0 %v5031
    %5216 = vmatpush1.bf16.msra.mxu0 %v5030
    %5217 = vmatprep.subr.bf16.mxu0 %v5040
    %5218 = vmatpush1.bf16.msra.mxu0 %v5039
    %5219 = vmatprep.subr.bf16.mxu0 %v5049
    %5220 = vmatpush1.bf16.msra.mxu0 %v5048
    %5221 = vmatprep.subr.bf16.mxu0 %v5058
    %5222 = vmatpush1.bf16.msra.mxu0 %v5057
    %5223 = vmatprep.subr.bf16.mxu0 %v5067
    %5224 = vmatpush1.bf16.msra.mxu0 %v5066
    %5225 = vmatprep.subr.bf16.mxu0 %v5076
    %5226 = vmatpush1.bf16.msra.mxu0 %v5075
    %5227 = vmatprep.subr.bf16.mxu0 %v5085
    %5228 = vmatpush1.bf16.msra.mxu0 %v5084
    %5229 = vmatprep.subr.bf16.mxu0 %v5094
    %5230 = vmatpush1.bf16.msra.mxu0 %v5093
    %5231 = vmatprep.subr.bf16.mxu0 0
    %5232 = vmatpush1.bf16.msra.mxu0 0
    %5233 = vmatprep.subr.bf16.mxu0 0
    %5234 = vmatpush1.bf16.msra.mxu0 0
    %5235 = vmatprep.subr.bf16.mxu0 0
    %5236 = vmatpush1.bf16.msra.mxu0 0
    %5237 = vmatprep.subr.bf16.mxu0 0
    %5238 = vmatpush1.bf16.msra.mxu0 0
    %5239 = vmatprep.subr.bf16.mxu0 0
    %5240 = vmatpush1.bf16.msra.mxu0 0
    %5241 = vmatprep.subr.bf16.mxu0 0
    %5242 = vmatpush1.bf16.msra.mxu0 0
    %5243 = vmatprep.subr.bf16.mxu0 0
    %5244 = vmatpush1.bf16.msra.mxu0 0
    %5245 = vmatprep.subr.bf16.mxu0 0
    %5246 = vmatpush1.bf16.msra.mxu0 0
    %5247 = vmatprep.mubr.bf16.mxu0 0
    %5248 = vmatmul.mubr.bf16.gmra.mrb[0].mxu0 %v4674
    %v5249 = vpop.f32.mrb[0].mxu0
    %v5250 = vadd.f32 %v4770, %v5249
    %v5251 = vpop.f32.mrb[0].mxu0
    %v5252 = vadd.f32 %v4774, %v5251
    %v5253 = vpop.f32.mrb[0].mxu0
    %v5254 = vadd.f32 %v4770, %v5253
    %v5255 = vpop.f32.mrb[0].mxu0
    %v5256 = vadd.f32 %v4774, %v5255
    %5257 = vdwg.mxu0
    %5258 = vmatprep.subr.bf16.mxu0 %v5033
    %5259 = vmatpush1.bf16.msra.mxu0 %v5032
    %5260 = vmatprep.subr.bf16.mxu0 %v5042
    %5261 = vmatpush1.bf16.msra.mxu0 %v5041
    %5262 = vmatprep.subr.bf16.mxu0 %v5051
    %5263 = vmatpush1.bf16.msra.mxu0 %v5050
    %5264 = vmatprep.subr.bf16.mxu0 %v5060
    %5265 = vmatpush1.bf16.msra.mxu0 %v5059
    %5266 = vmatprep.subr.bf16.mxu0 %v5069
    %5267 = vmatpush1.bf16.msra.mxu0 %v5068
    %5268 = vmatprep.subr.bf16.mxu0 %v5078
    %5269 = vmatpush1.bf16.msra.mxu0 %v5077
    %5270 = vmatprep.subr.bf16.mxu0 %v5087
    %5271 = vmatpush1.bf16.msra.mxu0 %v5086
    %5272 = vmatprep.subr.bf16.mxu0 %v5096
    %5273 = vmatpush1.bf16.msra.mxu0 %v5095
    %5274 = vmatprep.subr.bf16.mxu0 0
    %5275 = vmatpush1.bf16.msra.mxu0 0
    %5276 = vmatprep.subr.bf16.mxu0 0
    %5277 = vmatpush1.bf16.msra.mxu0 0
    %5278 = vmatprep.subr.bf16.mxu0 0
    %5279 = vmatpush1.bf16.msra.mxu0 0
    %5280 = vmatprep.subr.bf16.mxu0 0
    %5281 = vmatpush1.bf16.msra.mxu0 0
    %5282 = vmatprep.subr.bf16.mxu0 0
    %5283 = vmatpush1.bf16.msra.mxu0 0
    %5284 = vmatprep.subr.bf16.mxu0 0
    %5285 = vmatpush1.bf16.msra.mxu0 0
    %5286 = vmatprep.subr.bf16.mxu0 0
    %5287 = vmatpush1.bf16.msra.mxu0 0
    %5288 = vmatprep.subr.bf16.mxu0 0
    %5289 = vmatpush1.bf16.msra.mxu0 0
    %5290 = vmatprep.mubr.bf16.mxu0 0
    %5291 = vmatmul.mubr.bf16.gmra.mrb[0].mxu0 %v4674
    %v5292 = vpop.f32.mrb[0].mxu0
    %v5293 = vadd.f32 %v4778, %v5292
    %v5294 = vpop.f32.mrb[0].mxu0
    %v5295 = vadd.f32 %v4782, %v5294
    %v5296 = vpop.f32.mrb[0].mxu0
    %v5297 = vadd.f32 %v4778, %v5296
    %v5298 = vpop.f32.mrb[0].mxu0
    %v5299 = vadd.f32 %v4782, %v5298
    %5300 = vdwg.mxu0
    %5301 = vmatprep.subr.bf16.mxu0 %v5035
    %5302 = vmatpush1.bf16.msra.mxu0 %v5034
    %5303 = vmatprep.subr.bf16.mxu0 %v5044
    %5304 = vmatpush1.bf16.msra.mxu0 %v5043
    %5305 = vmatprep.subr.bf16.mxu0 %v5053
    %5306 = vmatpush1.bf16.msra.mxu0 %v5052
    %5307 = vmatprep.subr.bf16.mxu0 %v5062
    %5308 = vmatpush1.bf16.msra.mxu0 %v5061
    %5309 = vmatprep.subr.bf16.mxu0 %v5071
    %5310 = vmatpush1.bf16.msra.mxu0 %v5070
    %5311 = vmatprep.subr.bf16.mxu0 %v5080
    %5312 = vmatpush1.bf16.msra.mxu0 %v5079
    %5313 = vmatprep.subr.bf16.mxu0 %v5089
    %5314 = vmatpush1.bf16.msra.mxu0 %v5088
    %5315 = vmatprep.subr.bf16.mxu0 %v5098
    %5316 = vmatpush1.bf16.msra.mxu0 %v5097
    %5317 = vmatprep.subr.bf16.mxu0 0
    %5318 = vmatpush1.bf16.msra.mxu0 0
    %5319 = vmatprep.subr.bf16.mxu0 0
    %5320 = vmatpush1.bf16.msra.mxu0 0
    %5321 = vmatprep.subr.bf16.mxu0 0
    %5322 = vmatpush1.bf16.msra.mxu0 0
    %5323 = vmatprep.subr.bf16.mxu0 0
    %5324 = vmatpush1.bf16.msra.mxu0 0
    %5325 = vmatprep.subr.bf16.mxu0 0
    %5326 = vmatpush1.bf16.msra.mxu0 0
    %5327 = vmatprep.subr.bf16.mxu0 0
    %5328 = vmatpush1.bf16.msra.mxu0 0
    %5329 = vmatprep.subr.bf16.mxu0 0
    %5330 = vmatpush1.bf16.msra.mxu0 0
    %5331 = vmatprep.subr.bf16.mxu0 0
    %5332 = vmatpush1.bf16.msra.mxu0 0
    %5333 = vmatprep.mubr.bf16.mxu0 0
    %5334 = vmatmul.mubr.bf16.gmra.mrb[0].mxu0 %v4674
    %v5335 = vpop.f32.mrb[0].mxu0
    %v5336 = vadd.f32 %v4786, %v5335
    %v5337 = vpop.f32.mrb[0].mxu0
    %v5338 = vadd.f32 %v4790, %v5337
    %v5339 = vpop.f32.mrb[0].mxu0
    %v5340 = vadd.f32 %v4786, %v5339
    %v5341 = vpop.f32.mrb[0].mxu0
    %v5342 = vadd.f32 %v4790, %v5341
    %5343 = vdwg.mxu0
    %5344 = vmatprep.subr.bf16.mxu0 0
    %5345 = vmatpush1.bf16.msra.mxu0 %v5036
    %5346 = vmatprep.subr.bf16.mxu0 0
    %5347 = vmatpush1.bf16.msra.mxu0 %v5045
    %5348 = vmatprep.subr.bf16.mxu0 0
    %5349 = vmatpush1.bf16.msra.mxu0 %v5054
    %5350 = vmatprep.subr.bf16.mxu0 0
    %5351 = vmatpush1.bf16.msra.mxu0 %v5063
    %5352 = vmatprep.subr.bf16.mxu0 0
    %5353 = vmatpush1.bf16.msra.mxu0 %v5072
    %5354 = vmatprep.subr.bf16.mxu0 0
    %5355 = vmatpush1.bf16.msra.mxu0 %v5081
    %5356 = vmatprep.subr.bf16.mxu0 0
    %5357 = vmatpush1.bf16.msra.mxu0 %v5090
    %5358 = vmatprep.subr.bf16.mxu0 0
    %5359 = vmatpush1.bf16.msra.mxu0 %v5099
    %5360 = vmatprep.subr.bf16.mxu0 0
    %5361 = vmatpush1.bf16.msra.mxu0 0
    %5362 = vmatprep.subr.bf16.mxu0 0
    %5363 = vmatpush1.bf16.msra.mxu0 0
    %5364 = vmatprep.subr.bf16.mxu0 0
    %5365 = vmatpush1.bf16.msra.mxu0 0
    %5366 = vmatprep.subr.bf16.mxu0 0
    %5367 = vmatpush1.bf16.msra.mxu0 0
    %5368 = vmatprep.subr.bf16.mxu0 0
    %5369 = vmatpush1.bf16.msra.mxu0 0
    %5370 = vmatprep.subr.bf16.mxu0 0
    %5371 = vmatpush1.bf16.msra.mxu0 0
    %5372 = vmatprep.subr.bf16.mxu0 0
    %5373 = vmatpush1.bf16.msra.mxu0 0
    %5374 = vmatprep.subr.bf16.mxu0 0
    %5375 = vmatpush1.bf16.msra.mxu0 0
    %5376 = vmatprep.mubr.bf16.mxu0 0
    %5377 = vmatmul.mubr.bf16.gmra.mrb[0].mxu0 %v4674
    %v5378 = vpop.f32.mrb[0].mxu0
    %v5379 = vadd.f32 %v4794, %v5378
    %v5380 = vpop.f32.mrb[0].mxu0
    %v5381 = vpop.f32.mrb[0].mxu0
    %v5382 = vadd.f32 %v4794, %v5381
    %v5383 = vpop.f32.mrb[0].mxu0
    %5384 = vdwg.mxu0
    %5385 = vst [vmem:[#allocation9] sm:$0xff] %v5207
    %5386 = vst [vmem:[#allocation9 + $0x8] sm:$0xff] %v5211
    %v5387 = vld [vmem:[%s7] sm:$0xff]
    %v5388 = vld [vmem:[%s7 + $0x8] sm:$0xff]
    %v5389 = vld [vmem:[%s7 + $0x10] sm:$0xff]
    %v5390 = vld [vmem:[%s7 + $0x18] sm:$0xff]
    %v5391 = vld [vmem:[%s7 + $0x20] sm:$0xff]
    %v5392 = vld [vmem:[%s7 + $0x28] sm:$0xff]
    %v5393 = vld [vmem:[%s7 + $0x30] sm:$0xff]
    %v5394 = vld [vmem:[%s7 + $0x38] sm:$0xff]
    %v5395 = vmul.f32 %v5209, %v5387
    %v5396 = vmul.f32 %v5213, %v5391
    %v5397 = vadd.f32 %v5395, 0.0
    %v5398 = vadd.f32 %v5396, 0.0
    %v5399 = vmul.f32 %v5295, %v5387
    %v5400 = vmul.f32 %v5299, %v5391
    %v5401 = vadd.f32 %v5399, 0.0
    %v5402 = vadd.f32 %v5400, 0.0
    %v5403 = vmul.f32 %v5250, %v5388
    %v5404 = vmul.f32 %v5254, %v5392
    %v5405 = vadd.f32 %v5397, %v5403
    %v5406 = vadd.f32 %v5398, %v5404
    %v5407 = vmul.f32 %v5336, %v5388
    %v5408 = vmul.f32 %v5340, %v5392
    %v5409 = vadd.f32 %v5401, %v5407
    %v5410 = vadd.f32 %v5402, %v5408
    %v5411 = vmul.f32 %v5252, %v5389
    %v5412 = vmul.f32 %v5256, %v5393
    %v5413 = vadd.f32 %v5405, %v5411
    %v5414 = vadd.f32 %v5406, %v5412
    %v5415 = vmul.f32 %v5338, %v5389
    %v5416 = vmul.f32 %v5342, %v5393
    %v5417 = vadd.f32 %v5409, %v5415
    %v5418 = vadd.f32 %v5410, %v5416
    %v5419 = vmul.f32 %v5293, %v5390
    %v5420 = vmul.f32 %v5297, %v5394
    %v5421 = vadd.f32 %v5413, %v5419
    %v5422 = vadd.f32 %v5414, %v5420
    %v5423 = vmul.f32 %v5379, %v5390
    %v5424 = vmul.f32 %v5382, %v5394
    %v5425 = vadd.f32 %v5417, %v5423
    %v5426 = vadd.f32 %v5418, %v5424
    %5427 = vst [vmem:[#allocation12] sm:$0xff] %v5421
    %5428 = vst [vmem:[#allocation12 + $0x8] sm:$0xff] %v5422
    %5429 = vst [vmem:[#allocation14] sm:$0xff] %v5425
    %5430 = vst [vmem:[#allocation14 + $0x8] sm:$0xff] %v5426
    %v5431 = vld [vmem:[%s9] sm:$0x3]
    %v5432 = vpack.c.bf16 %v5431, %v5431
    %v5433 = vld [vmem:[%s39] sm:$0x3]
    %v5434 = vld [vmem:[%s41] sm:$0x1]
    %v5436 = vlaneseq
    %v5437 = vshrl.u32 %v5436, 7
    %v5438 = vsub.s32 0, %v5437
    %v5439 = vrot.slane %v5434, %v5438
    %vm5441 = vcmask 31744
    %v5443 = vsel %vm5441, %v5432, 0
    %vm5445 = vcmask 1041408
    %v5447 = vsel %vm5445, %v5433, 0
    %5449 = vmatprep.subr.bf16.mxu0 0
    %5450 = vmatpush1.bf16.msra.mxu0 %v5447
    %5451 = vmatprep.subr.bf16.mxu0 0
    %5452 = vmatpush1.bf16.msra.mxu0 0
    %5453 = vmatprep.subr.bf16.mxu0 0
    %5454 = vmatpush1.bf16.msra.mxu0 0
    %5455 = vmatprep.subr.bf16.mxu0 0
    %5456 = vmatpush1.bf16.msra.mxu0 0
    %5457 = vmatprep.subr.bf16.mxu0 0
    %5458 = vmatpush1.bf16.msra.mxu0 0
    %5459 = vmatprep.subr.bf16.mxu0 0
    %5460 = vmatpush1.bf16.msra.mxu0 0
    %5461 = vmatprep.subr.bf16.mxu0 0
    %5462 = vmatpush1.bf16.msra.mxu0 0
    %5463 = vmatprep.subr.bf16.mxu0 0
    %5464 = vmatpush1.bf16.msra.mxu0 0
    %5465 = vmatprep.subr.bf16.mxu0 0
    %5466 = vmatpush1.bf16.msra.mxu0 0
    %5467 = vmatprep.subr.bf16.mxu0 0
    %5468 = vmatpush1.bf16.msra.mxu0 0
    %5469 = vmatprep.subr.bf16.mxu0 0
    %5470 = vmatpush1.bf16.msra.mxu0 0
    %5471 = vmatprep.subr.bf16.mxu0 0
    %5472 = vmatpush1.bf16.msra.mxu0 0
    %5473 = vmatprep.subr.bf16.mxu0 0
    %5474 = vmatpush1.bf16.msra.mxu0 0
    %5475 = vmatprep.subr.bf16.mxu0 0
    %5476 = vmatpush1.bf16.msra.mxu0 0
    %5477 = vmatprep.subr.bf16.mxu0 0
    %5478 = vmatpush1.bf16.msra.mxu0 0
    %5479 = vmatprep.subr.bf16.mxu0 0
    %5480 = vmatpush1.bf16.msra.mxu0 0
    %5481 = vmatprep.mubr.bf16.mxu0 0
    %5482 = vmatmul.mubr.bf16.gmra.mrb[0].mxu0 %v5443
    %v5483 = vpop.f32.mrb[0].mxu0
    %v5484 = vadd.f32 %v5439, %v5483
    %v5485 = vpop.f32.mrb[0].mxu0
    %v5486 = vpop.f32.mrb[0].mxu0
    %v5487 = vpop.f32.mrb[0].mxu0
    %5488 = vdwg.mxu0
    %v5491 = vunpack.c.l.s4 1966171168
    %v5492 = vunpack.c.0.s8 %v5491
    %v5493 = vlaneseq
    %v5494 = vshrl.u32 %v5493, 7
    %v5495 = vsub.s32 %v5492, %v5494
    %v5496 = vrot.slane %v5484, %v5495
    %v5497 = vcombine.high %v5496, %v5496
    %v5499 = vunpack.c.l.s4 1966171168
    %v5500 = vunpack.c.0.s8 %v5499
    %v5501 = vlaneseq
    %v5502 = vshrl.u32 %v5501, 7
    %v5503 = vsub.s32 %v5500, %v5502
    %v5504 = vrot.slane %v5496, %v5503
    %v5506 = vunpack.c.l.s4 1966171168
    %v5507 = vunpack.c.0.s8 %v5506
    %v5508 = vlaneseq
    %v5509 = vshrl.u32 %v5508, 7
    %v5510 = vsub.s32 %v5507, %v5509
    %v5511 = vrot.slane %v5497, %v5510
    %v5512 = vlaneseq
    %v5513 = vshrl.u32 %v5512, 7
    %v5514 = vsub.s32 0, %v5513
    %v5515 = vrot.slane %v5504, %v5514
    %v5516 = vlaneseq
    %v5517 = vshrl.u32 %v5516, 7
    %v5518 = vsub.s32 0, %v5517
    %v5519 = vrot.slane %v5511, %v5518
    %v5522 = vadd.f32 %v4670, %v5515
    %v5523 = vadd.f32 %v4671, %v5519
    %v5526 = vcombine.low %v5522, %v5523
    %v5528 = vpack.c.bf16 %v5526, %v5526
    %v5529 = vld [vmem:[%s43] sm:$0xf]
    %v5530 = vld [vmem:[%s43 + $0x4] sm:$0xf]
    %v5531 = vld [vmem:[%s43 + $0x8] sm:$0xf]
    %v5532 = vld [vmem:[%s43 + $0xc] sm:$0xf]
    %v5533 = vld [vmem:[%s43 + $0x10] sm:$0xf]
    %v5534 = vld [vmem:[%s43 + $0x14] sm:$0xf]
    %v5535 = vld [vmem:[%s43 + $0x18] sm:$0xf]
    %v5536 = vld [vmem:[%s43 + $0x1c] sm:$0xf]
    %v5537 = vld [vmem:[%s43 + $0x20] sm:$0xf]
    %v5538 = vld [vmem:[%s43 + $0x24] sm:$0xf]
    %v5539 = vld [vmem:[%s43 + $0x28] sm:$0xf]
    %v5540 = vld [vmem:[%s43 + $0x2c] sm:$0xf]
    %v5541 = vld [vmem:[%s43 + $0x30] sm:$0xf]
    %v5542 = vld [vmem:[%s43 + $0x34] sm:$0xf]
    %v5543 = vld [vmem:[%s43 + $0x38] sm:$0xf]
    %v5544 = vld [vmem:[%s43 + $0x3c] sm:$0xf]
    %v5545 = vld [vmem:[%s45] sm:$0x1]
    %v5547 = vlaneseq
    %v5548 = vshrl.u32 %v5547, 7
    %v5549 = vsub.s32 0, %v5548
    %v5550 = vrot.slane %v5545, %v5549
    %v5568 = vunpack.c.l.b16 %v5529
    %v5569 = vunpack.c.l.b16 %v5530
    %v5570 = vunpack.c.l.b16 %v5531
    %v5571 = vunpack.c.l.b16 %v5532
    %v5572 = vunpack.c.l.b16 %v5533
    %v5573 = vunpack.c.l.b16 %v5534
    %v5574 = vunpack.c.l.b16 %v5535
    %v5575 = vunpack.c.l.b16 %v5536
    %v5576 = vunpack.c.l.b16 %v5537
    %v5577 = vunpack.c.l.b16 %v5538
    %v5578 = vunpack.c.l.b16 %v5539
    %v5579 = vunpack.c.l.b16 %v5540
    %v5580 = vunpack.c.l.b16 %v5541
    %v5581 = vunpack.c.l.b16 %v5542
    %v5582 = vunpack.c.l.b16 %v5543
    %v5583 = vunpack.c.l.b16 %v5544
    %v5584 = vpack.c.b16 %v5569, %v5568
    %v5585 = vpack.c.b16 %v5571, %v5570
    %v5586 = vpack.c.b16 %v5573, %v5572
    %v5587 = vpack.c.b16 %v5575, %v5574
    %v5588 = vpack.c.b16 %v5577, %v5576
    %v5589 = vpack.c.b16 %v5579, %v5578
    %v5590 = vpack.c.b16 %v5581, %v5580
    %v5591 = vpack.c.b16 %v5583, %v5582
    %5600 = vmatprep.subr.bf16.mxu0 0
    %5601 = vmatpush1.bf16.msra.mxu0 %v5584
    %5602 = vmatprep.subr.bf16.mxu0 0
    %5603 = vmatpush1.bf16.msra.mxu0 %v5585
    %5604 = vmatprep.subr.bf16.mxu0 0
    %5605 = vmatpush1.bf16.msra.mxu0 %v5586
    %5606 = vmatprep.subr.bf16.mxu0 0
    %5607 = vmatpush1.bf16.msra.mxu0 %v5587
    %5608 = vmatprep.subr.bf16.mxu0 0
    %5609 = vmatpush1.bf16.msra.mxu0 %v5588
    %5610 = vmatprep.subr.bf16.mxu0 0
    %5611 = vmatpush1.bf16.msra.mxu0 %v5589
    %5612 = vmatprep.subr.bf16.mxu0 0
    %5613 = vmatpush1.bf16.msra.mxu0 %v5590
    %5614 = vmatprep.subr.bf16.mxu0 0
    %5615 = vmatpush1.bf16.msra.mxu0 %v5591
    %5616 = vmatprep.subr.bf16.mxu0 0
    %5617 = vmatpush1.bf16.msra.mxu0 0
    %5618 = vmatprep.subr.bf16.mxu0 0
    %5619 = vmatpush1.bf16.msra.mxu0 0
    %5620 = vmatprep.subr.bf16.mxu0 0
    %5621 = vmatpush1.bf16.msra.mxu0 0
    %5622 = vmatprep.subr.bf16.mxu0 0
    %5623 = vmatpush1.bf16.msra.mxu0 0
    %5624 = vmatprep.subr.bf16.mxu0 0
    %5625 = vmatpush1.bf16.msra.mxu0 0
    %5626 = vmatprep.subr.bf16.mxu0 0
    %5627 = vmatpush1.bf16.msra.mxu0 0
    %5628 = vmatprep.subr.bf16.mxu0 0
    %5629 = vmatpush1.bf16.msra.mxu0 0
    %5630 = vmatprep.subr.bf16.mxu0 0
    %5631 = vmatpush1.bf16.msra.mxu0 0
    %5632 = vmatprep.mubr.bf16.mxu0 0
    %5633 = vmatmul.mubr.bf16.gmra.mrb[0].mxu0 %v5528
    %v5634 = vpop.f32.mrb[0].mxu0
    %v5635 = vadd.f32 %v5550, %v5634
    %v5636 = vpop.f32.mrb[0].mxu0
    %v5637 = vpop.f32.mrb[0].mxu0
    %v5638 = vpop.f32.mrb[0].mxu0
    %5639 = vdwg.mxu0
    %v5640 = vmax.f32 %v5635, 0.0
    %v5641 = vsel %vm646, %v5640, 0.0
    %5642 = vadd.xlane.f32.xlu0 %v5641
    %v5643 = vpop.xlane.xlu0 %5642
    %v5644 = vrcp.pop 64.0
    %v5645 = vmul.f32 %v5643, %v5644
    %v5646 = vsub.f32 %v5640, %v5645
    %v5647 = vmul.f32 %v5646, %v5646
    %v5648 = vsel %vm646, %v5647, 0.0
    %5649 = vadd.xlane.f32.xlu0 %v5648
    %v5650 = vpop.xlane.xlu0 %5649
    %v5651 = vmul.f32 %v5650, %v5644
    %v5652 = vadd.f32 %v5651, 1e-05
    %v5653 = vrsqrt.pop %v5652
    %v5654 = vmul.f32 %v5646, %v5653
    %v5656 = vcombine.high %v5654, %v5654
    %v5658 = vld [vmem:[%s47] sm:$0x1]
    %v5660 = vlaneseq
    %v5661 = vshrl.u32 %v5660, 7
    %v5662 = vsub.s32 0, %v5661
    %v5663 = vrot.slane %v5658, %v5662
    %v5665 = vmul.f32 %v5654, %v5663
    %v5666 = vmul.f32 %v5656, %v5663
    %vm5667 = vcmask 519168
    %v5668 = vsel %vm5667, %v5665, 0.0
    %5669 = vadd.xlane.f32.xlu0 %v5668
    %v5670 = vpop.xlane.xlu0 %5669
    %v5671 = vsel %vm5667, %v5666, 0.0
    %5672 = vadd.xlane.f32.xlu0 %v5671
    %v5673 = vpop.xlane.xlu0 %5672
    %v5674 = vld [vmem:[#allocation2] sm:$0x1]
    %v5676 = vlaneseq
    %v5677 = vshrl.u32 %v5676, 7
    %v5678 = vsub.s32 0, %v5677
    %v5679 = vrot.slane %v5674, %v5678
    %5680 = vset.pattern.permute.xlu0 0
    %5681 = vperm.xlu0 %5680, %v5679
    %v5682 = vpop.permute.xlu0 %5681
    %v5684 = vadd.f32 %v5670, %v5682
    %v5685 = vadd.f32 %v5673, %v5682
    %v5688 = vlaneseq
    %v5689 = vand.u32 %v5688, 127
    %v5690 = vlaneseq
    %v5691 = vshrl.u32 %v5690, 7
    %v5692 = vsub.s32 %v5689, %v5691
    %v5693 = vrot.slane %v5684, %v5692
    %v5694 = vlaneseq
    %v5695 = vshrl.u32 %v5694, 7
    %v5696 = vsub.s32 %v5689, %v5695
    %v5697 = vrot.slane %v5685, %v5696
    %vm5698 = vcmask 1041409
    %v5699 = vsel %vm5698, %v5697, %v5693
    %vm5701 = vcmask 25600
    %v5702 = vsel %vm5701, %v5699, -inf
    %5703 = vmax.xlane.f32.xlu0 %v5702
    %v5704 = vpop.xlane.xlu0 %5703
    %v5706 = vlaneseq
    %v5707 = vshrl.u32 %v5706, 7
    %v5708 = vsub.s32 0, %v5707
    %v5709 = vrot.slane %v5704, %v5708
    %v5710 = vlaneseq
    %v5711 = vshrl.u32 %v5710, 7
    %v5712 = vsub.s32 1, %v5711
    %v5713 = vrot.slane %v5704, %v5712
    %v5716 = vsub.f32 %v5684, %v5709
    %v5717 = vsub.f32 %v5685, %v5713
    %v5718 = vmul.f32 %v5716, 1.442695
    %v5719 = vpow.pop %v5718
    %v5720 = vmul.f32 %v5717, 1.442695
    %v5721 = vpow.pop %v5720
    %5724 = vset.pattern.permute.xlu0 0
    %5725 = vperm.xlu0 %5724, %v5719
    %v5726 = vpop.permute.xlu0 %5725
    %5727 = vset.pattern.permute.xlu0 0
    %5728 = vperm.xlu0 %5727, %v5721
    %v5729 = vpop.permute.xlu0 %5728
    %v5730 = vlaneseq
    %v5731 = vshrl.u32 %v5730, 7
    %v5732 = vsub.s32 %v5689, %v5731
    %v5733 = vrot.slane %v5726, %v5732
    %v5734 = vlaneseq
    %v5735 = vshrl.u32 %v5734, 7
    %v5736 = vsub.s32 %v5689, %v5735
    %v5737 = vrot.slane %v5729, %v5736
    %v5738 = vsel %vm5698, %v5737, %v5733
    %v5740 = vsel %vm5701, %v5738, 0.0
    %5741 = vadd.xlane.f32.xlu0 %v5740
    %v5742 = vpop.xlane.xlu0 %5741
    %v5744 = vlaneseq
    %v5745 = vshrl.u32 %v5744, 7
    %v5746 = vsub.s32 0, %v5745
    %v5747 = vrot.slane %v5742, %v5746
    %v5748 = vlaneseq
    %v5749 = vshrl.u32 %v5748, 7
    %v5750 = vsub.s32 1, %v5749
    %v5751 = vrot.slane %v5742, %v5750
    %v5754 = vrcp.pop %v5747
    %v5755 = vmul.f32 %v5719, %v5754
    %v5756 = vrcp.pop %v5751
    %v5757 = vmul.f32 %v5721, %v5756
    %5760 = vset.pattern.permute.xlu0 0
    %5761 = vperm.xlu0 %5760, %v5755
    %v5762 = vpop.permute.xlu0 %5761
    %5763 = vset.pattern.permute.xlu0 0
    %5764 = vperm.xlu0 %5763, %v5757
    %v5765 = vpop.permute.xlu0 %5764
    %v5766 = vlaneseq
    %v5767 = vshrl.u32 %v5766, 7
    %v5768 = vsub.s32 %v5689, %v5767
    %v5769 = vrot.slane %v5762, %v5768
    %v5770 = vlaneseq
    %v5771 = vshrl.u32 %v5770, 7
    %v5772 = vsub.s32 %v5689, %v5771
    %v5773 = vrot.slane %v5765, %v5772
    %v5774 = vsel %vm5698, %v5773, %v5769
    %v5776 = vsel %vm5441, %v5774, 0.0
    %5777 = vst [vmem:[#allocation11] sm:$0x3] %v5776
    // Predicated region
    $region110: #{tvae_point_encoder_forward.1} parent=1 // pred_check
      _
    $region111: #{tvae_point_encoder_forward.1} parent=1 // pred_check_branch
      %5779 = sbr.rel (0) target = $region113
    $region112: #{tvae_point_encoder_forward.1} parent=1 // pred_region
      %s5781 = ssub.s32 256, 256
      %5782 = vsyncadd [#allocation5], %s5781
      %s5783 = sshll.u32 [#allocation8], 4
      %s5784 = int_to_ptr.vmem [resolvable:$true] %s5783
      %5789 = dma.vmem_to_hbm [thread:$0]  %s5784, 256, %s51, [#allocation5], 128, 128, 8
    $region113: #{tvae_point_encoder_forward.1} parent=1 // pred_fallthru
      _
    // Predicated region
    $region114: #{tvae_point_encoder_forward.1} parent=1 // pred_check
      _
    $region115: #{tvae_point_encoder_forward.1} parent=1 // pred_check_branch
      %5791 = sbr.rel (0) target = $region117
    $region116: #{tvae_point_encoder_forward.1} parent=1 // pred_region
      %s5793 = ssub.s32 256, 256
      %5794 = vsyncadd [#allocation10], %s5793
      %s5795 = sshll.u32 [#allocation9], 4
      %s5796 = int_to_ptr.vmem [resolvable:$true] %s5795
      %5801 = dma.vmem_to_hbm [thread:$0]  %s5796, 256, %s53, [#allocation10], 128, 128, 8
    $region117: #{tvae_point_encoder_forward.1} parent=1 // pred_fallthru
      _
    // Predicated region
    $region118: #{tvae_point_encoder_forward.1} parent=1 // pred_check
      _
    $region119: #{tvae_point_encoder_forward.1} parent=1 // pred_check_branch
      %5803 = sbr.rel (0) target = $region121
    $region120: #{tvae_point_encoder_forward.1} parent=1 // pred_region
      %s5805 = ssub.s32 32, 32
      %5806 = vsyncadd [#allocation10], %s5805
      %s5808 = sshll.u32 [#allocation11], 4
      %s5809 = int_to_ptr.vmem [resolvable:$true] %s5808
      %5811 = dma.vmem_to_hbm [thread:$0]  %s5809, 32, %s55, [#allocation10]
    $region121: #{tvae_point_encoder_forward.1} parent=1 // pred_fallthru
      _
    // Predicated region
    $region122: #{tvae_point_encoder_forward.1} parent=1 // pred_check
      _
    $region123: #{tvae_point_encoder_forward.1} parent=1 // pred_check_branch
      %5813 = sbr.rel (0) target = $region125
    $region124: #{tvae_point_encoder_forward.1} parent=1 // pred_region
      %s5815 = ssub.s32 256, 256
      %5816 = vsyncadd [#allocation13], %s5815
      %s5817 = sshll.u32 [#allocation12], 4
      %s5818 = int_to_ptr.vmem [resolvable:$true] %s5817
      %5823 = dma.vmem_to_hbm [thread:$0]  %s5818, 256, %s57, [#allocation13], 128, 128, 8
    $region125: #{tvae_point_encoder_forward.1} parent=1 // pred_fallthru
      _
    // Predicated region
    $region126: #{tvae_point_encoder_forward.1} parent=1 // pred_check
      _
    $region127: #{tvae_point_encoder_forward.1} parent=1 // pred_check_branch
      %5825 = sbr.rel (0) target = $region129
    $region128: #{tvae_point_encoder_forward.1} parent=1 // pred_region
      %s5827 = ssub.s32 256, 256
      %5828 = vsyncadd [#allocation13], %s5827
      %s5829 = sshll.u32 [#allocation14], 4
      %s5830 = int_to_ptr.vmem [resolvable:$true] %s5829
      %5835 = dma.vmem_to_hbm [thread:$0]  %s5830, 256, %s59, [#allocation13], 128, 128, 8
    $region129: #{tvae_point_encoder_forward.1} parent=1 // pred_fallthru
      _
    // Predicated region
    $region130: #{tvae_point_encoder_forward.1} parent=1 // pred_check
      _
    $region131: #{tvae_point_encoder_forward.1} parent=1 // pred_check_branch
      %5837 = sbr.rel (0) target = $region133
    $region132: #{tvae_point_encoder_forward.1} parent=1 // pred_region
      %5838 = dma.done [#allocation5], 256
    $region133: #{tvae_point_encoder_forward.1} parent=1 // pred_fallthru
      _
    // Predicated region
    $region134: #{tvae_point_encoder_forward.1} parent=1 // pred_check
      _
    $region135: #{tvae_point_encoder_forward.1} parent=1 // pred_check_branch
      %5840 = sbr.rel (0) target = $region137
    $region136: #{tvae_point_encoder_forward.1} parent=1 // pred_region
      %5841 = dma.done [#allocation10], 256
    $region137: #{tvae_point_encoder_forward.1} parent=1 // pred_fallthru
      _
    // Predicated region
    $region138: #{tvae_point_encoder_forward.1} parent=1 // pred_check
      _
    $region139: #{tvae_point_encoder_forward.1} parent=1 // pred_check_branch
      %5843 = sbr.rel (0) target = $region141
    $region140: #{tvae_point_encoder_forward.1} parent=1 // pred_region
      %5844 = dma.done [#allocation10], 32
    $region141: #{tvae_point_encoder_forward.1} parent=1 // pred_fallthru
      _
    // Predicated region
    $region142: #{tvae_point_encoder_forward.1} parent=1 // pred_check
      _
    $region143: #{tvae_point_encoder_forward.1} parent=1 // pred_check_branch
      %5846 = sbr.rel (0) target = $region145
    $region144: #{tvae_point_encoder_forward.1} parent=1 // pred_region
      %5847 = dma.done [#allocation13], 256
    $region145: #{tvae_point_encoder_forward.1} parent=1 // pred_fallthru
      _
    // Predicated region
    $region146: #{tvae_point_encoder_forward.1} parent=1 // pred_check
      _
    $region147: #{tvae_point_encoder_forward.1} parent=1 // pred_check_branch
      %5849 = sbr.rel (0) target = $region149
    $region148: #{tvae_point_encoder_forward.1} parent=1 // pred_region
      %5850 = dma.done [#allocation13], 256
    $region149: #{tvae_point_encoder_forward.1} parent=1 // pred_fallthru
      _
    %5851 = vsyncpa [#allocation4], 1
    %5852 = vsyncpa [#allocation7], 1
    %5853 = vsyncpa [#allocation5], 1
    %5854 = vsyncpa [#allocation10], 1
    %5855 = vsyncpa [#allocation13], 1

</llo_original>
